<compile_context>
chip_gen: v7x
topology: tpu7x:2x2x1
jax: 0.10.0
libtpu: 0.0.40
codegen_flags: <defaults>
</compile_context>

<pallas_src>
import functools

import jax
import jax.numpy as jnp
from jax import lax
from jax.experimental import pallas as pl
from jax.experimental.pallas import tpu as pltpu

LANE = 128


# --------------------------------------------------------------------------- #
# Static layer layout (shared by param packing and kernel 1)
# --------------------------------------------------------------------------- #
def _slot_dims(arch):
    """(cin, cout) per packed weight slot, in kernel consumption order."""
    dims = []
    prev = arch["pc_in_dim"]
    for widths in arch["edgeconv_widths"]:
        cin = prev
        for w in widths:
            dims.append((cin, w))
            cin = w
        prev = widths[-1]
    cin = sum(b[-1] for b in arch["edgeconv_widths"])
    for w in arch["dgcnn_mlp_widths"]:
        dims.append((cin, w))
        cin = w
    # fused BaseLearner layer-0 + linear_mapper (both consume feat2)
    feat2 = arch["dgcnn_mlp_widths"][-1]
    dims.append((feat2, arch["base_widths"][0] + arch["output_dim"]))
    cin = arch["base_widths"][0]
    for w in arch["base_widths"][1:]:
        dims.append((cin, w))
        cin = w
    return dims


def _slot_offsets(dims):
    """128-lane-aligned column offset per slot + total slab width."""
    offs, c = [], 0
    for _, cout in dims:
        offs.append(c)
        c += pl.cdiv(cout, LANE) * LANE
    return offs, c


def feature_dims(arch):
    d_real = (sum(b[-1] for b in arch["edgeconv_widths"])
              + arch["output_dim"] + arch["base_widths"][-1])
    d_pad = pl.cdiv(d_real, LANE) * LANE
    return d_real, d_pad


# --------------------------------------------------------------------------- #
# Kernel 1: fused feature extractor (edgeconv stand-in + mlp + base + mapper)
# --------------------------------------------------------------------------- #
def _make_features_kernel(arch, d_pad, col_offs, act_dtype):
    edge_widths = arch["edgeconv_widths"]
    mlp_widths = arch["dgcnn_mlp_widths"]
    base_widths = arch["base_widths"]
    out_dim = arch["output_dim"]
    d_level1 = sum(b[-1] for b in edge_widths)
    d_real = d_level1 + out_dim + base_widths[-1]

    def kernel(x_ref, w_ref, b_ref, o_ref):
        tm = o_ref.shape[0]

        def matmul_bias(h, slot, cin, cout):
            c0 = col_offs[slot]
            w = w_ref[0:cin, c0:c0 + cout]        # bf16, BN scale pre-folded
            b = b_ref[0:1, c0:c0 + cout]          # f32, folded BN shift
            return jnp.dot(h.astype(jnp.bfloat16), w,
                           preferred_element_type=jnp.float32) + b

        slot = 0
        cin = x_ref.shape[1]
        h = x_ref[...]                            # (tm, Cin) f32 rows (points)
        ec_outs = []
        # edge-conv blocks (pointwise stand-in); block 2 consumes block 1 output
        for widths in edge_widths:
            for w_out in widths:
                y = jnp.maximum(matmul_bias(h, slot, cin, w_out), 0.0)   # f32
                slot += 1
                cin = w_out
                h = y.astype(act_dtype)           # bf16-resident on v6e/v7x
            ec_outs.append(y)                     # f32 block output (for feat1)
        feat1 = (jnp.concatenate(ec_outs, axis=1)
                 if len(ec_outs) > 1 else ec_outs[0])          # (tm, d_level1)

        # DGCNN mlp head
        h = feat1.astype(act_dtype)
        cin = d_level1
        for w_out in mlp_widths:
            y = jnp.maximum(matmul_bias(h, slot, cin, w_out), 0.0)
            slot += 1
            cin = w_out
            h = y.astype(act_dtype)
        feat2 = h                                 # (tm, mlp[-1])

        # fused BaseLearner layer-0 + linear_mapper: one matmul, sliced halves
        nb = len(base_widths)
        nb0 = base_widths[0]
        y = matmul_bias(feat2, slot, mlp_widths[-1], nb0 + out_dim)
        slot += 1
        map_feat = y[:, nb0:nb0 + out_dim]        # mapper half: bias-free, no ReLU
        y3 = y[:, 0:nb0]
        if nb > 1:                                # BaseLearner: ReLU except last layer
            y3 = jnp.maximum(y3, 0.0)
        cin = nb0
        for j in range(1, nb):
            y3 = matmul_bias(y3.astype(act_dtype), slot, cin, base_widths[j])
            if j != nb - 1:
                y3 = jnp.maximum(y3, 0.0)
            slot += 1
            cin = base_widths[j]
        feat3 = y3                                # (tm, base[-1]) f32

        # assemble the full feature row in registers; single lane-dense store
        parts = [feat1, map_feat, feat3]
        if d_pad > d_real:
            parts.append(jnp.zeros((tm, d_pad - d_real), jnp.float32))
        o_ref[...] = jnp.concatenate(parts, axis=1)

    return kernel


def fused_features(x_flat, w_slab, b_row, col_offs, arch, d_pad, act_dtype, tm=2048):
    """x_flat: (M, C_in) channels-last rows -> (M, d_pad) features (zero-padded cols)."""
    m, cin = x_flat.shape
    tm_eff = min(tm, pl.cdiv(m, 8) * 8)           # one grid step at toy sizes
    m_pad = pl.cdiv(m, tm_eff) * tm_eff
    if m_pad != m:
        x_flat = jnp.pad(x_flat, ((0, m_pad - m), (0, 0)))

    out = pl.pallas_call(
        _make_features_kernel(arch, d_pad, col_offs, act_dtype),
        out_shape=jax.ShapeDtypeStruct((m_pad, d_pad), jnp.float32),
        grid=(m_pad // tm_eff,),
        in_specs=[pl.BlockSpec((tm_eff, cin), lambda i: (i, 0)),
                  pl.BlockSpec(w_slab.shape, lambda i: (0, 0)),
                  pl.BlockSpec(b_row.shape, lambda i: (0, 0))],
        out_specs=pl.BlockSpec((tm_eff, d_pad), lambda i: (i, 0)),
        compiler_params=pltpu.CompilerParams(dimension_semantics=("parallel",)),
    )(x_flat, w_slab, b_row)
    return out[:m]


# --------------------------------------------------------------------------- #
# Kernel 2: fused foreground/background masked average pooling (batched shots)
# --------------------------------------------------------------------------- #
def _pool_kernel(f_ref, m_ref, o_ref):
    # f_ref: (nbs, L, D)   m_ref: (nbs, 1, L) fg mask   o_ref: (nbs, 2, D) [fg; bg]
    f = f_ref[...]
    m = m_ref[...]
    mm = jnp.concatenate([m, 1.0 - m], axis=1)                     # (nbs, 2, L)
    num = jnp.einsum('skl,sld->skd', mm.astype(jnp.bfloat16),
                     f.astype(jnp.bfloat16),
                     preferred_element_type=jnp.float32)           # masked sums (MXU)
    den = jnp.sum(mm, axis=2, keepdims=True) + 1e-5                # sum(mask)+eps, exact
    o_ref[...] = num / den


def masked_pool_fg_bg(s_feat, fg_mask, nbs=8):
    """s_feat: (NK, L, D), fg_mask: (NK, 1, L) binary -> (NK, 2, D) [fg, bg]."""
    nk, L, D = s_feat.shape
    nbs = min(nbs, nk)
    nk_pad = pl.cdiv(nk, nbs) * nbs
    if nk_pad != nk:
        s_feat = jnp.pad(s_feat, ((0, nk_pad - nk), (0, 0), (0, 0)))
        fg_mask = jnp.pad(fg_mask, ((0, nk_pad - nk), (0, 0), (0, 0)))
    out = pl.pallas_call(
        _pool_kernel,
        out_shape=jax.ShapeDtypeStruct((nk_pad, 2, D), jnp.float32),
        grid=(nk_pad // nbs,),
        in_specs=[pl.BlockSpec((nbs, L, D), lambda b: (b, 0, 0)),
                  pl.BlockSpec((nbs, 1, L), lambda b: (b, 0, 0))],
        out_specs=pl.BlockSpec((nbs, 2, D), lambda b: (b, 0, 0)),
        compiler_params=pltpu.CompilerParams(dimension_semantics=("parallel",)),
    )(s_feat, fg_mask)
    return out[:nk]


# --------------------------------------------------------------------------- #
# Kernel 3: fused cosine similarity (scaler=10) + per-point cross entropy
# --------------------------------------------------------------------------- #
def _sim_ce_kernel(q_ref, p_ref, lb_ref, pred_ref, nll_ref, *, scaler, eps):
    # q_ref: (nbq, L, D) query features; p_ref: (P, D) pre-normalized prototypes
    pr = p_ref[...].astype(jnp.bfloat16)                          # (P, D)
    nbq = q_ref.shape[0]
    for b in range(nbq):                                          # static unroll
        f = q_ref[b]                                              # (L, D) f32
        # exact normalization: 1/max(||f||, eps) == rsqrt(max(||f||^2, eps^2))
        inv = lax.rsqrt(jnp.maximum(jnp.sum(f * f, axis=1, keepdims=True),
                                    eps * eps))                   # (L, 1), EUP
        fn = (f * inv).astype(jnp.bfloat16)                       # (L, D)
        sim = scaler * lax.dot_general(pr, fn, (((1,), (1,)), ((), ())),
                                       preferred_element_type=jnp.float32)  # (P, L)
        pred_ref[b] = sim                                         # lane-dense logits

        lb = lb_ref[b]                                            # (1, L) int32
        onehot = (lax.broadcasted_iota(jnp.int32, sim.shape, 0) == lb).astype(jnp.float32)
        mx = jnp.max(sim, axis=0, keepdims=True)                  # (1, L)
        lse = mx + jnp.log(jnp.sum(jnp.exp(sim - mx), axis=0, keepdims=True))
        nll_ref[b] = lse - jnp.sum(sim * onehot, axis=0, keepdims=True)


def sim_and_ce(q_feat, prototypes, labels, scaler=10.0, eps=1e-8, nbq=8):
    """q_feat: (n_q, L, D); prototypes: (P, D); labels: (n_q, 1, L) int32."""
    n_q, L, D = q_feat.shape
    P = prototypes.shape[0]
    # pre-normalize prototypes in the wrapper (exact division, hoisted off the grid)
    pn = jnp.sqrt(jnp.sum(prototypes * prototypes, axis=1, keepdims=True))
    pr_n = prototypes / jnp.maximum(pn, eps)

    nbq = min(nbq, n_q)
    nq_pad = pl.cdiv(n_q, nbq) * nbq
    if nq_pad != n_q:
        q_feat = jnp.pad(q_feat, ((0, nq_pad - n_q), (0, 0), (0, 0)))
        labels = jnp.pad(labels, ((0, nq_pad - n_q), (0, 0), (0, 0)))

    pred, nll = pl.pallas_call(
        functools.partial(_sim_ce_kernel, scaler=scaler, eps=eps),
        out_shape=(jax.ShapeDtypeStruct((nq_pad, P, L), jnp.float32),
                   jax.ShapeDtypeStruct((nq_pad, 1, L), jnp.float32)),
        grid=(nq_pad // nbq,),
        in_specs=[pl.BlockSpec((nbq, L, D), lambda b: (b, 0, 0)),
                  pl.BlockSpec((P, D), lambda b: (0, 0)),
                  pl.BlockSpec((nbq, 1, L), lambda b: (b, 0, 0))],
        out_specs=(pl.BlockSpec((nbq, P, L), lambda b: (b, 0, 0)),
                   pl.BlockSpec((nbq, 1, L), lambda b: (b, 0, 0))),
        compiler_params=pltpu.CompilerParams(dimension_semantics=("parallel",)),
    )(q_feat, pr_n, labels)
    return pred[:n_q], nll[:n_q]


# --------------------------------------------------------------------------- #
# Deterministic parameters: Conv1d(k=1) + eval-mode BN folded into (W*scale, shift)
# --------------------------------------------------------------------------- #
def make_conv_bn_params(key, cin, cout, eps=1e-5):
    kw, kb, kg, kbe = jax.random.split(key, 4)
    W = jax.random.normal(kw, (cin, cout), jnp.float32) / jnp.sqrt(cin)
    bias = 0.01 * jax.random.normal(kb, (cout,), jnp.float32)
    gamma = 1.0 + 0.1 * jax.random.normal(kg, (cout,), jnp.float32)
    beta = 0.1 * jax.random.normal(kbe, (cout,), jnp.float32)
    r_mean = jnp.zeros((cout,), jnp.float32)
    r_var = jnp.ones((cout,), jnp.float32)
    scale = gamma / jnp.sqrt(r_var + eps)
    shift = beta + scale * (bias - r_mean)
    W_fold = (W * scale[None, :]).astype(jnp.bfloat16)        # BN scale folded into W
    return W_fold, shift.reshape(1, cout).astype(jnp.float32)


def build_params(key, arch):
    convs = []
    prev = arch["pc_in_dim"]
    for widths in arch["edgeconv_widths"]:        # edge-conv stand-in blocks
        c_in = prev
        for w in widths:
            key, sub = jax.random.split(key)
            convs.append(make_conv_bn_params(sub, c_in, w))
            c_in = w
        prev = widths[-1]
    c_in = sum(b[-1] for b in arch["edgeconv_widths"])
    for w in arch["dgcnn_mlp_widths"]:            # DGCNN mlp head
        key, sub = jax.random.split(key)
        convs.append(make_conv_bn_params(sub, c_in, w))
        c_in = w
    c_in = arch["dgcnn_mlp_widths"][-1]
    for w in arch["base_widths"]:                 # BaseLearner
        key, sub = jax.random.split(key)
        convs.append(make_conv_bn_params(sub, c_in, w))
        c_in = w
    key, sub = jax.random.split(key)              # linear_mapper (bias-free)
    cin = arch["dgcnn_mlp_widths"][-1]
    cout = arch["output_dim"]
    mapper = (jax.random.normal(sub, (cin, cout), jnp.float32)
              / jnp.sqrt(cin)).astype(jnp.bfloat16)
    return {"convs": convs, "mapper": mapper}


def pack_params(params, arch):
    """Pack every layer into one bf16 weight slab + one f32 bias row (128-aligned cols)."""
    dims = _slot_dims(arch)
    col_offs, total_cols = _slot_offsets(dims)
    convs = list(params["convs"])
    mapper = params["mapper"]
    n_ec = sum(len(b) for b in arch["edgeconv_widths"])
    n_mlp = len(arch["dgcnn_mlp_widths"])
    ec, mlp, base = convs[:n_ec], convs[n_ec:n_ec + n_mlp], convs[n_ec + n_mlp:]
    # fuse BaseLearner layer-0 with linear_mapper along Cout (mapper half has zero bias)
    wb0, bb0 = base[0]
    w_fused = jnp.concatenate([wb0, mapper], axis=1)
    b_fused = jnp.concatenate([bb0, jnp.zeros((1, mapper.shape[1]), jnp.float32)], axis=1)
    layers = ec + mlp + [(w_fused, b_fused)] + base[1:]
    assert len(layers) == len(dims)

    max_cin = max(cin for cin, _ in dims)
    w_slab = jnp.zeros((max_cin, total_cols), jnp.bfloat16)
    b_row = jnp.zeros((1, total_cols), jnp.float32)
    for (w, b), (cin, cout), c0 in zip(layers, dims, col_offs):
        w_slab = w_slab.at[0:cin, c0:c0 + cout].set(w.astype(jnp.bfloat16))
        b_row = b_row.at[0:1, c0:c0 + cout].set(b.astype(jnp.float32))
    return w_slab, b_row, tuple(col_offs)


# --------------------------------------------------------------------------- #
# ProtoNet forward (glue in JAX, hot paths in 3 Pallas kernels)
# --------------------------------------------------------------------------- #
def protonet_forward(params_packed, arch, act_dtype,
                     support_x, support_y, query_x, query_y):
    """
    support_x: (n_way, k_shot, C_in, L)   support_y: (n_way, k_shot, L) binary
    query_x:   (n_q, C_in, L)             query_y:   (n_q, L) in {0..n_way}
    returns (query_pred (n_q, n_way+1, L), loss scalar)
    """
    w_slab, b_row, col_offs = params_packed
    n_way, k_shot, c_in, L = support_x.shape
    n_q = query_x.shape[0]
    nk = n_way * k_shot
    _, d_pad = feature_dims(arch)

    # stack support + query rows -> one fused feature call over (B*L, C_in)
    sx = support_x.reshape(nk, c_in, L).transpose(0, 2, 1)     # (NK, L, C)
    qx = query_x.transpose(0, 2, 1)                            # (n_q, L, C)
    x_all = jnp.concatenate([sx, qx], axis=0).reshape((nk + n_q) * L, c_in)

    feats = fused_features(x_all, w_slab, b_row, col_offs, arch, d_pad, act_dtype)
    feats = feats.reshape(nk + n_q, L, d_pad)
    s_feat = feats[:nk]                                        # (NK, L, D)
    q_feat = feats[nk:]                                        # (n_q, L, D) -- no HBM transpose

    # fg / bg prototypes (bg = logical_not of binary support mask)
    fg_mask = support_y.reshape(nk, 1, L).astype(jnp.float32)
    pooled = masked_pool_fg_bg(s_feat, fg_mask)                # (NK, 2, D)
    fg = pooled[:, 0, :].reshape(n_way, k_shot, d_pad)
    bg = pooled[:, 1, :]
    fg_prototypes = jnp.sum(fg, axis=1) / k_shot               # (n_way, D)
    bg_prototype = jnp.sum(bg, axis=0) / (n_way * k_shot)      # (D,)
    prototypes = jnp.concatenate([bg_prototype[None], fg_prototypes], axis=0)  # (P, D)

    labels = query_y.astype(jnp.int32).reshape(n_q, 1, L)
    query_pred, nll = sim_and_ce(q_feat, prototypes, labels, scaler=10.0)
    loss = jnp.mean(nll)                                       # F.cross_entropy (mean)
    return query_pred, loss


# --------------------------------------------------------------------------- #
if __name__ == "__main__":
    arch = dict(
        n_way=2, k_shot=2, n_queries=2,
        pc_in_dim=4, pc_npts=128,
        dist_method="cosine", use_attention=False,
        edgeconv_widths=[[16, 16], [16, 16]],
        dgcnn_mlp_widths=[32, 64],
        base_widths=[32, 32],
        output_dim=32, dgcnn_k=8,
    )

    key = jax.random.PRNGKey(0)
    key, kp = jax.random.split(key)
    params = build_params(kp, arch)
    w_slab, b_row, col_offs = pack_params(params, arch)

    # bf16-resident activations only where the VPU is natively bf16 (v6e / v7x);
    # v5e keeps f32-resident activations and only casts at the MXU input.
    try:
        kind = jax.devices()[0].device_kind.lower()
    except Exception:
        kind = ""
    act_dtype = jnp.bfloat16 if ("v6" in kind or "v7" in kind) else jnp.float32

    k1, k2, k3, k4 = jax.random.split(key, 4)
    support_x = jax.random.normal(
        k1, (arch["n_way"], arch["k_shot"], arch["pc_in_dim"], arch["pc_npts"]),
        jnp.float32)
    support_y = (jax.random.uniform(
        k2, (arch["n_way"], arch["k_shot"], arch["pc_npts"])) > 0.5).astype(jnp.float32)
    query_x = jax.random.normal(
        k3, (arch["n_queries"], arch["pc_in_dim"], arch["pc_npts"]), jnp.float32)
    query_y = jax.random.randint(
        k4, (arch["n_queries"], arch["pc_npts"]), 0, arch["n_way"] + 1, dtype=jnp.int32)

    fwd = jax.jit(functools.partial(
        protonet_forward, (w_slab, b_row, col_offs), arch, act_dtype))
    query_pred, loss = fwd(support_x, support_y, query_x, query_y)
    jax.block_until_ready((query_pred, loss))

    assert query_pred.shape == (arch["n_queries"], arch["n_way"] + 1, arch["pc_npts"])
    assert loss.shape == ()
    assert bool(jnp.isfinite(loss))
    print("KERNEL_OK")
</pallas_src>

<mosaic_0001>
module attributes {stable_mosaic.version = 11 : i64} {
  func.func @kernel(%arg0: i32, %arg1: memref<768x4xf32, #tpu.memory_space<vmem>>, %arg2: memref<64x1024xbf16, #tpu.memory_space<vmem>>, %arg3: memref<1x1024xf32, #tpu.memory_space<vmem>>, %arg4: memref<768x128xf32, #tpu.memory_space<vmem>>) attributes {dimension_semantics = [#tpu.dimension_semantics<parallel>], iteration_bounds = array<i64: 1>, scalar_prefetch = 0 : i64, scratch_operands = 0 : i64, tpu.core_type = #tpu.core_type<tc>, window_params = [{transform_indices = @transform_0, window_bounds = array<i64: 768, 4>}, {pipeline_mode = #tpu.pipeline_mode<synchronous>, transform_indices = @transform_1, window_bounds = array<i64: 64, 1024>}, {pipeline_mode = #tpu.pipeline_mode<synchronous>, transform_indices = @transform_2, window_bounds = array<i64: 1, 1024>}, {transform_indices = @transform_3, window_bounds = array<i64: 768, 128>}]} {
    %c0 = arith.constant 0 : index
    %c0_0 = arith.constant 0 : index
    %0 = vector.load %arg1[%c0, %c0_0] : memref<768x4xf32, #tpu.memory_space<vmem>>, vector<768x4xf32>
    %c0_1 = arith.constant 0 : index
    %c0_2 = arith.constant 0 : index
    %1 = vector.load %arg2[%c0_1, %c0_2] : memref<64x1024xbf16, #tpu.memory_space<vmem>>, vector<4x16xbf16>
    %c0_3 = arith.constant 0 : index
    %c0_4 = arith.constant 0 : index
    %2 = vector.load %arg3[%c0_3, %c0_4] : memref<1x1024xf32, #tpu.memory_space<vmem>>, vector<1x16xf32>
    %3 = arith.truncf %0 : vector<768x4xf32> to vector<768x4xbf16>
    %cst = arith.constant dense<0.000000e+00> : vector<768x16xf32>
    %4 = tpu.matmul %3, %1, %cst {dimension_numbers = #tpu.dot_dimension_numbers<[1], [0], [0], [1], [0, 0, 1, 1], [], []>} : vector<768x4xbf16>, vector<4x16xbf16>, vector<768x16xf32> -> vector<768x16xf32>
    %5 = vector.broadcast %2 : vector<1x16xf32> to vector<768x16xf32>
    %6 = arith.addf %4, %5 : vector<768x16xf32>
    %cst_5 = arith.constant 0.000000e+00 : f32
    %7 = vector.broadcast %cst_5 : f32 to vector<768x16xf32>
    %8 = arith.maximumf %6, %7 : vector<768x16xf32>
    %c0_6 = arith.constant 0 : index
    %c128 = arith.constant 128 : index
    %9 = vector.load %arg2[%c0_6, %c128] : memref<64x1024xbf16, #tpu.memory_space<vmem>>, vector<16x16xbf16>
    %c0_7 = arith.constant 0 : index
    %c128_8 = arith.constant 128 : index
    %10 = vector.load %arg3[%c0_7, %c128_8] : memref<1x1024xf32, #tpu.memory_space<vmem>>, vector<1x16xf32>
    %11 = arith.truncf %8 : vector<768x16xf32> to vector<768x16xbf16>
    %cst_9 = arith.constant dense<0.000000e+00> : vector<768x16xf32>
    %12 = tpu.matmul %11, %9, %cst_9 {dimension_numbers = #tpu.dot_dimension_numbers<[1], [0], [0], [1], [0, 0, 1, 1], [], []>} : vector<768x16xbf16>, vector<16x16xbf16>, vector<768x16xf32> -> vector<768x16xf32>
    %13 = vector.broadcast %10 : vector<1x16xf32> to vector<768x16xf32>
    %14 = arith.addf %12, %13 : vector<768x16xf32>
    %cst_10 = arith.constant 0.000000e+00 : f32
    %15 = vector.broadcast %cst_10 : f32 to vector<768x16xf32>
    %16 = arith.maximumf %14, %15 : vector<768x16xf32>
    %c0_11 = arith.constant 0 : index
    %c256 = arith.constant 256 : index
    %17 = vector.load %arg2[%c0_11, %c256] : memref<64x1024xbf16, #tpu.memory_space<vmem>>, vector<16x16xbf16>
    %c0_12 = arith.constant 0 : index
    %c256_13 = arith.constant 256 : index
    %18 = vector.load %arg3[%c0_12, %c256_13] : memref<1x1024xf32, #tpu.memory_space<vmem>>, vector<1x16xf32>
    %19 = arith.truncf %16 : vector<768x16xf32> to vector<768x16xbf16>
    %cst_14 = arith.constant dense<0.000000e+00> : vector<768x16xf32>
    %20 = tpu.matmul %19, %17, %cst_14 {dimension_numbers = #tpu.dot_dimension_numbers<[1], [0], [0], [1], [0, 0, 1, 1], [], []>} : vector<768x16xbf16>, vector<16x16xbf16>, vector<768x16xf32> -> vector<768x16xf32>
    %21 = vector.broadcast %18 : vector<1x16xf32> to vector<768x16xf32>
    %22 = arith.addf %20, %21 : vector<768x16xf32>
    %cst_15 = arith.constant 0.000000e+00 : f32
    %23 = vector.broadcast %cst_15 : f32 to vector<768x16xf32>
    %24 = arith.maximumf %22, %23 : vector<768x16xf32>
    %c0_16 = arith.constant 0 : index
    %c384 = arith.constant 384 : index
    %25 = vector.load %arg2[%c0_16, %c384] : memref<64x1024xbf16, #tpu.memory_space<vmem>>, vector<16x16xbf16>
    %c0_17 = arith.constant 0 : index
    %c384_18 = arith.constant 384 : index
    %26 = vector.load %arg3[%c0_17, %c384_18] : memref<1x1024xf32, #tpu.memory_space<vmem>>, vector<1x16xf32>
    %27 = arith.truncf %24 : vector<768x16xf32> to vector<768x16xbf16>
    %cst_19 = arith.constant dense<0.000000e+00> : vector<768x16xf32>
    %28 = tpu.matmul %27, %25, %cst_19 {dimension_numbers = #tpu.dot_dimension_numbers<[1], [0], [0], [1], [0, 0, 1, 1], [], []>} : vector<768x16xbf16>, vector<16x16xbf16>, vector<768x16xf32> -> vector<768x16xf32>
    %29 = vector.broadcast %26 : vector<1x16xf32> to vector<768x16xf32>
    %30 = arith.addf %28, %29 : vector<768x16xf32>
    %cst_20 = arith.constant 0.000000e+00 : f32
    %31 = vector.broadcast %cst_20 : f32 to vector<768x16xf32>
    %32 = arith.maximumf %30, %31 : vector<768x16xf32>
    %33 = tpu.concatenate %16, %32 in 1 : vector<768x16xf32>, vector<768x16xf32> -> vector<768x32xf32>
    %c0_21 = arith.constant 0 : index
    %c512 = arith.constant 512 : index
    %34 = vector.load %arg2[%c0_21, %c512] : memref<64x1024xbf16, #tpu.memory_space<vmem>>, vector<32x32xbf16>
    %c0_22 = arith.constant 0 : index
    %c512_23 = arith.constant 512 : index
    %35 = vector.load %arg3[%c0_22, %c512_23] : memref<1x1024xf32, #tpu.memory_space<vmem>>, vector<1x32xf32>
    %36 = arith.truncf %33 : vector<768x32xf32> to vector<768x32xbf16>
    %cst_24 = arith.constant dense<0.000000e+00> : vector<768x32xf32>
    %37 = tpu.matmul %36, %34, %cst_24 {dimension_numbers = #tpu.dot_dimension_numbers<[1], [0], [0], [1], [0, 0, 1, 1], [], []>} : vector<768x32xbf16>, vector<32x32xbf16>, vector<768x32xf32> -> vector<768x32xf32>
    %38 = vector.broadcast %35 : vector<1x32xf32> to vector<768x32xf32>
    %39 = arith.addf %37, %38 : vector<768x32xf32>
    %cst_25 = arith.constant 0.000000e+00 : f32
    %40 = vector.broadcast %cst_25 : f32 to vector<768x32xf32>
    %41 = arith.maximumf %39, %40 : vector<768x32xf32>
    %c0_26 = arith.constant 0 : index
    %c640 = arith.constant 640 : index
    %42 = vector.load %arg2[%c0_26, %c640] : memref<64x1024xbf16, #tpu.memory_space<vmem>>, vector<32x64xbf16>
    %c0_27 = arith.constant 0 : index
    %c640_28 = arith.constant 640 : index
    %43 = vector.load %arg3[%c0_27, %c640_28] : memref<1x1024xf32, #tpu.memory_space<vmem>>, vector<1x64xf32>
    %44 = arith.truncf %41 : vector<768x32xf32> to vector<768x32xbf16>
    %cst_29 = arith.constant dense<0.000000e+00> : vector<768x64xf32>
    %45 = tpu.matmul %44, %42, %cst_29 {dimension_numbers = #tpu.dot_dimension_numbers<[1], [0], [0], [1], [0, 0, 1, 1], [], []>} : vector<768x32xbf16>, vector<32x64xbf16>, vector<768x64xf32> -> vector<768x64xf32>
    %46 = vector.broadcast %43 : vector<1x64xf32> to vector<768x64xf32>
    %47 = arith.addf %45, %46 : vector<768x64xf32>
    %cst_30 = arith.constant 0.000000e+00 : f32
    %48 = vector.broadcast %cst_30 : f32 to vector<768x64xf32>
    %49 = arith.maximumf %47, %48 : vector<768x64xf32>
    %c0_31 = arith.constant 0 : index
    %c768 = arith.constant 768 : index
    %50 = vector.load %arg2[%c0_31, %c768] : memref<64x1024xbf16, #tpu.memory_space<vmem>>, vector<64x64xbf16>
    %c0_32 = arith.constant 0 : index
    %c768_33 = arith.constant 768 : index
    %51 = vector.load %arg3[%c0_32, %c768_33] : memref<1x1024xf32, #tpu.memory_space<vmem>>, vector<1x64xf32>
    %52 = arith.truncf %49 : vector<768x64xf32> to vector<768x64xbf16>
    %cst_34 = arith.constant dense<0.000000e+00> : vector<768x64xf32>
    %53 = tpu.matmul %52, %50, %cst_34 {dimension_numbers = #tpu.dot_dimension_numbers<[1], [0], [0], [1], [0, 0, 1, 1], [], []>} : vector<768x64xbf16>, vector<64x64xbf16>, vector<768x64xf32> -> vector<768x64xf32>
    %54 = vector.broadcast %51 : vector<1x64xf32> to vector<768x64xf32>
    %55 = arith.addf %53, %54 : vector<768x64xf32>
    %56 = vector.extract_strided_slice %55 {offsets = [0, 32], sizes = [768, 32], strides = [1, 1]} : vector<768x64xf32> to vector<768x32xf32>
    %57 = vector.extract_strided_slice %55 {offsets = [0, 0], sizes = [768, 32], strides = [1, 1]} : vector<768x64xf32> to vector<768x32xf32>
    %cst_35 = arith.constant 0.000000e+00 : f32
    %58 = vector.broadcast %cst_35 : f32 to vector<768x32xf32>
    %59 = arith.maximumf %57, %58 : vector<768x32xf32>
    %c0_36 = arith.constant 0 : index
    %c896 = arith.constant 896 : index
    %60 = vector.load %arg2[%c0_36, %c896] : memref<64x1024xbf16, #tpu.memory_space<vmem>>, vector<32x32xbf16>
    %c0_37 = arith.constant 0 : index
    %c896_38 = arith.constant 896 : index
    %61 = vector.load %arg3[%c0_37, %c896_38] : memref<1x1024xf32, #tpu.memory_space<vmem>>, vector<1x32xf32>
    %62 = arith.truncf %59 : vector<768x32xf32> to vector<768x32xbf16>
    %cst_39 = arith.constant dense<0.000000e+00> : vector<768x32xf32>
    %63 = tpu.matmul %62, %60, %cst_39 {dimension_numbers = #tpu.dot_dimension_numbers<[1], [0], [0], [1], [0, 0, 1, 1], [], []>} : vector<768x32xbf16>, vector<32x32xbf16>, vector<768x32xf32> -> vector<768x32xf32>
    %64 = vector.broadcast %61 : vector<1x32xf32> to vector<768x32xf32>
    %65 = arith.addf %63, %64 : vector<768x32xf32>
    %cst_40 = arith.constant 0.000000e+00 : f32
    %66 = vector.broadcast %cst_40 : f32 to vector<768x32xf32>
    %67 = tpu.concatenate %33, %56, %65, %66 in 1 : vector<768x32xf32>, vector<768x32xf32>, vector<768x32xf32>, vector<768x32xf32> -> vector<768x128xf32>
    %c0_41 = arith.constant 0 : index
    %c0_42 = arith.constant 0 : index
    %68 = vector.load %arg4[%c0_41, %c0_42] : memref<768x128xf32, #tpu.memory_space<vmem>>, vector<768x128xf32>
    tpu.vector_store %arg4[%c0_41, %c0_42], %67 {strides = array<i32>} : memref<768x128xf32, #tpu.memory_space<vmem>>, vector<768x128xf32>,
    return
  }
  func.func @transform_0(%arg0: i32) -> (i32, i32) {
    %c0_i32 = arith.constant 0 : i32
    %c0_i32_0 = arith.constant 0 : i32
    return %arg0, %c0_i32 : i32, i32
  }
  func.func @transform_1(%arg0: i32) -> (i32, i32) {
    %c0_i32 = arith.constant 0 : i32
    %c0_i32_0 = arith.constant 0 : i32
    %c0_i32_1 = arith.constant 0 : i32
    return %c0_i32, %c0_i32_0 : i32, i32
  }
  func.func @transform_2(%arg0: i32) -> (i32, i32) {
    %c0_i32 = arith.constant 0 : i32
    %c0_i32_0 = arith.constant 0 : i32
    %c0_i32_1 = arith.constant 0 : i32
    return %c0_i32, %c0_i32_0 : i32, i32
  }
  func.func @transform_3(%arg0: i32) -> (i32, i32) {
    %c0_i32 = arith.constant 0 : i32
    %c0_i32_0 = arith.constant 0 : i32
    return %arg0, %c0_i32 : i32, i32
  }
}

module attributes {stable_mosaic.version = 11 : i64} {
  func.func @_pool_kernel(%arg0: i32, %arg1: memref<4x128x128xf32, #tpu.memory_space<vmem>>, %arg2: memref<4x1x128xf32, #tpu.memory_space<vmem>>, %arg3: memref<4x2x128xf32, #tpu.memory_space<vmem>>) attributes {dimension_semantics = [#tpu.dimension_semantics<parallel>], iteration_bounds = array<i64: 1>, scalar_prefetch = 0 : i64, scratch_operands = 0 : i64, tpu.core_type = #tpu.core_type<tc>, window_params = [{transform_indices = @transform_0, window_bounds = array<i64: 4, 128, 128>}, {transform_indices = @transform_1, window_bounds = array<i64: 4, 1, 128>}, {transform_indices = @transform_2, window_bounds = array<i64: 4, 2, 128>}]} {
    %c0 = arith.constant 0 : index
    %c0_0 = arith.constant 0 : index
    %c0_1 = arith.constant 0 : index
    %0 = vector.load %arg1[%c0, %c0_0, %c0_1] : memref<4x128x128xf32, #tpu.memory_space<vmem>>, vector<4x128x128xf32>
    %c0_2 = arith.constant 0 : index
    %c0_3 = arith.constant 0 : index
    %c0_4 = arith.constant 0 : index
    %1 = vector.load %arg2[%c0_2, %c0_3, %c0_4] : memref<4x1x128xf32, #tpu.memory_space<vmem>>, vector<4x1x128xf32>
    %cst = arith.constant 1.000000e+00 : f32
    %2 = vector.broadcast %cst : f32 to vector<4x1x128xf32>
    %3 = arith.subf %2, %1 : vector<4x1x128xf32>
    %4 = tpu.concatenate %1, %3 in 1 : vector<4x1x128xf32>, vector<4x1x128xf32> -> vector<4x2x128xf32>
    %5 = arith.truncf %4 : vector<4x2x128xf32> to vector<4x2x128xbf16>
    %6 = arith.truncf %0 : vector<4x128x128xf32> to vector<4x128x128xbf16>
    "tpu.trace_start"() <{level = 10 : i32, message = "skl,sld->skd"}> : () -> ()
    %cst_5 = arith.constant dense<0.000000e+00> : vector<4x2x128xf32>
    %7 = tpu.matmul %5, %6, %cst_5 {dimension_numbers = #tpu.dot_dimension_numbers<[2], [1], [1], [2], [0, 0, 0, 1, 1, 2], [0], [0]>} : vector<4x2x128xbf16>, vector<4x128x128xbf16>, vector<4x2x128xf32> -> vector<4x2x128xf32>
    "tpu.trace_stop"() : () -> ()
    %cst_6 = arith.constant dense<0.000000e+00> : vector<4x2xf32>
    %8 = vector.multi_reduction <add>, %4, %cst_6 [2] : vector<4x2x128xf32> to vector<4x2xf32>
    %9 = vector.shape_cast %8 : vector<4x2xf32> to vector<4x2x1xf32>
    %cst_7 = arith.constant 9.99999974E-6 : f32
    %10 = vector.broadcast %cst_7 : f32 to vector<4x2x1xf32>
    %11 = arith.addf %9, %10 : vector<4x2x1xf32>
    %12 = vector.broadcast %11 : vector<4x2x1xf32> to vector<4x2x128xf32>
    %13 = arith.divf %7, %12 : vector<4x2x128xf32>
    %c0_8 = arith.constant 0 : index
    %c0_9 = arith.constant 0 : index
    %c0_10 = arith.constant 0 : index
    %14 = vector.load %arg3[%c0_8, %c0_9, %c0_10] : memref<4x2x128xf32, #tpu.memory_space<vmem>>, vector<4x2x128xf32>
    tpu.vector_store %arg3[%c0_8, %c0_9, %c0_10], %13 {strides = array<i32>} : memref<4x2x128xf32, #tpu.memory_space<vmem>>, vector<4x2x128xf32>,
    return
  }
  func.func @transform_0(%arg0: i32) -> (i32, i32, i32) {
    %c0_i32 = arith.constant 0 : i32
    %c0_i32_0 = arith.constant 0 : i32
    %c0_i32_1 = arith.constant 0 : i32
    return %arg0, %c0_i32, %c0_i32_0 : i32, i32, i32
  }
  func.func @transform_1(%arg0: i32) -> (i32, i32, i32) {
    %c0_i32 = arith.constant 0 : i32
    %c0_i32_0 = arith.constant 0 : i32
    %c0_i32_1 = arith.constant 0 : i32
    return %arg0, %c0_i32, %c0_i32_0 : i32, i32, i32
  }
  func.func @transform_2(%arg0: i32) -> (i32, i32, i32) {
    %c0_i32 = arith.constant 0 : i32
    %c0_i32_0 = arith.constant 0 : i32
    %c0_i32_1 = arith.constant 0 : i32
    return %arg0, %c0_i32, %c0_i32_0 : i32, i32, i32
  }
}

module attributes {stable_mosaic.version = 11 : i64} {
  func.func @_sim_ce_kernel(%arg0: i32, %arg1: memref<2x128x128xf32, #tpu.memory_space<vmem>>, %arg2: memref<3x128xf32, #tpu.memory_space<vmem>>, %arg3: memref<2x1x128xi32, #tpu.memory_space<vmem>>, %arg4: memref<2x3x128xf32, #tpu.memory_space<vmem>>, %arg5: memref<2x1x128xf32, #tpu.memory_space<vmem>>) attributes {dimension_semantics = [#tpu.dimension_semantics<parallel>], iteration_bounds = array<i64: 1>, scalar_prefetch = 0 : i64, scratch_operands = 0 : i64, tpu.core_type = #tpu.core_type<tc>, window_params = [{transform_indices = @transform_0, window_bounds = array<i64: 2, 128, 128>}, {pipeline_mode = #tpu.pipeline_mode<synchronous>, transform_indices = @transform_1, window_bounds = array<i64: 3, 128>}, {transform_indices = @transform_2, window_bounds = array<i64: 2, 1, 128>}, {transform_indices = @transform_3, window_bounds = array<i64: 2, 3, 128>}, {transform_indices = @transform_4, window_bounds = array<i64: 2, 1, 128>}]} {
    %c0 = arith.constant 0 : index
    %c0_0 = arith.constant 0 : index
    %0 = vector.load %arg2[%c0, %c0_0] : memref<3x128xf32, #tpu.memory_space<vmem>>, vector<3x128xf32>
    %1 = arith.truncf %0 : vector<3x128xf32> to vector<3x128xbf16>
    %c0_1 = arith.constant 0 : index
    %c0_2 = arith.constant 0 : index
    %c0_3 = arith.constant 0 : index
    %2 = vector.load %arg1[%c0_1, %c0_2, %c0_3] : memref<2x128x128xf32, #tpu.memory_space<vmem>>, vector<1x128x128xf32>
    %3 = vector.shape_cast %2 : vector<1x128x128xf32> to vector<128x128xf32>
    %4 = arith.mulf %3, %3 : vector<128x128xf32>
    %cst = arith.constant dense<0.000000e+00> : vector<128xf32>
    %5 = vector.multi_reduction <add>, %4, %cst [1] : vector<128x128xf32> to vector<128xf32>
    %6 = vector.shape_cast %5 : vector<128xf32> to vector<128x1xf32>
    %cst_4 = arith.constant 1.000000e-16 : f32
    %7 = vector.broadcast %cst_4 : f32 to vector<128x1xf32>
    %8 = arith.maximumf %6, %7 : vector<128x1xf32>
    %9 = math.rsqrt %8 : vector<128x1xf32>
    %10 = vector.broadcast %9 : vector<128x1xf32> to vector<128x128xf32>
    %11 = arith.mulf %3, %10 : vector<128x128xf32>
    %12 = arith.truncf %11 : vector<128x128xf32> to vector<128x128xbf16>
    %cst_5 = arith.constant dense<0.000000e+00> : vector<3x128xf32>
    %13 = tpu.matmul %1, %12, %cst_5 {dimension_numbers = #tpu.dot_dimension_numbers<[1], [1], [0], [0], [0, 0, 1, 0], [], []>} : vector<3x128xbf16>, vector<128x128xbf16>, vector<3x128xf32> -> vector<3x128xf32>
    %cst_6 = arith.constant 1.000000e+01 : f32
    %14 = vector.broadcast %cst_6 : f32 to vector<3x128xf32>
    %15 = arith.mulf %14, %13 : vector<3x128xf32>
    %c0_7 = arith.constant 0 : index
    %c0_8 = arith.constant 0 : index
    %c0_9 = arith.constant 0 : index
    %16 = vector.load %arg4[%c0_7, %c0_8, %c0_9] : memref<2x3x128xf32, #tpu.memory_space<vmem>>, vector<1x3x128xf32>
    %17 = vector.shape_cast %16 : vector<1x3x128xf32> to vector<3x128xf32>
    %18 = vector.shape_cast %15 : vector<3x128xf32> to vector<1x3x128xf32>
    tpu.vector_store %arg4[%c0_7, %c0_8, %c0_9], %18 {strides = array<i32>} : memref<2x3x128xf32, #tpu.memory_space<vmem>>, vector<1x3x128xf32>,
    %c0_10 = arith.constant 0 : index
    %c0_11 = arith.constant 0 : index
    %c0_12 = arith.constant 0 : index
    %19 = vector.load %arg3[%c0_10, %c0_11, %c0_12] : memref<2x1x128xi32, #tpu.memory_space<vmem>>, vector<1x1x128xi32>
    %20 = vector.shape_cast %19 : vector<1x1x128xi32> to vector<1x128xi32>
    %21 = tpu.iota {dimensions = array<i32: 0>} : vector<3x128xi32>
    %22 = vector.broadcast %20 : vector<1x128xi32> to vector<3x128xi32>
    %23 = arith.cmpi eq, %21, %22 : vector<3x128xi32>
    %24 = arith.extui %23 : vector<3x128xi1> to vector<3x128xi32>
    %25 = arith.sitofp %24 : vector<3x128xi32> to vector<3x128xf32>
    %cst_13 = arith.constant dense<0xFF800000> : vector<128xf32>
    %26 = vector.multi_reduction <maximumf>, %15, %cst_13 [0] : vector<3x128xf32> to vector<128xf32>
    %27 = vector.shape_cast %26 : vector<128xf32> to vector<1x128xf32>
    %28 = vector.broadcast %27 : vector<1x128xf32> to vector<3x128xf32>
    %29 = arith.subf %15, %28 : vector<3x128xf32>
    %30 = math.exp %29 : vector<3x128xf32>
    %cst_14 = arith.constant dense<0.000000e+00> : vector<128xf32>
    %31 = vector.multi_reduction <add>, %30, %cst_14 [0] : vector<3x128xf32> to vector<128xf32>
    %32 = vector.shape_cast %31 : vector<128xf32> to vector<1x128xf32>
    %33 = math.log %32 : vector<1x128xf32>
    %34 = arith.addf %27, %33 : vector<1x128xf32>
    %35 = arith.mulf %15, %25 : vector<3x128xf32>
    %cst_15 = arith.constant dense<0.000000e+00> : vector<128xf32>
    %36 = vector.multi_reduction <add>, %35, %cst_15 [0] : vector<3x128xf32> to vector<128xf32>
    %37 = vector.shape_cast %36 : vector<128xf32> to vector<1x128xf32>
    %38 = arith.subf %34, %37 : vector<1x128xf32>
    %c0_16 = arith.constant 0 : index
    %c0_17 = arith.constant 0 : index
    %c0_18 = arith.constant 0 : index
    %39 = vector.load %arg5[%c0_16, %c0_17, %c0_18] : memref<2x1x128xf32, #tpu.memory_space<vmem>>, vector<1x1x128xf32>
    %40 = vector.shape_cast %39 : vector<1x1x128xf32> to vector<1x128xf32>
    %41 = vector.shape_cast %38 : vector<1x128xf32> to vector<1x1x128xf32>
    tpu.vector_store %arg5[%c0_16, %c0_17, %c0_18], %41 {strides = array<i32>} : memref<2x1x128xf32, #tpu.memory_space<vmem>>, vector<1x1x128xf32>,
    %c1 = arith.constant 1 : index
    %c0_19 = arith.constant 0 : index
    %c0_20 = arith.constant 0 : index
    %42 = vector.load %arg1[%c1, %c0_19, %c0_20] : memref<2x128x128xf32, #tpu.memory_space<vmem>>, vector<1x128x128xf32>
    %43 = vector.shape_cast %42 : vector<1x128x128xf32> to vector<128x128xf32>
    %44 = arith.mulf %43, %43 : vector<128x128xf32>
    %cst_21 = arith.constant dense<0.000000e+00> : vector<128xf32>
    %45 = vector.multi_reduction <add>, %44, %cst_21 [1] : vector<128x128xf32> to vector<128xf32>
    %46 = vector.shape_cast %45 : vector<128xf32> to vector<128x1xf32>
    %cst_22 = arith.constant 1.000000e-16 : f32
    %47 = vector.broadcast %cst_22 : f32 to vector<128x1xf32>
    %48 = arith.maximumf %46, %47 : vector<128x1xf32>
    %49 = math.rsqrt %48 : vector<128x1xf32>
    %50 = vector.broadcast %49 : vector<128x1xf32> to vector<128x128xf32>
    %51 = arith.mulf %43, %50 : vector<128x128xf32>
    %52 = arith.truncf %51 : vector<128x128xf32> to vector<128x128xbf16>
    %cst_23 = arith.constant dense<0.000000e+00> : vector<3x128xf32>
    %53 = tpu.matmul %1, %52, %cst_23 {dimension_numbers = #tpu.dot_dimension_numbers<[1], [1], [0], [0], [0, 0, 1, 0], [], []>} : vector<3x128xbf16>, vector<128x128xbf16>, vector<3x128xf32> -> vector<3x128xf32>
    %cst_24 = arith.constant 1.000000e+01 : f32
    %54 = vector.broadcast %cst_24 : f32 to vector<3x128xf32>
    %55 = arith.mulf %54, %53 : vector<3x128xf32>
    %c1_25 = arith.constant 1 : index
    %c0_26 = arith.constant 0 : index
    %c0_27 = arith.constant 0 : index
    %56 = vector.load %arg4[%c1_25, %c0_26, %c0_27] : memref<2x3x128xf32, #tpu.memory_space<vmem>>, vector<1x3x128xf32>
    %57 = vector.shape_cast %56 : vector<1x3x128xf32> to vector<3x128xf32>
    %58 = vector.shape_cast %55 : vector<3x128xf32> to vector<1x3x128xf32>
    tpu.vector_store %arg4[%c1_25, %c0_26, %c0_27], %58 {strides = array<i32>} : memref<2x3x128xf32, #tpu.memory_space<vmem>>, vector<1x3x128xf32>,
    %c1_28 = arith.constant 1 : index
    %c0_29 = arith.constant 0 : index
    %c0_30 = arith.constant 0 : index
    %59 = vector.load %arg3[%c1_28, %c0_29, %c0_30] : memref<2x1x128xi32, #tpu.memory_space<vmem>>, vector<1x1x128xi32>
    %60 = vector.shape_cast %59 : vector<1x1x128xi32> to vector<1x128xi32>
    %61 = tpu.iota {dimensions = array<i32: 0>} : vector<3x128xi32>
    %62 = vector.broadcast %60 : vector<1x128xi32> to vector<3x128xi32>
    %63 = arith.cmpi eq, %61, %62 : vector<3x128xi32>
    %64 = arith.extui %63 : vector<3x128xi1> to vector<3x128xi32>
    %65 = arith.sitofp %64 : vector<3x128xi32> to vector<3x128xf32>
    %cst_31 = arith.constant dense<0xFF800000> : vector<128xf32>
    %66 = vector.multi_reduction <maximumf>, %55, %cst_31 [0] : vector<3x128xf32> to vector<128xf32>
    %67 = vector.shape_cast %66 : vector<128xf32> to vector<1x128xf32>
    %68 = vector.broadcast %67 : vector<1x128xf32> to vector<3x128xf32>
    %69 = arith.subf %55, %68 : vector<3x128xf32>
    %70 = math.exp %69 : vector<3x128xf32>
    %cst_32 = arith.constant dense<0.000000e+00> : vector<128xf32>
    %71 = vector.multi_reduction <add>, %70, %cst_32 [0] : vector<3x128xf32> to vector<128xf32>
    %72 = vector.shape_cast %71 : vector<128xf32> to vector<1x128xf32>
    %73 = math.log %72 : vector<1x128xf32>
    %74 = arith.addf %67, %73 : vector<1x128xf32>
    %75 = arith.mulf %55, %65 : vector<3x128xf32>
    %cst_33 = arith.constant dense<0.000000e+00> : vector<128xf32>
    %76 = vector.multi_reduction <add>, %75, %cst_33 [0] : vector<3x128xf32> to vector<128xf32>
    %77 = vector.shape_cast %76 : vector<128xf32> to vector<1x128xf32>
    %78 = arith.subf %74, %77 : vector<1x128xf32>
    %c1_34 = arith.constant 1 : index
    %c0_35 = arith.constant 0 : index
    %c0_36 = arith.constant 0 : index
    %79 = vector.load %arg5[%c1_34, %c0_35, %c0_36] : memref<2x1x128xf32, #tpu.memory_space<vmem>>, vector<1x1x128xf32>
    %80 = vector.shape_cast %79 : vector<1x1x128xf32> to vector<1x128xf32>
    %81 = vector.shape_cast %78 : vector<1x128xf32> to vector<1x1x128xf32>
    tpu.vector_store %arg5[%c1_34, %c0_35, %c0_36], %81 {strides = array<i32>} : memref<2x1x128xf32, #tpu.memory_space<vmem>>, vector<1x1x128xf32>,
    return
  }
  func.func @transform_0(%arg0: i32) -> (i32, i32, i32) {
    %c0_i32 = arith.constant 0 : i32
    %c0_i32_0 = arith.constant 0 : i32
    %c0_i32_1 = arith.constant 0 : i32
    return %arg0, %c0_i32, %c0_i32_0 : i32, i32, i32
  }
  func.func @transform_1(%arg0: i32) -> (i32, i32) {
    %c0_i32 = arith.constant 0 : i32
    %c0_i32_0 = arith.constant 0 : i32
    %c0_i32_1 = arith.constant 0 : i32
    return %c0_i32, %c0_i32_0 : i32, i32
  }
  func.func @transform_2(%arg0: i32) -> (i32, i32, i32) {
    %c0_i32 = arith.constant 0 : i32
    %c0_i32_0 = arith.constant 0 : i32
    %c0_i32_1 = arith.constant 0 : i32
    return %arg0, %c0_i32, %c0_i32_0 : i32, i32, i32
  }
  func.func @transform_3(%arg0: i32) -> (i32, i32, i32) {
    %c0_i32 = arith.constant 0 : i32
    %c0_i32_0 = arith.constant 0 : i32
    %c0_i32_1 = arith.constant 0 : i32
    return %arg0, %c0_i32, %c0_i32_0 : i32, i32, i32
  }
  func.func @transform_4(%arg0: i32) -> (i32, i32, i32) {
    %c0_i32 = arith.constant 0 : i32
    %c0_i32_0 = arith.constant 0 : i32
    %c0_i32_1 = arith.constant 0 : i32
    return %arg0, %c0_i32, %c0_i32_0 : i32, i32, i32
  }
}

</mosaic_0001>

<llo_original>
// kernel: protonet_forward.4
$region0: #{protonet_forward.4}
  #allocation0 [shape = 'u32[]', space=smem, size = 0x4, offset = 0x4, fixed_abs, tag = 'smem constant byte address 0x4 - core index']
  #allocation1 [shape = 'u32[144,128]{1,0:T(1,128)}', space=vmem, size = 0x12000, scoped, tag = 'internal scratch']
  %s0 = inlined_call_operand.vmem [shape: f32[4,128,128], index: 0, kind: input, shape index: {}]
  %s1 = inlined_call_operand.vmem [shape: f32[4,1,128], index: 1, kind: input, shape index: {}]
  %s2 = inlined_call_operand.vmem [shape: f32[4,2,128], index: 2, kind: output, shape index: {}]
  %s3 = sld [smem:[#allocation0]]
  $region18: #{protonet_forward.4} parent=0
    _
  %s5 = ssub.s32 1, %s3
  %s6 = scalar_select 0, %s5, %s3
  // Predicated region
  $region2: #{protonet_forward.4} parent=0 // pred_check
    _
  $region3: #{protonet_forward.4} parent=0 // pred_check_branch
    %8 = sbr.rel (0) target = $region5
  $region4: #{protonet_forward.4} parent=0 // pred_region
    _
  $region5: #{protonet_forward.4} parent=0 // pred_fallthru
    _
  // Predicated region
  $region6: #{protonet_forward.4} parent=0 // pred_check
    _
  $region7: #{protonet_forward.4} parent=0 // pred_check_branch
    %10 = sbr.rel (0) target = $region9
  $region8: #{protonet_forward.4} parent=0 // pred_region
    _
  $region9: #{protonet_forward.4} parent=0 // pred_fallthru
    _
  %v12 = vld [vmem:[%s0] sm:$0xff]
  %v13 = vld [vmem:[%s0 + $0x8] sm:$0xff]
  %v14 = vld [vmem:[%s0 + $0x10] sm:$0xff]
  %v15 = vld [vmem:[%s0 + $0x18] sm:$0xff]
  %v16 = vld [vmem:[%s0 + $0x20] sm:$0xff]
  %v17 = vld [vmem:[%s0 + $0x28] sm:$0xff]
  %v18 = vld [vmem:[%s0 + $0x30] sm:$0xff]
  %v19 = vld [vmem:[%s0 + $0x38] sm:$0xff]
  %v20 = vld [vmem:[%s0 + $0x40] sm:$0xff]
  %v21 = vld [vmem:[%s0 + $0x48] sm:$0xff]
  %v22 = vld [vmem:[%s0 + $0x50] sm:$0xff]
  %v23 = vld [vmem:[%s0 + $0x58] sm:$0xff]
  %v24 = vld [vmem:[%s0 + $0x60] sm:$0xff]
  %v25 = vld [vmem:[%s0 + $0x68] sm:$0xff]
  %v26 = vld [vmem:[%s0 + $0x70] sm:$0xff]
  %v27 = vld [vmem:[%s0 + $0x78] sm:$0xff]
  %v28 = vld [vmem:[%s0 + $0x80] sm:$0xff]
  %v29 = vld [vmem:[%s0 + $0x88] sm:$0xff]
  %v30 = vld [vmem:[%s0 + $0x90] sm:$0xff]
  %v31 = vld [vmem:[%s0 + $0x98] sm:$0xff]
  %v32 = vld [vmem:[%s0 + $0xa0] sm:$0xff]
  %v33 = vld [vmem:[%s0 + $0xa8] sm:$0xff]
  %v34 = vld [vmem:[%s0 + $0xb0] sm:$0xff]
  %v35 = vld [vmem:[%s0 + $0xb8] sm:$0xff]
  %v36 = vld [vmem:[%s0 + $0xc0] sm:$0xff]
  %v37 = vld [vmem:[%s0 + $0xc8] sm:$0xff]
  %v38 = vld [vmem:[%s0 + $0xd0] sm:$0xff]
  %v39 = vld [vmem:[%s0 + $0xd8] sm:$0xff]
  %v40 = vld [vmem:[%s0 + $0xe0] sm:$0xff]
  %v41 = vld [vmem:[%s0 + $0xe8] sm:$0xff]
  %v42 = vld [vmem:[%s0 + $0xf0] sm:$0xff]
  %v43 = vld [vmem:[%s0 + $0xf8] sm:$0xff]
  %v44 = vld [vmem:[%s0 + $0x100] sm:$0xff]
  %v45 = vld [vmem:[%s0 + $0x108] sm:$0xff]
  %v46 = vld [vmem:[%s0 + $0x110] sm:$0xff]
  %v47 = vld [vmem:[%s0 + $0x118] sm:$0xff]
  %v48 = vld [vmem:[%s0 + $0x120] sm:$0xff]
  %v49 = vld [vmem:[%s0 + $0x128] sm:$0xff]
  %v50 = vld [vmem:[%s0 + $0x130] sm:$0xff]
  %v51 = vld [vmem:[%s0 + $0x138] sm:$0xff]
  %v52 = vld [vmem:[%s0 + $0x140] sm:$0xff]
  %v53 = vld [vmem:[%s0 + $0x148] sm:$0xff]
  %v54 = vld [vmem:[%s0 + $0x150] sm:$0xff]
  %v55 = vld [vmem:[%s0 + $0x158] sm:$0xff]
  %v56 = vld [vmem:[%s0 + $0x160] sm:$0xff]
  %v57 = vld [vmem:[%s0 + $0x168] sm:$0xff]
  %v58 = vld [vmem:[%s0 + $0x170] sm:$0xff]
  %v59 = vld [vmem:[%s0 + $0x178] sm:$0xff]
  %v60 = vld [vmem:[%s0 + $0x180] sm:$0xff]
  %v61 = vld [vmem:[%s0 + $0x188] sm:$0xff]
  %v62 = vld [vmem:[%s0 + $0x190] sm:$0xff]
  %v63 = vld [vmem:[%s0 + $0x198] sm:$0xff]
  %v64 = vld [vmem:[%s0 + $0x1a0] sm:$0xff]
  %v65 = vld [vmem:[%s0 + $0x1a8] sm:$0xff]
  %v66 = vld [vmem:[%s0 + $0x1b0] sm:$0xff]
  %v67 = vld [vmem:[%s0 + $0x1b8] sm:$0xff]
  %v68 = vld [vmem:[%s0 + $0x1c0] sm:$0xff]
  %v69 = vld [vmem:[%s0 + $0x1c8] sm:$0xff]
  %v70 = vld [vmem:[%s0 + $0x1d0] sm:$0xff]
  %v71 = vld [vmem:[%s0 + $0x1d8] sm:$0xff]
  %v72 = vld [vmem:[%s0 + $0x1e0] sm:$0xff]
  %v73 = vld [vmem:[%s0 + $0x1e8] sm:$0xff]
  %v74 = vld [vmem:[%s0 + $0x1f0] sm:$0xff]
  %v75 = vld [vmem:[%s0 + $0x1f8] sm:$0xff]
  %v76 = vld [vmem:[%s1] sm:$0x1]
  %v77 = vld [vmem:[%s1 + $0x1] sm:$0x1]
  %v78 = vld [vmem:[%s1 + $0x2] sm:$0x1]
  %v79 = vld [vmem:[%s1 + $0x3] sm:$0x1]
  %v80 = vsub.f32 1.0, %v76
  %v81 = vsub.f32 1.0, %v77
  %v82 = vsub.f32 1.0, %v78
  %v83 = vsub.f32 1.0, %v79
  %v88 = vlaneseq
  %v89 = vshrl.u32 %v88, 7
  %v90 = vsub.s32 0, %v89
  %v91 = vrot.slane %v80, %v90
  %v92 = vlaneseq
  %v93 = vshrl.u32 %v92, 7
  %v94 = vsub.s32 0, %v93
  %v95 = vrot.slane %v81, %v94
  %v96 = vlaneseq
  %v97 = vshrl.u32 %v96, 7
  %v98 = vsub.s32 0, %v97
  %v99 = vrot.slane %v82, %v98
  %v100 = vlaneseq
  %v101 = vshrl.u32 %v100, 7
  %v102 = vsub.s32 0, %v101
  %v103 = vrot.slane %v83, %v102
  %vm108 = vcmask 1040384
  %v109 = vsel %vm108, %v76, %v91
  %v110 = vsel %vm108, %v77, %v95
  %v111 = vsel %vm108, %v78, %v99
  %v112 = vsel %vm108, %v79, %v103
  %v113 = vpack.c.bf16 %v109, %v109
  %v114 = vpack.c.bf16 %v110, %v110
  %v115 = vpack.c.bf16 %v111, %v111
  %v116 = vpack.c.bf16 %v112, %v112
  %v117 = vpack.c.bf16 %v13, %v12
  %v118 = vpack.c.bf16 %v15, %v14
  %v119 = vpack.c.bf16 %v17, %v16
  %v120 = vpack.c.bf16 %v19, %v18
  %v121 = vpack.c.bf16 %v21, %v20
  %v122 = vpack.c.bf16 %v23, %v22
  %v123 = vpack.c.bf16 %v25, %v24
  %v124 = vpack.c.bf16 %v27, %v26
  %v125 = vpack.c.bf16 %v29, %v28
  %v126 = vpack.c.bf16 %v31, %v30
  %v127 = vpack.c.bf16 %v33, %v32
  %v128 = vpack.c.bf16 %v35, %v34
  %v129 = vpack.c.bf16 %v37, %v36
  %v130 = vpack.c.bf16 %v39, %v38
  %v131 = vpack.c.bf16 %v41, %v40
  %v132 = vpack.c.bf16 %v43, %v42
  %v133 = vpack.c.bf16 %v45, %v44
  %v134 = vpack.c.bf16 %v47, %v46
  %v135 = vpack.c.bf16 %v49, %v48
  %v136 = vpack.c.bf16 %v51, %v50
  %v137 = vpack.c.bf16 %v53, %v52
  %v138 = vpack.c.bf16 %v55, %v54
  %v139 = vpack.c.bf16 %v57, %v56
  %v140 = vpack.c.bf16 %v59, %v58
  %v141 = vpack.c.bf16 %v61, %v60
  %v142 = vpack.c.bf16 %v63, %v62
  %v143 = vpack.c.bf16 %v65, %v64
  %v144 = vpack.c.bf16 %v67, %v66
  %v145 = vpack.c.bf16 %v69, %v68
  %v146 = vpack.c.bf16 %v71, %v70
  %v147 = vpack.c.bf16 %v73, %v72
  %v148 = vpack.c.bf16 %v75, %v74
  %149 = vmatprep.subr.bf16.mxu0 0
  %150 = vmatpush1.bf16.msra.mxu0 %v117
  %151 = vmatprep.subr.bf16.mxu0 0
  %152 = vmatpush1.bf16.msra.mxu0 %v118
  %153 = vmatprep.subr.bf16.mxu0 0
  %154 = vmatpush1.bf16.msra.mxu0 %v119
  %155 = vmatprep.subr.bf16.mxu0 0
  %156 = vmatpush1.bf16.msra.mxu0 %v120
  %157 = vmatprep.subr.bf16.mxu0 0
  %158 = vmatpush1.bf16.msra.mxu0 %v121
  %159 = vmatprep.subr.bf16.mxu0 0
  %160 = vmatpush1.bf16.msra.mxu0 %v122
  %161 = vmatprep.subr.bf16.mxu0 0
  %162 = vmatpush1.bf16.msra.mxu0 %v123
  %163 = vmatprep.subr.bf16.mxu0 0
  %164 = vmatpush1.bf16.msra.mxu0 %v124
  %165 = vmatprep.subr.bf16.mxu0 0
  %166 = vmatpush1.bf16.msra.mxu0 0
  %167 = vmatprep.subr.bf16.mxu0 0
  %168 = vmatpush1.bf16.msra.mxu0 0
  %169 = vmatprep.subr.bf16.mxu0 0
  %170 = vmatpush1.bf16.msra.mxu0 0
  %171 = vmatprep.subr.bf16.mxu0 0
  %172 = vmatpush1.bf16.msra.mxu0 0
  %173 = vmatprep.subr.bf16.mxu0 0
  %174 = vmatpush1.bf16.msra.mxu0 0
  %175 = vmatprep.subr.bf16.mxu0 0
  %176 = vmatpush1.bf16.msra.mxu0 0
  %177 = vmatprep.subr.bf16.mxu0 0
  %178 = vmatpush1.bf16.msra.mxu0 0
  %179 = vmatprep.subr.bf16.mxu0 0
  %180 = vmatpush1.bf16.msra.mxu0 0
  %181 = vmatprep.mubr.bf16.mxu0 0
  %182 = vmatmul.mubr.bf16.gmra.mrb[0].mxu0 %v113
  %v183 = vpop.f32.mrb[0].mxu0
  %v184 = vadd.f32 0.0, %v183
  %v185 = vpop.f32.mrb[0].mxu0
  %v186 = vpop.f32.mrb[0].mxu0
  %v187 = vpop.f32.mrb[0].mxu0
  %188 = vdwg.mxu0
  %189 = vmatprep.subr.bf16.mxu0 0
  %190 = vmatpush1.bf16.msra.mxu0 %v125
  %191 = vmatprep.subr.bf16.mxu0 0
  %192 = vmatpush1.bf16.msra.mxu0 %v126
  %193 = vmatprep.subr.bf16.mxu0 0
  %194 = vmatpush1.bf16.msra.mxu0 %v127
  %195 = vmatprep.subr.bf16.mxu0 0
  %196 = vmatpush1.bf16.msra.mxu0 %v128
  %197 = vmatprep.subr.bf16.mxu0 0
  %198 = vmatpush1.bf16.msra.mxu0 %v129
  %199 = vmatprep.subr.bf16.mxu0 0
  %200 = vmatpush1.bf16.msra.mxu0 %v130
  %201 = vmatprep.subr.bf16.mxu0 0
  %202 = vmatpush1.bf16.msra.mxu0 %v131
  %203 = vmatprep.subr.bf16.mxu0 0
  %204 = vmatpush1.bf16.msra.mxu0 %v132
  %205 = vmatprep.subr.bf16.mxu0 0
  %206 = vmatpush1.bf16.msra.mxu0 0
  %207 = vmatprep.subr.bf16.mxu0 0
  %208 = vmatpush1.bf16.msra.mxu0 0
  %209 = vmatprep.subr.bf16.mxu0 0
  %210 = vmatpush1.bf16.msra.mxu0 0
  %211 = vmatprep.subr.bf16.mxu0 0
  %212 = vmatpush1.bf16.msra.mxu0 0
  %213 = vmatprep.subr.bf16.mxu0 0
  %214 = vmatpush1.bf16.msra.mxu0 0
  %215 = vmatprep.subr.bf16.mxu0 0
  %216 = vmatpush1.bf16.msra.mxu0 0
  %217 = vmatprep.subr.bf16.mxu0 0
  %218 = vmatpush1.bf16.msra.mxu0 0
  %219 = vmatprep.subr.bf16.mxu0 0
  %220 = vmatpush1.bf16.msra.mxu0 0
  %221 = vmatprep.mubr.bf16.mxu0 0
  %222 = vmatmul.mubr.bf16.gmra.mrb[0].mxu0 %v114
  %v223 = vpop.f32.mrb[0].mxu0
  %v224 = vadd.f32 0.0, %v223
  %v225 = vpop.f32.mrb[0].mxu0
  %v226 = vpop.f32.mrb[0].mxu0
  %v227 = vpop.f32.mrb[0].mxu0
  %228 = vdwg.mxu0
  %229 = vmatprep.subr.bf16.mxu0 0
  %230 = vmatpush1.bf16.msra.mxu0 %v133
  %231 = vmatprep.subr.bf16.mxu0 0
  %232 = vmatpush1.bf16.msra.mxu0 %v134
  %233 = vmatprep.subr.bf16.mxu0 0
  %234 = vmatpush1.bf16.msra.mxu0 %v135
  %235 = vmatprep.subr.bf16.mxu0 0
  %236 = vmatpush1.bf16.msra.mxu0 %v136
  %237 = vmatprep.subr.bf16.mxu0 0
  %238 = vmatpush1.bf16.msra.mxu0 %v137
  %239 = vmatprep.subr.bf16.mxu0 0
  %240 = vmatpush1.bf16.msra.mxu0 %v138
  %241 = vmatprep.subr.bf16.mxu0 0
  %242 = vmatpush1.bf16.msra.mxu0 %v139
  %243 = vmatprep.subr.bf16.mxu0 0
  %244 = vmatpush1.bf16.msra.mxu0 %v140
  %245 = vmatprep.subr.bf16.mxu0 0
  %246 = vmatpush1.bf16.msra.mxu0 0
  %247 = vmatprep.subr.bf16.mxu0 0
  %248 = vmatpush1.bf16.msra.mxu0 0
  %249 = vmatprep.subr.bf16.mxu0 0
  %250 = vmatpush1.bf16.msra.mxu0 0
  %251 = vmatprep.subr.bf16.mxu0 0
  %252 = vmatpush1.bf16.msra.mxu0 0
  %253 = vmatprep.subr.bf16.mxu0 0
  %254 = vmatpush1.bf16.msra.mxu0 0
  %255 = vmatprep.subr.bf16.mxu0 0
  %256 = vmatpush1.bf16.msra.mxu0 0
  %257 = vmatprep.subr.bf16.mxu0 0
  %258 = vmatpush1.bf16.msra.mxu0 0
  %259 = vmatprep.subr.bf16.mxu0 0
  %260 = vmatpush1.bf16.msra.mxu0 0
  %261 = vmatprep.mubr.bf16.mxu0 0
  %262 = vmatmul.mubr.bf16.gmra.mrb[0].mxu0 %v115
  %v263 = vpop.f32.mrb[0].mxu0
  %v264 = vadd.f32 0.0, %v263
  %v265 = vpop.f32.mrb[0].mxu0
  %v266 = vpop.f32.mrb[0].mxu0
  %v267 = vpop.f32.mrb[0].mxu0
  %268 = vdwg.mxu0
  %269 = vmatprep.subr.bf16.mxu0 0
  %270 = vmatpush1.bf16.msra.mxu0 %v141
  %271 = vmatprep.subr.bf16.mxu0 0
  %272 = vmatpush1.bf16.msra.mxu0 %v142
  %273 = vmatprep.subr.bf16.mxu0 0
  %274 = vmatpush1.bf16.msra.mxu0 %v143
  %275 = vmatprep.subr.bf16.mxu0 0
  %276 = vmatpush1.bf16.msra.mxu0 %v144
  %277 = vmatprep.subr.bf16.mxu0 0
  %278 = vmatpush1.bf16.msra.mxu0 %v145
  %279 = vmatprep.subr.bf16.mxu0 0
  %280 = vmatpush1.bf16.msra.mxu0 %v146
  %281 = vmatprep.subr.bf16.mxu0 0
  %282 = vmatpush1.bf16.msra.mxu0 %v147
  %283 = vmatprep.subr.bf16.mxu0 0
  %284 = vmatpush1.bf16.msra.mxu0 %v148
  %285 = vmatprep.subr.bf16.mxu0 0
  %286 = vmatpush1.bf16.msra.mxu0 0
  %287 = vmatprep.subr.bf16.mxu0 0
  %288 = vmatpush1.bf16.msra.mxu0 0
  %289 = vmatprep.subr.bf16.mxu0 0
  %290 = vmatpush1.bf16.msra.mxu0 0
  %291 = vmatprep.subr.bf16.mxu0 0
  %292 = vmatpush1.bf16.msra.mxu0 0
  %293 = vmatprep.subr.bf16.mxu0 0
  %294 = vmatpush1.bf16.msra.mxu0 0
  %295 = vmatprep.subr.bf16.mxu0 0
  %296 = vmatpush1.bf16.msra.mxu0 0
  %297 = vmatprep.subr.bf16.mxu0 0
  %298 = vmatpush1.bf16.msra.mxu0 0
  %299 = vmatprep.subr.bf16.mxu0 0
  %300 = vmatpush1.bf16.msra.mxu0 0
  %301 = vmatprep.mubr.bf16.mxu0 0
  %302 = vmatmul.mubr.bf16.gmra.mrb[0].mxu0 %v116
  %v303 = vpop.f32.mrb[0].mxu0
  %v304 = vadd.f32 0.0, %v303
  %v305 = vpop.f32.mrb[0].mxu0
  %v306 = vpop.f32.mrb[0].mxu0
  %v307 = vpop.f32.mrb[0].mxu0
  %308 = vdwg.mxu0
  %vm309 = vcmask 1041408
  %v310 = vsel %vm309, %v109, 0.0
  %311 = vadd.xlane.f32.xlu0 %v310
  %v312 = vpop.xlane.xlu0 %311
  %v313 = vsel %vm309, %v110, 0.0
  %314 = vadd.xlane.f32.xlu0 %v313
  %v315 = vpop.xlane.xlu0 %314
  %v316 = vsel %vm309, %v111, 0.0
  %317 = vadd.xlane.f32.xlu0 %v316
  %v318 = vpop.xlane.xlu0 %317
  %v319 = vsel %vm309, %v112, 0.0
  %320 = vadd.xlane.f32.xlu0 %v319
  %v321 = vpop.xlane.xlu0 %320
  %v322 = vadd.f32 %v312, 1e-05
  %v323 = vadd.f32 %v315, 1e-05
  %v324 = vadd.f32 %v318, 1e-05
  %v325 = vadd.f32 %v321, 1e-05
  %v326 = vrcp.pop %v322
  %v327 = vmul.f32 %v184, %v326
  %v328 = vrcp.pop %v323
  %v329 = vmul.f32 %v224, %v328
  %v330 = vrcp.pop %v324
  %v331 = vmul.f32 %v264, %v330
  %v332 = vrcp.pop %v325
  %v333 = vmul.f32 %v304, %v332
  %334 = vst [vmem:[%s2] sm:$0x3] %v327
  %335 = vst [vmem:[%s2 + $0x2] sm:$0x3] %v329
  %336 = vst [vmem:[%s2 + $0x4] sm:$0x3] %v331
  %337 = vst [vmem:[%s2 + $0x6] sm:$0x3] %v333
  // Predicated region
  $region10: #{protonet_forward.4} parent=0 // pred_check
    _
  $region11: #{protonet_forward.4} parent=0 // pred_check_branch
    %339 = sbr.rel (0) target = $region13
  $region12: #{protonet_forward.4} parent=0 // pred_region
    _
  $region13: #{protonet_forward.4} parent=0 // pred_fallthru
    _
  // Predicated region
  $region14: #{protonet_forward.4} parent=0 // pred_check
    _
  $region15: #{protonet_forward.4} parent=0 // pred_check_branch
    %341 = sbr.rel (0) target = $region17
  $region16: #{protonet_forward.4} parent=0 // pred_region
    _
  $region17: #{protonet_forward.4} parent=0 // pred_fallthru
    _

// kernel: protonet_forward.5
$region0: #{protonet_forward.5}
  #allocation0 [shape = 'u32[]', space=smem, size = 0x4, offset = 0x4, fixed_abs, tag = 'smem constant byte address 0x4 - core index']
  #allocation1 [shape = 'u32[144,128]{1,0:T(1,128)}', space=vmem, size = 0x12000, scoped, tag = 'internal scratch']
  %s0 = inlined_call_operand.vmem [shape: f32[2,128,128], index: 0, kind: input, shape index: {}]
  %s1 = inlined_call_operand.vmem [shape: f32[3,128], index: 1, kind: input, shape index: {}]
  %s2 = inlined_call_operand.vmem [shape: s32[2,1,128], index: 2, kind: input, shape index: {}]
  %s3 = inlined_call_operand.vmem [shape: f32[2,3,128], index: 3, kind: output, shape index: {0}]
  %s4 = inlined_call_operand.vmem [shape: f32[2,1,128], index: 4, kind: output, shape index: {1}]
  %5 = xla_tuple %s3, %s4
  %s6 = sld [smem:[#allocation0]]
  $region30: #{protonet_forward.5} parent=0
    _
  %s8 = ssub.s32 1, %s6
  %s9 = scalar_select 0, %s8, %s6
  // Predicated region
  $region2: #{protonet_forward.5} parent=0 // pred_check
    _
  $region3: #{protonet_forward.5} parent=0 // pred_check_branch
    %11 = sbr.rel (0) target = $region5
  $region4: #{protonet_forward.5} parent=0 // pred_region
    _
  $region5: #{protonet_forward.5} parent=0 // pred_fallthru
    _
  // Predicated region
  $region6: #{protonet_forward.5} parent=0 // pred_check
    _
  $region7: #{protonet_forward.5} parent=0 // pred_check_branch
    %13 = sbr.rel (0) target = $region9
  $region8: #{protonet_forward.5} parent=0 // pred_region
    _
  $region9: #{protonet_forward.5} parent=0 // pred_fallthru
    _
  // Predicated region
  $region10: #{protonet_forward.5} parent=0 // pred_check
    _
  $region11: #{protonet_forward.5} parent=0 // pred_check_branch
    %15 = sbr.rel (0) target = $region13
  $region12: #{protonet_forward.5} parent=0 // pred_region
    _
  $region13: #{protonet_forward.5} parent=0 // pred_fallthru
    _
  %v17 = vld [vmem:[%s1] sm:$0x7]
  %v18 = vpack.c.bf16 %v17, %v17
  %v19 = vld [vmem:[%s0] sm:$0xff]
  %v20 = vld [vmem:[%s0 + $0x8] sm:$0xff]
  %v21 = vld [vmem:[%s0 + $0x10] sm:$0xff]
  %v22 = vld [vmem:[%s0 + $0x18] sm:$0xff]
  %v23 = vld [vmem:[%s0 + $0x20] sm:$0xff]
  %v24 = vld [vmem:[%s0 + $0x28] sm:$0xff]
  %v25 = vld [vmem:[%s0 + $0x30] sm:$0xff]
  %v26 = vld [vmem:[%s0 + $0x38] sm:$0xff]
  %v27 = vld [vmem:[%s0 + $0x40] sm:$0xff]
  %v28 = vld [vmem:[%s0 + $0x48] sm:$0xff]
  %v29 = vld [vmem:[%s0 + $0x50] sm:$0xff]
  %v30 = vld [vmem:[%s0 + $0x58] sm:$0xff]
  %v31 = vld [vmem:[%s0 + $0x60] sm:$0xff]
  %v32 = vld [vmem:[%s0 + $0x68] sm:$0xff]
  %v33 = vld [vmem:[%s0 + $0x70] sm:$0xff]
  %v34 = vld [vmem:[%s0 + $0x78] sm:$0xff]
  %v35 = vmul.f32 %v19, %v19
  %v36 = vmul.f32 %v20, %v20
  %v37 = vmul.f32 %v21, %v21
  %v38 = vmul.f32 %v22, %v22
  %v39 = vmul.f32 %v23, %v23
  %v40 = vmul.f32 %v24, %v24
  %v41 = vmul.f32 %v25, %v25
  %v42 = vmul.f32 %v26, %v26
  %v43 = vmul.f32 %v27, %v27
  %v44 = vmul.f32 %v28, %v28
  %v45 = vmul.f32 %v29, %v29
  %v46 = vmul.f32 %v30, %v30
  %v47 = vmul.f32 %v31, %v31
  %v48 = vmul.f32 %v32, %v32
  %v49 = vmul.f32 %v33, %v33
  %v50 = vmul.f32 %v34, %v34
  %51 = vadd.xlane.f32.xlu0 %v35
  %v52 = vpop.xlane.xlu0 %51
  %53 = vadd.xlane.f32.xlu0 %v36
  %v54 = vpop.xlane.xlu0 %53
  %55 = vadd.xlane.f32.xlu0 %v37
  %v56 = vpop.xlane.xlu0 %55
  %57 = vadd.xlane.f32.xlu0 %v38
  %v58 = vpop.xlane.xlu0 %57
  %59 = vadd.xlane.f32.xlu0 %v39
  %v60 = vpop.xlane.xlu0 %59
  %61 = vadd.xlane.f32.xlu0 %v40
  %v62 = vpop.xlane.xlu0 %61
  %63 = vadd.xlane.f32.xlu0 %v41
  %v64 = vpop.xlane.xlu0 %63
  %65 = vadd.xlane.f32.xlu0 %v42
  %v66 = vpop.xlane.xlu0 %65
  %67 = vadd.xlane.f32.xlu0 %v43
  %v68 = vpop.xlane.xlu0 %67
  %69 = vadd.xlane.f32.xlu0 %v44
  %v70 = vpop.xlane.xlu0 %69
  %71 = vadd.xlane.f32.xlu0 %v45
  %v72 = vpop.xlane.xlu0 %71
  %73 = vadd.xlane.f32.xlu0 %v46
  %v74 = vpop.xlane.xlu0 %73
  %75 = vadd.xlane.f32.xlu0 %v47
  %v76 = vpop.xlane.xlu0 %75
  %77 = vadd.xlane.f32.xlu0 %v48
  %v78 = vpop.xlane.xlu0 %77
  %79 = vadd.xlane.f32.xlu0 %v49
  %v80 = vpop.xlane.xlu0 %79
  %81 = vadd.xlane.f32.xlu0 %v50
  %v82 = vpop.xlane.xlu0 %81
  %v83 = vmax.f32 %v52, 1e-16
  %v84 = vmax.f32 %v54, 1e-16
  %v85 = vmax.f32 %v56, 1e-16
  %v86 = vmax.f32 %v58, 1e-16
  %v87 = vmax.f32 %v60, 1e-16
  %v88 = vmax.f32 %v62, 1e-16
  %v89 = vmax.f32 %v64, 1e-16
  %v90 = vmax.f32 %v66, 1e-16
  %v91 = vmax.f32 %v68, 1e-16
  %v92 = vmax.f32 %v70, 1e-16
  %v93 = vmax.f32 %v72, 1e-16
  %v94 = vmax.f32 %v74, 1e-16
  %v95 = vmax.f32 %v76, 1e-16
  %v96 = vmax.f32 %v78, 1e-16
  %v97 = vmax.f32 %v80, 1e-16
  %v98 = vmax.f32 %v82, 1e-16
  %v99 = vrsqrt.pop %v83
  %v100 = vrsqrt.pop %v84
  %v101 = vrsqrt.pop %v85
  %v102 = vrsqrt.pop %v86
  %v103 = vrsqrt.pop %v87
  %v104 = vrsqrt.pop %v88
  %v105 = vrsqrt.pop %v89
  %v106 = vrsqrt.pop %v90
  %v107 = vrsqrt.pop %v91
  %v108 = vrsqrt.pop %v92
  %v109 = vrsqrt.pop %v93
  %v110 = vrsqrt.pop %v94
  %v111 = vrsqrt.pop %v95
  %v112 = vrsqrt.pop %v96
  %v113 = vrsqrt.pop %v97
  %v114 = vrsqrt.pop %v98
  %v115 = vmul.f32 %v19, %v99
  %v116 = vmul.f32 %v20, %v100
  %v117 = vmul.f32 %v21, %v101
  %v118 = vmul.f32 %v22, %v102
  %v119 = vmul.f32 %v23, %v103
  %v120 = vmul.f32 %v24, %v104
  %v121 = vmul.f32 %v25, %v105
  %v122 = vmul.f32 %v26, %v106
  %v123 = vmul.f32 %v27, %v107
  %v124 = vmul.f32 %v28, %v108
  %v125 = vmul.f32 %v29, %v109
  %v126 = vmul.f32 %v30, %v110
  %v127 = vmul.f32 %v31, %v111
  %v128 = vmul.f32 %v32, %v112
  %v129 = vmul.f32 %v33, %v113
  %v130 = vmul.f32 %v34, %v114
  %v131 = vpack.c.bf16 %v116, %v115
  %v132 = vpack.c.bf16 %v118, %v117
  %v133 = vpack.c.bf16 %v120, %v119
  %v134 = vpack.c.bf16 %v122, %v121
  %v135 = vpack.c.bf16 %v124, %v123
  %v136 = vpack.c.bf16 %v126, %v125
  %v137 = vpack.c.bf16 %v128, %v127
  %v138 = vpack.c.bf16 %v130, %v129
  %139 = vmatprep.subr.bf16.mxu0 0
  %140 = vmatpush1.bf16.xpose.msra.mxu0 %v131
  %141 = vmatprep.subr.bf16.mxu0 0
  %142 = vmatpush1.bf16.xpose.msra.mxu0 %v132
  %143 = vmatprep.subr.bf16.mxu0 0
  %144 = vmatpush1.bf16.xpose.msra.mxu0 %v133
  %145 = vmatprep.subr.bf16.mxu0 0
  %146 = vmatpush1.bf16.xpose.msra.mxu0 %v134
  %147 = vmatprep.subr.bf16.mxu0 0
  %148 = vmatpush1.bf16.xpose.msra.mxu0 %v135
  %149 = vmatprep.subr.bf16.mxu0 0
  %150 = vmatpush1.bf16.xpose.msra.mxu0 %v136
  %151 = vmatprep.subr.bf16.mxu0 0
  %152 = vmatpush1.bf16.xpose.msra.mxu0 %v137
  %153 = vmatprep.subr.bf16.mxu0 0
  %154 = vmatpush1.bf16.xpose.msra.mxu0 %v138
  %155 = vmatprep.subr.bf16.mxu0 0
  %156 = vmatpush1.bf16.xpose.msra.mxu0 0
  %157 = vmatprep.subr.bf16.mxu0 0
  %158 = vmatpush1.bf16.xpose.msra.mxu0 0
  %159 = vmatprep.subr.bf16.mxu0 0
  %160 = vmatpush1.bf16.xpose.msra.mxu0 0
  %161 = vmatprep.subr.bf16.mxu0 0
  %162 = vmatpush1.bf16.xpose.msra.mxu0 0
  %163 = vmatprep.subr.bf16.mxu0 0
  %164 = vmatpush1.bf16.xpose.msra.mxu0 0
  %165 = vmatprep.subr.bf16.mxu0 0
  %166 = vmatpush1.bf16.xpose.msra.mxu0 0
  %167 = vmatprep.subr.bf16.mxu0 0
  %168 = vmatpush1.bf16.xpose.msra.mxu0 0
  %169 = vmatprep.subr.bf16.mxu0 0
  %170 = vmatpush1.bf16.xpose.msra.mxu0 0
  %171 = vmatprep.mubr.bf16.mxu0 0
  %172 = vmatmul.mubr.bf16.gmra.mrb[0].mxu0 %v18
  %v173 = vpop.f32.mrb[0].mxu0
  %v174 = vadd.f32 0.0, %v173
  %v175 = vpop.f32.mrb[0].mxu0
  %v176 = vpop.f32.mrb[0].mxu0
  %v177 = vpop.f32.mrb[0].mxu0
  %178 = vdwg.mxu0
  %v179 = vmul.f32 %v174, 10.0
  %180 = vst [vmem:[%s3] sm:$0x7] %v179
  %v181 = vld [vmem:[%s2] sm:$0x1]
  %v182 = vlaneseq
  %v183 = vshrl.u32 %v182, 7
  %v184 = vlaneseq
  %v185 = vshrl.u32 %v184, 7
  %v186 = vsub.s32 0, %v185
  %v187 = vrot.slane %v181, %v186
  %vm188 = vcmp.eq.s32.totalorder %v183, %v187
  %v189 = vsel %vm188, 1, 0
  %v190 = vcvt.s32.f32 %v189
  %vm191 = vcmask 1042432
  %v192 = vsel %vm191, %v179, -inf
  %v193 = vrot.slane %v192, 4
  %v194 = vmax.f32 %v192, %v193
  %v195 = vrot.slane %v194, 2
  %v196 = vmax.f32 %v194, %v195
  %v197 = vrot.slane %v196, 1
  %v198 = vmax.f32 %v196, %v197
  %v199 = vsub.f32 %v179, %v198
  %v200 = vmul.f32 %v199, 1.442695
  %v201 = vpow.pop %v200
  %v202 = vsel %vm191, %v201, 0.0
  %v203 = vrot.slane %v202, 4
  %v204 = vadd.f32 %v202, %v203
  %v205 = vrot.slane %v204, 2
  %v206 = vadd.f32 %v204, %v205
  %v207 = vrot.slane %v206, 1
  %v208 = vadd.f32 %v206, %v207
  %v209 = vlog2.pop %v208
  %v210 = vmul.f32 %v209, 0.6931472
  %v211 = vadd.f32 %v198, %v210
  %v212 = vmul.f32 %v179, %v190
  %v213 = vsel %vm191, %v212, 0.0
  %v214 = vrot.slane %v213, 4
  %v215 = vadd.f32 %v213, %v214
  %v216 = vrot.slane %v215, 2
  %v217 = vadd.f32 %v215, %v216
  %v218 = vrot.slane %v217, 1
  %v219 = vadd.f32 %v217, %v218
  %v220 = vsub.f32 %v211, %v219
  %221 = vst [vmem:[%s4] sm:$0x1] %v220
  %s222 = scalar_lea.vmem %s0, 128
  %v223 = vld [vmem:[%s222] sm:$0xff]
  %v224 = vld [vmem:[%s222 + $0x8] sm:$0xff]
  %v225 = vld [vmem:[%s222 + $0x10] sm:$0xff]
  %v226 = vld [vmem:[%s222 + $0x18] sm:$0xff]
  %v227 = vld [vmem:[%s222 + $0x20] sm:$0xff]
  %v228 = vld [vmem:[%s222 + $0x28] sm:$0xff]
  %v229 = vld [vmem:[%s222 + $0x30] sm:$0xff]
  %v230 = vld [vmem:[%s222 + $0x38] sm:$0xff]
  %v231 = vld [vmem:[%s222 + $0x40] sm:$0xff]
  %v232 = vld [vmem:[%s222 + $0x48] sm:$0xff]
  %v233 = vld [vmem:[%s222 + $0x50] sm:$0xff]
  %v234 = vld [vmem:[%s222 + $0x58] sm:$0xff]
  %v235 = vld [vmem:[%s222 + $0x60] sm:$0xff]
  %v236 = vld [vmem:[%s222 + $0x68] sm:$0xff]
  %v237 = vld [vmem:[%s222 + $0x70] sm:$0xff]
  %v238 = vld [vmem:[%s222 + $0x78] sm:$0xff]
  %v239 = vmul.f32 %v223, %v223
  %v240 = vmul.f32 %v224, %v224
  %v241 = vmul.f32 %v225, %v225
  %v242 = vmul.f32 %v226, %v226
  %v243 = vmul.f32 %v227, %v227
  %v244 = vmul.f32 %v228, %v228
  %v245 = vmul.f32 %v229, %v229
  %v246 = vmul.f32 %v230, %v230
  %v247 = vmul.f32 %v231, %v231
  %v248 = vmul.f32 %v232, %v232
  %v249 = vmul.f32 %v233, %v233
  %v250 = vmul.f32 %v234, %v234
  %v251 = vmul.f32 %v235, %v235
  %v252 = vmul.f32 %v236, %v236
  %v253 = vmul.f32 %v237, %v237
  %v254 = vmul.f32 %v238, %v238
  %255 = vadd.xlane.f32.xlu0 %v239
  %v256 = vpop.xlane.xlu0 %255
  %257 = vadd.xlane.f32.xlu0 %v240
  %v258 = vpop.xlane.xlu0 %257
  %259 = vadd.xlane.f32.xlu0 %v241
  %v260 = vpop.xlane.xlu0 %259
  %261 = vadd.xlane.f32.xlu0 %v242
  %v262 = vpop.xlane.xlu0 %261
  %263 = vadd.xlane.f32.xlu0 %v243
  %v264 = vpop.xlane.xlu0 %263
  %265 = vadd.xlane.f32.xlu0 %v244
  %v266 = vpop.xlane.xlu0 %265
  %267 = vadd.xlane.f32.xlu0 %v245
  %v268 = vpop.xlane.xlu0 %267
  %269 = vadd.xlane.f32.xlu0 %v246
  %v270 = vpop.xlane.xlu0 %269
  %271 = vadd.xlane.f32.xlu0 %v247
  %v272 = vpop.xlane.xlu0 %271
  %273 = vadd.xlane.f32.xlu0 %v248
  %v274 = vpop.xlane.xlu0 %273
  %275 = vadd.xlane.f32.xlu0 %v249
  %v276 = vpop.xlane.xlu0 %275
  %277 = vadd.xlane.f32.xlu0 %v250
  %v278 = vpop.xlane.xlu0 %277
  %279 = vadd.xlane.f32.xlu0 %v251
  %v280 = vpop.xlane.xlu0 %279
  %281 = vadd.xlane.f32.xlu0 %v252
  %v282 = vpop.xlane.xlu0 %281
  %283 = vadd.xlane.f32.xlu0 %v253
  %v284 = vpop.xlane.xlu0 %283
  %285 = vadd.xlane.f32.xlu0 %v254
  %v286 = vpop.xlane.xlu0 %285
  %v287 = vmax.f32 %v256, 1e-16
  %v288 = vmax.f32 %v258, 1e-16
  %v289 = vmax.f32 %v260, 1e-16
  %v290 = vmax.f32 %v262, 1e-16
  %v291 = vmax.f32 %v264, 1e-16
  %v292 = vmax.f32 %v266, 1e-16
  %v293 = vmax.f32 %v268, 1e-16
  %v294 = vmax.f32 %v270, 1e-16
  %v295 = vmax.f32 %v272, 1e-16
  %v296 = vmax.f32 %v274, 1e-16
  %v297 = vmax.f32 %v276, 1e-16
  %v298 = vmax.f32 %v278, 1e-16
  %v299 = vmax.f32 %v280, 1e-16
  %v300 = vmax.f32 %v282, 1e-16
  %v301 = vmax.f32 %v284, 1e-16
  %v302 = vmax.f32 %v286, 1e-16
  %v303 = vrsqrt.pop %v287
  %v304 = vrsqrt.pop %v288
  %v305 = vrsqrt.pop %v289
  %v306 = vrsqrt.pop %v290
  %v307 = vrsqrt.pop %v291
  %v308 = vrsqrt.pop %v292
  %v309 = vrsqrt.pop %v293
  %v310 = vrsqrt.pop %v294
  %v311 = vrsqrt.pop %v295
  %v312 = vrsqrt.pop %v296
  %v313 = vrsqrt.pop %v297
  %v314 = vrsqrt.pop %v298
  %v315 = vrsqrt.pop %v299
  %v316 = vrsqrt.pop %v300
  %v317 = vrsqrt.pop %v301
  %v318 = vrsqrt.pop %v302
  %v319 = vmul.f32 %v223, %v303
  %v320 = vmul.f32 %v224, %v304
  %v321 = vmul.f32 %v225, %v305
  %v322 = vmul.f32 %v226, %v306
  %v323 = vmul.f32 %v227, %v307
  %v324 = vmul.f32 %v228, %v308
  %v325 = vmul.f32 %v229, %v309
  %v326 = vmul.f32 %v230, %v310
  %v327 = vmul.f32 %v231, %v311
  %v328 = vmul.f32 %v232, %v312
  %v329 = vmul.f32 %v233, %v313
  %v330 = vmul.f32 %v234, %v314
  %v331 = vmul.f32 %v235, %v315
  %v332 = vmul.f32 %v236, %v316
  %v333 = vmul.f32 %v237, %v317
  %v334 = vmul.f32 %v238, %v318
  %v335 = vpack.c.bf16 %v320, %v319
  %v336 = vpack.c.bf16 %v322, %v321
  %v337 = vpack.c.bf16 %v324, %v323
  %v338 = vpack.c.bf16 %v326, %v325
  %v339 = vpack.c.bf16 %v328, %v327
  %v340 = vpack.c.bf16 %v330, %v329
  %v341 = vpack.c.bf16 %v332, %v331
  %v342 = vpack.c.bf16 %v334, %v333
  %343 = vmatprep.subr.bf16.mxu0 0
  %344 = vmatpush1.bf16.xpose.msra.mxu0 %v335
  %345 = vmatprep.subr.bf16.mxu0 0
  %346 = vmatpush1.bf16.xpose.msra.mxu0 %v336
  %347 = vmatprep.subr.bf16.mxu0 0
  %348 = vmatpush1.bf16.xpose.msra.mxu0 %v337
  %349 = vmatprep.subr.bf16.mxu0 0
  %350 = vmatpush1.bf16.xpose.msra.mxu0 %v338
  %351 = vmatprep.subr.bf16.mxu0 0
  %352 = vmatpush1.bf16.xpose.msra.mxu0 %v339
  %353 = vmatprep.subr.bf16.mxu0 0
  %354 = vmatpush1.bf16.xpose.msra.mxu0 %v340
  %355 = vmatprep.subr.bf16.mxu0 0
  %356 = vmatpush1.bf16.xpose.msra.mxu0 %v341
  %357 = vmatprep.subr.bf16.mxu0 0
  %358 = vmatpush1.bf16.xpose.msra.mxu0 %v342
  %359 = vmatprep.subr.bf16.mxu0 0
  %360 = vmatpush1.bf16.xpose.msra.mxu0 0
  %361 = vmatprep.subr.bf16.mxu0 0
  %362 = vmatpush1.bf16.xpose.msra.mxu0 0
  %363 = vmatprep.subr.bf16.mxu0 0
  %364 = vmatpush1.bf16.xpose.msra.mxu0 0
  %365 = vmatprep.subr.bf16.mxu0 0
  %366 = vmatpush1.bf16.xpose.msra.mxu0 0
  %367 = vmatprep.subr.bf16.mxu0 0
  %368 = vmatpush1.bf16.xpose.msra.mxu0 0
  %369 = vmatprep.subr.bf16.mxu0 0
  %370 = vmatpush1.bf16.xpose.msra.mxu0 0
  %371 = vmatprep.subr.bf16.mxu0 0
  %372 = vmatpush1.bf16.xpose.msra.mxu0 0
  %373 = vmatprep.subr.bf16.mxu0 0
  %374 = vmatpush1.bf16.xpose.msra.mxu0 0
  %375 = vmatprep.mubr.bf16.mxu0 0
  %376 = vmatmul.mubr.bf16.gmra.mrb[0].mxu0 %v18
  %v377 = vpop.f32.mrb[0].mxu0
  %v378 = vadd.f32 0.0, %v377
  %v379 = vpop.f32.mrb[0].mxu0
  %v380 = vpop.f32.mrb[0].mxu0
  %v381 = vpop.f32.mrb[0].mxu0
  %382 = vdwg.mxu0
  %v383 = vmul.f32 %v378, 10.0
  %s384 = scalar_lea.vmem %s3, 4
  %385 = vst [vmem:[%s384] sm:$0x7] %v383
  %s386 = scalar_lea.vmem %s2, 1
  %v387 = vld [vmem:[%s386] sm:$0x1]
  %v388 = vlaneseq
  %v389 = vshrl.u32 %v388, 7
  %v390 = vsub.s32 0, %v389
  %v391 = vrot.slane %v387, %v390
  %vm392 = vcmp.eq.s32.totalorder %v183, %v391
  %v393 = vsel %vm392, 1, 0
  %v394 = vcvt.s32.f32 %v393
  %v395 = vsel %vm191, %v383, -inf
  %v396 = vrot.slane %v395, 4
  %v397 = vmax.f32 %v395, %v396
  %v398 = vrot.slane %v397, 2
  %v399 = vmax.f32 %v397, %v398
  %v400 = vrot.slane %v399, 1
  %v401 = vmax.f32 %v399, %v400
  %v402 = vsub.f32 %v383, %v401
  %v403 = vmul.f32 %v402, 1.442695
  %v404 = vpow.pop %v403
  %v405 = vsel %vm191, %v404, 0.0
  %v406 = vrot.slane %v405, 4
  %v407 = vadd.f32 %v405, %v406
  %v408 = vrot.slane %v407, 2
  %v409 = vadd.f32 %v407, %v408
  %v410 = vrot.slane %v409, 1
  %v411 = vadd.f32 %v409, %v410
  %v412 = vlog2.pop %v411
  %v413 = vmul.f32 %v412, 0.6931472
  %v414 = vadd.f32 %v401, %v413
  %v415 = vmul.f32 %v383, %v394
  %v416 = vsel %vm191, %v415, 0.0
  %v417 = vrot.slane %v416, 4
  %v418 = vadd.f32 %v416, %v417
  %v419 = vrot.slane %v418, 2
  %v420 = vadd.f32 %v418, %v419
  %v421 = vrot.slane %v420, 1
  %v422 = vadd.f32 %v420, %v421
  %v423 = vsub.f32 %v414, %v422
  %s424 = scalar_lea.vmem %s4, 1
  %425 = vst [vmem:[%s424] sm:$0x1] %v423
  // Predicated region
  $region14: #{protonet_forward.5} parent=0 // pred_check
    _
  $region15: #{protonet_forward.5} parent=0 // pred_check_branch
    %427 = sbr.rel (0) target = $region17
  $region16: #{protonet_forward.5} parent=0 // pred_region
    _
  $region17: #{protonet_forward.5} parent=0 // pred_fallthru
    _
  // Predicated region
  $region18: #{protonet_forward.5} parent=0 // pred_check
    _
  $region19: #{protonet_forward.5} parent=0 // pred_check_branch
    %429 = sbr.rel (0) target = $region21
  $region20: #{protonet_forward.5} parent=0 // pred_region
    _
  $region21: #{protonet_forward.5} parent=0 // pred_fallthru
    _
  // Predicated region
  $region22: #{protonet_forward.5} parent=0 // pred_check
    _
  $region23: #{protonet_forward.5} parent=0 // pred_check_branch
    %431 = sbr.rel (0) target = $region25
  $region24: #{protonet_forward.5} parent=0 // pred_region
    _
  $region25: #{protonet_forward.5} parent=0 // pred_fallthru
    _
  // Predicated region
  $region26: #{protonet_forward.5} parent=0 // pred_check
    _
  $region27: #{protonet_forward.5} parent=0 // pred_check_branch
    %433 = sbr.rel (0) target = $region29
  $region28: #{protonet_forward.5} parent=0 // pred_region
    _
  $region29: #{protonet_forward.5} parent=0 // pred_fallthru
    _

// kernel: protonet_forward.3
$region0: #{protonet_forward.3}
  #allocation0 [shape = 'u32[]', space=smem, size = 0x4, offset = 0x4, fixed_abs, tag = 'smem constant byte address 0x4 - core index']
  #allocation1 [shape = 'u32[144,128]{1,0:T(1,128)}', space=vmem, size = 0x12000, scoped, tag = 'internal scratch']
  %s0 = inlined_call_operand.vmem [shape: f32[768,4], index: 0, kind: input, shape index: {}]
  %s1 = inlined_call_operand.vmem [shape: bf16[64,1024], index: 1, kind: input, shape index: {}]
  %s2 = inlined_call_operand.vmem [shape: f32[1,1024], index: 2, kind: input, shape index: {}]
  %s3 = inlined_call_operand.vmem [shape: f32[768,128], index: 3, kind: output, shape index: {}]
  %s4 = sld [smem:[#allocation0]]
  $region22: #{protonet_forward.3} parent=0
    _
  %s6 = ssub.s32 1, %s4
  %s7 = scalar_select 0, %s6, %s4
  // Predicated region
  $region2: #{protonet_forward.3} parent=0 // pred_check
    _
  $region3: #{protonet_forward.3} parent=0 // pred_check_branch
    %9 = sbr.rel (0) target = $region5
  $region4: #{protonet_forward.3} parent=0 // pred_region
    _
  $region5: #{protonet_forward.3} parent=0 // pred_fallthru
    _
  // Predicated region
  $region6: #{protonet_forward.3} parent=0 // pred_check
    _
  $region7: #{protonet_forward.3} parent=0 // pred_check_branch
    %11 = sbr.rel (0) target = $region9
  $region8: #{protonet_forward.3} parent=0 // pred_region
    _
  $region9: #{protonet_forward.3} parent=0 // pred_fallthru
    _
  // Predicated region
  $region10: #{protonet_forward.3} parent=0 // pred_check
    _
  $region11: #{protonet_forward.3} parent=0 // pred_check_branch
    %13 = sbr.rel (0) target = $region13
  $region12: #{protonet_forward.3} parent=0 // pred_region
    _
  $region13: #{protonet_forward.3} parent=0 // pred_fallthru
    _
  %v15 = vld [vmem:[%s0] sm:$0xff]
  %v16 = vld [vmem:[%s0 + $0x8] sm:$0xff]
  %v17 = vld [vmem:[%s0 + $0x10] sm:$0xff]
  %v18 = vld [vmem:[%s0 + $0x18] sm:$0xff]
  %v19 = vld [vmem:[%s0 + $0x20] sm:$0xff]
  %v20 = vld [vmem:[%s0 + $0x28] sm:$0xff]
  %v21 = vld [vmem:[%s0 + $0x30] sm:$0xff]
  %v22 = vld [vmem:[%s0 + $0x38] sm:$0xff]
  %v23 = vld [vmem:[%s0 + $0x40] sm:$0xff]
  %v24 = vld [vmem:[%s0 + $0x48] sm:$0xff]
  %v25 = vld [vmem:[%s0 + $0x50] sm:$0xff]
  %v26 = vld [vmem:[%s0 + $0x58] sm:$0xff]
  %v27 = vld [vmem:[%s0 + $0x60] sm:$0xff]
  %v28 = vld [vmem:[%s0 + $0x68] sm:$0xff]
  %v29 = vld [vmem:[%s0 + $0x70] sm:$0xff]
  %v30 = vld [vmem:[%s0 + $0x78] sm:$0xff]
  %v31 = vld [vmem:[%s0 + $0x80] sm:$0xff]
  %v32 = vld [vmem:[%s0 + $0x88] sm:$0xff]
  %v33 = vld [vmem:[%s0 + $0x90] sm:$0xff]
  %v34 = vld [vmem:[%s0 + $0x98] sm:$0xff]
  %v35 = vld [vmem:[%s0 + $0xa0] sm:$0xff]
  %v36 = vld [vmem:[%s0 + $0xa8] sm:$0xff]
  %v37 = vld [vmem:[%s0 + $0xb0] sm:$0xff]
  %v38 = vld [vmem:[%s0 + $0xb8] sm:$0xff]
  %v39 = vld [vmem:[%s0 + $0xc0] sm:$0xff]
  %v40 = vld [vmem:[%s0 + $0xc8] sm:$0xff]
  %v41 = vld [vmem:[%s0 + $0xd0] sm:$0xff]
  %v42 = vld [vmem:[%s0 + $0xd8] sm:$0xff]
  %v43 = vld [vmem:[%s0 + $0xe0] sm:$0xff]
  %v44 = vld [vmem:[%s0 + $0xe8] sm:$0xff]
  %v45 = vld [vmem:[%s0 + $0xf0] sm:$0xff]
  %v46 = vld [vmem:[%s0 + $0xf8] sm:$0xff]
  %v47 = vld [vmem:[%s0 + $0x100] sm:$0xff]
  %v48 = vld [vmem:[%s0 + $0x108] sm:$0xff]
  %v49 = vld [vmem:[%s0 + $0x110] sm:$0xff]
  %v50 = vld [vmem:[%s0 + $0x118] sm:$0xff]
  %v51 = vld [vmem:[%s0 + $0x120] sm:$0xff]
  %v52 = vld [vmem:[%s0 + $0x128] sm:$0xff]
  %v53 = vld [vmem:[%s0 + $0x130] sm:$0xff]
  %v54 = vld [vmem:[%s0 + $0x138] sm:$0xff]
  %v55 = vld [vmem:[%s0 + $0x140] sm:$0xff]
  %v56 = vld [vmem:[%s0 + $0x148] sm:$0xff]
  %v57 = vld [vmem:[%s0 + $0x150] sm:$0xff]
  %v58 = vld [vmem:[%s0 + $0x158] sm:$0xff]
  %v59 = vld [vmem:[%s0 + $0x160] sm:$0xff]
  %v60 = vld [vmem:[%s0 + $0x168] sm:$0xff]
  %v61 = vld [vmem:[%s0 + $0x170] sm:$0xff]
  %v62 = vld [vmem:[%s0 + $0x178] sm:$0xff]
  %v63 = vld [vmem:[%s0 + $0x180] sm:$0xff]
  %v64 = vld [vmem:[%s0 + $0x188] sm:$0xff]
  %v65 = vld [vmem:[%s0 + $0x190] sm:$0xff]
  %v66 = vld [vmem:[%s0 + $0x198] sm:$0xff]
  %v67 = vld [vmem:[%s0 + $0x1a0] sm:$0xff]
  %v68 = vld [vmem:[%s0 + $0x1a8] sm:$0xff]
  %v69 = vld [vmem:[%s0 + $0x1b0] sm:$0xff]
  %v70 = vld [vmem:[%s0 + $0x1b8] sm:$0xff]
  %v71 = vld [vmem:[%s0 + $0x1c0] sm:$0xff]
  %v72 = vld [vmem:[%s0 + $0x1c8] sm:$0xff]
  %v73 = vld [vmem:[%s0 + $0x1d0] sm:$0xff]
  %v74 = vld [vmem:[%s0 + $0x1d8] sm:$0xff]
  %v75 = vld [vmem:[%s0 + $0x1e0] sm:$0xff]
  %v76 = vld [vmem:[%s0 + $0x1e8] sm:$0xff]
  %v77 = vld [vmem:[%s0 + $0x1f0] sm:$0xff]
  %v78 = vld [vmem:[%s0 + $0x1f8] sm:$0xff]
  %v79 = vld [vmem:[%s0 + $0x200] sm:$0xff]
  %v80 = vld [vmem:[%s0 + $0x208] sm:$0xff]
  %v81 = vld [vmem:[%s0 + $0x210] sm:$0xff]
  %v82 = vld [vmem:[%s0 + $0x218] sm:$0xff]
  %v83 = vld [vmem:[%s0 + $0x220] sm:$0xff]
  %v84 = vld [vmem:[%s0 + $0x228] sm:$0xff]
  %v85 = vld [vmem:[%s0 + $0x230] sm:$0xff]
  %v86 = vld [vmem:[%s0 + $0x238] sm:$0xff]
  %v87 = vld [vmem:[%s0 + $0x240] sm:$0xff]
  %v88 = vld [vmem:[%s0 + $0x248] sm:$0xff]
  %v89 = vld [vmem:[%s0 + $0x250] sm:$0xff]
  %v90 = vld [vmem:[%s0 + $0x258] sm:$0xff]
  %v91 = vld [vmem:[%s0 + $0x260] sm:$0xff]
  %v92 = vld [vmem:[%s0 + $0x268] sm:$0xff]
  %v93 = vld [vmem:[%s0 + $0x270] sm:$0xff]
  %v94 = vld [vmem:[%s0 + $0x278] sm:$0xff]
  %v95 = vld [vmem:[%s0 + $0x280] sm:$0xff]
  %v96 = vld [vmem:[%s0 + $0x288] sm:$0xff]
  %v97 = vld [vmem:[%s0 + $0x290] sm:$0xff]
  %v98 = vld [vmem:[%s0 + $0x298] sm:$0xff]
  %v99 = vld [vmem:[%s0 + $0x2a0] sm:$0xff]
  %v100 = vld [vmem:[%s0 + $0x2a8] sm:$0xff]
  %v101 = vld [vmem:[%s0 + $0x2b0] sm:$0xff]
  %v102 = vld [vmem:[%s0 + $0x2b8] sm:$0xff]
  %v103 = vld [vmem:[%s0 + $0x2c0] sm:$0xff]
  %v104 = vld [vmem:[%s0 + $0x2c8] sm:$0xff]
  %v105 = vld [vmem:[%s0 + $0x2d0] sm:$0xff]
  %v106 = vld [vmem:[%s0 + $0x2d8] sm:$0xff]
  %v107 = vld [vmem:[%s0 + $0x2e0] sm:$0xff]
  %v108 = vld [vmem:[%s0 + $0x2e8] sm:$0xff]
  %v109 = vld [vmem:[%s0 + $0x2f0] sm:$0xff]
  %v110 = vld [vmem:[%s0 + $0x2f8] sm:$0xff]
  %v111 = vld [vmem:[%s1] sm:$0x3]
  %v112 = vld [vmem:[%s2] sm:$0x1]
  %v113 = vpack.c.bf16 %v16, %v15
  %v114 = vpack.c.bf16 %v18, %v17
  %v115 = vpack.c.bf16 %v20, %v19
  %v116 = vpack.c.bf16 %v22, %v21
  %v117 = vpack.c.bf16 %v24, %v23
  %v118 = vpack.c.bf16 %v26, %v25
  %v119 = vpack.c.bf16 %v28, %v27
  %v120 = vpack.c.bf16 %v30, %v29
  %v121 = vpack.c.bf16 %v32, %v31
  %v122 = vpack.c.bf16 %v34, %v33
  %v123 = vpack.c.bf16 %v36, %v35
  %v124 = vpack.c.bf16 %v38, %v37
  %v125 = vpack.c.bf16 %v40, %v39
  %v126 = vpack.c.bf16 %v42, %v41
  %v127 = vpack.c.bf16 %v44, %v43
  %v128 = vpack.c.bf16 %v46, %v45
  %v129 = vpack.c.bf16 %v48, %v47
  %v130 = vpack.c.bf16 %v50, %v49
  %v131 = vpack.c.bf16 %v52, %v51
  %v132 = vpack.c.bf16 %v54, %v53
  %v133 = vpack.c.bf16 %v56, %v55
  %v134 = vpack.c.bf16 %v58, %v57
  %v135 = vpack.c.bf16 %v60, %v59
  %v136 = vpack.c.bf16 %v62, %v61
  %v137 = vpack.c.bf16 %v64, %v63
  %v138 = vpack.c.bf16 %v66, %v65
  %v139 = vpack.c.bf16 %v68, %v67
  %v140 = vpack.c.bf16 %v70, %v69
  %v141 = vpack.c.bf16 %v72, %v71
  %v142 = vpack.c.bf16 %v74, %v73
  %v143 = vpack.c.bf16 %v76, %v75
  %v144 = vpack.c.bf16 %v78, %v77
  %v145 = vpack.c.bf16 %v80, %v79
  %v146 = vpack.c.bf16 %v82, %v81
  %v147 = vpack.c.bf16 %v84, %v83
  %v148 = vpack.c.bf16 %v86, %v85
  %v149 = vpack.c.bf16 %v88, %v87
  %v150 = vpack.c.bf16 %v90, %v89
  %v151 = vpack.c.bf16 %v92, %v91
  %v152 = vpack.c.bf16 %v94, %v93
  %v153 = vpack.c.bf16 %v96, %v95
  %v154 = vpack.c.bf16 %v98, %v97
  %v155 = vpack.c.bf16 %v100, %v99
  %v156 = vpack.c.bf16 %v102, %v101
  %v157 = vpack.c.bf16 %v104, %v103
  %v158 = vpack.c.bf16 %v106, %v105
  %v159 = vpack.c.bf16 %v108, %v107
  %v160 = vpack.c.bf16 %v110, %v109
  %v162 = vlaneseq
  %v163 = vshrl.u32 %v162, 7
  %v164 = vsub.s32 0, %v163
  %v165 = vrot.slane %v112, %v164
  %vm167 = vcmask 31744
  %v169 = vsel %vm167, %v113, 0
  %v172 = vsel %vm167, %v114, 0
  %v175 = vsel %vm167, %v115, 0
  %v178 = vsel %vm167, %v116, 0
  %v181 = vsel %vm167, %v117, 0
  %v184 = vsel %vm167, %v118, 0
  %v187 = vsel %vm167, %v119, 0
  %v190 = vsel %vm167, %v120, 0
  %v193 = vsel %vm167, %v121, 0
  %v196 = vsel %vm167, %v122, 0
  %v199 = vsel %vm167, %v123, 0
  %v202 = vsel %vm167, %v124, 0
  %v205 = vsel %vm167, %v125, 0
  %v208 = vsel %vm167, %v126, 0
  %v211 = vsel %vm167, %v127, 0
  %v214 = vsel %vm167, %v128, 0
  %v217 = vsel %vm167, %v129, 0
  %v220 = vsel %vm167, %v130, 0
  %v223 = vsel %vm167, %v131, 0
  %v226 = vsel %vm167, %v132, 0
  %v229 = vsel %vm167, %v133, 0
  %v232 = vsel %vm167, %v134, 0
  %v235 = vsel %vm167, %v135, 0
  %v238 = vsel %vm167, %v136, 0
  %v241 = vsel %vm167, %v137, 0
  %v244 = vsel %vm167, %v138, 0
  %v247 = vsel %vm167, %v139, 0
  %v250 = vsel %vm167, %v140, 0
  %v253 = vsel %vm167, %v141, 0
  %v256 = vsel %vm167, %v142, 0
  %v259 = vsel %vm167, %v143, 0
  %v262 = vsel %vm167, %v144, 0
  %v265 = vsel %vm167, %v145, 0
  %v268 = vsel %vm167, %v146, 0
  %v271 = vsel %vm167, %v147, 0
  %v274 = vsel %vm167, %v148, 0
  %v277 = vsel %vm167, %v149, 0
  %v280 = vsel %vm167, %v150, 0
  %v283 = vsel %vm167, %v151, 0
  %v286 = vsel %vm167, %v152, 0
  %v289 = vsel %vm167, %v153, 0
  %v292 = vsel %vm167, %v154, 0
  %v295 = vsel %vm167, %v155, 0
  %v298 = vsel %vm167, %v156, 0
  %v301 = vsel %vm167, %v157, 0
  %v304 = vsel %vm167, %v158, 0
  %v307 = vsel %vm167, %v159, 0
  %v310 = vsel %vm167, %v160, 0
  %vm312 = vcmask 1041408
  %v314 = vsel %vm312, %v111, 0
  %316 = vmatprep.subr.bf16.mxu0 0
  %317 = vmatpush1.bf16.msra.mxu0 %v314
  %318 = vmatprep.subr.bf16.mxu0 0
  %319 = vmatpush1.bf16.msra.mxu0 0
  %320 = vmatprep.subr.bf16.mxu0 0
  %321 = vmatpush1.bf16.msra.mxu0 0
  %322 = vmatprep.subr.bf16.mxu0 0
  %323 = vmatpush1.bf16.msra.mxu0 0
  %324 = vmatprep.subr.bf16.mxu0 0
  %325 = vmatpush1.bf16.msra.mxu0 0
  %326 = vmatprep.subr.bf16.mxu0 0
  %327 = vmatpush1.bf16.msra.mxu0 0
  %328 = vmatprep.subr.bf16.mxu0 0
  %329 = vmatpush1.bf16.msra.mxu0 0
  %330 = vmatprep.subr.bf16.mxu0 0
  %331 = vmatpush1.bf16.msra.mxu0 0
  %332 = vmatprep.subr.bf16.mxu0 0
  %333 = vmatpush1.bf16.msra.mxu0 0
  %334 = vmatprep.subr.bf16.mxu0 0
  %335 = vmatpush1.bf16.msra.mxu0 0
  %336 = vmatprep.subr.bf16.mxu0 0
  %337 = vmatpush1.bf16.msra.mxu0 0
  %338 = vmatprep.subr.bf16.mxu0 0
  %339 = vmatpush1.bf16.msra.mxu0 0
  %340 = vmatprep.subr.bf16.mxu0 0
  %341 = vmatpush1.bf16.msra.mxu0 0
  %342 = vmatprep.subr.bf16.mxu0 0
  %343 = vmatpush1.bf16.msra.mxu0 0
  %344 = vmatprep.subr.bf16.mxu0 0
  %345 = vmatpush1.bf16.msra.mxu0 0
  %346 = vmatprep.subr.bf16.mxu0 0
  %347 = vmatpush1.bf16.msra.mxu0 0
  %348 = vmatprep.mubr.bf16.mxu0 0
  %349 = vmatmul.mubr.bf16.gmra.mrb[0].mxu0 %v169
  %v350 = vpop.f32.mrb[0].mxu0
  %v351 = vadd.f32 %v165, %v350
  %v352 = vpop.f32.mrb[0].mxu0
  %v353 = vpop.f32.mrb[0].mxu0
  %v354 = vadd.f32 %v165, %v353
  %v355 = vpop.f32.mrb[0].mxu0
  %356 = vmatprep.mubr.bf16.mxu0 0
  %357 = vmatmul.mubr.bf16.gmra.mrb[0].mxu0 %v172
  %v358 = vpop.f32.mrb[0].mxu0
  %v359 = vadd.f32 %v165, %v358
  %v360 = vpop.f32.mrb[0].mxu0
  %v361 = vpop.f32.mrb[0].mxu0
  %v362 = vadd.f32 %v165, %v361
  %v363 = vpop.f32.mrb[0].mxu0
  %364 = vmatprep.mubr.bf16.mxu0 0
  %365 = vmatmul.mubr.bf16.gmra.mrb[0].mxu0 %v175
  %v366 = vpop.f32.mrb[0].mxu0
  %v367 = vadd.f32 %v165, %v366
  %v368 = vpop.f32.mrb[0].mxu0
  %v369 = vpop.f32.mrb[0].mxu0
  %v370 = vadd.f32 %v165, %v369
  %v371 = vpop.f32.mrb[0].mxu0
  %372 = vmatprep.mubr.bf16.mxu0 0
  %373 = vmatmul.mubr.bf16.gmra.mrb[0].mxu0 %v178
  %v374 = vpop.f32.mrb[0].mxu0
  %v375 = vadd.f32 %v165, %v374
  %v376 = vpop.f32.mrb[0].mxu0
  %v377 = vpop.f32.mrb[0].mxu0
  %v378 = vadd.f32 %v165, %v377
  %v379 = vpop.f32.mrb[0].mxu0
  %380 = vmatprep.mubr.bf16.mxu0 0
  %381 = vmatmul.mubr.bf16.gmra.mrb[0].mxu0 %v181
  %v382 = vpop.f32.mrb[0].mxu0
  %v383 = vadd.f32 %v165, %v382
  %v384 = vpop.f32.mrb[0].mxu0
  %v385 = vpop.f32.mrb[0].mxu0
  %v386 = vadd.f32 %v165, %v385
  %v387 = vpop.f32.mrb[0].mxu0
  %388 = vmatprep.mubr.bf16.mxu0 0
  %389 = vmatmul.mubr.bf16.gmra.mrb[0].mxu0 %v184
  %v390 = vpop.f32.mrb[0].mxu0
  %v391 = vadd.f32 %v165, %v390
  %v392 = vpop.f32.mrb[0].mxu0
  %v393 = vpop.f32.mrb[0].mxu0
  %v394 = vadd.f32 %v165, %v393
  %v395 = vpop.f32.mrb[0].mxu0
  %396 = vmatprep.mubr.bf16.mxu0 0
  %397 = vmatmul.mubr.bf16.gmra.mrb[0].mxu0 %v187
  %v398 = vpop.f32.mrb[0].mxu0
  %v399 = vadd.f32 %v165, %v398
  %v400 = vpop.f32.mrb[0].mxu0
  %v401 = vpop.f32.mrb[0].mxu0
  %v402 = vadd.f32 %v165, %v401
  %v403 = vpop.f32.mrb[0].mxu0
  %404 = vmatprep.mubr.bf16.mxu0 0
  %405 = vmatmul.mubr.bf16.gmra.mrb[0].mxu0 %v190
  %v406 = vpop.f32.mrb[0].mxu0
  %v407 = vadd.f32 %v165, %v406
  %v408 = vpop.f32.mrb[0].mxu0
  %v409 = vpop.f32.mrb[0].mxu0
  %v410 = vadd.f32 %v165, %v409
  %v411 = vpop.f32.mrb[0].mxu0
  %412 = vmatprep.mubr.bf16.mxu0 0
  %413 = vmatmul.mubr.bf16.gmra.mrb[0].mxu0 %v193
  %v414 = vpop.f32.mrb[0].mxu0
  %v415 = vadd.f32 %v165, %v414
  %v416 = vpop.f32.mrb[0].mxu0
  %v417 = vpop.f32.mrb[0].mxu0
  %v418 = vadd.f32 %v165, %v417
  %v419 = vpop.f32.mrb[0].mxu0
  %420 = vmatprep.mubr.bf16.mxu0 0
  %421 = vmatmul.mubr.bf16.gmra.mrb[0].mxu0 %v196
  %v422 = vpop.f32.mrb[0].mxu0
  %v423 = vadd.f32 %v165, %v422
  %v424 = vpop.f32.mrb[0].mxu0
  %v425 = vpop.f32.mrb[0].mxu0
  %v426 = vadd.f32 %v165, %v425
  %v427 = vpop.f32.mrb[0].mxu0
  %428 = vmatprep.mubr.bf16.mxu0 0
  %429 = vmatmul.mubr.bf16.gmra.mrb[0].mxu0 %v199
  %v430 = vpop.f32.mrb[0].mxu0
  %v431 = vadd.f32 %v165, %v430
  %v432 = vpop.f32.mrb[0].mxu0
  %v433 = vpop.f32.mrb[0].mxu0
  %v434 = vadd.f32 %v165, %v433
  %v435 = vpop.f32.mrb[0].mxu0
  %436 = vmatprep.mubr.bf16.mxu0 0
  %437 = vmatmul.mubr.bf16.gmra.mrb[0].mxu0 %v202
  %v438 = vpop.f32.mrb[0].mxu0
  %v439 = vadd.f32 %v165, %v438
  %v440 = vpop.f32.mrb[0].mxu0
  %v441 = vpop.f32.mrb[0].mxu0
  %v442 = vadd.f32 %v165, %v441
  %v443 = vpop.f32.mrb[0].mxu0
  %444 = vmatprep.mubr.bf16.mxu0 0
  %445 = vmatmul.mubr.bf16.gmra.mrb[0].mxu0 %v205
  %v446 = vpop.f32.mrb[0].mxu0
  %v447 = vadd.f32 %v165, %v446
  %v448 = vpop.f32.mrb[0].mxu0
  %v449 = vpop.f32.mrb[0].mxu0
  %v450 = vadd.f32 %v165, %v449
  %v451 = vpop.f32.mrb[0].mxu0
  %452 = vmatprep.mubr.bf16.mxu0 0
  %453 = vmatmul.mubr.bf16.gmra.mrb[0].mxu0 %v208
  %v454 = vpop.f32.mrb[0].mxu0
  %v455 = vadd.f32 %v165, %v454
  %v456 = vpop.f32.mrb[0].mxu0
  %v457 = vpop.f32.mrb[0].mxu0
  %v458 = vadd.f32 %v165, %v457
  %v459 = vpop.f32.mrb[0].mxu0
  %460 = vmatprep.mubr.bf16.mxu0 0
  %461 = vmatmul.mubr.bf16.gmra.mrb[0].mxu0 %v211
  %v462 = vpop.f32.mrb[0].mxu0
  %v463 = vadd.f32 %v165, %v462
  %v464 = vpop.f32.mrb[0].mxu0
  %v465 = vpop.f32.mrb[0].mxu0
  %v466 = vadd.f32 %v165, %v465
  %v467 = vpop.f32.mrb[0].mxu0
  %468 = vmatprep.mubr.bf16.mxu0 0
  %469 = vmatmul.mubr.bf16.gmra.mrb[0].mxu0 %v214
  %v470 = vpop.f32.mrb[0].mxu0
  %v471 = vadd.f32 %v165, %v470
  %v472 = vpop.f32.mrb[0].mxu0
  %v473 = vpop.f32.mrb[0].mxu0
  %v474 = vadd.f32 %v165, %v473
  %v475 = vpop.f32.mrb[0].mxu0
  %476 = vmatprep.mubr.bf16.mxu0 0
  %477 = vmatmul.mubr.bf16.gmra.mrb[0].mxu0 %v217
  %v478 = vpop.f32.mrb[0].mxu0
  %v479 = vadd.f32 %v165, %v478
  %v480 = vpop.f32.mrb[0].mxu0
  %v481 = vpop.f32.mrb[0].mxu0
  %v482 = vadd.f32 %v165, %v481
  %v483 = vpop.f32.mrb[0].mxu0
  %484 = vmatprep.mubr.bf16.mxu0 0
  %485 = vmatmul.mubr.bf16.gmra.mrb[0].mxu0 %v220
  %v486 = vpop.f32.mrb[0].mxu0
  %v487 = vadd.f32 %v165, %v486
  %v488 = vpop.f32.mrb[0].mxu0
  %v489 = vpop.f32.mrb[0].mxu0
  %v490 = vadd.f32 %v165, %v489
  %v491 = vpop.f32.mrb[0].mxu0
  %492 = vmatprep.mubr.bf16.mxu0 0
  %493 = vmatmul.mubr.bf16.gmra.mrb[0].mxu0 %v223
  %v494 = vpop.f32.mrb[0].mxu0
  %v495 = vadd.f32 %v165, %v494
  %v496 = vpop.f32.mrb[0].mxu0
  %v497 = vpop.f32.mrb[0].mxu0
  %v498 = vadd.f32 %v165, %v497
  %v499 = vpop.f32.mrb[0].mxu0
  %500 = vmatprep.mubr.bf16.mxu0 0
  %501 = vmatmul.mubr.bf16.gmra.mrb[0].mxu0 %v226
  %v502 = vpop.f32.mrb[0].mxu0
  %v503 = vadd.f32 %v165, %v502
  %v504 = vpop.f32.mrb[0].mxu0
  %v505 = vpop.f32.mrb[0].mxu0
  %v506 = vadd.f32 %v165, %v505
  %v507 = vpop.f32.mrb[0].mxu0
  %508 = vmatprep.mubr.bf16.mxu0 0
  %509 = vmatmul.mubr.bf16.gmra.mrb[0].mxu0 %v229
  %v510 = vpop.f32.mrb[0].mxu0
  %v511 = vadd.f32 %v165, %v510
  %v512 = vpop.f32.mrb[0].mxu0
  %v513 = vpop.f32.mrb[0].mxu0
  %v514 = vadd.f32 %v165, %v513
  %v515 = vpop.f32.mrb[0].mxu0
  %516 = vmatprep.mubr.bf16.mxu0 0
  %517 = vmatmul.mubr.bf16.gmra.mrb[0].mxu0 %v232
  %v518 = vpop.f32.mrb[0].mxu0
  %v519 = vadd.f32 %v165, %v518
  %v520 = vpop.f32.mrb[0].mxu0
  %v521 = vpop.f32.mrb[0].mxu0
  %v522 = vadd.f32 %v165, %v521
  %v523 = vpop.f32.mrb[0].mxu0
  %524 = vmatprep.mubr.bf16.mxu0 0
  %525 = vmatmul.mubr.bf16.gmra.mrb[0].mxu0 %v235
  %v526 = vpop.f32.mrb[0].mxu0
  %v527 = vadd.f32 %v165, %v526
  %v528 = vpop.f32.mrb[0].mxu0
  %v529 = vpop.f32.mrb[0].mxu0
  %v530 = vadd.f32 %v165, %v529
  %v531 = vpop.f32.mrb[0].mxu0
  %532 = vmatprep.mubr.bf16.mxu0 0
  %533 = vmatmul.mubr.bf16.gmra.mrb[0].mxu0 %v238
  %v534 = vpop.f32.mrb[0].mxu0
  %v535 = vadd.f32 %v165, %v534
  %v536 = vpop.f32.mrb[0].mxu0
  %v537 = vpop.f32.mrb[0].mxu0
  %v538 = vadd.f32 %v165, %v537
  %v539 = vpop.f32.mrb[0].mxu0
  %540 = vmatprep.mubr.bf16.mxu0 0
  %541 = vmatmul.mubr.bf16.gmra.mrb[0].mxu0 %v241
  %v542 = vpop.f32.mrb[0].mxu0
  %v543 = vadd.f32 %v165, %v542
  %v544 = vpop.f32.mrb[0].mxu0
  %v545 = vpop.f32.mrb[0].mxu0
  %v546 = vadd.f32 %v165, %v545
  %v547 = vpop.f32.mrb[0].mxu0
  %548 = vmatprep.mubr.bf16.mxu0 0
  %549 = vmatmul.mubr.bf16.gmra.mrb[0].mxu0 %v244
  %v550 = vpop.f32.mrb[0].mxu0
  %v551 = vadd.f32 %v165, %v550
  %v552 = vpop.f32.mrb[0].mxu0
  %v553 = vpop.f32.mrb[0].mxu0
  %v554 = vadd.f32 %v165, %v553
  %v555 = vpop.f32.mrb[0].mxu0
  %556 = vmatprep.mubr.bf16.mxu0 0
  %557 = vmatmul.mubr.bf16.gmra.mrb[0].mxu0 %v247
  %v558 = vpop.f32.mrb[0].mxu0
  %v559 = vadd.f32 %v165, %v558
  %v560 = vpop.f32.mrb[0].mxu0
  %v561 = vpop.f32.mrb[0].mxu0
  %v562 = vadd.f32 %v165, %v561
  %v563 = vpop.f32.mrb[0].mxu0
  %564 = vmatprep.mubr.bf16.mxu0 0
  %565 = vmatmul.mubr.bf16.gmra.mrb[0].mxu0 %v250
  %v566 = vpop.f32.mrb[0].mxu0
  %v567 = vadd.f32 %v165, %v566
  %v568 = vpop.f32.mrb[0].mxu0
  %v569 = vpop.f32.mrb[0].mxu0
  %v570 = vadd.f32 %v165, %v569
  %v571 = vpop.f32.mrb[0].mxu0
  %572 = vmatprep.mubr.bf16.mxu0 0
  %573 = vmatmul.mubr.bf16.gmra.mrb[0].mxu0 %v253
  %v574 = vpop.f32.mrb[0].mxu0
  %v575 = vadd.f32 %v165, %v574
  %v576 = vpop.f32.mrb[0].mxu0
  %v577 = vpop.f32.mrb[0].mxu0
  %v578 = vadd.f32 %v165, %v577
  %v579 = vpop.f32.mrb[0].mxu0
  %580 = vmatprep.mubr.bf16.mxu0 0
  %581 = vmatmul.mubr.bf16.gmra.mrb[0].mxu0 %v256
  %v582 = vpop.f32.mrb[0].mxu0
  %v583 = vadd.f32 %v165, %v582
  %v584 = vpop.f32.mrb[0].mxu0
  %v585 = vpop.f32.mrb[0].mxu0
  %v586 = vadd.f32 %v165, %v585
  %v587 = vpop.f32.mrb[0].mxu0
  %588 = vmatprep.mubr.bf16.mxu0 0
  %589 = vmatmul.mubr.bf16.gmra.mrb[0].mxu0 %v259
  %v590 = vpop.f32.mrb[0].mxu0
  %v591 = vadd.f32 %v165, %v590
  %v592 = vpop.f32.mrb[0].mxu0
  %v593 = vpop.f32.mrb[0].mxu0
  %v594 = vadd.f32 %v165, %v593
  %v595 = vpop.f32.mrb[0].mxu0
  %596 = vmatprep.mubr.bf16.mxu0 0
  %597 = vmatmul.mubr.bf16.gmra.mrb[0].mxu0 %v262
  %v598 = vpop.f32.mrb[0].mxu0
  %v599 = vadd.f32 %v165, %v598
  %v600 = vpop.f32.mrb[0].mxu0
  %v601 = vpop.f32.mrb[0].mxu0
  %v602 = vadd.f32 %v165, %v601
  %v603 = vpop.f32.mrb[0].mxu0
  %604 = vmatprep.mubr.bf16.mxu0 0
  %605 = vmatmul.mubr.bf16.gmra.mrb[0].mxu0 %v265
  %v606 = vpop.f32.mrb[0].mxu0
  %v607 = vadd.f32 %v165, %v606
  %v608 = vpop.f32.mrb[0].mxu0
  %v609 = vpop.f32.mrb[0].mxu0
  %v610 = vadd.f32 %v165, %v609
  %v611 = vpop.f32.mrb[0].mxu0
  %612 = vmatprep.mubr.bf16.mxu0 0
  %613 = vmatmul.mubr.bf16.gmra.mrb[0].mxu0 %v268
  %v614 = vpop.f32.mrb[0].mxu0
  %v615 = vadd.f32 %v165, %v614
  %v616 = vpop.f32.mrb[0].mxu0
  %v617 = vpop.f32.mrb[0].mxu0
  %v618 = vadd.f32 %v165, %v617
  %v619 = vpop.f32.mrb[0].mxu0
  %620 = vmatprep.mubr.bf16.mxu0 0
  %621 = vmatmul.mubr.bf16.gmra.mrb[0].mxu0 %v271
  %v622 = vpop.f32.mrb[0].mxu0
  %v623 = vadd.f32 %v165, %v622
  %v624 = vpop.f32.mrb[0].mxu0
  %v625 = vpop.f32.mrb[0].mxu0
  %v626 = vadd.f32 %v165, %v625
  %v627 = vpop.f32.mrb[0].mxu0
  %628 = vmatprep.mubr.bf16.mxu0 0
  %629 = vmatmul.mubr.bf16.gmra.mrb[0].mxu0 %v274
  %v630 = vpop.f32.mrb[0].mxu0
  %v631 = vadd.f32 %v165, %v630
  %v632 = vpop.f32.mrb[0].mxu0
  %v633 = vpop.f32.mrb[0].mxu0
  %v634 = vadd.f32 %v165, %v633
  %v635 = vpop.f32.mrb[0].mxu0
  %636 = vmatprep.mubr.bf16.mxu0 0
  %637 = vmatmul.mubr.bf16.gmra.mrb[0].mxu0 %v277
  %v638 = vpop.f32.mrb[0].mxu0
  %v639 = vadd.f32 %v165, %v638
  %v640 = vpop.f32.mrb[0].mxu0
  %v641 = vpop.f32.mrb[0].mxu0
  %v642 = vadd.f32 %v165, %v641
  %v643 = vpop.f32.mrb[0].mxu0
  %644 = vmatprep.mubr.bf16.mxu0 0
  %645 = vmatmul.mubr.bf16.gmra.mrb[0].mxu0 %v280
  %v646 = vpop.f32.mrb[0].mxu0
  %v647 = vadd.f32 %v165, %v646
  %v648 = vpop.f32.mrb[0].mxu0
  %v649 = vpop.f32.mrb[0].mxu0
  %v650 = vadd.f32 %v165, %v649
  %v651 = vpop.f32.mrb[0].mxu0
  %652 = vmatprep.mubr.bf16.mxu0 0
  %653 = vmatmul.mubr.bf16.gmra.mrb[0].mxu0 %v283
  %v654 = vpop.f32.mrb[0].mxu0
  %v655 = vadd.f32 %v165, %v654
  %v656 = vpop.f32.mrb[0].mxu0
  %v657 = vpop.f32.mrb[0].mxu0
  %v658 = vadd.f32 %v165, %v657
  %v659 = vpop.f32.mrb[0].mxu0
  %660 = vmatprep.mubr.bf16.mxu0 0
  %661 = vmatmul.mubr.bf16.gmra.mrb[0].mxu0 %v286
  %v662 = vpop.f32.mrb[0].mxu0
  %v663 = vadd.f32 %v165, %v662
  %v664 = vpop.f32.mrb[0].mxu0
  %v665 = vpop.f32.mrb[0].mxu0
  %v666 = vadd.f32 %v165, %v665
  %v667 = vpop.f32.mrb[0].mxu0
  %668 = vmatprep.mubr.bf16.mxu0 0
  %669 = vmatmul.mubr.bf16.gmra.mrb[0].mxu0 %v289
  %v670 = vpop.f32.mrb[0].mxu0
  %v671 = vadd.f32 %v165, %v670
  %v672 = vpop.f32.mrb[0].mxu0
  %v673 = vpop.f32.mrb[0].mxu0
  %v674 = vadd.f32 %v165, %v673
  %v675 = vpop.f32.mrb[0].mxu0
  %676 = vmatprep.mubr.bf16.mxu0 0
  %677 = vmatmul.mubr.bf16.gmra.mrb[0].mxu0 %v292
  %v678 = vpop.f32.mrb[0].mxu0
  %v679 = vadd.f32 %v165, %v678
  %v680 = vpop.f32.mrb[0].mxu0
  %v681 = vpop.f32.mrb[0].mxu0
  %v682 = vadd.f32 %v165, %v681
  %v683 = vpop.f32.mrb[0].mxu0
  %684 = vmatprep.mubr.bf16.mxu0 0
  %685 = vmatmul.mubr.bf16.gmra.mrb[0].mxu0 %v295
  %v686 = vpop.f32.mrb[0].mxu0
  %v687 = vadd.f32 %v165, %v686
  %v688 = vpop.f32.mrb[0].mxu0
  %v689 = vpop.f32.mrb[0].mxu0
  %v690 = vadd.f32 %v165, %v689
  %v691 = vpop.f32.mrb[0].mxu0
  %692 = vmatprep.mubr.bf16.mxu0 0
  %693 = vmatmul.mubr.bf16.gmra.mrb[0].mxu0 %v298
  %v694 = vpop.f32.mrb[0].mxu0
  %v695 = vadd.f32 %v165, %v694
  %v696 = vpop.f32.mrb[0].mxu0
  %v697 = vpop.f32.mrb[0].mxu0
  %v698 = vadd.f32 %v165, %v697
  %v699 = vpop.f32.mrb[0].mxu0
  %700 = vmatprep.mubr.bf16.mxu0 0
  %701 = vmatmul.mubr.bf16.gmra.mrb[0].mxu0 %v301
  %v702 = vpop.f32.mrb[0].mxu0
  %v703 = vadd.f32 %v165, %v702
  %v704 = vpop.f32.mrb[0].mxu0
  %v705 = vpop.f32.mrb[0].mxu0
  %v706 = vadd.f32 %v165, %v705
  %v707 = vpop.f32.mrb[0].mxu0
  %708 = vmatprep.mubr.bf16.mxu0 0
  %709 = vmatmul.mubr.bf16.gmra.mrb[0].mxu0 %v304
  %v710 = vpop.f32.mrb[0].mxu0
  %v711 = vadd.f32 %v165, %v710
  %v712 = vpop.f32.mrb[0].mxu0
  %v713 = vpop.f32.mrb[0].mxu0
  %v714 = vadd.f32 %v165, %v713
  %v715 = vpop.f32.mrb[0].mxu0
  %716 = vmatprep.mubr.bf16.mxu0 0
  %717 = vmatmul.mubr.bf16.gmra.mrb[0].mxu0 %v307
  %v718 = vpop.f32.mrb[0].mxu0
  %v719 = vadd.f32 %v165, %v718
  %v720 = vpop.f32.mrb[0].mxu0
  %v721 = vpop.f32.mrb[0].mxu0
  %v722 = vadd.f32 %v165, %v721
  %v723 = vpop.f32.mrb[0].mxu0
  %724 = vmatprep.mubr.bf16.mxu0 0
  %725 = vmatmul.mubr.bf16.gmra.mrb[0].mxu0 %v310
  %v726 = vpop.f32.mrb[0].mxu0
  %v727 = vadd.f32 %v165, %v726
  %v728 = vpop.f32.mrb[0].mxu0
  %v729 = vpop.f32.mrb[0].mxu0
  %v730 = vadd.f32 %v165, %v729
  %v731 = vpop.f32.mrb[0].mxu0
  %732 = vdwg.mxu0
  %v733 = vmax.f32 %v351, 0.0
  %v734 = vmax.f32 %v354, 0.0
  %v735 = vmax.f32 %v359, 0.0
  %v736 = vmax.f32 %v362, 0.0
  %v737 = vmax.f32 %v367, 0.0
  %v738 = vmax.f32 %v370, 0.0
  %v739 = vmax.f32 %v375, 0.0
  %v740 = vmax.f32 %v378, 0.0
  %v741 = vmax.f32 %v383, 0.0
  %v742 = vmax.f32 %v386, 0.0
  %v743 = vmax.f32 %v391, 0.0
  %v744 = vmax.f32 %v394, 0.0
  %v745 = vmax.f32 %v399, 0.0
  %v746 = vmax.f32 %v402, 0.0
  %v747 = vmax.f32 %v407, 0.0
  %v748 = vmax.f32 %v410, 0.0
  %v749 = vmax.f32 %v415, 0.0
  %v750 = vmax.f32 %v418, 0.0
  %v751 = vmax.f32 %v423, 0.0
  %v752 = vmax.f32 %v426, 0.0
  %v753 = vmax.f32 %v431, 0.0
  %v754 = vmax.f32 %v434, 0.0
  %v755 = vmax.f32 %v439, 0.0
  %v756 = vmax.f32 %v442, 0.0
  %v757 = vmax.f32 %v447, 0.0
  %v758 = vmax.f32 %v450, 0.0
  %v759 = vmax.f32 %v455, 0.0
  %v760 = vmax.f32 %v458, 0.0
  %v761 = vmax.f32 %v463, 0.0
  %v762 = vmax.f32 %v466, 0.0
  %v763 = vmax.f32 %v471, 0.0
  %v764 = vmax.f32 %v474, 0.0
  %v765 = vmax.f32 %v479, 0.0
  %v766 = vmax.f32 %v482, 0.0
  %v767 = vmax.f32 %v487, 0.0
  %v768 = vmax.f32 %v490, 0.0
  %v769 = vmax.f32 %v495, 0.0
  %v770 = vmax.f32 %v498, 0.0
  %v771 = vmax.f32 %v503, 0.0
  %v772 = vmax.f32 %v506, 0.0
  %v773 = vmax.f32 %v511, 0.0
  %v774 = vmax.f32 %v514, 0.0
  %v775 = vmax.f32 %v519, 0.0
  %v776 = vmax.f32 %v522, 0.0
  %v777 = vmax.f32 %v527, 0.0
  %v778 = vmax.f32 %v530, 0.0
  %v779 = vmax.f32 %v535, 0.0
  %v780 = vmax.f32 %v538, 0.0
  %v781 = vmax.f32 %v543, 0.0
  %v782 = vmax.f32 %v546, 0.0
  %v783 = vmax.f32 %v551, 0.0
  %v784 = vmax.f32 %v554, 0.0
  %v785 = vmax.f32 %v559, 0.0
  %v786 = vmax.f32 %v562, 0.0
  %v787 = vmax.f32 %v567, 0.0
  %v788 = vmax.f32 %v570, 0.0
  %v789 = vmax.f32 %v575, 0.0
  %v790 = vmax.f32 %v578, 0.0
  %v791 = vmax.f32 %v583, 0.0
  %v792 = vmax.f32 %v586, 0.0
  %v793 = vmax.f32 %v591, 0.0
  %v794 = vmax.f32 %v594, 0.0
  %v795 = vmax.f32 %v599, 0.0
  %v796 = vmax.f32 %v602, 0.0
  %v797 = vmax.f32 %v607, 0.0
  %v798 = vmax.f32 %v610, 0.0
  %v799 = vmax.f32 %v615, 0.0
  %v800 = vmax.f32 %v618, 0.0
  %v801 = vmax.f32 %v623, 0.0
  %v802 = vmax.f32 %v626, 0.0
  %v803 = vmax.f32 %v631, 0.0
  %v804 = vmax.f32 %v634, 0.0
  %v805 = vmax.f32 %v639, 0.0
  %v806 = vmax.f32 %v642, 0.0
  %v807 = vmax.f32 %v647, 0.0
  %v808 = vmax.f32 %v650, 0.0
  %v809 = vmax.f32 %v655, 0.0
  %v810 = vmax.f32 %v658, 0.0
  %v811 = vmax.f32 %v663, 0.0
  %v812 = vmax.f32 %v666, 0.0
  %v813 = vmax.f32 %v671, 0.0
  %v814 = vmax.f32 %v674, 0.0
  %v815 = vmax.f32 %v679, 0.0
  %v816 = vmax.f32 %v682, 0.0
  %v817 = vmax.f32 %v687, 0.0
  %v818 = vmax.f32 %v690, 0.0
  %v819 = vmax.f32 %v695, 0.0
  %v820 = vmax.f32 %v698, 0.0
  %v821 = vmax.f32 %v703, 0.0
  %v822 = vmax.f32 %v706, 0.0
  %v823 = vmax.f32 %v711, 0.0
  %v824 = vmax.f32 %v714, 0.0
  %v825 = vmax.f32 %v719, 0.0
  %v826 = vmax.f32 %v722, 0.0
  %v827 = vmax.f32 %v727, 0.0
  %v828 = vmax.f32 %v730, 0.0
  %v829 = vld [vmem:[%s1 + $0x4] sm:$0xf]
  %v830 = vld [vmem:[%s1 + $0x24] sm:$0xf]
  %v831 = vld [vmem:[%s2 + $0x1] sm:$0x1]
  %v832 = vpack.c.bf16 %v734, %v733
  %v833 = vpack.c.bf16 %v736, %v735
  %v834 = vpack.c.bf16 %v738, %v737
  %v835 = vpack.c.bf16 %v740, %v739
  %v836 = vpack.c.bf16 %v742, %v741
  %v837 = vpack.c.bf16 %v744, %v743
  %v838 = vpack.c.bf16 %v746, %v745
  %v839 = vpack.c.bf16 %v748, %v747
  %v840 = vpack.c.bf16 %v750, %v749
  %v841 = vpack.c.bf16 %v752, %v751
  %v842 = vpack.c.bf16 %v754, %v753
  %v843 = vpack.c.bf16 %v756, %v755
  %v844 = vpack.c.bf16 %v758, %v757
  %v845 = vpack.c.bf16 %v760, %v759
  %v846 = vpack.c.bf16 %v762, %v761
  %v847 = vpack.c.bf16 %v764, %v763
  %v848 = vpack.c.bf16 %v766, %v765
  %v849 = vpack.c.bf16 %v768, %v767
  %v850 = vpack.c.bf16 %v770, %v769
  %v851 = vpack.c.bf16 %v772, %v771
  %v852 = vpack.c.bf16 %v774, %v773
  %v853 = vpack.c.bf16 %v776, %v775
  %v854 = vpack.c.bf16 %v778, %v777
  %v855 = vpack.c.bf16 %v780, %v779
  %v856 = vpack.c.bf16 %v782, %v781
  %v857 = vpack.c.bf16 %v784, %v783
  %v858 = vpack.c.bf16 %v786, %v785
  %v859 = vpack.c.bf16 %v788, %v787
  %v860 = vpack.c.bf16 %v790, %v789
  %v861 = vpack.c.bf16 %v792, %v791
  %v862 = vpack.c.bf16 %v794, %v793
  %v863 = vpack.c.bf16 %v796, %v795
  %v864 = vpack.c.bf16 %v798, %v797
  %v865 = vpack.c.bf16 %v800, %v799
  %v866 = vpack.c.bf16 %v802, %v801
  %v867 = vpack.c.bf16 %v804, %v803
  %v868 = vpack.c.bf16 %v806, %v805
  %v869 = vpack.c.bf16 %v808, %v807
  %v870 = vpack.c.bf16 %v810, %v809
  %v871 = vpack.c.bf16 %v812, %v811
  %v872 = vpack.c.bf16 %v814, %v813
  %v873 = vpack.c.bf16 %v816, %v815
  %v874 = vpack.c.bf16 %v818, %v817
  %v875 = vpack.c.bf16 %v820, %v819
  %v876 = vpack.c.bf16 %v822, %v821
  %v877 = vpack.c.bf16 %v824, %v823
  %v878 = vpack.c.bf16 %v826, %v825
  %v879 = vpack.c.bf16 %v828, %v827
  %v881 = vlaneseq
  %v882 = vshrl.u32 %v881, 7
  %v883 = vsub.s32 0, %v882
  %v884 = vrot.slane %v831, %v883
  %v888 = vunpack.c.l.b16 %v829
  %v889 = vunpack.c.l.b16 %v830
  %v890 = vpack.c.b16 %v889, %v888
  %vm892 = vcmask 130048
  %v894 = vsel %vm892, %v832, 0
  %v897 = vsel %vm892, %v833, 0
  %v900 = vsel %vm892, %v834, 0
  %v903 = vsel %vm892, %v835, 0
  %v906 = vsel %vm892, %v836, 0
  %v909 = vsel %vm892, %v837, 0
  %v912 = vsel %vm892, %v838, 0
  %v915 = vsel %vm892, %v839, 0
  %v918 = vsel %vm892, %v840, 0
  %v921 = vsel %vm892, %v841, 0
  %v924 = vsel %vm892, %v842, 0
  %v927 = vsel %vm892, %v843, 0
  %v930 = vsel %vm892, %v844, 0
  %v933 = vsel %vm892, %v845, 0
  %v936 = vsel %vm892, %v846, 0
  %v939 = vsel %vm892, %v847, 0
  %v942 = vsel %vm892, %v848, 0
  %v945 = vsel %vm892, %v849, 0
  %v948 = vsel %vm892, %v850, 0
  %v951 = vsel %vm892, %v851, 0
  %v954 = vsel %vm892, %v852, 0
  %v957 = vsel %vm892, %v853, 0
  %v960 = vsel %vm892, %v854, 0
  %v963 = vsel %vm892, %v855, 0
  %v966 = vsel %vm892, %v856, 0
  %v969 = vsel %vm892, %v857, 0
  %v972 = vsel %vm892, %v858, 0
  %v975 = vsel %vm892, %v859, 0
  %v978 = vsel %vm892, %v860, 0
  %v981 = vsel %vm892, %v861, 0
  %v984 = vsel %vm892, %v862, 0
  %v987 = vsel %vm892, %v863, 0
  %v990 = vsel %vm892, %v864, 0
  %v993 = vsel %vm892, %v865, 0
  %v996 = vsel %vm892, %v866, 0
  %v999 = vsel %vm892, %v867, 0
  %v1002 = vsel %vm892, %v868, 0
  %v1005 = vsel %vm892, %v869, 0
  %v1008 = vsel %vm892, %v870, 0
  %v1011 = vsel %vm892, %v871, 0
  %v1014 = vsel %vm892, %v872, 0
  %v1017 = vsel %vm892, %v873, 0
  %v1020 = vsel %vm892, %v874, 0
  %v1023 = vsel %vm892, %v875, 0
  %v1026 = vsel %vm892, %v876, 0
  %v1029 = vsel %vm892, %v877, 0
  %v1032 = vsel %vm892, %v878, 0
  %v1035 = vsel %vm892, %v879, 0
  %1037 = vmatprep.subr.bf16.mxu0 0
  %1038 = vmatpush1.bf16.msra.mxu0 %v890
  %1039 = vmatprep.subr.bf16.mxu0 0
  %1040 = vmatpush1.bf16.msra.mxu0 0
  %1041 = vmatprep.subr.bf16.mxu0 0
  %1042 = vmatpush1.bf16.msra.mxu0 0
  %1043 = vmatprep.subr.bf16.mxu0 0
  %1044 = vmatpush1.bf16.msra.mxu0 0
  %1045 = vmatprep.subr.bf16.mxu0 0
  %1046 = vmatpush1.bf16.msra.mxu0 0
  %1047 = vmatprep.subr.bf16.mxu0 0
  %1048 = vmatpush1.bf16.msra.mxu0 0
  %1049 = vmatprep.subr.bf16.mxu0 0
  %1050 = vmatpush1.bf16.msra.mxu0 0
  %1051 = vmatprep.subr.bf16.mxu0 0
  %1052 = vmatpush1.bf16.msra.mxu0 0
  %1053 = vmatprep.subr.bf16.mxu0 0
  %1054 = vmatpush1.bf16.msra.mxu0 0
  %1055 = vmatprep.subr.bf16.mxu0 0
  %1056 = vmatpush1.bf16.msra.mxu0 0
  %1057 = vmatprep.subr.bf16.mxu0 0
  %1058 = vmatpush1.bf16.msra.mxu0 0
  %1059 = vmatprep.subr.bf16.mxu0 0
  %1060 = vmatpush1.bf16.msra.mxu0 0
  %1061 = vmatprep.subr.bf16.mxu0 0
  %1062 = vmatpush1.bf16.msra.mxu0 0
  %1063 = vmatprep.subr.bf16.mxu0 0
  %1064 = vmatpush1.bf16.msra.mxu0 0
  %1065 = vmatprep.subr.bf16.mxu0 0
  %1066 = vmatpush1.bf16.msra.mxu0 0
  %1067 = vmatprep.subr.bf16.mxu0 0
  %1068 = vmatpush1.bf16.msra.mxu0 0
  %1069 = vmatprep.mubr.bf16.mxu0 0
  %1070 = vmatmul.mubr.bf16.gmra.mrb[0].mxu0 %v894
  %v1071 = vpop.f32.mrb[0].mxu0
  %v1072 = vadd.f32 %v884, %v1071
  %v1073 = vpop.f32.mrb[0].mxu0
  %v1074 = vpop.f32.mrb[0].mxu0
  %v1075 = vadd.f32 %v884, %v1074
  %v1076 = vpop.f32.mrb[0].mxu0
  %1077 = vmatprep.mubr.bf16.mxu0 0
  %1078 = vmatmul.mubr.bf16.gmra.mrb[0].mxu0 %v897
  %v1079 = vpop.f32.mrb[0].mxu0
  %v1080 = vadd.f32 %v884, %v1079
  %v1081 = vpop.f32.mrb[0].mxu0
  %v1082 = vpop.f32.mrb[0].mxu0
  %v1083 = vadd.f32 %v884, %v1082
  %v1084 = vpop.f32.mrb[0].mxu0
  %1085 = vmatprep.mubr.bf16.mxu0 0
  %1086 = vmatmul.mubr.bf16.gmra.mrb[0].mxu0 %v900
  %v1087 = vpop.f32.mrb[0].mxu0
  %v1088 = vadd.f32 %v884, %v1087
  %v1089 = vpop.f32.mrb[0].mxu0
  %v1090 = vpop.f32.mrb[0].mxu0
  %v1091 = vadd.f32 %v884, %v1090
  %v1092 = vpop.f32.mrb[0].mxu0
  %1093 = vmatprep.mubr.bf16.mxu0 0
  %1094 = vmatmul.mubr.bf16.gmra.mrb[0].mxu0 %v903
  %v1095 = vpop.f32.mrb[0].mxu0
  %v1096 = vadd.f32 %v884, %v1095
  %v1097 = vpop.f32.mrb[0].mxu0
  %v1098 = vpop.f32.mrb[0].mxu0
  %v1099 = vadd.f32 %v884, %v1098
  %v1100 = vpop.f32.mrb[0].mxu0
  %1101 = vmatprep.mubr.bf16.mxu0 0
  %1102 = vmatmul.mubr.bf16.gmra.mrb[0].mxu0 %v906
  %v1103 = vpop.f32.mrb[0].mxu0
  %v1104 = vadd.f32 %v884, %v1103
  %v1105 = vpop.f32.mrb[0].mxu0
  %v1106 = vpop.f32.mrb[0].mxu0
  %v1107 = vadd.f32 %v884, %v1106
  %v1108 = vpop.f32.mrb[0].mxu0
  %1109 = vmatprep.mubr.bf16.mxu0 0
  %1110 = vmatmul.mubr.bf16.gmra.mrb[0].mxu0 %v909
  %v1111 = vpop.f32.mrb[0].mxu0
  %v1112 = vadd.f32 %v884, %v1111
  %v1113 = vpop.f32.mrb[0].mxu0
  %v1114 = vpop.f32.mrb[0].mxu0
  %v1115 = vadd.f32 %v884, %v1114
  %v1116 = vpop.f32.mrb[0].mxu0
  %1117 = vmatprep.mubr.bf16.mxu0 0
  %1118 = vmatmul.mubr.bf16.gmra.mrb[0].mxu0 %v912
  %v1119 = vpop.f32.mrb[0].mxu0
  %v1120 = vadd.f32 %v884, %v1119
  %v1121 = vpop.f32.mrb[0].mxu0
  %v1122 = vpop.f32.mrb[0].mxu0
  %v1123 = vadd.f32 %v884, %v1122
  %v1124 = vpop.f32.mrb[0].mxu0
  %1125 = vmatprep.mubr.bf16.mxu0 0
  %1126 = vmatmul.mubr.bf16.gmra.mrb[0].mxu0 %v915
  %v1127 = vpop.f32.mrb[0].mxu0
  %v1128 = vadd.f32 %v884, %v1127
  %v1129 = vpop.f32.mrb[0].mxu0
  %v1130 = vpop.f32.mrb[0].mxu0
  %v1131 = vadd.f32 %v884, %v1130
  %v1132 = vpop.f32.mrb[0].mxu0
  %1133 = vmatprep.mubr.bf16.mxu0 0
  %1134 = vmatmul.mubr.bf16.gmra.mrb[0].mxu0 %v918
  %v1135 = vpop.f32.mrb[0].mxu0
  %v1136 = vadd.f32 %v884, %v1135
  %v1137 = vpop.f32.mrb[0].mxu0
  %v1138 = vpop.f32.mrb[0].mxu0
  %v1139 = vadd.f32 %v884, %v1138
  %v1140 = vpop.f32.mrb[0].mxu0
  %1141 = vmatprep.mubr.bf16.mxu0 0
  %1142 = vmatmul.mubr.bf16.gmra.mrb[0].mxu0 %v921
  %v1143 = vpop.f32.mrb[0].mxu0
  %v1144 = vadd.f32 %v884, %v1143
  %v1145 = vpop.f32.mrb[0].mxu0
  %v1146 = vpop.f32.mrb[0].mxu0
  %v1147 = vadd.f32 %v884, %v1146
  %v1148 = vpop.f32.mrb[0].mxu0
  %1149 = vmatprep.mubr.bf16.mxu0 0
  %1150 = vmatmul.mubr.bf16.gmra.mrb[0].mxu0 %v924
  %v1151 = vpop.f32.mrb[0].mxu0
  %v1152 = vadd.f32 %v884, %v1151
  %v1153 = vpop.f32.mrb[0].mxu0
  %v1154 = vpop.f32.mrb[0].mxu0
  %v1155 = vadd.f32 %v884, %v1154
  %v1156 = vpop.f32.mrb[0].mxu0
  %1157 = vmatprep.mubr.bf16.mxu0 0
  %1158 = vmatmul.mubr.bf16.gmra.mrb[0].mxu0 %v927
  %v1159 = vpop.f32.mrb[0].mxu0
  %v1160 = vadd.f32 %v884, %v1159
  %v1161 = vpop.f32.mrb[0].mxu0
  %v1162 = vpop.f32.mrb[0].mxu0
  %v1163 = vadd.f32 %v884, %v1162
  %v1164 = vpop.f32.mrb[0].mxu0
  %1165 = vmatprep.mubr.bf16.mxu0 0
  %1166 = vmatmul.mubr.bf16.gmra.mrb[0].mxu0 %v930
  %v1167 = vpop.f32.mrb[0].mxu0
  %v1168 = vadd.f32 %v884, %v1167
  %v1169 = vpop.f32.mrb[0].mxu0
  %v1170 = vpop.f32.mrb[0].mxu0
  %v1171 = vadd.f32 %v884, %v1170
  %v1172 = vpop.f32.mrb[0].mxu0
  %1173 = vmatprep.mubr.bf16.mxu0 0
  %1174 = vmatmul.mubr.bf16.gmra.mrb[0].mxu0 %v933
  %v1175 = vpop.f32.mrb[0].mxu0
  %v1176 = vadd.f32 %v884, %v1175
  %v1177 = vpop.f32.mrb[0].mxu0
  %v1178 = vpop.f32.mrb[0].mxu0
  %v1179 = vadd.f32 %v884, %v1178
  %v1180 = vpop.f32.mrb[0].mxu0
  %1181 = vmatprep.mubr.bf16.mxu0 0
  %1182 = vmatmul.mubr.bf16.gmra.mrb[0].mxu0 %v936
  %v1183 = vpop.f32.mrb[0].mxu0
  %v1184 = vadd.f32 %v884, %v1183
  %v1185 = vpop.f32.mrb[0].mxu0
  %v1186 = vpop.f32.mrb[0].mxu0
  %v1187 = vadd.f32 %v884, %v1186
  %v1188 = vpop.f32.mrb[0].mxu0
  %1189 = vmatprep.mubr.bf16.mxu0 0
  %1190 = vmatmul.mubr.bf16.gmra.mrb[0].mxu0 %v939
  %v1191 = vpop.f32.mrb[0].mxu0
  %v1192 = vadd.f32 %v884, %v1191
  %v1193 = vpop.f32.mrb[0].mxu0
  %v1194 = vpop.f32.mrb[0].mxu0
  %v1195 = vadd.f32 %v884, %v1194
  %v1196 = vpop.f32.mrb[0].mxu0
  %1197 = vmatprep.mubr.bf16.mxu0 0
  %1198 = vmatmul.mubr.bf16.gmra.mrb[0].mxu0 %v942
  %v1199 = vpop.f32.mrb[0].mxu0
  %v1200 = vadd.f32 %v884, %v1199
  %v1201 = vpop.f32.mrb[0].mxu0
  %v1202 = vpop.f32.mrb[0].mxu0
  %v1203 = vadd.f32 %v884, %v1202
  %v1204 = vpop.f32.mrb[0].mxu0
  %1205 = vmatprep.mubr.bf16.mxu0 0
  %1206 = vmatmul.mubr.bf16.gmra.mrb[0].mxu0 %v945
  %v1207 = vpop.f32.mrb[0].mxu0
  %v1208 = vadd.f32 %v884, %v1207
  %v1209 = vpop.f32.mrb[0].mxu0
  %v1210 = vpop.f32.mrb[0].mxu0
  %v1211 = vadd.f32 %v884, %v1210
  %v1212 = vpop.f32.mrb[0].mxu0
  %1213 = vmatprep.mubr.bf16.mxu0 0
  %1214 = vmatmul.mubr.bf16.gmra.mrb[0].mxu0 %v948
  %v1215 = vpop.f32.mrb[0].mxu0
  %v1216 = vadd.f32 %v884, %v1215
  %v1217 = vpop.f32.mrb[0].mxu0
  %v1218 = vpop.f32.mrb[0].mxu0
  %v1219 = vadd.f32 %v884, %v1218
  %v1220 = vpop.f32.mrb[0].mxu0
  %1221 = vmatprep.mubr.bf16.mxu0 0
  %1222 = vmatmul.mubr.bf16.gmra.mrb[0].mxu0 %v951
  %v1223 = vpop.f32.mrb[0].mxu0
  %v1224 = vadd.f32 %v884, %v1223
  %v1225 = vpop.f32.mrb[0].mxu0
  %v1226 = vpop.f32.mrb[0].mxu0
  %v1227 = vadd.f32 %v884, %v1226
  %v1228 = vpop.f32.mrb[0].mxu0
  %1229 = vmatprep.mubr.bf16.mxu0 0
  %1230 = vmatmul.mubr.bf16.gmra.mrb[0].mxu0 %v954
  %v1231 = vpop.f32.mrb[0].mxu0
  %v1232 = vadd.f32 %v884, %v1231
  %v1233 = vpop.f32.mrb[0].mxu0
  %v1234 = vpop.f32.mrb[0].mxu0
  %v1235 = vadd.f32 %v884, %v1234
  %v1236 = vpop.f32.mrb[0].mxu0
  %1237 = vmatprep.mubr.bf16.mxu0 0
  %1238 = vmatmul.mubr.bf16.gmra.mrb[0].mxu0 %v957
  %v1239 = vpop.f32.mrb[0].mxu0
  %v1240 = vadd.f32 %v884, %v1239
  %v1241 = vpop.f32.mrb[0].mxu0
  %v1242 = vpop.f32.mrb[0].mxu0
  %v1243 = vadd.f32 %v884, %v1242
  %v1244 = vpop.f32.mrb[0].mxu0
  %1245 = vmatprep.mubr.bf16.mxu0 0
  %1246 = vmatmul.mubr.bf16.gmra.mrb[0].mxu0 %v960
  %v1247 = vpop.f32.mrb[0].mxu0
  %v1248 = vadd.f32 %v884, %v1247
  %v1249 = vpop.f32.mrb[0].mxu0
  %v1250 = vpop.f32.mrb[0].mxu0
  %v1251 = vadd.f32 %v884, %v1250
  %v1252 = vpop.f32.mrb[0].mxu0
  %1253 = vmatprep.mubr.bf16.mxu0 0
  %1254 = vmatmul.mubr.bf16.gmra.mrb[0].mxu0 %v963
  %v1255 = vpop.f32.mrb[0].mxu0
  %v1256 = vadd.f32 %v884, %v1255
  %v1257 = vpop.f32.mrb[0].mxu0
  %v1258 = vpop.f32.mrb[0].mxu0
  %v1259 = vadd.f32 %v884, %v1258
  %v1260 = vpop.f32.mrb[0].mxu0
  %1261 = vmatprep.mubr.bf16.mxu0 0
  %1262 = vmatmul.mubr.bf16.gmra.mrb[0].mxu0 %v966
  %v1263 = vpop.f32.mrb[0].mxu0
  %v1264 = vadd.f32 %v884, %v1263
  %v1265 = vpop.f32.mrb[0].mxu0
  %v1266 = vpop.f32.mrb[0].mxu0
  %v1267 = vadd.f32 %v884, %v1266
  %v1268 = vpop.f32.mrb[0].mxu0
  %1269 = vmatprep.mubr.bf16.mxu0 0
  %1270 = vmatmul.mubr.bf16.gmra.mrb[0].mxu0 %v969
  %v1271 = vpop.f32.mrb[0].mxu0
  %v1272 = vadd.f32 %v884, %v1271
  %v1273 = vpop.f32.mrb[0].mxu0
  %v1274 = vpop.f32.mrb[0].mxu0
  %v1275 = vadd.f32 %v884, %v1274
  %v1276 = vpop.f32.mrb[0].mxu0
  %1277 = vmatprep.mubr.bf16.mxu0 0
  %1278 = vmatmul.mubr.bf16.gmra.mrb[0].mxu0 %v972
  %v1279 = vpop.f32.mrb[0].mxu0
  %v1280 = vadd.f32 %v884, %v1279
  %v1281 = vpop.f32.mrb[0].mxu0
  %v1282 = vpop.f32.mrb[0].mxu0
  %v1283 = vadd.f32 %v884, %v1282
  %v1284 = vpop.f32.mrb[0].mxu0
  %1285 = vmatprep.mubr.bf16.mxu0 0
  %1286 = vmatmul.mubr.bf16.gmra.mrb[0].mxu0 %v975
  %v1287 = vpop.f32.mrb[0].mxu0
  %v1288 = vadd.f32 %v884, %v1287
  %v1289 = vpop.f32.mrb[0].mxu0
  %v1290 = vpop.f32.mrb[0].mxu0
  %v1291 = vadd.f32 %v884, %v1290
  %v1292 = vpop.f32.mrb[0].mxu0
  %1293 = vmatprep.mubr.bf16.mxu0 0
  %1294 = vmatmul.mubr.bf16.gmra.mrb[0].mxu0 %v978
  %v1295 = vpop.f32.mrb[0].mxu0
  %v1296 = vadd.f32 %v884, %v1295
  %v1297 = vpop.f32.mrb[0].mxu0
  %v1298 = vpop.f32.mrb[0].mxu0
  %v1299 = vadd.f32 %v884, %v1298
  %v1300 = vpop.f32.mrb[0].mxu0
  %1301 = vmatprep.mubr.bf16.mxu0 0
  %1302 = vmatmul.mubr.bf16.gmra.mrb[0].mxu0 %v981
  %v1303 = vpop.f32.mrb[0].mxu0
  %v1304 = vadd.f32 %v884, %v1303
  %v1305 = vpop.f32.mrb[0].mxu0
  %v1306 = vpop.f32.mrb[0].mxu0
  %v1307 = vadd.f32 %v884, %v1306
  %v1308 = vpop.f32.mrb[0].mxu0
  %1309 = vmatprep.mubr.bf16.mxu0 0
  %1310 = vmatmul.mubr.bf16.gmra.mrb[0].mxu0 %v984
  %v1311 = vpop.f32.mrb[0].mxu0
  %v1312 = vadd.f32 %v884, %v1311
  %v1313 = vpop.f32.mrb[0].mxu0
  %v1314 = vpop.f32.mrb[0].mxu0
  %v1315 = vadd.f32 %v884, %v1314
  %v1316 = vpop.f32.mrb[0].mxu0
  %1317 = vmatprep.mubr.bf16.mxu0 0
  %1318 = vmatmul.mubr.bf16.gmra.mrb[0].mxu0 %v987
  %v1319 = vpop.f32.mrb[0].mxu0
  %v1320 = vadd.f32 %v884, %v1319
  %v1321 = vpop.f32.mrb[0].mxu0
  %v1322 = vpop.f32.mrb[0].mxu0
  %v1323 = vadd.f32 %v884, %v1322
  %v1324 = vpop.f32.mrb[0].mxu0
  %1325 = vmatprep.mubr.bf16.mxu0 0
  %1326 = vmatmul.mubr.bf16.gmra.mrb[0].mxu0 %v990
  %v1327 = vpop.f32.mrb[0].mxu0
  %v1328 = vadd.f32 %v884, %v1327
  %v1329 = vpop.f32.mrb[0].mxu0
  %v1330 = vpop.f32.mrb[0].mxu0
  %v1331 = vadd.f32 %v884, %v1330
  %v1332 = vpop.f32.mrb[0].mxu0
  %1333 = vmatprep.mubr.bf16.mxu0 0
  %1334 = vmatmul.mubr.bf16.gmra.mrb[0].mxu0 %v993
  %v1335 = vpop.f32.mrb[0].mxu0
  %v1336 = vadd.f32 %v884, %v1335
  %v1337 = vpop.f32.mrb[0].mxu0
  %v1338 = vpop.f32.mrb[0].mxu0
  %v1339 = vadd.f32 %v884, %v1338
  %v1340 = vpop.f32.mrb[0].mxu0
  %1341 = vmatprep.mubr.bf16.mxu0 0
  %1342 = vmatmul.mubr.bf16.gmra.mrb[0].mxu0 %v996
  %v1343 = vpop.f32.mrb[0].mxu0
  %v1344 = vadd.f32 %v884, %v1343
  %v1345 = vpop.f32.mrb[0].mxu0
  %v1346 = vpop.f32.mrb[0].mxu0
  %v1347 = vadd.f32 %v884, %v1346
  %v1348 = vpop.f32.mrb[0].mxu0
  %1349 = vmatprep.mubr.bf16.mxu0 0
  %1350 = vmatmul.mubr.bf16.gmra.mrb[0].mxu0 %v999
  %v1351 = vpop.f32.mrb[0].mxu0
  %v1352 = vadd.f32 %v884, %v1351
  %v1353 = vpop.f32.mrb[0].mxu0
  %v1354 = vpop.f32.mrb[0].mxu0
  %v1355 = vadd.f32 %v884, %v1354
  %v1356 = vpop.f32.mrb[0].mxu0
  %1357 = vmatprep.mubr.bf16.mxu0 0
  %1358 = vmatmul.mubr.bf16.gmra.mrb[0].mxu0 %v1002
  %v1359 = vpop.f32.mrb[0].mxu0
  %v1360 = vadd.f32 %v884, %v1359
  %v1361 = vpop.f32.mrb[0].mxu0
  %v1362 = vpop.f32.mrb[0].mxu0
  %v1363 = vadd.f32 %v884, %v1362
  %v1364 = vpop.f32.mrb[0].mxu0
  %1365 = vmatprep.mubr.bf16.mxu0 0
  %1366 = vmatmul.mubr.bf16.gmra.mrb[0].mxu0 %v1005
  %v1367 = vpop.f32.mrb[0].mxu0
  %v1368 = vadd.f32 %v884, %v1367
  %v1369 = vpop.f32.mrb[0].mxu0
  %v1370 = vpop.f32.mrb[0].mxu0
  %v1371 = vadd.f32 %v884, %v1370
  %v1372 = vpop.f32.mrb[0].mxu0
  %1373 = vmatprep.mubr.bf16.mxu0 0
  %1374 = vmatmul.mubr.bf16.gmra.mrb[0].mxu0 %v1008
  %v1375 = vpop.f32.mrb[0].mxu0
  %v1376 = vadd.f32 %v884, %v1375
  %v1377 = vpop.f32.mrb[0].mxu0
  %v1378 = vpop.f32.mrb[0].mxu0
  %v1379 = vadd.f32 %v884, %v1378
  %v1380 = vpop.f32.mrb[0].mxu0
  %1381 = vmatprep.mubr.bf16.mxu0 0
  %1382 = vmatmul.mubr.bf16.gmra.mrb[0].mxu0 %v1011
  %v1383 = vpop.f32.mrb[0].mxu0
  %v1384 = vadd.f32 %v884, %v1383
  %v1385 = vpop.f32.mrb[0].mxu0
  %v1386 = vpop.f32.mrb[0].mxu0
  %v1387 = vadd.f32 %v884, %v1386
  %v1388 = vpop.f32.mrb[0].mxu0
  %1389 = vmatprep.mubr.bf16.mxu0 0
  %1390 = vmatmul.mubr.bf16.gmra.mrb[0].mxu0 %v1014
  %v1391 = vpop.f32.mrb[0].mxu0
  %v1392 = vadd.f32 %v884, %v1391
  %v1393 = vpop.f32.mrb[0].mxu0
  %v1394 = vpop.f32.mrb[0].mxu0
  %v1395 = vadd.f32 %v884, %v1394
  %v1396 = vpop.f32.mrb[0].mxu0
  %1397 = vmatprep.mubr.bf16.mxu0 0
  %1398 = vmatmul.mubr.bf16.gmra.mrb[0].mxu0 %v1017
  %v1399 = vpop.f32.mrb[0].mxu0
  %v1400 = vadd.f32 %v884, %v1399
  %v1401 = vpop.f32.mrb[0].mxu0
  %v1402 = vpop.f32.mrb[0].mxu0
  %v1403 = vadd.f32 %v884, %v1402
  %v1404 = vpop.f32.mrb[0].mxu0
  %1405 = vmatprep.mubr.bf16.mxu0 0
  %1406 = vmatmul.mubr.bf16.gmra.mrb[0].mxu0 %v1020
  %v1407 = vpop.f32.mrb[0].mxu0
  %v1408 = vadd.f32 %v884, %v1407
  %v1409 = vpop.f32.mrb[0].mxu0
  %v1410 = vpop.f32.mrb[0].mxu0
  %v1411 = vadd.f32 %v884, %v1410
  %v1412 = vpop.f32.mrb[0].mxu0
  %1413 = vmatprep.mubr.bf16.mxu0 0
  %1414 = vmatmul.mubr.bf16.gmra.mrb[0].mxu0 %v1023
  %v1415 = vpop.f32.mrb[0].mxu0
  %v1416 = vadd.f32 %v884, %v1415
  %v1417 = vpop.f32.mrb[0].mxu0
  %v1418 = vpop.f32.mrb[0].mxu0
  %v1419 = vadd.f32 %v884, %v1418
  %v1420 = vpop.f32.mrb[0].mxu0
  %1421 = vmatprep.mubr.bf16.mxu0 0
  %1422 = vmatmul.mubr.bf16.gmra.mrb[0].mxu0 %v1026
  %v1423 = vpop.f32.mrb[0].mxu0
  %v1424 = vadd.f32 %v884, %v1423
  %v1425 = vpop.f32.mrb[0].mxu0
  %v1426 = vpop.f32.mrb[0].mxu0
  %v1427 = vadd.f32 %v884, %v1426
  %v1428 = vpop.f32.mrb[0].mxu0
  %1429 = vmatprep.mubr.bf16.mxu0 0
  %1430 = vmatmul.mubr.bf16.gmra.mrb[0].mxu0 %v1029
  %v1431 = vpop.f32.mrb[0].mxu0
  %v1432 = vadd.f32 %v884, %v1431
  %v1433 = vpop.f32.mrb[0].mxu0
  %v1434 = vpop.f32.mrb[0].mxu0
  %v1435 = vadd.f32 %v884, %v1434
  %v1436 = vpop.f32.mrb[0].mxu0
  %1437 = vmatprep.mubr.bf16.mxu0 0
  %1438 = vmatmul.mubr.bf16.gmra.mrb[0].mxu0 %v1032
  %v1439 = vpop.f32.mrb[0].mxu0
  %v1440 = vadd.f32 %v884, %v1439
  %v1441 = vpop.f32.mrb[0].mxu0
  %v1442 = vpop.f32.mrb[0].mxu0
  %v1443 = vadd.f32 %v884, %v1442
  %v1444 = vpop.f32.mrb[0].mxu0
  %1445 = vmatprep.mubr.bf16.mxu0 0
  %1446 = vmatmul.mubr.bf16.gmra.mrb[0].mxu0 %v1035
  %v1447 = vpop.f32.mrb[0].mxu0
  %v1448 = vadd.f32 %v884, %v1447
  %v1449 = vpop.f32.mrb[0].mxu0
  %v1450 = vpop.f32.mrb[0].mxu0
  %v1451 = vadd.f32 %v884, %v1450
  %v1452 = vpop.f32.mrb[0].mxu0
  %1453 = vdwg.mxu0
  %v1454 = vmax.f32 %v1072, 0.0
  %v1455 = vmax.f32 %v1075, 0.0
  %v1456 = vmax.f32 %v1080, 0.0
  %v1457 = vmax.f32 %v1083, 0.0
  %v1458 = vmax.f32 %v1088, 0.0
  %v1459 = vmax.f32 %v1091, 0.0
  %v1460 = vmax.f32 %v1096, 0.0
  %v1461 = vmax.f32 %v1099, 0.0
  %v1462 = vmax.f32 %v1104, 0.0
  %v1463 = vmax.f32 %v1107, 0.0
  %v1464 = vmax.f32 %v1112, 0.0
  %v1465 = vmax.f32 %v1115, 0.0
  %v1466 = vmax.f32 %v1120, 0.0
  %v1467 = vmax.f32 %v1123, 0.0
  %v1468 = vmax.f32 %v1128, 0.0
  %v1469 = vmax.f32 %v1131, 0.0
  %v1470 = vmax.f32 %v1136, 0.0
  %v1471 = vmax.f32 %v1139, 0.0
  %v1472 = vmax.f32 %v1144, 0.0
  %v1473 = vmax.f32 %v1147, 0.0
  %v1474 = vmax.f32 %v1152, 0.0
  %v1475 = vmax.f32 %v1155, 0.0
  %v1476 = vmax.f32 %v1160, 0.0
  %v1477 = vmax.f32 %v1163, 0.0
  %v1478 = vmax.f32 %v1168, 0.0
  %v1479 = vmax.f32 %v1171, 0.0
  %v1480 = vmax.f32 %v1176, 0.0
  %v1481 = vmax.f32 %v1179, 0.0
  %v1482 = vmax.f32 %v1184, 0.0
  %v1483 = vmax.f32 %v1187, 0.0
  %v1484 = vmax.f32 %v1192, 0.0
  %v1485 = vmax.f32 %v1195, 0.0
  %v1486 = vmax.f32 %v1200, 0.0
  %v1487 = vmax.f32 %v1203, 0.0
  %v1488 = vmax.f32 %v1208, 0.0
  %v1489 = vmax.f32 %v1211, 0.0
  %v1490 = vmax.f32 %v1216, 0.0
  %v1491 = vmax.f32 %v1219, 0.0
  %v1492 = vmax.f32 %v1224, 0.0
  %v1493 = vmax.f32 %v1227, 0.0
  %v1494 = vmax.f32 %v1232, 0.0
  %v1495 = vmax.f32 %v1235, 0.0
  %v1496 = vmax.f32 %v1240, 0.0
  %v1497 = vmax.f32 %v1243, 0.0
  %v1498 = vmax.f32 %v1248, 0.0
  %v1499 = vmax.f32 %v1251, 0.0
  %v1500 = vmax.f32 %v1256, 0.0
  %v1501 = vmax.f32 %v1259, 0.0
  %v1502 = vmax.f32 %v1264, 0.0
  %v1503 = vmax.f32 %v1267, 0.0
  %v1504 = vmax.f32 %v1272, 0.0
  %v1505 = vmax.f32 %v1275, 0.0
  %v1506 = vmax.f32 %v1280, 0.0
  %v1507 = vmax.f32 %v1283, 0.0
  %v1508 = vmax.f32 %v1288, 0.0
  %v1509 = vmax.f32 %v1291, 0.0
  %v1510 = vmax.f32 %v1296, 0.0
  %v1511 = vmax.f32 %v1299, 0.0
  %v1512 = vmax.f32 %v1304, 0.0
  %v1513 = vmax.f32 %v1307, 0.0
  %v1514 = vmax.f32 %v1312, 0.0
  %v1515 = vmax.f32 %v1315, 0.0
  %v1516 = vmax.f32 %v1320, 0.0
  %v1517 = vmax.f32 %v1323, 0.0
  %v1518 = vmax.f32 %v1328, 0.0
  %v1519 = vmax.f32 %v1331, 0.0
  %v1520 = vmax.f32 %v1336, 0.0
  %v1521 = vmax.f32 %v1339, 0.0
  %v1522 = vmax.f32 %v1344, 0.0
  %v1523 = vmax.f32 %v1347, 0.0
  %v1524 = vmax.f32 %v1352, 0.0
  %v1525 = vmax.f32 %v1355, 0.0
  %v1526 = vmax.f32 %v1360, 0.0
  %v1527 = vmax.f32 %v1363, 0.0
  %v1528 = vmax.f32 %v1368, 0.0
  %v1529 = vmax.f32 %v1371, 0.0
  %v1530 = vmax.f32 %v1376, 0.0
  %v1531 = vmax.f32 %v1379, 0.0
  %v1532 = vmax.f32 %v1384, 0.0
  %v1533 = vmax.f32 %v1387, 0.0
  %v1534 = vmax.f32 %v1392, 0.0
  %v1535 = vmax.f32 %v1395, 0.0
  %v1536 = vmax.f32 %v1400, 0.0
  %v1537 = vmax.f32 %v1403, 0.0
  %v1538 = vmax.f32 %v1408, 0.0
  %v1539 = vmax.f32 %v1411, 0.0
  %v1540 = vmax.f32 %v1416, 0.0
  %v1541 = vmax.f32 %v1419, 0.0
  %v1542 = vmax.f32 %v1424, 0.0
  %v1543 = vmax.f32 %v1427, 0.0
  %v1544 = vmax.f32 %v1432, 0.0
  %v1545 = vmax.f32 %v1435, 0.0
  %v1546 = vmax.f32 %v1440, 0.0
  %v1547 = vmax.f32 %v1443, 0.0
  %v1548 = vmax.f32 %v1448, 0.0
  %v1549 = vmax.f32 %v1451, 0.0
  %v1550 = vld [vmem:[%s1 + $0x8] sm:$0xf]
  %v1551 = vld [vmem:[%s1 + $0x28] sm:$0xf]
  %v1552 = vld [vmem:[%s2 + $0x2] sm:$0x1]
  %v1553 = vpack.c.bf16 %v1455, %v1454
  %v1554 = vpack.c.bf16 %v1457, %v1456
  %v1555 = vpack.c.bf16 %v1459, %v1458
  %v1556 = vpack.c.bf16 %v1461, %v1460
  %v1557 = vpack.c.bf16 %v1463, %v1462
  %v1558 = vpack.c.bf16 %v1465, %v1464
  %v1559 = vpack.c.bf16 %v1467, %v1466
  %v1560 = vpack.c.bf16 %v1469, %v1468
  %v1561 = vpack.c.bf16 %v1471, %v1470
  %v1562 = vpack.c.bf16 %v1473, %v1472
  %v1563 = vpack.c.bf16 %v1475, %v1474
  %v1564 = vpack.c.bf16 %v1477, %v1476
  %v1565 = vpack.c.bf16 %v1479, %v1478
  %v1566 = vpack.c.bf16 %v1481, %v1480
  %v1567 = vpack.c.bf16 %v1483, %v1482
  %v1568 = vpack.c.bf16 %v1485, %v1484
  %v1569 = vpack.c.bf16 %v1487, %v1486
  %v1570 = vpack.c.bf16 %v1489, %v1488
  %v1571 = vpack.c.bf16 %v1491, %v1490
  %v1572 = vpack.c.bf16 %v1493, %v1492
  %v1573 = vpack.c.bf16 %v1495, %v1494
  %v1574 = vpack.c.bf16 %v1497, %v1496
  %v1575 = vpack.c.bf16 %v1499, %v1498
  %v1576 = vpack.c.bf16 %v1501, %v1500
  %v1577 = vpack.c.bf16 %v1503, %v1502
  %v1578 = vpack.c.bf16 %v1505, %v1504
  %v1579 = vpack.c.bf16 %v1507, %v1506
  %v1580 = vpack.c.bf16 %v1509, %v1508
  %v1581 = vpack.c.bf16 %v1511, %v1510
  %v1582 = vpack.c.bf16 %v1513, %v1512
  %v1583 = vpack.c.bf16 %v1515, %v1514
  %v1584 = vpack.c.bf16 %v1517, %v1516
  %v1585 = vpack.c.bf16 %v1519, %v1518
  %v1586 = vpack.c.bf16 %v1521, %v1520
  %v1587 = vpack.c.bf16 %v1523, %v1522
  %v1588 = vpack.c.bf16 %v1525, %v1524
  %v1589 = vpack.c.bf16 %v1527, %v1526
  %v1590 = vpack.c.bf16 %v1529, %v1528
  %v1591 = vpack.c.bf16 %v1531, %v1530
  %v1592 = vpack.c.bf16 %v1533, %v1532
  %v1593 = vpack.c.bf16 %v1535, %v1534
  %v1594 = vpack.c.bf16 %v1537, %v1536
  %v1595 = vpack.c.bf16 %v1539, %v1538
  %v1596 = vpack.c.bf16 %v1541, %v1540
  %v1597 = vpack.c.bf16 %v1543, %v1542
  %v1598 = vpack.c.bf16 %v1545, %v1544
  %v1599 = vpack.c.bf16 %v1547, %v1546
  %v1600 = vpack.c.bf16 %v1549, %v1548
  %v1602 = vlaneseq
  %v1603 = vshrl.u32 %v1602, 7
  %v1604 = vsub.s32 0, %v1603
  %v1605 = vrot.slane %v1552, %v1604
  %v1609 = vunpack.c.l.b16 %v1550
  %v1610 = vunpack.c.l.b16 %v1551
  %v1611 = vpack.c.b16 %v1610, %v1609
  %v1614 = vsel %vm892, %v1553, 0
  %v1617 = vsel %vm892, %v1554, 0
  %v1620 = vsel %vm892, %v1555, 0
  %v1623 = vsel %vm892, %v1556, 0
  %v1626 = vsel %vm892, %v1557, 0
  %v1629 = vsel %vm892, %v1558, 0
  %v1632 = vsel %vm892, %v1559, 0
  %v1635 = vsel %vm892, %v1560, 0
  %v1638 = vsel %vm892, %v1561, 0
  %v1641 = vsel %vm892, %v1562, 0
  %v1644 = vsel %vm892, %v1563, 0
  %v1647 = vsel %vm892, %v1564, 0
  %v1650 = vsel %vm892, %v1565, 0
  %v1653 = vsel %vm892, %v1566, 0
  %v1656 = vsel %vm892, %v1567, 0
  %v1659 = vsel %vm892, %v1568, 0
  %v1662 = vsel %vm892, %v1569, 0
  %v1665 = vsel %vm892, %v1570, 0
  %v1668 = vsel %vm892, %v1571, 0
  %v1671 = vsel %vm892, %v1572, 0
  %v1674 = vsel %vm892, %v1573, 0
  %v1677 = vsel %vm892, %v1574, 0
  %v1680 = vsel %vm892, %v1575, 0
  %v1683 = vsel %vm892, %v1576, 0
  %v1686 = vsel %vm892, %v1577, 0
  %v1689 = vsel %vm892, %v1578, 0
  %v1692 = vsel %vm892, %v1579, 0
  %v1695 = vsel %vm892, %v1580, 0
  %v1698 = vsel %vm892, %v1581, 0
  %v1701 = vsel %vm892, %v1582, 0
  %v1704 = vsel %vm892, %v1583, 0
  %v1707 = vsel %vm892, %v1584, 0
  %v1710 = vsel %vm892, %v1585, 0
  %v1713 = vsel %vm892, %v1586, 0
  %v1716 = vsel %vm892, %v1587, 0
  %v1719 = vsel %vm892, %v1588, 0
  %v1722 = vsel %vm892, %v1589, 0
  %v1725 = vsel %vm892, %v1590, 0
  %v1728 = vsel %vm892, %v1591, 0
  %v1731 = vsel %vm892, %v1592, 0
  %v1734 = vsel %vm892, %v1593, 0
  %v1737 = vsel %vm892, %v1594, 0
  %v1740 = vsel %vm892, %v1595, 0
  %v1743 = vsel %vm892, %v1596, 0
  %v1746 = vsel %vm892, %v1597, 0
  %v1749 = vsel %vm892, %v1598, 0
  %v1752 = vsel %vm892, %v1599, 0
  %v1755 = vsel %vm892, %v1600, 0
  %1757 = vmatprep.subr.bf16.mxu0 0
  %1758 = vmatpush1.bf16.msra.mxu0 %v1611
  %1759 = vmatprep.subr.bf16.mxu0 0
  %1760 = vmatpush1.bf16.msra.mxu0 0
  %1761 = vmatprep.subr.bf16.mxu0 0
  %1762 = vmatpush1.bf16.msra.mxu0 0
  %1763 = vmatprep.subr.bf16.mxu0 0
  %1764 = vmatpush1.bf16.msra.mxu0 0
  %1765 = vmatprep.subr.bf16.mxu0 0
  %1766 = vmatpush1.bf16.msra.mxu0 0
  %1767 = vmatprep.subr.bf16.mxu0 0
  %1768 = vmatpush1.bf16.msra.mxu0 0
  %1769 = vmatprep.subr.bf16.mxu0 0
  %1770 = vmatpush1.bf16.msra.mxu0 0
  %1771 = vmatprep.subr.bf16.mxu0 0
  %1772 = vmatpush1.bf16.msra.mxu0 0
  %1773 = vmatprep.subr.bf16.mxu0 0
  %1774 = vmatpush1.bf16.msra.mxu0 0
  %1775 = vmatprep.subr.bf16.mxu0 0
  %1776 = vmatpush1.bf16.msra.mxu0 0
  %1777 = vmatprep.subr.bf16.mxu0 0
  %1778 = vmatpush1.bf16.msra.mxu0 0
  %1779 = vmatprep.subr.bf16.mxu0 0
  %1780 = vmatpush1.bf16.msra.mxu0 0
  %1781 = vmatprep.subr.bf16.mxu0 0
  %1782 = vmatpush1.bf16.msra.mxu0 0
  %1783 = vmatprep.subr.bf16.mxu0 0
  %1784 = vmatpush1.bf16.msra.mxu0 0
  %1785 = vmatprep.subr.bf16.mxu0 0
  %1786 = vmatpush1.bf16.msra.mxu0 0
  %1787 = vmatprep.subr.bf16.mxu0 0
  %1788 = vmatpush1.bf16.msra.mxu0 0
  %1789 = vmatprep.mubr.bf16.mxu0 0
  %1790 = vmatmul.mubr.bf16.gmra.mrb[0].mxu0 %v1614
  %v1791 = vpop.f32.mrb[0].mxu0
  %v1792 = vadd.f32 %v1605, %v1791
  %v1793 = vpop.f32.mrb[0].mxu0
  %v1794 = vpop.f32.mrb[0].mxu0
  %v1795 = vadd.f32 %v1605, %v1794
  %v1796 = vpop.f32.mrb[0].mxu0
  %1797 = vmatprep.mubr.bf16.mxu0 0
  %1798 = vmatmul.mubr.bf16.gmra.mrb[0].mxu0 %v1617
  %v1799 = vpop.f32.mrb[0].mxu0
  %v1800 = vadd.f32 %v1605, %v1799
  %v1801 = vpop.f32.mrb[0].mxu0
  %v1802 = vpop.f32.mrb[0].mxu0
  %v1803 = vadd.f32 %v1605, %v1802
  %v1804 = vpop.f32.mrb[0].mxu0
  %1805 = vmatprep.mubr.bf16.mxu0 0
  %1806 = vmatmul.mubr.bf16.gmra.mrb[0].mxu0 %v1620
  %v1807 = vpop.f32.mrb[0].mxu0
  %v1808 = vadd.f32 %v1605, %v1807
  %v1809 = vpop.f32.mrb[0].mxu0
  %v1810 = vpop.f32.mrb[0].mxu0
  %v1811 = vadd.f32 %v1605, %v1810
  %v1812 = vpop.f32.mrb[0].mxu0
  %1813 = vmatprep.mubr.bf16.mxu0 0
  %1814 = vmatmul.mubr.bf16.gmra.mrb[0].mxu0 %v1623
  %v1815 = vpop.f32.mrb[0].mxu0
  %v1816 = vadd.f32 %v1605, %v1815
  %v1817 = vpop.f32.mrb[0].mxu0
  %v1818 = vpop.f32.mrb[0].mxu0
  %v1819 = vadd.f32 %v1605, %v1818
  %v1820 = vpop.f32.mrb[0].mxu0
  %1821 = vmatprep.mubr.bf16.mxu0 0
  %1822 = vmatmul.mubr.bf16.gmra.mrb[0].mxu0 %v1626
  %v1823 = vpop.f32.mrb[0].mxu0
  %v1824 = vadd.f32 %v1605, %v1823
  %v1825 = vpop.f32.mrb[0].mxu0
  %v1826 = vpop.f32.mrb[0].mxu0
  %v1827 = vadd.f32 %v1605, %v1826
  %v1828 = vpop.f32.mrb[0].mxu0
  %1829 = vmatprep.mubr.bf16.mxu0 0
  %1830 = vmatmul.mubr.bf16.gmra.mrb[0].mxu0 %v1629
  %v1831 = vpop.f32.mrb[0].mxu0
  %v1832 = vadd.f32 %v1605, %v1831
  %v1833 = vpop.f32.mrb[0].mxu0
  %v1834 = vpop.f32.mrb[0].mxu0
  %v1835 = vadd.f32 %v1605, %v1834
  %v1836 = vpop.f32.mrb[0].mxu0
  %1837 = vmatprep.mubr.bf16.mxu0 0
  %1838 = vmatmul.mubr.bf16.gmra.mrb[0].mxu0 %v1632
  %v1839 = vpop.f32.mrb[0].mxu0
  %v1840 = vadd.f32 %v1605, %v1839
  %v1841 = vpop.f32.mrb[0].mxu0
  %v1842 = vpop.f32.mrb[0].mxu0
  %v1843 = vadd.f32 %v1605, %v1842
  %v1844 = vpop.f32.mrb[0].mxu0
  %1845 = vmatprep.mubr.bf16.mxu0 0
  %1846 = vmatmul.mubr.bf16.gmra.mrb[0].mxu0 %v1635
  %v1847 = vpop.f32.mrb[0].mxu0
  %v1848 = vadd.f32 %v1605, %v1847
  %v1849 = vpop.f32.mrb[0].mxu0
  %v1850 = vpop.f32.mrb[0].mxu0
  %v1851 = vadd.f32 %v1605, %v1850
  %v1852 = vpop.f32.mrb[0].mxu0
  %1853 = vmatprep.mubr.bf16.mxu0 0
  %1854 = vmatmul.mubr.bf16.gmra.mrb[0].mxu0 %v1638
  %v1855 = vpop.f32.mrb[0].mxu0
  %v1856 = vadd.f32 %v1605, %v1855
  %v1857 = vpop.f32.mrb[0].mxu0
  %v1858 = vpop.f32.mrb[0].mxu0
  %v1859 = vadd.f32 %v1605, %v1858
  %v1860 = vpop.f32.mrb[0].mxu0
  %1861 = vmatprep.mubr.bf16.mxu0 0
  %1862 = vmatmul.mubr.bf16.gmra.mrb[0].mxu0 %v1641
  %v1863 = vpop.f32.mrb[0].mxu0
  %v1864 = vadd.f32 %v1605, %v1863
  %v1865 = vpop.f32.mrb[0].mxu0
  %v1866 = vpop.f32.mrb[0].mxu0
  %v1867 = vadd.f32 %v1605, %v1866
  %v1868 = vpop.f32.mrb[0].mxu0
  %1869 = vmatprep.mubr.bf16.mxu0 0
  %1870 = vmatmul.mubr.bf16.gmra.mrb[0].mxu0 %v1644
  %v1871 = vpop.f32.mrb[0].mxu0
  %v1872 = vadd.f32 %v1605, %v1871
  %v1873 = vpop.f32.mrb[0].mxu0
  %v1874 = vpop.f32.mrb[0].mxu0
  %v1875 = vadd.f32 %v1605, %v1874
  %v1876 = vpop.f32.mrb[0].mxu0
  %1877 = vmatprep.mubr.bf16.mxu0 0
  %1878 = vmatmul.mubr.bf16.gmra.mrb[0].mxu0 %v1647
  %v1879 = vpop.f32.mrb[0].mxu0
  %v1880 = vadd.f32 %v1605, %v1879
  %v1881 = vpop.f32.mrb[0].mxu0
  %v1882 = vpop.f32.mrb[0].mxu0
  %v1883 = vadd.f32 %v1605, %v1882
  %v1884 = vpop.f32.mrb[0].mxu0
  %1885 = vmatprep.mubr.bf16.mxu0 0
  %1886 = vmatmul.mubr.bf16.gmra.mrb[0].mxu0 %v1650
  %v1887 = vpop.f32.mrb[0].mxu0
  %v1888 = vadd.f32 %v1605, %v1887
  %v1889 = vpop.f32.mrb[0].mxu0
  %v1890 = vpop.f32.mrb[0].mxu0
  %v1891 = vadd.f32 %v1605, %v1890
  %v1892 = vpop.f32.mrb[0].mxu0
  %1893 = vmatprep.mubr.bf16.mxu0 0
  %1894 = vmatmul.mubr.bf16.gmra.mrb[0].mxu0 %v1653
  %v1895 = vpop.f32.mrb[0].mxu0
  %v1896 = vadd.f32 %v1605, %v1895
  %v1897 = vpop.f32.mrb[0].mxu0
  %v1898 = vpop.f32.mrb[0].mxu0
  %v1899 = vadd.f32 %v1605, %v1898
  %v1900 = vpop.f32.mrb[0].mxu0
  %1901 = vmatprep.mubr.bf16.mxu0 0
  %1902 = vmatmul.mubr.bf16.gmra.mrb[0].mxu0 %v1656
  %v1903 = vpop.f32.mrb[0].mxu0
  %v1904 = vadd.f32 %v1605, %v1903
  %v1905 = vpop.f32.mrb[0].mxu0
  %v1906 = vpop.f32.mrb[0].mxu0
  %v1907 = vadd.f32 %v1605, %v1906
  %v1908 = vpop.f32.mrb[0].mxu0
  %1909 = vmatprep.mubr.bf16.mxu0 0
  %1910 = vmatmul.mubr.bf16.gmra.mrb[0].mxu0 %v1659
  %v1911 = vpop.f32.mrb[0].mxu0
  %v1912 = vadd.f32 %v1605, %v1911
  %v1913 = vpop.f32.mrb[0].mxu0
  %v1914 = vpop.f32.mrb[0].mxu0
  %v1915 = vadd.f32 %v1605, %v1914
  %v1916 = vpop.f32.mrb[0].mxu0
  %1917 = vmatprep.mubr.bf16.mxu0 0
  %1918 = vmatmul.mubr.bf16.gmra.mrb[0].mxu0 %v1662
  %v1919 = vpop.f32.mrb[0].mxu0
  %v1920 = vadd.f32 %v1605, %v1919
  %v1921 = vpop.f32.mrb[0].mxu0
  %v1922 = vpop.f32.mrb[0].mxu0
  %v1923 = vadd.f32 %v1605, %v1922
  %v1924 = vpop.f32.mrb[0].mxu0
  %1925 = vmatprep.mubr.bf16.mxu0 0
  %1926 = vmatmul.mubr.bf16.gmra.mrb[0].mxu0 %v1665
  %v1927 = vpop.f32.mrb[0].mxu0
  %v1928 = vadd.f32 %v1605, %v1927
  %v1929 = vpop.f32.mrb[0].mxu0
  %v1930 = vpop.f32.mrb[0].mxu0
  %v1931 = vadd.f32 %v1605, %v1930
  %v1932 = vpop.f32.mrb[0].mxu0
  %1933 = vmatprep.mubr.bf16.mxu0 0
  %1934 = vmatmul.mubr.bf16.gmra.mrb[0].mxu0 %v1668
  %v1935 = vpop.f32.mrb[0].mxu0
  %v1936 = vadd.f32 %v1605, %v1935
  %v1937 = vpop.f32.mrb[0].mxu0
  %v1938 = vpop.f32.mrb[0].mxu0
  %v1939 = vadd.f32 %v1605, %v1938
  %v1940 = vpop.f32.mrb[0].mxu0
  %1941 = vmatprep.mubr.bf16.mxu0 0
  %1942 = vmatmul.mubr.bf16.gmra.mrb[0].mxu0 %v1671
  %v1943 = vpop.f32.mrb[0].mxu0
  %v1944 = vadd.f32 %v1605, %v1943
  %v1945 = vpop.f32.mrb[0].mxu0
  %v1946 = vpop.f32.mrb[0].mxu0
  %v1947 = vadd.f32 %v1605, %v1946
  %v1948 = vpop.f32.mrb[0].mxu0
  %1949 = vmatprep.mubr.bf16.mxu0 0
  %1950 = vmatmul.mubr.bf16.gmra.mrb[0].mxu0 %v1674
  %v1951 = vpop.f32.mrb[0].mxu0
  %v1952 = vadd.f32 %v1605, %v1951
  %v1953 = vpop.f32.mrb[0].mxu0
  %v1954 = vpop.f32.mrb[0].mxu0
  %v1955 = vadd.f32 %v1605, %v1954
  %v1956 = vpop.f32.mrb[0].mxu0
  %1957 = vmatprep.mubr.bf16.mxu0 0
  %1958 = vmatmul.mubr.bf16.gmra.mrb[0].mxu0 %v1677
  %v1959 = vpop.f32.mrb[0].mxu0
  %v1960 = vadd.f32 %v1605, %v1959
  %v1961 = vpop.f32.mrb[0].mxu0
  %v1962 = vpop.f32.mrb[0].mxu0
  %v1963 = vadd.f32 %v1605, %v1962
  %v1964 = vpop.f32.mrb[0].mxu0
  %1965 = vmatprep.mubr.bf16.mxu0 0
  %1966 = vmatmul.mubr.bf16.gmra.mrb[0].mxu0 %v1680
  %v1967 = vpop.f32.mrb[0].mxu0
  %v1968 = vadd.f32 %v1605, %v1967
  %v1969 = vpop.f32.mrb[0].mxu0
  %v1970 = vpop.f32.mrb[0].mxu0
  %v1971 = vadd.f32 %v1605, %v1970
  %v1972 = vpop.f32.mrb[0].mxu0
  %1973 = vmatprep.mubr.bf16.mxu0 0
  %1974 = vmatmul.mubr.bf16.gmra.mrb[0].mxu0 %v1683
  %v1975 = vpop.f32.mrb[0].mxu0
  %v1976 = vadd.f32 %v1605, %v1975
  %v1977 = vpop.f32.mrb[0].mxu0
  %v1978 = vpop.f32.mrb[0].mxu0
  %v1979 = vadd.f32 %v1605, %v1978
  %v1980 = vpop.f32.mrb[0].mxu0
  %1981 = vmatprep.mubr.bf16.mxu0 0
  %1982 = vmatmul.mubr.bf16.gmra.mrb[0].mxu0 %v1686
  %v1983 = vpop.f32.mrb[0].mxu0
  %v1984 = vadd.f32 %v1605, %v1983
  %v1985 = vpop.f32.mrb[0].mxu0
  %v1986 = vpop.f32.mrb[0].mxu0
  %v1987 = vadd.f32 %v1605, %v1986
  %v1988 = vpop.f32.mrb[0].mxu0
  %1989 = vmatprep.mubr.bf16.mxu0 0
  %1990 = vmatmul.mubr.bf16.gmra.mrb[0].mxu0 %v1689
  %v1991 = vpop.f32.mrb[0].mxu0
  %v1992 = vadd.f32 %v1605, %v1991
  %v1993 = vpop.f32.mrb[0].mxu0
  %v1994 = vpop.f32.mrb[0].mxu0
  %v1995 = vadd.f32 %v1605, %v1994
  %v1996 = vpop.f32.mrb[0].mxu0
  %1997 = vmatprep.mubr.bf16.mxu0 0
  %1998 = vmatmul.mubr.bf16.gmra.mrb[0].mxu0 %v1692
  %v1999 = vpop.f32.mrb[0].mxu0
  %v2000 = vadd.f32 %v1605, %v1999
  %v2001 = vpop.f32.mrb[0].mxu0
  %v2002 = vpop.f32.mrb[0].mxu0
  %v2003 = vadd.f32 %v1605, %v2002
  %v2004 = vpop.f32.mrb[0].mxu0
  %2005 = vmatprep.mubr.bf16.mxu0 0
  %2006 = vmatmul.mubr.bf16.gmra.mrb[0].mxu0 %v1695
  %v2007 = vpop.f32.mrb[0].mxu0
  %v2008 = vadd.f32 %v1605, %v2007
  %v2009 = vpop.f32.mrb[0].mxu0
  %v2010 = vpop.f32.mrb[0].mxu0
  %v2011 = vadd.f32 %v1605, %v2010
  %v2012 = vpop.f32.mrb[0].mxu0
  %2013 = vmatprep.mubr.bf16.mxu0 0
  %2014 = vmatmul.mubr.bf16.gmra.mrb[0].mxu0 %v1698
  %v2015 = vpop.f32.mrb[0].mxu0
  %v2016 = vadd.f32 %v1605, %v2015
  %v2017 = vpop.f32.mrb[0].mxu0
  %v2018 = vpop.f32.mrb[0].mxu0
  %v2019 = vadd.f32 %v1605, %v2018
  %v2020 = vpop.f32.mrb[0].mxu0
  %2021 = vmatprep.mubr.bf16.mxu0 0
  %2022 = vmatmul.mubr.bf16.gmra.mrb[0].mxu0 %v1701
  %v2023 = vpop.f32.mrb[0].mxu0
  %v2024 = vadd.f32 %v1605, %v2023
  %v2025 = vpop.f32.mrb[0].mxu0
  %v2026 = vpop.f32.mrb[0].mxu0
  %v2027 = vadd.f32 %v1605, %v2026
  %v2028 = vpop.f32.mrb[0].mxu0
  %2029 = vmatprep.mubr.bf16.mxu0 0
  %2030 = vmatmul.mubr.bf16.gmra.mrb[0].mxu0 %v1704
  %v2031 = vpop.f32.mrb[0].mxu0
  %v2032 = vadd.f32 %v1605, %v2031
  %v2033 = vpop.f32.mrb[0].mxu0
  %v2034 = vpop.f32.mrb[0].mxu0
  %v2035 = vadd.f32 %v1605, %v2034
  %v2036 = vpop.f32.mrb[0].mxu0
  %2037 = vmatprep.mubr.bf16.mxu0 0
  %2038 = vmatmul.mubr.bf16.gmra.mrb[0].mxu0 %v1707
  %v2039 = vpop.f32.mrb[0].mxu0
  %v2040 = vadd.f32 %v1605, %v2039
  %v2041 = vpop.f32.mrb[0].mxu0
  %v2042 = vpop.f32.mrb[0].mxu0
  %v2043 = vadd.f32 %v1605, %v2042
  %v2044 = vpop.f32.mrb[0].mxu0
  %2045 = vmatprep.mubr.bf16.mxu0 0
  %2046 = vmatmul.mubr.bf16.gmra.mrb[0].mxu0 %v1710
  %v2047 = vpop.f32.mrb[0].mxu0
  %v2048 = vadd.f32 %v1605, %v2047
  %v2049 = vpop.f32.mrb[0].mxu0
  %v2050 = vpop.f32.mrb[0].mxu0
  %v2051 = vadd.f32 %v1605, %v2050
  %v2052 = vpop.f32.mrb[0].mxu0
  %2053 = vmatprep.mubr.bf16.mxu0 0
  %2054 = vmatmul.mubr.bf16.gmra.mrb[0].mxu0 %v1713
  %v2055 = vpop.f32.mrb[0].mxu0
  %v2056 = vadd.f32 %v1605, %v2055
  %v2057 = vpop.f32.mrb[0].mxu0
  %v2058 = vpop.f32.mrb[0].mxu0
  %v2059 = vadd.f32 %v1605, %v2058
  %v2060 = vpop.f32.mrb[0].mxu0
  %2061 = vmatprep.mubr.bf16.mxu0 0
  %2062 = vmatmul.mubr.bf16.gmra.mrb[0].mxu0 %v1716
  %v2063 = vpop.f32.mrb[0].mxu0
  %v2064 = vadd.f32 %v1605, %v2063
  %v2065 = vpop.f32.mrb[0].mxu0
  %v2066 = vpop.f32.mrb[0].mxu0
  %v2067 = vadd.f32 %v1605, %v2066
  %v2068 = vpop.f32.mrb[0].mxu0
  %2069 = vmatprep.mubr.bf16.mxu0 0
  %2070 = vmatmul.mubr.bf16.gmra.mrb[0].mxu0 %v1719
  %v2071 = vpop.f32.mrb[0].mxu0
  %v2072 = vadd.f32 %v1605, %v2071
  %v2073 = vpop.f32.mrb[0].mxu0
  %v2074 = vpop.f32.mrb[0].mxu0
  %v2075 = vadd.f32 %v1605, %v2074
  %v2076 = vpop.f32.mrb[0].mxu0
  %2077 = vmatprep.mubr.bf16.mxu0 0
  %2078 = vmatmul.mubr.bf16.gmra.mrb[0].mxu0 %v1722
  %v2079 = vpop.f32.mrb[0].mxu0
  %v2080 = vadd.f32 %v1605, %v2079
  %v2081 = vpop.f32.mrb[0].mxu0
  %v2082 = vpop.f32.mrb[0].mxu0
  %v2083 = vadd.f32 %v1605, %v2082
  %v2084 = vpop.f32.mrb[0].mxu0
  %2085 = vmatprep.mubr.bf16.mxu0 0
  %2086 = vmatmul.mubr.bf16.gmra.mrb[0].mxu0 %v1725
  %v2087 = vpop.f32.mrb[0].mxu0
  %v2088 = vadd.f32 %v1605, %v2087
  %v2089 = vpop.f32.mrb[0].mxu0
  %v2090 = vpop.f32.mrb[0].mxu0
  %v2091 = vadd.f32 %v1605, %v2090
  %v2092 = vpop.f32.mrb[0].mxu0
  %2093 = vmatprep.mubr.bf16.mxu0 0
  %2094 = vmatmul.mubr.bf16.gmra.mrb[0].mxu0 %v1728
  %v2095 = vpop.f32.mrb[0].mxu0
  %v2096 = vadd.f32 %v1605, %v2095
  %v2097 = vpop.f32.mrb[0].mxu0
  %v2098 = vpop.f32.mrb[0].mxu0
  %v2099 = vadd.f32 %v1605, %v2098
  %v2100 = vpop.f32.mrb[0].mxu0
  %2101 = vmatprep.mubr.bf16.mxu0 0
  %2102 = vmatmul.mubr.bf16.gmra.mrb[0].mxu0 %v1731
  %v2103 = vpop.f32.mrb[0].mxu0
  %v2104 = vadd.f32 %v1605, %v2103
  %v2105 = vpop.f32.mrb[0].mxu0
  %v2106 = vpop.f32.mrb[0].mxu0
  %v2107 = vadd.f32 %v1605, %v2106
  %v2108 = vpop.f32.mrb[0].mxu0
  %2109 = vmatprep.mubr.bf16.mxu0 0
  %2110 = vmatmul.mubr.bf16.gmra.mrb[0].mxu0 %v1734
  %v2111 = vpop.f32.mrb[0].mxu0
  %v2112 = vadd.f32 %v1605, %v2111
  %v2113 = vpop.f32.mrb[0].mxu0
  %v2114 = vpop.f32.mrb[0].mxu0
  %v2115 = vadd.f32 %v1605, %v2114
  %v2116 = vpop.f32.mrb[0].mxu0
  %2117 = vmatprep.mubr.bf16.mxu0 0
  %2118 = vmatmul.mubr.bf16.gmra.mrb[0].mxu0 %v1737
  %v2119 = vpop.f32.mrb[0].mxu0
  %v2120 = vadd.f32 %v1605, %v2119
  %v2121 = vpop.f32.mrb[0].mxu0
  %v2122 = vpop.f32.mrb[0].mxu0
  %v2123 = vadd.f32 %v1605, %v2122
  %v2124 = vpop.f32.mrb[0].mxu0
  %2125 = vmatprep.mubr.bf16.mxu0 0
  %2126 = vmatmul.mubr.bf16.gmra.mrb[0].mxu0 %v1740
  %v2127 = vpop.f32.mrb[0].mxu0
  %v2128 = vadd.f32 %v1605, %v2127
  %v2129 = vpop.f32.mrb[0].mxu0
  %v2130 = vpop.f32.mrb[0].mxu0
  %v2131 = vadd.f32 %v1605, %v2130
  %v2132 = vpop.f32.mrb[0].mxu0
  %2133 = vmatprep.mubr.bf16.mxu0 0
  %2134 = vmatmul.mubr.bf16.gmra.mrb[0].mxu0 %v1743
  %v2135 = vpop.f32.mrb[0].mxu0
  %v2136 = vadd.f32 %v1605, %v2135
  %v2137 = vpop.f32.mrb[0].mxu0
  %v2138 = vpop.f32.mrb[0].mxu0
  %v2139 = vadd.f32 %v1605, %v2138
  %v2140 = vpop.f32.mrb[0].mxu0
  %2141 = vmatprep.mubr.bf16.mxu0 0
  %2142 = vmatmul.mubr.bf16.gmra.mrb[0].mxu0 %v1746
  %v2143 = vpop.f32.mrb[0].mxu0
  %v2144 = vadd.f32 %v1605, %v2143
  %v2145 = vpop.f32.mrb[0].mxu0
  %v2146 = vpop.f32.mrb[0].mxu0
  %v2147 = vadd.f32 %v1605, %v2146
  %v2148 = vpop.f32.mrb[0].mxu0
  %2149 = vmatprep.mubr.bf16.mxu0 0
  %2150 = vmatmul.mubr.bf16.gmra.mrb[0].mxu0 %v1749
  %v2151 = vpop.f32.mrb[0].mxu0
  %v2152 = vadd.f32 %v1605, %v2151
  %v2153 = vpop.f32.mrb[0].mxu0
  %v2154 = vpop.f32.mrb[0].mxu0
  %v2155 = vadd.f32 %v1605, %v2154
  %v2156 = vpop.f32.mrb[0].mxu0
  %2157 = vmatprep.mubr.bf16.mxu0 0
  %2158 = vmatmul.mubr.bf16.gmra.mrb[0].mxu0 %v1752
  %v2159 = vpop.f32.mrb[0].mxu0
  %v2160 = vadd.f32 %v1605, %v2159
  %v2161 = vpop.f32.mrb[0].mxu0
  %v2162 = vpop.f32.mrb[0].mxu0
  %v2163 = vadd.f32 %v1605, %v2162
  %v2164 = vpop.f32.mrb[0].mxu0
  %2165 = vmatprep.mubr.bf16.mxu0 0
  %2166 = vmatmul.mubr.bf16.gmra.mrb[0].mxu0 %v1755
  %v2167 = vpop.f32.mrb[0].mxu0
  %v2168 = vadd.f32 %v1605, %v2167
  %v2169 = vpop.f32.mrb[0].mxu0
  %v2170 = vpop.f32.mrb[0].mxu0
  %v2171 = vadd.f32 %v1605, %v2170
  %v2172 = vpop.f32.mrb[0].mxu0
  %2173 = vdwg.mxu0
  %v2174 = vmax.f32 %v1792, 0.0
  %v2175 = vmax.f32 %v1795, 0.0
  %v2176 = vmax.f32 %v1800, 0.0
  %v2177 = vmax.f32 %v1803, 0.0
  %v2178 = vmax.f32 %v1808, 0.0
  %v2179 = vmax.f32 %v1811, 0.0
  %v2180 = vmax.f32 %v1816, 0.0
  %v2181 = vmax.f32 %v1819, 0.0
  %v2182 = vmax.f32 %v1824, 0.0
  %v2183 = vmax.f32 %v1827, 0.0
  %v2184 = vmax.f32 %v1832, 0.0
  %v2185 = vmax.f32 %v1835, 0.0
  %v2186 = vmax.f32 %v1840, 0.0
  %v2187 = vmax.f32 %v1843, 0.0
  %v2188 = vmax.f32 %v1848, 0.0
  %v2189 = vmax.f32 %v1851, 0.0
  %v2190 = vmax.f32 %v1856, 0.0
  %v2191 = vmax.f32 %v1859, 0.0
  %v2192 = vmax.f32 %v1864, 0.0
  %v2193 = vmax.f32 %v1867, 0.0
  %v2194 = vmax.f32 %v1872, 0.0
  %v2195 = vmax.f32 %v1875, 0.0
  %v2196 = vmax.f32 %v1880, 0.0
  %v2197 = vmax.f32 %v1883, 0.0
  %v2198 = vmax.f32 %v1888, 0.0
  %v2199 = vmax.f32 %v1891, 0.0
  %v2200 = vmax.f32 %v1896, 0.0
  %v2201 = vmax.f32 %v1899, 0.0
  %v2202 = vmax.f32 %v1904, 0.0
  %v2203 = vmax.f32 %v1907, 0.0
  %v2204 = vmax.f32 %v1912, 0.0
  %v2205 = vmax.f32 %v1915, 0.0
  %v2206 = vmax.f32 %v1920, 0.0
  %v2207 = vmax.f32 %v1923, 0.0
  %v2208 = vmax.f32 %v1928, 0.0
  %v2209 = vmax.f32 %v1931, 0.0
  %v2210 = vmax.f32 %v1936, 0.0
  %v2211 = vmax.f32 %v1939, 0.0
  %v2212 = vmax.f32 %v1944, 0.0
  %v2213 = vmax.f32 %v1947, 0.0
  %v2214 = vmax.f32 %v1952, 0.0
  %v2215 = vmax.f32 %v1955, 0.0
  %v2216 = vmax.f32 %v1960, 0.0
  %v2217 = vmax.f32 %v1963, 0.0
  %v2218 = vmax.f32 %v1968, 0.0
  %v2219 = vmax.f32 %v1971, 0.0
  %v2220 = vmax.f32 %v1976, 0.0
  %v2221 = vmax.f32 %v1979, 0.0
  %v2222 = vmax.f32 %v1984, 0.0
  %v2223 = vmax.f32 %v1987, 0.0
  %v2224 = vmax.f32 %v1992, 0.0
  %v2225 = vmax.f32 %v1995, 0.0
  %v2226 = vmax.f32 %v2000, 0.0
  %v2227 = vmax.f32 %v2003, 0.0
  %v2228 = vmax.f32 %v2008, 0.0
  %v2229 = vmax.f32 %v2011, 0.0
  %v2230 = vmax.f32 %v2016, 0.0
  %v2231 = vmax.f32 %v2019, 0.0
  %v2232 = vmax.f32 %v2024, 0.0
  %v2233 = vmax.f32 %v2027, 0.0
  %v2234 = vmax.f32 %v2032, 0.0
  %v2235 = vmax.f32 %v2035, 0.0
  %v2236 = vmax.f32 %v2040, 0.0
  %v2237 = vmax.f32 %v2043, 0.0
  %v2238 = vmax.f32 %v2048, 0.0
  %v2239 = vmax.f32 %v2051, 0.0
  %v2240 = vmax.f32 %v2056, 0.0
  %v2241 = vmax.f32 %v2059, 0.0
  %v2242 = vmax.f32 %v2064, 0.0
  %v2243 = vmax.f32 %v2067, 0.0
  %v2244 = vmax.f32 %v2072, 0.0
  %v2245 = vmax.f32 %v2075, 0.0
  %v2246 = vmax.f32 %v2080, 0.0
  %v2247 = vmax.f32 %v2083, 0.0
  %v2248 = vmax.f32 %v2088, 0.0
  %v2249 = vmax.f32 %v2091, 0.0
  %v2250 = vmax.f32 %v2096, 0.0
  %v2251 = vmax.f32 %v2099, 0.0
  %v2252 = vmax.f32 %v2104, 0.0
  %v2253 = vmax.f32 %v2107, 0.0
  %v2254 = vmax.f32 %v2112, 0.0
  %v2255 = vmax.f32 %v2115, 0.0
  %v2256 = vmax.f32 %v2120, 0.0
  %v2257 = vmax.f32 %v2123, 0.0
  %v2258 = vmax.f32 %v2128, 0.0
  %v2259 = vmax.f32 %v2131, 0.0
  %v2260 = vmax.f32 %v2136, 0.0
  %v2261 = vmax.f32 %v2139, 0.0
  %v2262 = vmax.f32 %v2144, 0.0
  %v2263 = vmax.f32 %v2147, 0.0
  %v2264 = vmax.f32 %v2152, 0.0
  %v2265 = vmax.f32 %v2155, 0.0
  %v2266 = vmax.f32 %v2160, 0.0
  %v2267 = vmax.f32 %v2163, 0.0
  %v2268 = vmax.f32 %v2168, 0.0
  %v2269 = vmax.f32 %v2171, 0.0
  %v2270 = vld [vmem:[%s1 + $0xc] sm:$0xf]
  %v2271 = vld [vmem:[%s1 + $0x2c] sm:$0xf]
  %v2272 = vld [vmem:[%s2 + $0x3] sm:$0x1]
  %v2273 = vpack.c.bf16 %v2175, %v2174
  %v2274 = vpack.c.bf16 %v2177, %v2176
  %v2275 = vpack.c.bf16 %v2179, %v2178
  %v2276 = vpack.c.bf16 %v2181, %v2180
  %v2277 = vpack.c.bf16 %v2183, %v2182
  %v2278 = vpack.c.bf16 %v2185, %v2184
  %v2279 = vpack.c.bf16 %v2187, %v2186
  %v2280 = vpack.c.bf16 %v2189, %v2188
  %v2281 = vpack.c.bf16 %v2191, %v2190
  %v2282 = vpack.c.bf16 %v2193, %v2192
  %v2283 = vpack.c.bf16 %v2195, %v2194
  %v2284 = vpack.c.bf16 %v2197, %v2196
  %v2285 = vpack.c.bf16 %v2199, %v2198
  %v2286 = vpack.c.bf16 %v2201, %v2200
  %v2287 = vpack.c.bf16 %v2203, %v2202
  %v2288 = vpack.c.bf16 %v2205, %v2204
  %v2289 = vpack.c.bf16 %v2207, %v2206
  %v2290 = vpack.c.bf16 %v2209, %v2208
  %v2291 = vpack.c.bf16 %v2211, %v2210
  %v2292 = vpack.c.bf16 %v2213, %v2212
  %v2293 = vpack.c.bf16 %v2215, %v2214
  %v2294 = vpack.c.bf16 %v2217, %v2216
  %v2295 = vpack.c.bf16 %v2219, %v2218
  %v2296 = vpack.c.bf16 %v2221, %v2220
  %v2297 = vpack.c.bf16 %v2223, %v2222
  %v2298 = vpack.c.bf16 %v2225, %v2224
  %v2299 = vpack.c.bf16 %v2227, %v2226
  %v2300 = vpack.c.bf16 %v2229, %v2228
  %v2301 = vpack.c.bf16 %v2231, %v2230
  %v2302 = vpack.c.bf16 %v2233, %v2232
  %v2303 = vpack.c.bf16 %v2235, %v2234
  %v2304 = vpack.c.bf16 %v2237, %v2236
  %v2305 = vpack.c.bf16 %v2239, %v2238
  %v2306 = vpack.c.bf16 %v2241, %v2240
  %v2307 = vpack.c.bf16 %v2243, %v2242
  %v2308 = vpack.c.bf16 %v2245, %v2244
  %v2309 = vpack.c.bf16 %v2247, %v2246
  %v2310 = vpack.c.bf16 %v2249, %v2248
  %v2311 = vpack.c.bf16 %v2251, %v2250
  %v2312 = vpack.c.bf16 %v2253, %v2252
  %v2313 = vpack.c.bf16 %v2255, %v2254
  %v2314 = vpack.c.bf16 %v2257, %v2256
  %v2315 = vpack.c.bf16 %v2259, %v2258
  %v2316 = vpack.c.bf16 %v2261, %v2260
  %v2317 = vpack.c.bf16 %v2263, %v2262
  %v2318 = vpack.c.bf16 %v2265, %v2264
  %v2319 = vpack.c.bf16 %v2267, %v2266
  %v2320 = vpack.c.bf16 %v2269, %v2268
  %v2322 = vlaneseq
  %v2323 = vshrl.u32 %v2322, 7
  %v2324 = vsub.s32 0, %v2323
  %v2325 = vrot.slane %v2272, %v2324
  %v2329 = vunpack.c.l.b16 %v2270
  %v2330 = vunpack.c.l.b16 %v2271
  %v2331 = vpack.c.b16 %v2330, %v2329
  %v2334 = vsel %vm892, %v2273, 0
  %v2337 = vsel %vm892, %v2274, 0
  %v2340 = vsel %vm892, %v2275, 0
  %v2343 = vsel %vm892, %v2276, 0
  %v2346 = vsel %vm892, %v2277, 0
  %v2349 = vsel %vm892, %v2278, 0
  %v2352 = vsel %vm892, %v2279, 0
  %v2355 = vsel %vm892, %v2280, 0
  %v2358 = vsel %vm892, %v2281, 0
  %v2361 = vsel %vm892, %v2282, 0
  %v2364 = vsel %vm892, %v2283, 0
  %v2367 = vsel %vm892, %v2284, 0
  %v2370 = vsel %vm892, %v2285, 0
  %v2373 = vsel %vm892, %v2286, 0
  %v2376 = vsel %vm892, %v2287, 0
  %v2379 = vsel %vm892, %v2288, 0
  %v2382 = vsel %vm892, %v2289, 0
  %v2385 = vsel %vm892, %v2290, 0
  %v2388 = vsel %vm892, %v2291, 0
  %v2391 = vsel %vm892, %v2292, 0
  %v2394 = vsel %vm892, %v2293, 0
  %v2397 = vsel %vm892, %v2294, 0
  %v2400 = vsel %vm892, %v2295, 0
  %v2403 = vsel %vm892, %v2296, 0
  %v2406 = vsel %vm892, %v2297, 0
  %v2409 = vsel %vm892, %v2298, 0
  %v2412 = vsel %vm892, %v2299, 0
  %v2415 = vsel %vm892, %v2300, 0
  %v2418 = vsel %vm892, %v2301, 0
  %v2421 = vsel %vm892, %v2302, 0
  %v2424 = vsel %vm892, %v2303, 0
  %v2427 = vsel %vm892, %v2304, 0
  %v2430 = vsel %vm892, %v2305, 0
  %v2433 = vsel %vm892, %v2306, 0
  %v2436 = vsel %vm892, %v2307, 0
  %v2439 = vsel %vm892, %v2308, 0
  %v2442 = vsel %vm892, %v2309, 0
  %v2445 = vsel %vm892, %v2310, 0
  %v2448 = vsel %vm892, %v2311, 0
  %v2451 = vsel %vm892, %v2312, 0
  %v2454 = vsel %vm892, %v2313, 0
  %v2457 = vsel %vm892, %v2314, 0
  %v2460 = vsel %vm892, %v2315, 0
  %v2463 = vsel %vm892, %v2316, 0
  %v2466 = vsel %vm892, %v2317, 0
  %v2469 = vsel %vm892, %v2318, 0
  %v2472 = vsel %vm892, %v2319, 0
  %v2475 = vsel %vm892, %v2320, 0
  %2477 = vmatprep.subr.bf16.mxu0 0
  %2478 = vmatpush1.bf16.msra.mxu0 %v2331
  %2479 = vmatprep.subr.bf16.mxu0 0
  %2480 = vmatpush1.bf16.msra.mxu0 0
  %2481 = vmatprep.subr.bf16.mxu0 0
  %2482 = vmatpush1.bf16.msra.mxu0 0
  %2483 = vmatprep.subr.bf16.mxu0 0
  %2484 = vmatpush1.bf16.msra.mxu0 0
  %2485 = vmatprep.subr.bf16.mxu0 0
  %2486 = vmatpush1.bf16.msra.mxu0 0
  %2487 = vmatprep.subr.bf16.mxu0 0
  %2488 = vmatpush1.bf16.msra.mxu0 0
  %2489 = vmatprep.subr.bf16.mxu0 0
  %2490 = vmatpush1.bf16.msra.mxu0 0
  %2491 = vmatprep.subr.bf16.mxu0 0
  %2492 = vmatpush1.bf16.msra.mxu0 0
  %2493 = vmatprep.subr.bf16.mxu0 0
  %2494 = vmatpush1.bf16.msra.mxu0 0
  %2495 = vmatprep.subr.bf16.mxu0 0
  %2496 = vmatpush1.bf16.msra.mxu0 0
  %2497 = vmatprep.subr.bf16.mxu0 0
  %2498 = vmatpush1.bf16.msra.mxu0 0
  %2499 = vmatprep.subr.bf16.mxu0 0
  %2500 = vmatpush1.bf16.msra.mxu0 0
  %2501 = vmatprep.subr.bf16.mxu0 0
  %2502 = vmatpush1.bf16.msra.mxu0 0
  %2503 = vmatprep.subr.bf16.mxu0 0
  %2504 = vmatpush1.bf16.msra.mxu0 0
  %2505 = vmatprep.subr.bf16.mxu0 0
  %2506 = vmatpush1.bf16.msra.mxu0 0
  %2507 = vmatprep.subr.bf16.mxu0 0
  %2508 = vmatpush1.bf16.msra.mxu0 0
  %2509 = vmatprep.mubr.bf16.mxu0 0
  %2510 = vmatmul.mubr.bf16.gmra.mrb[0].mxu0 %v2334
  %v2511 = vpop.f32.mrb[0].mxu0
  %v2512 = vadd.f32 %v2325, %v2511
  %v2513 = vpop.f32.mrb[0].mxu0
  %v2514 = vpop.f32.mrb[0].mxu0
  %v2515 = vadd.f32 %v2325, %v2514
  %v2516 = vpop.f32.mrb[0].mxu0
  %2517 = vmatprep.mubr.bf16.mxu0 0
  %2518 = vmatmul.mubr.bf16.gmra.mrb[0].mxu0 %v2337
  %v2519 = vpop.f32.mrb[0].mxu0
  %v2520 = vadd.f32 %v2325, %v2519
  %v2521 = vpop.f32.mrb[0].mxu0
  %v2522 = vpop.f32.mrb[0].mxu0
  %v2523 = vadd.f32 %v2325, %v2522
  %v2524 = vpop.f32.mrb[0].mxu0
  %2525 = vmatprep.mubr.bf16.mxu0 0
  %2526 = vmatmul.mubr.bf16.gmra.mrb[0].mxu0 %v2340
  %v2527 = vpop.f32.mrb[0].mxu0
  %v2528 = vadd.f32 %v2325, %v2527
  %v2529 = vpop.f32.mrb[0].mxu0
  %v2530 = vpop.f32.mrb[0].mxu0
  %v2531 = vadd.f32 %v2325, %v2530
  %v2532 = vpop.f32.mrb[0].mxu0
  %2533 = vmatprep.mubr.bf16.mxu0 0
  %2534 = vmatmul.mubr.bf16.gmra.mrb[0].mxu0 %v2343
  %v2535 = vpop.f32.mrb[0].mxu0
  %v2536 = vadd.f32 %v2325, %v2535
  %v2537 = vpop.f32.mrb[0].mxu0
  %v2538 = vpop.f32.mrb[0].mxu0
  %v2539 = vadd.f32 %v2325, %v2538
  %v2540 = vpop.f32.mrb[0].mxu0
  %2541 = vmatprep.mubr.bf16.mxu0 0
  %2542 = vmatmul.mubr.bf16.gmra.mrb[0].mxu0 %v2346
  %v2543 = vpop.f32.mrb[0].mxu0
  %v2544 = vadd.f32 %v2325, %v2543
  %v2545 = vpop.f32.mrb[0].mxu0
  %v2546 = vpop.f32.mrb[0].mxu0
  %v2547 = vadd.f32 %v2325, %v2546
  %v2548 = vpop.f32.mrb[0].mxu0
  %2549 = vmatprep.mubr.bf16.mxu0 0
  %2550 = vmatmul.mubr.bf16.gmra.mrb[0].mxu0 %v2349
  %v2551 = vpop.f32.mrb[0].mxu0
  %v2552 = vadd.f32 %v2325, %v2551
  %v2553 = vpop.f32.mrb[0].mxu0
  %v2554 = vpop.f32.mrb[0].mxu0
  %v2555 = vadd.f32 %v2325, %v2554
  %v2556 = vpop.f32.mrb[0].mxu0
  %2557 = vmatprep.mubr.bf16.mxu0 0
  %2558 = vmatmul.mubr.bf16.gmra.mrb[0].mxu0 %v2352
  %v2559 = vpop.f32.mrb[0].mxu0
  %v2560 = vadd.f32 %v2325, %v2559
  %v2561 = vpop.f32.mrb[0].mxu0
  %v2562 = vpop.f32.mrb[0].mxu0
  %v2563 = vadd.f32 %v2325, %v2562
  %v2564 = vpop.f32.mrb[0].mxu0
  %2565 = vmatprep.mubr.bf16.mxu0 0
  %2566 = vmatmul.mubr.bf16.gmra.mrb[0].mxu0 %v2355
  %v2567 = vpop.f32.mrb[0].mxu0
  %v2568 = vadd.f32 %v2325, %v2567
  %v2569 = vpop.f32.mrb[0].mxu0
  %v2570 = vpop.f32.mrb[0].mxu0
  %v2571 = vadd.f32 %v2325, %v2570
  %v2572 = vpop.f32.mrb[0].mxu0
  %2573 = vmatprep.mubr.bf16.mxu0 0
  %2574 = vmatmul.mubr.bf16.gmra.mrb[0].mxu0 %v2358
  %v2575 = vpop.f32.mrb[0].mxu0
  %v2576 = vadd.f32 %v2325, %v2575
  %v2577 = vpop.f32.mrb[0].mxu0
  %v2578 = vpop.f32.mrb[0].mxu0
  %v2579 = vadd.f32 %v2325, %v2578
  %v2580 = vpop.f32.mrb[0].mxu0
  %2581 = vmatprep.mubr.bf16.mxu0 0
  %2582 = vmatmul.mubr.bf16.gmra.mrb[0].mxu0 %v2361
  %v2583 = vpop.f32.mrb[0].mxu0
  %v2584 = vadd.f32 %v2325, %v2583
  %v2585 = vpop.f32.mrb[0].mxu0
  %v2586 = vpop.f32.mrb[0].mxu0
  %v2587 = vadd.f32 %v2325, %v2586
  %v2588 = vpop.f32.mrb[0].mxu0
  %2589 = vmatprep.mubr.bf16.mxu0 0
  %2590 = vmatmul.mubr.bf16.gmra.mrb[0].mxu0 %v2364
  %v2591 = vpop.f32.mrb[0].mxu0
  %v2592 = vadd.f32 %v2325, %v2591
  %v2593 = vpop.f32.mrb[0].mxu0
  %v2594 = vpop.f32.mrb[0].mxu0
  %v2595 = vadd.f32 %v2325, %v2594
  %v2596 = vpop.f32.mrb[0].mxu0
  %2597 = vmatprep.mubr.bf16.mxu0 0
  %2598 = vmatmul.mubr.bf16.gmra.mrb[0].mxu0 %v2367
  %v2599 = vpop.f32.mrb[0].mxu0
  %v2600 = vadd.f32 %v2325, %v2599
  %v2601 = vpop.f32.mrb[0].mxu0
  %v2602 = vpop.f32.mrb[0].mxu0
  %v2603 = vadd.f32 %v2325, %v2602
  %v2604 = vpop.f32.mrb[0].mxu0
  %2605 = vmatprep.mubr.bf16.mxu0 0
  %2606 = vmatmul.mubr.bf16.gmra.mrb[0].mxu0 %v2370
  %v2607 = vpop.f32.mrb[0].mxu0
  %v2608 = vadd.f32 %v2325, %v2607
  %v2609 = vpop.f32.mrb[0].mxu0
  %v2610 = vpop.f32.mrb[0].mxu0
  %v2611 = vadd.f32 %v2325, %v2610
  %v2612 = vpop.f32.mrb[0].mxu0
  %2613 = vmatprep.mubr.bf16.mxu0 0
  %2614 = vmatmul.mubr.bf16.gmra.mrb[0].mxu0 %v2373
  %v2615 = vpop.f32.mrb[0].mxu0
  %v2616 = vadd.f32 %v2325, %v2615
  %v2617 = vpop.f32.mrb[0].mxu0
  %v2618 = vpop.f32.mrb[0].mxu0
  %v2619 = vadd.f32 %v2325, %v2618
  %v2620 = vpop.f32.mrb[0].mxu0
  %2621 = vmatprep.mubr.bf16.mxu0 0
  %2622 = vmatmul.mubr.bf16.gmra.mrb[0].mxu0 %v2376
  %v2623 = vpop.f32.mrb[0].mxu0
  %v2624 = vadd.f32 %v2325, %v2623
  %v2625 = vpop.f32.mrb[0].mxu0
  %v2626 = vpop.f32.mrb[0].mxu0
  %v2627 = vadd.f32 %v2325, %v2626
  %v2628 = vpop.f32.mrb[0].mxu0
  %2629 = vmatprep.mubr.bf16.mxu0 0
  %2630 = vmatmul.mubr.bf16.gmra.mrb[0].mxu0 %v2379
  %v2631 = vpop.f32.mrb[0].mxu0
  %v2632 = vadd.f32 %v2325, %v2631
  %v2633 = vpop.f32.mrb[0].mxu0
  %v2634 = vpop.f32.mrb[0].mxu0
  %v2635 = vadd.f32 %v2325, %v2634
  %v2636 = vpop.f32.mrb[0].mxu0
  %2637 = vmatprep.mubr.bf16.mxu0 0
  %2638 = vmatmul.mubr.bf16.gmra.mrb[0].mxu0 %v2382
  %v2639 = vpop.f32.mrb[0].mxu0
  %v2640 = vadd.f32 %v2325, %v2639
  %v2641 = vpop.f32.mrb[0].mxu0
  %v2642 = vpop.f32.mrb[0].mxu0
  %v2643 = vadd.f32 %v2325, %v2642
  %v2644 = vpop.f32.mrb[0].mxu0
  %2645 = vmatprep.mubr.bf16.mxu0 0
  %2646 = vmatmul.mubr.bf16.gmra.mrb[0].mxu0 %v2385
  %v2647 = vpop.f32.mrb[0].mxu0
  %v2648 = vadd.f32 %v2325, %v2647
  %v2649 = vpop.f32.mrb[0].mxu0
  %v2650 = vpop.f32.mrb[0].mxu0
  %v2651 = vadd.f32 %v2325, %v2650
  %v2652 = vpop.f32.mrb[0].mxu0
  %2653 = vmatprep.mubr.bf16.mxu0 0
  %2654 = vmatmul.mubr.bf16.gmra.mrb[0].mxu0 %v2388
  %v2655 = vpop.f32.mrb[0].mxu0
  %v2656 = vadd.f32 %v2325, %v2655
  %v2657 = vpop.f32.mrb[0].mxu0
  %v2658 = vpop.f32.mrb[0].mxu0
  %v2659 = vadd.f32 %v2325, %v2658
  %v2660 = vpop.f32.mrb[0].mxu0
  %2661 = vmatprep.mubr.bf16.mxu0 0
  %2662 = vmatmul.mubr.bf16.gmra.mrb[0].mxu0 %v2391
  %v2663 = vpop.f32.mrb[0].mxu0
  %v2664 = vadd.f32 %v2325, %v2663
  %v2665 = vpop.f32.mrb[0].mxu0
  %v2666 = vpop.f32.mrb[0].mxu0
  %v2667 = vadd.f32 %v2325, %v2666
  %v2668 = vpop.f32.mrb[0].mxu0
  %2669 = vmatprep.mubr.bf16.mxu0 0
  %2670 = vmatmul.mubr.bf16.gmra.mrb[0].mxu0 %v2394
  %v2671 = vpop.f32.mrb[0].mxu0
  %v2672 = vadd.f32 %v2325, %v2671
  %v2673 = vpop.f32.mrb[0].mxu0
  %v2674 = vpop.f32.mrb[0].mxu0
  %v2675 = vadd.f32 %v2325, %v2674
  %v2676 = vpop.f32.mrb[0].mxu0
  %2677 = vmatprep.mubr.bf16.mxu0 0
  %2678 = vmatmul.mubr.bf16.gmra.mrb[0].mxu0 %v2397
  %v2679 = vpop.f32.mrb[0].mxu0
  %v2680 = vadd.f32 %v2325, %v2679
  %v2681 = vpop.f32.mrb[0].mxu0
  %v2682 = vpop.f32.mrb[0].mxu0
  %v2683 = vadd.f32 %v2325, %v2682
  %v2684 = vpop.f32.mrb[0].mxu0
  %2685 = vmatprep.mubr.bf16.mxu0 0
  %2686 = vmatmul.mubr.bf16.gmra.mrb[0].mxu0 %v2400
  %v2687 = vpop.f32.mrb[0].mxu0
  %v2688 = vadd.f32 %v2325, %v2687
  %v2689 = vpop.f32.mrb[0].mxu0
  %v2690 = vpop.f32.mrb[0].mxu0
  %v2691 = vadd.f32 %v2325, %v2690
  %v2692 = vpop.f32.mrb[0].mxu0
  %2693 = vmatprep.mubr.bf16.mxu0 0
  %2694 = vmatmul.mubr.bf16.gmra.mrb[0].mxu0 %v2403
  %v2695 = vpop.f32.mrb[0].mxu0
  %v2696 = vadd.f32 %v2325, %v2695
  %v2697 = vpop.f32.mrb[0].mxu0
  %v2698 = vpop.f32.mrb[0].mxu0
  %v2699 = vadd.f32 %v2325, %v2698
  %v2700 = vpop.f32.mrb[0].mxu0
  %2701 = vmatprep.mubr.bf16.mxu0 0
  %2702 = vmatmul.mubr.bf16.gmra.mrb[0].mxu0 %v2406
  %v2703 = vpop.f32.mrb[0].mxu0
  %v2704 = vadd.f32 %v2325, %v2703
  %v2705 = vpop.f32.mrb[0].mxu0
  %v2706 = vpop.f32.mrb[0].mxu0
  %v2707 = vadd.f32 %v2325, %v2706
  %v2708 = vpop.f32.mrb[0].mxu0
  %2709 = vmatprep.mubr.bf16.mxu0 0
  %2710 = vmatmul.mubr.bf16.gmra.mrb[0].mxu0 %v2409
  %v2711 = vpop.f32.mrb[0].mxu0
  %v2712 = vadd.f32 %v2325, %v2711
  %v2713 = vpop.f32.mrb[0].mxu0
  %v2714 = vpop.f32.mrb[0].mxu0
  %v2715 = vadd.f32 %v2325, %v2714
  %v2716 = vpop.f32.mrb[0].mxu0
  %2717 = vmatprep.mubr.bf16.mxu0 0
  %2718 = vmatmul.mubr.bf16.gmra.mrb[0].mxu0 %v2412
  %v2719 = vpop.f32.mrb[0].mxu0
  %v2720 = vadd.f32 %v2325, %v2719
  %v2721 = vpop.f32.mrb[0].mxu0
  %v2722 = vpop.f32.mrb[0].mxu0
  %v2723 = vadd.f32 %v2325, %v2722
  %v2724 = vpop.f32.mrb[0].mxu0
  %2725 = vmatprep.mubr.bf16.mxu0 0
  %2726 = vmatmul.mubr.bf16.gmra.mrb[0].mxu0 %v2415
  %v2727 = vpop.f32.mrb[0].mxu0
  %v2728 = vadd.f32 %v2325, %v2727
  %v2729 = vpop.f32.mrb[0].mxu0
  %v2730 = vpop.f32.mrb[0].mxu0
  %v2731 = vadd.f32 %v2325, %v2730
  %v2732 = vpop.f32.mrb[0].mxu0
  %2733 = vmatprep.mubr.bf16.mxu0 0
  %2734 = vmatmul.mubr.bf16.gmra.mrb[0].mxu0 %v2418
  %v2735 = vpop.f32.mrb[0].mxu0
  %v2736 = vadd.f32 %v2325, %v2735
  %v2737 = vpop.f32.mrb[0].mxu0
  %v2738 = vpop.f32.mrb[0].mxu0
  %v2739 = vadd.f32 %v2325, %v2738
  %v2740 = vpop.f32.mrb[0].mxu0
  %2741 = vmatprep.mubr.bf16.mxu0 0
  %2742 = vmatmul.mubr.bf16.gmra.mrb[0].mxu0 %v2421
  %v2743 = vpop.f32.mrb[0].mxu0
  %v2744 = vadd.f32 %v2325, %v2743
  %v2745 = vpop.f32.mrb[0].mxu0
  %v2746 = vpop.f32.mrb[0].mxu0
  %v2747 = vadd.f32 %v2325, %v2746
  %v2748 = vpop.f32.mrb[0].mxu0
  %2749 = vmatprep.mubr.bf16.mxu0 0
  %2750 = vmatmul.mubr.bf16.gmra.mrb[0].mxu0 %v2424
  %v2751 = vpop.f32.mrb[0].mxu0
  %v2752 = vadd.f32 %v2325, %v2751
  %v2753 = vpop.f32.mrb[0].mxu0
  %v2754 = vpop.f32.mrb[0].mxu0
  %v2755 = vadd.f32 %v2325, %v2754
  %v2756 = vpop.f32.mrb[0].mxu0
  %2757 = vmatprep.mubr.bf16.mxu0 0
  %2758 = vmatmul.mubr.bf16.gmra.mrb[0].mxu0 %v2427
  %v2759 = vpop.f32.mrb[0].mxu0
  %v2760 = vadd.f32 %v2325, %v2759
  %v2761 = vpop.f32.mrb[0].mxu0
  %v2762 = vpop.f32.mrb[0].mxu0
  %v2763 = vadd.f32 %v2325, %v2762
  %v2764 = vpop.f32.mrb[0].mxu0
  %2765 = vmatprep.mubr.bf16.mxu0 0
  %2766 = vmatmul.mubr.bf16.gmra.mrb[0].mxu0 %v2430
  %v2767 = vpop.f32.mrb[0].mxu0
  %v2768 = vadd.f32 %v2325, %v2767
  %v2769 = vpop.f32.mrb[0].mxu0
  %v2770 = vpop.f32.mrb[0].mxu0
  %v2771 = vadd.f32 %v2325, %v2770
  %v2772 = vpop.f32.mrb[0].mxu0
  %2773 = vmatprep.mubr.bf16.mxu0 0
  %2774 = vmatmul.mubr.bf16.gmra.mrb[0].mxu0 %v2433
  %v2775 = vpop.f32.mrb[0].mxu0
  %v2776 = vadd.f32 %v2325, %v2775
  %v2777 = vpop.f32.mrb[0].mxu0
  %v2778 = vpop.f32.mrb[0].mxu0
  %v2779 = vadd.f32 %v2325, %v2778
  %v2780 = vpop.f32.mrb[0].mxu0
  %2781 = vmatprep.mubr.bf16.mxu0 0
  %2782 = vmatmul.mubr.bf16.gmra.mrb[0].mxu0 %v2436
  %v2783 = vpop.f32.mrb[0].mxu0
  %v2784 = vadd.f32 %v2325, %v2783
  %v2785 = vpop.f32.mrb[0].mxu0
  %v2786 = vpop.f32.mrb[0].mxu0
  %v2787 = vadd.f32 %v2325, %v2786
  %v2788 = vpop.f32.mrb[0].mxu0
  %2789 = vmatprep.mubr.bf16.mxu0 0
  %2790 = vmatmul.mubr.bf16.gmra.mrb[0].mxu0 %v2439
  %v2791 = vpop.f32.mrb[0].mxu0
  %v2792 = vadd.f32 %v2325, %v2791
  %v2793 = vpop.f32.mrb[0].mxu0
  %v2794 = vpop.f32.mrb[0].mxu0
  %v2795 = vadd.f32 %v2325, %v2794
  %v2796 = vpop.f32.mrb[0].mxu0
  %2797 = vmatprep.mubr.bf16.mxu0 0
  %2798 = vmatmul.mubr.bf16.gmra.mrb[0].mxu0 %v2442
  %v2799 = vpop.f32.mrb[0].mxu0
  %v2800 = vadd.f32 %v2325, %v2799
  %v2801 = vpop.f32.mrb[0].mxu0
  %v2802 = vpop.f32.mrb[0].mxu0
  %v2803 = vadd.f32 %v2325, %v2802
  %v2804 = vpop.f32.mrb[0].mxu0
  %2805 = vmatprep.mubr.bf16.mxu0 0
  %2806 = vmatmul.mubr.bf16.gmra.mrb[0].mxu0 %v2445
  %v2807 = vpop.f32.mrb[0].mxu0
  %v2808 = vadd.f32 %v2325, %v2807
  %v2809 = vpop.f32.mrb[0].mxu0
  %v2810 = vpop.f32.mrb[0].mxu0
  %v2811 = vadd.f32 %v2325, %v2810
  %v2812 = vpop.f32.mrb[0].mxu0
  %2813 = vmatprep.mubr.bf16.mxu0 0
  %2814 = vmatmul.mubr.bf16.gmra.mrb[0].mxu0 %v2448
  %v2815 = vpop.f32.mrb[0].mxu0
  %v2816 = vadd.f32 %v2325, %v2815
  %v2817 = vpop.f32.mrb[0].mxu0
  %v2818 = vpop.f32.mrb[0].mxu0
  %v2819 = vadd.f32 %v2325, %v2818
  %v2820 = vpop.f32.mrb[0].mxu0
  %2821 = vmatprep.mubr.bf16.mxu0 0
  %2822 = vmatmul.mubr.bf16.gmra.mrb[0].mxu0 %v2451
  %v2823 = vpop.f32.mrb[0].mxu0
  %v2824 = vadd.f32 %v2325, %v2823
  %v2825 = vpop.f32.mrb[0].mxu0
  %v2826 = vpop.f32.mrb[0].mxu0
  %v2827 = vadd.f32 %v2325, %v2826
  %v2828 = vpop.f32.mrb[0].mxu0
  %2829 = vmatprep.mubr.bf16.mxu0 0
  %2830 = vmatmul.mubr.bf16.gmra.mrb[0].mxu0 %v2454
  %v2831 = vpop.f32.mrb[0].mxu0
  %v2832 = vadd.f32 %v2325, %v2831
  %v2833 = vpop.f32.mrb[0].mxu0
  %v2834 = vpop.f32.mrb[0].mxu0
  %v2835 = vadd.f32 %v2325, %v2834
  %v2836 = vpop.f32.mrb[0].mxu0
  %2837 = vmatprep.mubr.bf16.mxu0 0
  %2838 = vmatmul.mubr.bf16.gmra.mrb[0].mxu0 %v2457
  %v2839 = vpop.f32.mrb[0].mxu0
  %v2840 = vadd.f32 %v2325, %v2839
  %v2841 = vpop.f32.mrb[0].mxu0
  %v2842 = vpop.f32.mrb[0].mxu0
  %v2843 = vadd.f32 %v2325, %v2842
  %v2844 = vpop.f32.mrb[0].mxu0
  %2845 = vmatprep.mubr.bf16.mxu0 0
  %2846 = vmatmul.mubr.bf16.gmra.mrb[0].mxu0 %v2460
  %v2847 = vpop.f32.mrb[0].mxu0
  %v2848 = vadd.f32 %v2325, %v2847
  %v2849 = vpop.f32.mrb[0].mxu0
  %v2850 = vpop.f32.mrb[0].mxu0
  %v2851 = vadd.f32 %v2325, %v2850
  %v2852 = vpop.f32.mrb[0].mxu0
  %2853 = vmatprep.mubr.bf16.mxu0 0
  %2854 = vmatmul.mubr.bf16.gmra.mrb[0].mxu0 %v2463
  %v2855 = vpop.f32.mrb[0].mxu0
  %v2856 = vadd.f32 %v2325, %v2855
  %v2857 = vpop.f32.mrb[0].mxu0
  %v2858 = vpop.f32.mrb[0].mxu0
  %v2859 = vadd.f32 %v2325, %v2858
  %v2860 = vpop.f32.mrb[0].mxu0
  %2861 = vmatprep.mubr.bf16.mxu0 0
  %2862 = vmatmul.mubr.bf16.gmra.mrb[0].mxu0 %v2466
  %v2863 = vpop.f32.mrb[0].mxu0
  %v2864 = vadd.f32 %v2325, %v2863
  %v2865 = vpop.f32.mrb[0].mxu0
  %v2866 = vpop.f32.mrb[0].mxu0
  %v2867 = vadd.f32 %v2325, %v2866
  %v2868 = vpop.f32.mrb[0].mxu0
  %2869 = vmatprep.mubr.bf16.mxu0 0
  %2870 = vmatmul.mubr.bf16.gmra.mrb[0].mxu0 %v2469
  %v2871 = vpop.f32.mrb[0].mxu0
  %v2872 = vadd.f32 %v2325, %v2871
  %v2873 = vpop.f32.mrb[0].mxu0
  %v2874 = vpop.f32.mrb[0].mxu0
  %v2875 = vadd.f32 %v2325, %v2874
  %v2876 = vpop.f32.mrb[0].mxu0
  %2877 = vmatprep.mubr.bf16.mxu0 0
  %2878 = vmatmul.mubr.bf16.gmra.mrb[0].mxu0 %v2472
  %v2879 = vpop.f32.mrb[0].mxu0
  %v2880 = vadd.f32 %v2325, %v2879
  %v2881 = vpop.f32.mrb[0].mxu0
  %v2882 = vpop.f32.mrb[0].mxu0
  %v2883 = vadd.f32 %v2325, %v2882
  %v2884 = vpop.f32.mrb[0].mxu0
  %2885 = vmatprep.mubr.bf16.mxu0 0
  %2886 = vmatmul.mubr.bf16.gmra.mrb[0].mxu0 %v2475
  %v2887 = vpop.f32.mrb[0].mxu0
  %v2888 = vadd.f32 %v2325, %v2887
  %v2889 = vpop.f32.mrb[0].mxu0
  %v2890 = vpop.f32.mrb[0].mxu0
  %v2891 = vadd.f32 %v2325, %v2890
  %v2892 = vpop.f32.mrb[0].mxu0
  %2893 = vdwg.mxu0
  %v2894 = vmax.f32 %v2512, 0.0
  %v2895 = vmax.f32 %v2515, 0.0
  %v2896 = vmax.f32 %v2520, 0.0
  %v2897 = vmax.f32 %v2523, 0.0
  %v2898 = vmax.f32 %v2528, 0.0
  %v2899 = vmax.f32 %v2531, 0.0
  %v2900 = vmax.f32 %v2536, 0.0
  %v2901 = vmax.f32 %v2539, 0.0
  %v2902 = vmax.f32 %v2544, 0.0
  %v2903 = vmax.f32 %v2547, 0.0
  %v2904 = vmax.f32 %v2552, 0.0
  %v2905 = vmax.f32 %v2555, 0.0
  %v2906 = vmax.f32 %v2560, 0.0
  %v2907 = vmax.f32 %v2563, 0.0
  %v2908 = vmax.f32 %v2568, 0.0
  %v2909 = vmax.f32 %v2571, 0.0
  %v2910 = vmax.f32 %v2576, 0.0
  %v2911 = vmax.f32 %v2579, 0.0
  %v2912 = vmax.f32 %v2584, 0.0
  %v2913 = vmax.f32 %v2587, 0.0
  %v2914 = vmax.f32 %v2592, 0.0
  %v2915 = vmax.f32 %v2595, 0.0
  %v2916 = vmax.f32 %v2600, 0.0
  %v2917 = vmax.f32 %v2603, 0.0
  %v2918 = vmax.f32 %v2608, 0.0
  %v2919 = vmax.f32 %v2611, 0.0
  %v2920 = vmax.f32 %v2616, 0.0
  %v2921 = vmax.f32 %v2619, 0.0
  %v2922 = vmax.f32 %v2624, 0.0
  %v2923 = vmax.f32 %v2627, 0.0
  %v2924 = vmax.f32 %v2632, 0.0
  %v2925 = vmax.f32 %v2635, 0.0
  %v2926 = vmax.f32 %v2640, 0.0
  %v2927 = vmax.f32 %v2643, 0.0
  %v2928 = vmax.f32 %v2648, 0.0
  %v2929 = vmax.f32 %v2651, 0.0
  %v2930 = vmax.f32 %v2656, 0.0
  %v2931 = vmax.f32 %v2659, 0.0
  %v2932 = vmax.f32 %v2664, 0.0
  %v2933 = vmax.f32 %v2667, 0.0
  %v2934 = vmax.f32 %v2672, 0.0
  %v2935 = vmax.f32 %v2675, 0.0
  %v2936 = vmax.f32 %v2680, 0.0
  %v2937 = vmax.f32 %v2683, 0.0
  %v2938 = vmax.f32 %v2688, 0.0
  %v2939 = vmax.f32 %v2691, 0.0
  %v2940 = vmax.f32 %v2696, 0.0
  %v2941 = vmax.f32 %v2699, 0.0
  %v2942 = vmax.f32 %v2704, 0.0
  %v2943 = vmax.f32 %v2707, 0.0
  %v2944 = vmax.f32 %v2712, 0.0
  %v2945 = vmax.f32 %v2715, 0.0
  %v2946 = vmax.f32 %v2720, 0.0
  %v2947 = vmax.f32 %v2723, 0.0
  %v2948 = vmax.f32 %v2728, 0.0
  %v2949 = vmax.f32 %v2731, 0.0
  %v2950 = vmax.f32 %v2736, 0.0
  %v2951 = vmax.f32 %v2739, 0.0
  %v2952 = vmax.f32 %v2744, 0.0
  %v2953 = vmax.f32 %v2747, 0.0
  %v2954 = vmax.f32 %v2752, 0.0
  %v2955 = vmax.f32 %v2755, 0.0
  %v2956 = vmax.f32 %v2760, 0.0
  %v2957 = vmax.f32 %v2763, 0.0
  %v2958 = vmax.f32 %v2768, 0.0
  %v2959 = vmax.f32 %v2771, 0.0
  %v2960 = vmax.f32 %v2776, 0.0
  %v2961 = vmax.f32 %v2779, 0.0
  %v2962 = vmax.f32 %v2784, 0.0
  %v2963 = vmax.f32 %v2787, 0.0
  %v2964 = vmax.f32 %v2792, 0.0
  %v2965 = vmax.f32 %v2795, 0.0
  %v2966 = vmax.f32 %v2800, 0.0
  %v2967 = vmax.f32 %v2803, 0.0
  %v2968 = vmax.f32 %v2808, 0.0
  %v2969 = vmax.f32 %v2811, 0.0
  %v2970 = vmax.f32 %v2816, 0.0
  %v2971 = vmax.f32 %v2819, 0.0
  %v2972 = vmax.f32 %v2824, 0.0
  %v2973 = vmax.f32 %v2827, 0.0
  %v2974 = vmax.f32 %v2832, 0.0
  %v2975 = vmax.f32 %v2835, 0.0
  %v2976 = vmax.f32 %v2840, 0.0
  %v2977 = vmax.f32 %v2843, 0.0
  %v2978 = vmax.f32 %v2848, 0.0
  %v2979 = vmax.f32 %v2851, 0.0
  %v2980 = vmax.f32 %v2856, 0.0
  %v2981 = vmax.f32 %v2859, 0.0
  %v2982 = vmax.f32 %v2864, 0.0
  %v2983 = vmax.f32 %v2867, 0.0
  %v2984 = vmax.f32 %v2872, 0.0
  %v2985 = vmax.f32 %v2875, 0.0
  %v2986 = vmax.f32 %v2880, 0.0
  %v2987 = vmax.f32 %v2883, 0.0
  %v2988 = vmax.f32 %v2888, 0.0
  %v2989 = vmax.f32 %v2891, 0.0
  %3086 = vrot.lane.b32.xlu0 %v2894, 16
  %v3087 = vpop.permute.xlu0 %3086
  %3088 = vrot.lane.b32.xlu0 %v2895, 16
  %v3089 = vpop.permute.xlu0 %3088
  %3090 = vrot.lane.b32.xlu0 %v2896, 16
  %v3091 = vpop.permute.xlu0 %3090
  %3092 = vrot.lane.b32.xlu0 %v2897, 16
  %v3093 = vpop.permute.xlu0 %3092
  %3094 = vrot.lane.b32.xlu0 %v2898, 16
  %v3095 = vpop.permute.xlu0 %3094
  %3096 = vrot.lane.b32.xlu0 %v2899, 16
  %v3097 = vpop.permute.xlu0 %3096
  %3098 = vrot.lane.b32.xlu0 %v2900, 16
  %v3099 = vpop.permute.xlu0 %3098
  %3100 = vrot.lane.b32.xlu0 %v2901, 16
  %v3101 = vpop.permute.xlu0 %3100
  %3102 = vrot.lane.b32.xlu0 %v2902, 16
  %v3103 = vpop.permute.xlu0 %3102
  %3104 = vrot.lane.b32.xlu0 %v2903, 16
  %v3105 = vpop.permute.xlu0 %3104
  %3106 = vrot.lane.b32.xlu0 %v2904, 16
  %v3107 = vpop.permute.xlu0 %3106
  %3108 = vrot.lane.b32.xlu0 %v2905, 16
  %v3109 = vpop.permute.xlu0 %3108
  %3110 = vrot.lane.b32.xlu0 %v2906, 16
  %v3111 = vpop.permute.xlu0 %3110
  %3112 = vrot.lane.b32.xlu0 %v2907, 16
  %v3113 = vpop.permute.xlu0 %3112
  %3114 = vrot.lane.b32.xlu0 %v2908, 16
  %v3115 = vpop.permute.xlu0 %3114
  %3116 = vrot.lane.b32.xlu0 %v2909, 16
  %v3117 = vpop.permute.xlu0 %3116
  %3118 = vrot.lane.b32.xlu0 %v2910, 16
  %v3119 = vpop.permute.xlu0 %3118
  %3120 = vrot.lane.b32.xlu0 %v2911, 16
  %v3121 = vpop.permute.xlu0 %3120
  %3122 = vrot.lane.b32.xlu0 %v2912, 16
  %v3123 = vpop.permute.xlu0 %3122
  %3124 = vrot.lane.b32.xlu0 %v2913, 16
  %v3125 = vpop.permute.xlu0 %3124
  %3126 = vrot.lane.b32.xlu0 %v2914, 16
  %v3127 = vpop.permute.xlu0 %3126
  %3128 = vrot.lane.b32.xlu0 %v2915, 16
  %v3129 = vpop.permute.xlu0 %3128
  %3130 = vrot.lane.b32.xlu0 %v2916, 16
  %v3131 = vpop.permute.xlu0 %3130
  %3132 = vrot.lane.b32.xlu0 %v2917, 16
  %v3133 = vpop.permute.xlu0 %3132
  %3134 = vrot.lane.b32.xlu0 %v2918, 16
  %v3135 = vpop.permute.xlu0 %3134
  %3136 = vrot.lane.b32.xlu0 %v2919, 16
  %v3137 = vpop.permute.xlu0 %3136
  %3138 = vrot.lane.b32.xlu0 %v2920, 16
  %v3139 = vpop.permute.xlu0 %3138
  %3140 = vrot.lane.b32.xlu0 %v2921, 16
  %v3141 = vpop.permute.xlu0 %3140
  %3142 = vrot.lane.b32.xlu0 %v2922, 16
  %v3143 = vpop.permute.xlu0 %3142
  %3144 = vrot.lane.b32.xlu0 %v2923, 16
  %v3145 = vpop.permute.xlu0 %3144
  %3146 = vrot.lane.b32.xlu0 %v2924, 16
  %v3147 = vpop.permute.xlu0 %3146
  %3148 = vrot.lane.b32.xlu0 %v2925, 16
  %v3149 = vpop.permute.xlu0 %3148
  %3150 = vrot.lane.b32.xlu0 %v2926, 16
  %v3151 = vpop.permute.xlu0 %3150
  %3152 = vrot.lane.b32.xlu0 %v2927, 16
  %v3153 = vpop.permute.xlu0 %3152
  %3154 = vrot.lane.b32.xlu0 %v2928, 16
  %v3155 = vpop.permute.xlu0 %3154
  %3156 = vrot.lane.b32.xlu0 %v2929, 16
  %v3157 = vpop.permute.xlu0 %3156
  %3158 = vrot.lane.b32.xlu0 %v2930, 16
  %v3159 = vpop.permute.xlu0 %3158
  %3160 = vrot.lane.b32.xlu0 %v2931, 16
  %v3161 = vpop.permute.xlu0 %3160
  %3162 = vrot.lane.b32.xlu0 %v2932, 16
  %v3163 = vpop.permute.xlu0 %3162
  %3164 = vrot.lane.b32.xlu0 %v2933, 16
  %v3165 = vpop.permute.xlu0 %3164
  %3166 = vrot.lane.b32.xlu0 %v2934, 16
  %v3167 = vpop.permute.xlu0 %3166
  %3168 = vrot.lane.b32.xlu0 %v2935, 16
  %v3169 = vpop.permute.xlu0 %3168
  %3170 = vrot.lane.b32.xlu0 %v2936, 16
  %v3171 = vpop.permute.xlu0 %3170
  %3172 = vrot.lane.b32.xlu0 %v2937, 16
  %v3173 = vpop.permute.xlu0 %3172
  %3174 = vrot.lane.b32.xlu0 %v2938, 16
  %v3175 = vpop.permute.xlu0 %3174
  %3176 = vrot.lane.b32.xlu0 %v2939, 16
  %v3177 = vpop.permute.xlu0 %3176
  %3178 = vrot.lane.b32.xlu0 %v2940, 16
  %v3179 = vpop.permute.xlu0 %3178
  %3180 = vrot.lane.b32.xlu0 %v2941, 16
  %v3181 = vpop.permute.xlu0 %3180
  %3182 = vrot.lane.b32.xlu0 %v2942, 16
  %v3183 = vpop.permute.xlu0 %3182
  %3184 = vrot.lane.b32.xlu0 %v2943, 16
  %v3185 = vpop.permute.xlu0 %3184
  %3186 = vrot.lane.b32.xlu0 %v2944, 16
  %v3187 = vpop.permute.xlu0 %3186
  %3188 = vrot.lane.b32.xlu0 %v2945, 16
  %v3189 = vpop.permute.xlu0 %3188
  %3190 = vrot.lane.b32.xlu0 %v2946, 16
  %v3191 = vpop.permute.xlu0 %3190
  %3192 = vrot.lane.b32.xlu0 %v2947, 16
  %v3193 = vpop.permute.xlu0 %3192
  %3194 = vrot.lane.b32.xlu0 %v2948, 16
  %v3195 = vpop.permute.xlu0 %3194
  %3196 = vrot.lane.b32.xlu0 %v2949, 16
  %v3197 = vpop.permute.xlu0 %3196
  %3198 = vrot.lane.b32.xlu0 %v2950, 16
  %v3199 = vpop.permute.xlu0 %3198
  %3200 = vrot.lane.b32.xlu0 %v2951, 16
  %v3201 = vpop.permute.xlu0 %3200
  %3202 = vrot.lane.b32.xlu0 %v2952, 16
  %v3203 = vpop.permute.xlu0 %3202
  %3204 = vrot.lane.b32.xlu0 %v2953, 16
  %v3205 = vpop.permute.xlu0 %3204
  %3206 = vrot.lane.b32.xlu0 %v2954, 16
  %v3207 = vpop.permute.xlu0 %3206
  %3208 = vrot.lane.b32.xlu0 %v2955, 16
  %v3209 = vpop.permute.xlu0 %3208
  %3210 = vrot.lane.b32.xlu0 %v2956, 16
  %v3211 = vpop.permute.xlu0 %3210
  %3212 = vrot.lane.b32.xlu0 %v2957, 16
  %v3213 = vpop.permute.xlu0 %3212
  %3214 = vrot.lane.b32.xlu0 %v2958, 16
  %v3215 = vpop.permute.xlu0 %3214
  %3216 = vrot.lane.b32.xlu0 %v2959, 16
  %v3217 = vpop.permute.xlu0 %3216
  %3218 = vrot.lane.b32.xlu0 %v2960, 16
  %v3219 = vpop.permute.xlu0 %3218
  %3220 = vrot.lane.b32.xlu0 %v2961, 16
  %v3221 = vpop.permute.xlu0 %3220
  %3222 = vrot.lane.b32.xlu0 %v2962, 16
  %v3223 = vpop.permute.xlu0 %3222
  %3224 = vrot.lane.b32.xlu0 %v2963, 16
  %v3225 = vpop.permute.xlu0 %3224
  %3226 = vrot.lane.b32.xlu0 %v2964, 16
  %v3227 = vpop.permute.xlu0 %3226
  %3228 = vrot.lane.b32.xlu0 %v2965, 16
  %v3229 = vpop.permute.xlu0 %3228
  %3230 = vrot.lane.b32.xlu0 %v2966, 16
  %v3231 = vpop.permute.xlu0 %3230
  %3232 = vrot.lane.b32.xlu0 %v2967, 16
  %v3233 = vpop.permute.xlu0 %3232
  %3234 = vrot.lane.b32.xlu0 %v2968, 16
  %v3235 = vpop.permute.xlu0 %3234
  %3236 = vrot.lane.b32.xlu0 %v2969, 16
  %v3237 = vpop.permute.xlu0 %3236
  %3238 = vrot.lane.b32.xlu0 %v2970, 16
  %v3239 = vpop.permute.xlu0 %3238
  %3240 = vrot.lane.b32.xlu0 %v2971, 16
  %v3241 = vpop.permute.xlu0 %3240
  %3242 = vrot.lane.b32.xlu0 %v2972, 16
  %v3243 = vpop.permute.xlu0 %3242
  %3244 = vrot.lane.b32.xlu0 %v2973, 16
  %v3245 = vpop.permute.xlu0 %3244
  %3246 = vrot.lane.b32.xlu0 %v2974, 16
  %v3247 = vpop.permute.xlu0 %3246
  %3248 = vrot.lane.b32.xlu0 %v2975, 16
  %v3249 = vpop.permute.xlu0 %3248
  %3250 = vrot.lane.b32.xlu0 %v2976, 16
  %v3251 = vpop.permute.xlu0 %3250
  %3252 = vrot.lane.b32.xlu0 %v2977, 16
  %v3253 = vpop.permute.xlu0 %3252
  %3254 = vrot.lane.b32.xlu0 %v2978, 16
  %v3255 = vpop.permute.xlu0 %3254
  %3256 = vrot.lane.b32.xlu0 %v2979, 16
  %v3257 = vpop.permute.xlu0 %3256
  %3258 = vrot.lane.b32.xlu0 %v2980, 16
  %v3259 = vpop.permute.xlu0 %3258
  %3260 = vrot.lane.b32.xlu0 %v2981, 16
  %v3261 = vpop.permute.xlu0 %3260
  %3262 = vrot.lane.b32.xlu0 %v2982, 16
  %v3263 = vpop.permute.xlu0 %3262
  %3264 = vrot.lane.b32.xlu0 %v2983, 16
  %v3265 = vpop.permute.xlu0 %3264
  %3266 = vrot.lane.b32.xlu0 %v2984, 16
  %v3267 = vpop.permute.xlu0 %3266
  %3268 = vrot.lane.b32.xlu0 %v2985, 16
  %v3269 = vpop.permute.xlu0 %3268
  %3270 = vrot.lane.b32.xlu0 %v2986, 16
  %v3271 = vpop.permute.xlu0 %3270
  %3272 = vrot.lane.b32.xlu0 %v2987, 16
  %v3273 = vpop.permute.xlu0 %3272
  %3274 = vrot.lane.b32.xlu0 %v2988, 16
  %v3275 = vpop.permute.xlu0 %3274
  %3276 = vrot.lane.b32.xlu0 %v2989, 16
  %v3277 = vpop.permute.xlu0 %3276
  %v3374 = vsel %vm892, %v1454, %v3087
  %v3375 = vsel %vm892, %v1455, %v3089
  %v3376 = vsel %vm892, %v1456, %v3091
  %v3377 = vsel %vm892, %v1457, %v3093
  %v3378 = vsel %vm892, %v1458, %v3095
  %v3379 = vsel %vm892, %v1459, %v3097
  %v3380 = vsel %vm892, %v1460, %v3099
  %v3381 = vsel %vm892, %v1461, %v3101
  %v3382 = vsel %vm892, %v1462, %v3103
  %v3383 = vsel %vm892, %v1463, %v3105
  %v3384 = vsel %vm892, %v1464, %v3107
  %v3385 = vsel %vm892, %v1465, %v3109
  %v3386 = vsel %vm892, %v1466, %v3111
  %v3387 = vsel %vm892, %v1467, %v3113
  %v3388 = vsel %vm892, %v1468, %v3115
  %v3389 = vsel %vm892, %v1469, %v3117
  %v3390 = vsel %vm892, %v1470, %v3119
  %v3391 = vsel %vm892, %v1471, %v3121
  %v3392 = vsel %vm892, %v1472, %v3123
  %v3393 = vsel %vm892, %v1473, %v3125
  %v3394 = vsel %vm892, %v1474, %v3127
  %v3395 = vsel %vm892, %v1475, %v3129
  %v3396 = vsel %vm892, %v1476, %v3131
  %v3397 = vsel %vm892, %v1477, %v3133
  %v3398 = vsel %vm892, %v1478, %v3135
  %v3399 = vsel %vm892, %v1479, %v3137
  %v3400 = vsel %vm892, %v1480, %v3139
  %v3401 = vsel %vm892, %v1481, %v3141
  %v3402 = vsel %vm892, %v1482, %v3143
  %v3403 = vsel %vm892, %v1483, %v3145
  %v3404 = vsel %vm892, %v1484, %v3147
  %v3405 = vsel %vm892, %v1485, %v3149
  %v3406 = vsel %vm892, %v1486, %v3151
  %v3407 = vsel %vm892, %v1487, %v3153
  %v3408 = vsel %vm892, %v1488, %v3155
  %v3409 = vsel %vm892, %v1489, %v3157
  %v3410 = vsel %vm892, %v1490, %v3159
  %v3411 = vsel %vm892, %v1491, %v3161
  %v3412 = vsel %vm892, %v1492, %v3163
  %v3413 = vsel %vm892, %v1493, %v3165
  %v3414 = vsel %vm892, %v1494, %v3167
  %v3415 = vsel %vm892, %v1495, %v3169
  %v3416 = vsel %vm892, %v1496, %v3171
  %v3417 = vsel %vm892, %v1497, %v3173
  %v3418 = vsel %vm892, %v1498, %v3175
  %v3419 = vsel %vm892, %v1499, %v3177
  %v3420 = vsel %vm892, %v1500, %v3179
  %v3421 = vsel %vm892, %v1501, %v3181
  %v3422 = vsel %vm892, %v1502, %v3183
  %v3423 = vsel %vm892, %v1503, %v3185
  %v3424 = vsel %vm892, %v1504, %v3187
  %v3425 = vsel %vm892, %v1505, %v3189
  %v3426 = vsel %vm892, %v1506, %v3191
  %v3427 = vsel %vm892, %v1507, %v3193
  %v3428 = vsel %vm892, %v1508, %v3195
  %v3429 = vsel %vm892, %v1509, %v3197
  %v3430 = vsel %vm892, %v1510, %v3199
  %v3431 = vsel %vm892, %v1511, %v3201
  %v3432 = vsel %vm892, %v1512, %v3203
  %v3433 = vsel %vm892, %v1513, %v3205
  %v3434 = vsel %vm892, %v1514, %v3207
  %v3435 = vsel %vm892, %v1515, %v3209
  %v3436 = vsel %vm892, %v1516, %v3211
  %v3437 = vsel %vm892, %v1517, %v3213
  %v3438 = vsel %vm892, %v1518, %v3215
  %v3439 = vsel %vm892, %v1519, %v3217
  %v3440 = vsel %vm892, %v1520, %v3219
  %v3441 = vsel %vm892, %v1521, %v3221
  %v3442 = vsel %vm892, %v1522, %v3223
  %v3443 = vsel %vm892, %v1523, %v3225
  %v3444 = vsel %vm892, %v1524, %v3227
  %v3445 = vsel %vm892, %v1525, %v3229
  %v3446 = vsel %vm892, %v1526, %v3231
  %v3447 = vsel %vm892, %v1527, %v3233
  %v3448 = vsel %vm892, %v1528, %v3235
  %v3449 = vsel %vm892, %v1529, %v3237
  %v3450 = vsel %vm892, %v1530, %v3239
  %v3451 = vsel %vm892, %v1531, %v3241
  %v3452 = vsel %vm892, %v1532, %v3243
  %v3453 = vsel %vm892, %v1533, %v3245
  %v3454 = vsel %vm892, %v1534, %v3247
  %v3455 = vsel %vm892, %v1535, %v3249
  %v3456 = vsel %vm892, %v1536, %v3251
  %v3457 = vsel %vm892, %v1537, %v3253
  %v3458 = vsel %vm892, %v1538, %v3255
  %v3459 = vsel %vm892, %v1539, %v3257
  %v3460 = vsel %vm892, %v1540, %v3259
  %v3461 = vsel %vm892, %v1541, %v3261
  %v3462 = vsel %vm892, %v1542, %v3263
  %v3463 = vsel %vm892, %v1543, %v3265
  %v3464 = vsel %vm892, %v1544, %v3267
  %v3465 = vsel %vm892, %v1545, %v3269
  %v3466 = vsel %vm892, %v1546, %v3271
  %v3467 = vsel %vm892, %v1547, %v3273
  %v3468 = vsel %vm892, %v1548, %v3275
  %v3469 = vsel %vm892, %v1549, %v3277
  %v3470 = vld [vmem:[%s1 + $0x10] sm:$0xf]
  %v3471 = vld [vmem:[%s1 + $0x30] sm:$0xf]
  %v3472 = vld [vmem:[%s1 + $0x50] sm:$0xf]
  %v3473 = vld [vmem:[%s1 + $0x70] sm:$0xf]
  %v3474 = vld [vmem:[%s2 + $0x4] sm:$0x1]
  %v3475 = vpack.c.bf16 %v3375, %v3374
  %v3476 = vpack.c.bf16 %v3377, %v3376
  %v3477 = vpack.c.bf16 %v3379, %v3378
  %v3478 = vpack.c.bf16 %v3381, %v3380
  %v3479 = vpack.c.bf16 %v3383, %v3382
  %v3480 = vpack.c.bf16 %v3385, %v3384
  %v3481 = vpack.c.bf16 %v3387, %v3386
  %v3482 = vpack.c.bf16 %v3389, %v3388
  %v3483 = vpack.c.bf16 %v3391, %v3390
  %v3484 = vpack.c.bf16 %v3393, %v3392
  %v3485 = vpack.c.bf16 %v3395, %v3394
  %v3486 = vpack.c.bf16 %v3397, %v3396
  %v3487 = vpack.c.bf16 %v3399, %v3398
  %v3488 = vpack.c.bf16 %v3401, %v3400
  %v3489 = vpack.c.bf16 %v3403, %v3402
  %v3490 = vpack.c.bf16 %v3405, %v3404
  %v3491 = vpack.c.bf16 %v3407, %v3406
  %v3492 = vpack.c.bf16 %v3409, %v3408
  %v3493 = vpack.c.bf16 %v3411, %v3410
  %v3494 = vpack.c.bf16 %v3413, %v3412
  %v3495 = vpack.c.bf16 %v3415, %v3414
  %v3496 = vpack.c.bf16 %v3417, %v3416
  %v3497 = vpack.c.bf16 %v3419, %v3418
  %v3498 = vpack.c.bf16 %v3421, %v3420
  %v3499 = vpack.c.bf16 %v3423, %v3422
  %v3500 = vpack.c.bf16 %v3425, %v3424
  %v3501 = vpack.c.bf16 %v3427, %v3426
  %v3502 = vpack.c.bf16 %v3429, %v3428
  %v3503 = vpack.c.bf16 %v3431, %v3430
  %v3504 = vpack.c.bf16 %v3433, %v3432
  %v3505 = vpack.c.bf16 %v3435, %v3434
  %v3506 = vpack.c.bf16 %v3437, %v3436
  %v3507 = vpack.c.bf16 %v3439, %v3438
  %v3508 = vpack.c.bf16 %v3441, %v3440
  %v3509 = vpack.c.bf16 %v3443, %v3442
  %v3510 = vpack.c.bf16 %v3445, %v3444
  %v3511 = vpack.c.bf16 %v3447, %v3446
  %v3512 = vpack.c.bf16 %v3449, %v3448
  %v3513 = vpack.c.bf16 %v3451, %v3450
  %v3514 = vpack.c.bf16 %v3453, %v3452
  %v3515 = vpack.c.bf16 %v3455, %v3454
  %v3516 = vpack.c.bf16 %v3457, %v3456
  %v3517 = vpack.c.bf16 %v3459, %v3458
  %v3518 = vpack.c.bf16 %v3461, %v3460
  %v3519 = vpack.c.bf16 %v3463, %v3462
  %v3520 = vpack.c.bf16 %v3465, %v3464
  %v3521 = vpack.c.bf16 %v3467, %v3466
  %v3522 = vpack.c.bf16 %v3469, %v3468
  %v3524 = vlaneseq
  %v3525 = vshrl.u32 %v3524, 7
  %v3526 = vsub.s32 0, %v3525
  %v3527 = vrot.slane %v3474, %v3526
  %v3533 = vunpack.c.l.b16 %v3470
  %v3534 = vunpack.c.l.b16 %v3471
  %v3535 = vunpack.c.l.b16 %v3472
  %v3536 = vunpack.c.l.b16 %v3473
  %v3537 = vpack.c.b16 %v3534, %v3533
  %v3538 = vpack.c.b16 %v3536, %v3535
  %vm3541 = vcmask 261120
  %v3543 = vsel %vm3541, %v3475, 0
  %v3546 = vsel %vm3541, %v3476, 0
  %v3549 = vsel %vm3541, %v3477, 0
  %v3552 = vsel %vm3541, %v3478, 0
  %v3555 = vsel %vm3541, %v3479, 0
  %v3558 = vsel %vm3541, %v3480, 0
  %v3561 = vsel %vm3541, %v3481, 0
  %v3564 = vsel %vm3541, %v3482, 0
  %v3567 = vsel %vm3541, %v3483, 0
  %v3570 = vsel %vm3541, %v3484, 0
  %v3573 = vsel %vm3541, %v3485, 0
  %v3576 = vsel %vm3541, %v3486, 0
  %v3579 = vsel %vm3541, %v3487, 0
  %v3582 = vsel %vm3541, %v3488, 0
  %v3585 = vsel %vm3541, %v3489, 0
  %v3588 = vsel %vm3541, %v3490, 0
  %v3591 = vsel %vm3541, %v3491, 0
  %v3594 = vsel %vm3541, %v3492, 0
  %v3597 = vsel %vm3541, %v3493, 0
  %v3600 = vsel %vm3541, %v3494, 0
  %v3603 = vsel %vm3541, %v3495, 0
  %v3606 = vsel %vm3541, %v3496, 0
  %v3609 = vsel %vm3541, %v3497, 0
  %v3612 = vsel %vm3541, %v3498, 0
  %v3615 = vsel %vm3541, %v3499, 0
  %v3618 = vsel %vm3541, %v3500, 0
  %v3621 = vsel %vm3541, %v3501, 0
  %v3624 = vsel %vm3541, %v3502, 0
  %v3627 = vsel %vm3541, %v3503, 0
  %v3630 = vsel %vm3541, %v3504, 0
  %v3633 = vsel %vm3541, %v3505, 0
  %v3636 = vsel %vm3541, %v3506, 0
  %v3639 = vsel %vm3541, %v3507, 0
  %v3642 = vsel %vm3541, %v3508, 0
  %v3645 = vsel %vm3541, %v3509, 0
  %v3648 = vsel %vm3541, %v3510, 0
  %v3651 = vsel %vm3541, %v3511, 0
  %v3654 = vsel %vm3541, %v3512, 0
  %v3657 = vsel %vm3541, %v3513, 0
  %v3660 = vsel %vm3541, %v3514, 0
  %v3663 = vsel %vm3541, %v3515, 0
  %v3666 = vsel %vm3541, %v3516, 0
  %v3669 = vsel %vm3541, %v3517, 0
  %v3672 = vsel %vm3541, %v3518, 0
  %v3675 = vsel %vm3541, %v3519, 0
  %v3678 = vsel %vm3541, %v3520, 0
  %v3681 = vsel %vm3541, %v3521, 0
  %v3684 = vsel %vm3541, %v3522, 0
  %3686 = vmatprep.subr.bf16.mxu0 0
  %3687 = vmatpush1.bf16.msra.mxu0 %v3537
  %3688 = vmatprep.subr.bf16.mxu0 0
  %3689 = vmatpush1.bf16.msra.mxu0 %v3538
  %3690 = vmatprep.subr.bf16.mxu0 0
  %3691 = vmatpush1.bf16.msra.mxu0 0
  %3692 = vmatprep.subr.bf16.mxu0 0
  %3693 = vmatpush1.bf16.msra.mxu0 0
  %3694 = vmatprep.subr.bf16.mxu0 0
  %3695 = vmatpush1.bf16.msra.mxu0 0
  %3696 = vmatprep.subr.bf16.mxu0 0
  %3697 = vmatpush1.bf16.msra.mxu0 0
  %3698 = vmatprep.subr.bf16.mxu0 0
  %3699 = vmatpush1.bf16.msra.mxu0 0
  %3700 = vmatprep.subr.bf16.mxu0 0
  %3701 = vmatpush1.bf16.msra.mxu0 0
  %3702 = vmatprep.subr.bf16.mxu0 0
  %3703 = vmatpush1.bf16.msra.mxu0 0
  %3704 = vmatprep.subr.bf16.mxu0 0
  %3705 = vmatpush1.bf16.msra.mxu0 0
  %3706 = vmatprep.subr.bf16.mxu0 0
  %3707 = vmatpush1.bf16.msra.mxu0 0
  %3708 = vmatprep.subr.bf16.mxu0 0
  %3709 = vmatpush1.bf16.msra.mxu0 0
  %3710 = vmatprep.subr.bf16.mxu0 0
  %3711 = vmatpush1.bf16.msra.mxu0 0
  %3712 = vmatprep.subr.bf16.mxu0 0
  %3713 = vmatpush1.bf16.msra.mxu0 0
  %3714 = vmatprep.subr.bf16.mxu0 0
  %3715 = vmatpush1.bf16.msra.mxu0 0
  %3716 = vmatprep.subr.bf16.mxu0 0
  %3717 = vmatpush1.bf16.msra.mxu0 0
  %3718 = vmatprep.mubr.bf16.mxu0 0
  %3719 = vmatmul.mubr.bf16.gmra.mrb[0].mxu0 %v3543
  %v3720 = vpop.f32.mrb[0].mxu0
  %v3721 = vadd.f32 %v3527, %v3720
  %v3722 = vpop.f32.mrb[0].mxu0
  %v3723 = vpop.f32.mrb[0].mxu0
  %v3724 = vadd.f32 %v3527, %v3723
  %v3725 = vpop.f32.mrb[0].mxu0
  %3726 = vmatprep.mubr.bf16.mxu0 0
  %3727 = vmatmul.mubr.bf16.gmra.mrb[0].mxu0 %v3546
  %v3728 = vpop.f32.mrb[0].mxu0
  %v3729 = vadd.f32 %v3527, %v3728
  %v3730 = vpop.f32.mrb[0].mxu0
  %v3731 = vpop.f32.mrb[0].mxu0
  %v3732 = vadd.f32 %v3527, %v3731
  %v3733 = vpop.f32.mrb[0].mxu0
  %3734 = vmatprep.mubr.bf16.mxu0 0
  %3735 = vmatmul.mubr.bf16.gmra.mrb[0].mxu0 %v3549
  %v3736 = vpop.f32.mrb[0].mxu0
  %v3737 = vadd.f32 %v3527, %v3736
  %v3738 = vpop.f32.mrb[0].mxu0
  %v3739 = vpop.f32.mrb[0].mxu0
  %v3740 = vadd.f32 %v3527, %v3739
  %v3741 = vpop.f32.mrb[0].mxu0
  %3742 = vmatprep.mubr.bf16.mxu0 0
  %3743 = vmatmul.mubr.bf16.gmra.mrb[0].mxu0 %v3552
  %v3744 = vpop.f32.mrb[0].mxu0
  %v3745 = vadd.f32 %v3527, %v3744
  %v3746 = vpop.f32.mrb[0].mxu0
  %v3747 = vpop.f32.mrb[0].mxu0
  %v3748 = vadd.f32 %v3527, %v3747
  %v3749 = vpop.f32.mrb[0].mxu0
  %3750 = vmatprep.mubr.bf16.mxu0 0
  %3751 = vmatmul.mubr.bf16.gmra.mrb[0].mxu0 %v3555
  %v3752 = vpop.f32.mrb[0].mxu0
  %v3753 = vadd.f32 %v3527, %v3752
  %v3754 = vpop.f32.mrb[0].mxu0
  %v3755 = vpop.f32.mrb[0].mxu0
  %v3756 = vadd.f32 %v3527, %v3755
  %v3757 = vpop.f32.mrb[0].mxu0
  %3758 = vmatprep.mubr.bf16.mxu0 0
  %3759 = vmatmul.mubr.bf16.gmra.mrb[0].mxu0 %v3558
  %v3760 = vpop.f32.mrb[0].mxu0
  %v3761 = vadd.f32 %v3527, %v3760
  %v3762 = vpop.f32.mrb[0].mxu0
  %v3763 = vpop.f32.mrb[0].mxu0
  %v3764 = vadd.f32 %v3527, %v3763
  %v3765 = vpop.f32.mrb[0].mxu0
  %3766 = vmatprep.mubr.bf16.mxu0 0
  %3767 = vmatmul.mubr.bf16.gmra.mrb[0].mxu0 %v3561
  %v3768 = vpop.f32.mrb[0].mxu0
  %v3769 = vadd.f32 %v3527, %v3768
  %v3770 = vpop.f32.mrb[0].mxu0
  %v3771 = vpop.f32.mrb[0].mxu0
  %v3772 = vadd.f32 %v3527, %v3771
  %v3773 = vpop.f32.mrb[0].mxu0
  %3774 = vmatprep.mubr.bf16.mxu0 0
  %3775 = vmatmul.mubr.bf16.gmra.mrb[0].mxu0 %v3564
  %v3776 = vpop.f32.mrb[0].mxu0
  %v3777 = vadd.f32 %v3527, %v3776
  %v3778 = vpop.f32.mrb[0].mxu0
  %v3779 = vpop.f32.mrb[0].mxu0
  %v3780 = vadd.f32 %v3527, %v3779
  %v3781 = vpop.f32.mrb[0].mxu0
  %3782 = vmatprep.mubr.bf16.mxu0 0
  %3783 = vmatmul.mubr.bf16.gmra.mrb[0].mxu0 %v3567
  %v3784 = vpop.f32.mrb[0].mxu0
  %v3785 = vadd.f32 %v3527, %v3784
  %v3786 = vpop.f32.mrb[0].mxu0
  %v3787 = vpop.f32.mrb[0].mxu0
  %v3788 = vadd.f32 %v3527, %v3787
  %v3789 = vpop.f32.mrb[0].mxu0
  %3790 = vmatprep.mubr.bf16.mxu0 0
  %3791 = vmatmul.mubr.bf16.gmra.mrb[0].mxu0 %v3570
  %v3792 = vpop.f32.mrb[0].mxu0
  %v3793 = vadd.f32 %v3527, %v3792
  %v3794 = vpop.f32.mrb[0].mxu0
  %v3795 = vpop.f32.mrb[0].mxu0
  %v3796 = vadd.f32 %v3527, %v3795
  %v3797 = vpop.f32.mrb[0].mxu0
  %3798 = vmatprep.mubr.bf16.mxu0 0
  %3799 = vmatmul.mubr.bf16.gmra.mrb[0].mxu0 %v3573
  %v3800 = vpop.f32.mrb[0].mxu0
  %v3801 = vadd.f32 %v3527, %v3800
  %v3802 = vpop.f32.mrb[0].mxu0
  %v3803 = vpop.f32.mrb[0].mxu0
  %v3804 = vadd.f32 %v3527, %v3803
  %v3805 = vpop.f32.mrb[0].mxu0
  %3806 = vmatprep.mubr.bf16.mxu0 0
  %3807 = vmatmul.mubr.bf16.gmra.mrb[0].mxu0 %v3576
  %v3808 = vpop.f32.mrb[0].mxu0
  %v3809 = vadd.f32 %v3527, %v3808
  %v3810 = vpop.f32.mrb[0].mxu0
  %v3811 = vpop.f32.mrb[0].mxu0
  %v3812 = vadd.f32 %v3527, %v3811
  %v3813 = vpop.f32.mrb[0].mxu0
  %3814 = vmatprep.mubr.bf16.mxu0 0
  %3815 = vmatmul.mubr.bf16.gmra.mrb[0].mxu0 %v3579
  %v3816 = vpop.f32.mrb[0].mxu0
  %v3817 = vadd.f32 %v3527, %v3816
  %v3818 = vpop.f32.mrb[0].mxu0
  %v3819 = vpop.f32.mrb[0].mxu0
  %v3820 = vadd.f32 %v3527, %v3819
  %v3821 = vpop.f32.mrb[0].mxu0
  %3822 = vmatprep.mubr.bf16.mxu0 0
  %3823 = vmatmul.mubr.bf16.gmra.mrb[0].mxu0 %v3582
  %v3824 = vpop.f32.mrb[0].mxu0
  %v3825 = vadd.f32 %v3527, %v3824
  %v3826 = vpop.f32.mrb[0].mxu0
  %v3827 = vpop.f32.mrb[0].mxu0
  %v3828 = vadd.f32 %v3527, %v3827
  %v3829 = vpop.f32.mrb[0].mxu0
  %3830 = vmatprep.mubr.bf16.mxu0 0
  %3831 = vmatmul.mubr.bf16.gmra.mrb[0].mxu0 %v3585
  %v3832 = vpop.f32.mrb[0].mxu0
  %v3833 = vadd.f32 %v3527, %v3832
  %v3834 = vpop.f32.mrb[0].mxu0
  %v3835 = vpop.f32.mrb[0].mxu0
  %v3836 = vadd.f32 %v3527, %v3835
  %v3837 = vpop.f32.mrb[0].mxu0
  %3838 = vmatprep.mubr.bf16.mxu0 0
  %3839 = vmatmul.mubr.bf16.gmra.mrb[0].mxu0 %v3588
  %v3840 = vpop.f32.mrb[0].mxu0
  %v3841 = vadd.f32 %v3527, %v3840
  %v3842 = vpop.f32.mrb[0].mxu0
  %v3843 = vpop.f32.mrb[0].mxu0
  %v3844 = vadd.f32 %v3527, %v3843
  %v3845 = vpop.f32.mrb[0].mxu0
  %3846 = vmatprep.mubr.bf16.mxu0 0
  %3847 = vmatmul.mubr.bf16.gmra.mrb[0].mxu0 %v3591
  %v3848 = vpop.f32.mrb[0].mxu0
  %v3849 = vadd.f32 %v3527, %v3848
  %v3850 = vpop.f32.mrb[0].mxu0
  %v3851 = vpop.f32.mrb[0].mxu0
  %v3852 = vadd.f32 %v3527, %v3851
  %v3853 = vpop.f32.mrb[0].mxu0
  %3854 = vmatprep.mubr.bf16.mxu0 0
  %3855 = vmatmul.mubr.bf16.gmra.mrb[0].mxu0 %v3594
  %v3856 = vpop.f32.mrb[0].mxu0
  %v3857 = vadd.f32 %v3527, %v3856
  %v3858 = vpop.f32.mrb[0].mxu0
  %v3859 = vpop.f32.mrb[0].mxu0
  %v3860 = vadd.f32 %v3527, %v3859
  %v3861 = vpop.f32.mrb[0].mxu0
  %3862 = vmatprep.mubr.bf16.mxu0 0
  %3863 = vmatmul.mubr.bf16.gmra.mrb[0].mxu0 %v3597
  %v3864 = vpop.f32.mrb[0].mxu0
  %v3865 = vadd.f32 %v3527, %v3864
  %v3866 = vpop.f32.mrb[0].mxu0
  %v3867 = vpop.f32.mrb[0].mxu0
  %v3868 = vadd.f32 %v3527, %v3867
  %v3869 = vpop.f32.mrb[0].mxu0
  %3870 = vmatprep.mubr.bf16.mxu0 0
  %3871 = vmatmul.mubr.bf16.gmra.mrb[0].mxu0 %v3600
  %v3872 = vpop.f32.mrb[0].mxu0
  %v3873 = vadd.f32 %v3527, %v3872
  %v3874 = vpop.f32.mrb[0].mxu0
  %v3875 = vpop.f32.mrb[0].mxu0
  %v3876 = vadd.f32 %v3527, %v3875
  %v3877 = vpop.f32.mrb[0].mxu0
  %3878 = vmatprep.mubr.bf16.mxu0 0
  %3879 = vmatmul.mubr.bf16.gmra.mrb[0].mxu0 %v3603
  %v3880 = vpop.f32.mrb[0].mxu0
  %v3881 = vadd.f32 %v3527, %v3880
  %v3882 = vpop.f32.mrb[0].mxu0
  %v3883 = vpop.f32.mrb[0].mxu0
  %v3884 = vadd.f32 %v3527, %v3883
  %v3885 = vpop.f32.mrb[0].mxu0
  %3886 = vmatprep.mubr.bf16.mxu0 0
  %3887 = vmatmul.mubr.bf16.gmra.mrb[0].mxu0 %v3606
  %v3888 = vpop.f32.mrb[0].mxu0
  %v3889 = vadd.f32 %v3527, %v3888
  %v3890 = vpop.f32.mrb[0].mxu0
  %v3891 = vpop.f32.mrb[0].mxu0
  %v3892 = vadd.f32 %v3527, %v3891
  %v3893 = vpop.f32.mrb[0].mxu0
  %3894 = vmatprep.mubr.bf16.mxu0 0
  %3895 = vmatmul.mubr.bf16.gmra.mrb[0].mxu0 %v3609
  %v3896 = vpop.f32.mrb[0].mxu0
  %v3897 = vadd.f32 %v3527, %v3896
  %v3898 = vpop.f32.mrb[0].mxu0
  %v3899 = vpop.f32.mrb[0].mxu0
  %v3900 = vadd.f32 %v3527, %v3899
  %v3901 = vpop.f32.mrb[0].mxu0
  %3902 = vmatprep.mubr.bf16.mxu0 0
  %3903 = vmatmul.mubr.bf16.gmra.mrb[0].mxu0 %v3612
  %v3904 = vpop.f32.mrb[0].mxu0
  %v3905 = vadd.f32 %v3527, %v3904
  %v3906 = vpop.f32.mrb[0].mxu0
  %v3907 = vpop.f32.mrb[0].mxu0
  %v3908 = vadd.f32 %v3527, %v3907
  %v3909 = vpop.f32.mrb[0].mxu0
  %3910 = vmatprep.mubr.bf16.mxu0 0
  %3911 = vmatmul.mubr.bf16.gmra.mrb[0].mxu0 %v3615
  %v3912 = vpop.f32.mrb[0].mxu0
  %v3913 = vadd.f32 %v3527, %v3912
  %v3914 = vpop.f32.mrb[0].mxu0
  %v3915 = vpop.f32.mrb[0].mxu0
  %v3916 = vadd.f32 %v3527, %v3915
  %v3917 = vpop.f32.mrb[0].mxu0
  %3918 = vmatprep.mubr.bf16.mxu0 0
  %3919 = vmatmul.mubr.bf16.gmra.mrb[0].mxu0 %v3618
  %v3920 = vpop.f32.mrb[0].mxu0
  %v3921 = vadd.f32 %v3527, %v3920
  %v3922 = vpop.f32.mrb[0].mxu0
  %v3923 = vpop.f32.mrb[0].mxu0
  %v3924 = vadd.f32 %v3527, %v3923
  %v3925 = vpop.f32.mrb[0].mxu0
  %3926 = vmatprep.mubr.bf16.mxu0 0
  %3927 = vmatmul.mubr.bf16.gmra.mrb[0].mxu0 %v3621
  %v3928 = vpop.f32.mrb[0].mxu0
  %v3929 = vadd.f32 %v3527, %v3928
  %v3930 = vpop.f32.mrb[0].mxu0
  %v3931 = vpop.f32.mrb[0].mxu0
  %v3932 = vadd.f32 %v3527, %v3931
  %v3933 = vpop.f32.mrb[0].mxu0
  %3934 = vmatprep.mubr.bf16.mxu0 0
  %3935 = vmatmul.mubr.bf16.gmra.mrb[0].mxu0 %v3624
  %v3936 = vpop.f32.mrb[0].mxu0
  %v3937 = vadd.f32 %v3527, %v3936
  %v3938 = vpop.f32.mrb[0].mxu0
  %v3939 = vpop.f32.mrb[0].mxu0
  %v3940 = vadd.f32 %v3527, %v3939
  %v3941 = vpop.f32.mrb[0].mxu0
  %3942 = vmatprep.mubr.bf16.mxu0 0
  %3943 = vmatmul.mubr.bf16.gmra.mrb[0].mxu0 %v3627
  %v3944 = vpop.f32.mrb[0].mxu0
  %v3945 = vadd.f32 %v3527, %v3944
  %v3946 = vpop.f32.mrb[0].mxu0
  %v3947 = vpop.f32.mrb[0].mxu0
  %v3948 = vadd.f32 %v3527, %v3947
  %v3949 = vpop.f32.mrb[0].mxu0
  %3950 = vmatprep.mubr.bf16.mxu0 0
  %3951 = vmatmul.mubr.bf16.gmra.mrb[0].mxu0 %v3630
  %v3952 = vpop.f32.mrb[0].mxu0
  %v3953 = vadd.f32 %v3527, %v3952
  %v3954 = vpop.f32.mrb[0].mxu0
  %v3955 = vpop.f32.mrb[0].mxu0
  %v3956 = vadd.f32 %v3527, %v3955
  %v3957 = vpop.f32.mrb[0].mxu0
  %3958 = vmatprep.mubr.bf16.mxu0 0
  %3959 = vmatmul.mubr.bf16.gmra.mrb[0].mxu0 %v3633
  %v3960 = vpop.f32.mrb[0].mxu0
  %v3961 = vadd.f32 %v3527, %v3960
  %v3962 = vpop.f32.mrb[0].mxu0
  %v3963 = vpop.f32.mrb[0].mxu0
  %v3964 = vadd.f32 %v3527, %v3963
  %v3965 = vpop.f32.mrb[0].mxu0
  %3966 = vmatprep.mubr.bf16.mxu0 0
  %3967 = vmatmul.mubr.bf16.gmra.mrb[0].mxu0 %v3636
  %v3968 = vpop.f32.mrb[0].mxu0
  %v3969 = vadd.f32 %v3527, %v3968
  %v3970 = vpop.f32.mrb[0].mxu0
  %v3971 = vpop.f32.mrb[0].mxu0
  %v3972 = vadd.f32 %v3527, %v3971
  %v3973 = vpop.f32.mrb[0].mxu0
  %3974 = vmatprep.mubr.bf16.mxu0 0
  %3975 = vmatmul.mubr.bf16.gmra.mrb[0].mxu0 %v3639
  %v3976 = vpop.f32.mrb[0].mxu0
  %v3977 = vadd.f32 %v3527, %v3976
  %v3978 = vpop.f32.mrb[0].mxu0
  %v3979 = vpop.f32.mrb[0].mxu0
  %v3980 = vadd.f32 %v3527, %v3979
  %v3981 = vpop.f32.mrb[0].mxu0
  %3982 = vmatprep.mubr.bf16.mxu0 0
  %3983 = vmatmul.mubr.bf16.gmra.mrb[0].mxu0 %v3642
  %v3984 = vpop.f32.mrb[0].mxu0
  %v3985 = vadd.f32 %v3527, %v3984
  %v3986 = vpop.f32.mrb[0].mxu0
  %v3987 = vpop.f32.mrb[0].mxu0
  %v3988 = vadd.f32 %v3527, %v3987
  %v3989 = vpop.f32.mrb[0].mxu0
  %3990 = vmatprep.mubr.bf16.mxu0 0
  %3991 = vmatmul.mubr.bf16.gmra.mrb[0].mxu0 %v3645
  %v3992 = vpop.f32.mrb[0].mxu0
  %v3993 = vadd.f32 %v3527, %v3992
  %v3994 = vpop.f32.mrb[0].mxu0
  %v3995 = vpop.f32.mrb[0].mxu0
  %v3996 = vadd.f32 %v3527, %v3995
  %v3997 = vpop.f32.mrb[0].mxu0
  %3998 = vmatprep.mubr.bf16.mxu0 0
  %3999 = vmatmul.mubr.bf16.gmra.mrb[0].mxu0 %v3648
  %v4000 = vpop.f32.mrb[0].mxu0
  %v4001 = vadd.f32 %v3527, %v4000
  %v4002 = vpop.f32.mrb[0].mxu0
  %v4003 = vpop.f32.mrb[0].mxu0
  %v4004 = vadd.f32 %v3527, %v4003
  %v4005 = vpop.f32.mrb[0].mxu0
  %4006 = vmatprep.mubr.bf16.mxu0 0
  %4007 = vmatmul.mubr.bf16.gmra.mrb[0].mxu0 %v3651
  %v4008 = vpop.f32.mrb[0].mxu0
  %v4009 = vadd.f32 %v3527, %v4008
  %v4010 = vpop.f32.mrb[0].mxu0
  %v4011 = vpop.f32.mrb[0].mxu0
  %v4012 = vadd.f32 %v3527, %v4011
  %v4013 = vpop.f32.mrb[0].mxu0
  %4014 = vmatprep.mubr.bf16.mxu0 0
  %4015 = vmatmul.mubr.bf16.gmra.mrb[0].mxu0 %v3654
  %v4016 = vpop.f32.mrb[0].mxu0
  %v4017 = vadd.f32 %v3527, %v4016
  %v4018 = vpop.f32.mrb[0].mxu0
  %v4019 = vpop.f32.mrb[0].mxu0
  %v4020 = vadd.f32 %v3527, %v4019
  %v4021 = vpop.f32.mrb[0].mxu0
  %4022 = vmatprep.mubr.bf16.mxu0 0
  %4023 = vmatmul.mubr.bf16.gmra.mrb[0].mxu0 %v3657
  %v4024 = vpop.f32.mrb[0].mxu0
  %v4025 = vadd.f32 %v3527, %v4024
  %v4026 = vpop.f32.mrb[0].mxu0
  %v4027 = vpop.f32.mrb[0].mxu0
  %v4028 = vadd.f32 %v3527, %v4027
  %v4029 = vpop.f32.mrb[0].mxu0
  %4030 = vmatprep.mubr.bf16.mxu0 0
  %4031 = vmatmul.mubr.bf16.gmra.mrb[0].mxu0 %v3660
  %v4032 = vpop.f32.mrb[0].mxu0
  %v4033 = vadd.f32 %v3527, %v4032
  %v4034 = vpop.f32.mrb[0].mxu0
  %v4035 = vpop.f32.mrb[0].mxu0
  %v4036 = vadd.f32 %v3527, %v4035
  %v4037 = vpop.f32.mrb[0].mxu0
  %4038 = vmatprep.mubr.bf16.mxu0 0
  %4039 = vmatmul.mubr.bf16.gmra.mrb[0].mxu0 %v3663
  %v4040 = vpop.f32.mrb[0].mxu0
  %v4041 = vadd.f32 %v3527, %v4040
  %v4042 = vpop.f32.mrb[0].mxu0
  %v4043 = vpop.f32.mrb[0].mxu0
  %v4044 = vadd.f32 %v3527, %v4043
  %v4045 = vpop.f32.mrb[0].mxu0
  %4046 = vmatprep.mubr.bf16.mxu0 0
  %4047 = vmatmul.mubr.bf16.gmra.mrb[0].mxu0 %v3666
  %v4048 = vpop.f32.mrb[0].mxu0
  %v4049 = vadd.f32 %v3527, %v4048
  %v4050 = vpop.f32.mrb[0].mxu0
  %v4051 = vpop.f32.mrb[0].mxu0
  %v4052 = vadd.f32 %v3527, %v4051
  %v4053 = vpop.f32.mrb[0].mxu0
  %4054 = vmatprep.mubr.bf16.mxu0 0
  %4055 = vmatmul.mubr.bf16.gmra.mrb[0].mxu0 %v3669
  %v4056 = vpop.f32.mrb[0].mxu0
  %v4057 = vadd.f32 %v3527, %v4056
  %v4058 = vpop.f32.mrb[0].mxu0
  %v4059 = vpop.f32.mrb[0].mxu0
  %v4060 = vadd.f32 %v3527, %v4059
  %v4061 = vpop.f32.mrb[0].mxu0
  %4062 = vmatprep.mubr.bf16.mxu0 0
  %4063 = vmatmul.mubr.bf16.gmra.mrb[0].mxu0 %v3672
  %v4064 = vpop.f32.mrb[0].mxu0
  %v4065 = vadd.f32 %v3527, %v4064
  %v4066 = vpop.f32.mrb[0].mxu0
  %v4067 = vpop.f32.mrb[0].mxu0
  %v4068 = vadd.f32 %v3527, %v4067
  %v4069 = vpop.f32.mrb[0].mxu0
  %4070 = vmatprep.mubr.bf16.mxu0 0
  %4071 = vmatmul.mubr.bf16.gmra.mrb[0].mxu0 %v3675
  %v4072 = vpop.f32.mrb[0].mxu0
  %v4073 = vadd.f32 %v3527, %v4072
  %v4074 = vpop.f32.mrb[0].mxu0
  %v4075 = vpop.f32.mrb[0].mxu0
  %v4076 = vadd.f32 %v3527, %v4075
  %v4077 = vpop.f32.mrb[0].mxu0
  %4078 = vmatprep.mubr.bf16.mxu0 0
  %4079 = vmatmul.mubr.bf16.gmra.mrb[0].mxu0 %v3678
  %v4080 = vpop.f32.mrb[0].mxu0
  %v4081 = vadd.f32 %v3527, %v4080
  %v4082 = vpop.f32.mrb[0].mxu0
  %v4083 = vpop.f32.mrb[0].mxu0
  %v4084 = vadd.f32 %v3527, %v4083
  %v4085 = vpop.f32.mrb[0].mxu0
  %4086 = vmatprep.mubr.bf16.mxu0 0
  %4087 = vmatmul.mubr.bf16.gmra.mrb[0].mxu0 %v3681
  %v4088 = vpop.f32.mrb[0].mxu0
  %v4089 = vadd.f32 %v3527, %v4088
  %v4090 = vpop.f32.mrb[0].mxu0
  %v4091 = vpop.f32.mrb[0].mxu0
  %v4092 = vadd.f32 %v3527, %v4091
  %v4093 = vpop.f32.mrb[0].mxu0
  %4094 = vmatprep.mubr.bf16.mxu0 0
  %4095 = vmatmul.mubr.bf16.gmra.mrb[0].mxu0 %v3684
  %v4096 = vpop.f32.mrb[0].mxu0
  %v4097 = vadd.f32 %v3527, %v4096
  %v4098 = vpop.f32.mrb[0].mxu0
  %v4099 = vpop.f32.mrb[0].mxu0
  %v4100 = vadd.f32 %v3527, %v4099
  %v4101 = vpop.f32.mrb[0].mxu0
  %4102 = vdwg.mxu0
  %v4103 = vmax.f32 %v3721, 0.0
  %v4104 = vmax.f32 %v3724, 0.0
  %v4105 = vmax.f32 %v3729, 0.0
  %v4106 = vmax.f32 %v3732, 0.0
  %v4107 = vmax.f32 %v3737, 0.0
  %v4108 = vmax.f32 %v3740, 0.0
  %v4109 = vmax.f32 %v3745, 0.0
  %v4110 = vmax.f32 %v3748, 0.0
  %v4111 = vmax.f32 %v3753, 0.0
  %v4112 = vmax.f32 %v3756, 0.0
  %v4113 = vmax.f32 %v3761, 0.0
  %v4114 = vmax.f32 %v3764, 0.0
  %v4115 = vmax.f32 %v3769, 0.0
  %v4116 = vmax.f32 %v3772, 0.0
  %v4117 = vmax.f32 %v3777, 0.0
  %v4118 = vmax.f32 %v3780, 0.0
  %v4119 = vmax.f32 %v3785, 0.0
  %v4120 = vmax.f32 %v3788, 0.0
  %v4121 = vmax.f32 %v3793, 0.0
  %v4122 = vmax.f32 %v3796, 0.0
  %v4123 = vmax.f32 %v3801, 0.0
  %v4124 = vmax.f32 %v3804, 0.0
  %v4125 = vmax.f32 %v3809, 0.0
  %v4126 = vmax.f32 %v3812, 0.0
  %v4127 = vmax.f32 %v3817, 0.0
  %v4128 = vmax.f32 %v3820, 0.0
  %v4129 = vmax.f32 %v3825, 0.0
  %v4130 = vmax.f32 %v3828, 0.0
  %v4131 = vmax.f32 %v3833, 0.0
  %v4132 = vmax.f32 %v3836, 0.0
  %v4133 = vmax.f32 %v3841, 0.0
  %v4134 = vmax.f32 %v3844, 0.0
  %v4135 = vmax.f32 %v3849, 0.0
  %v4136 = vmax.f32 %v3852, 0.0
  %v4137 = vmax.f32 %v3857, 0.0
  %v4138 = vmax.f32 %v3860, 0.0
  %v4139 = vmax.f32 %v3865, 0.0
  %v4140 = vmax.f32 %v3868, 0.0
  %v4141 = vmax.f32 %v3873, 0.0
  %v4142 = vmax.f32 %v3876, 0.0
  %v4143 = vmax.f32 %v3881, 0.0
  %v4144 = vmax.f32 %v3884, 0.0
  %v4145 = vmax.f32 %v3889, 0.0
  %v4146 = vmax.f32 %v3892, 0.0
  %v4147 = vmax.f32 %v3897, 0.0
  %v4148 = vmax.f32 %v3900, 0.0
  %v4149 = vmax.f32 %v3905, 0.0
  %v4150 = vmax.f32 %v3908, 0.0
  %v4151 = vmax.f32 %v3913, 0.0
  %v4152 = vmax.f32 %v3916, 0.0
  %v4153 = vmax.f32 %v3921, 0.0
  %v4154 = vmax.f32 %v3924, 0.0
  %v4155 = vmax.f32 %v3929, 0.0
  %v4156 = vmax.f32 %v3932, 0.0
  %v4157 = vmax.f32 %v3937, 0.0
  %v4158 = vmax.f32 %v3940, 0.0
  %v4159 = vmax.f32 %v3945, 0.0
  %v4160 = vmax.f32 %v3948, 0.0
  %v4161 = vmax.f32 %v3953, 0.0
  %v4162 = vmax.f32 %v3956, 0.0
  %v4163 = vmax.f32 %v3961, 0.0
  %v4164 = vmax.f32 %v3964, 0.0
  %v4165 = vmax.f32 %v3969, 0.0
  %v4166 = vmax.f32 %v3972, 0.0
  %v4167 = vmax.f32 %v3977, 0.0
  %v4168 = vmax.f32 %v3980, 0.0
  %v4169 = vmax.f32 %v3985, 0.0
  %v4170 = vmax.f32 %v3988, 0.0
  %v4171 = vmax.f32 %v3993, 0.0
  %v4172 = vmax.f32 %v3996, 0.0
  %v4173 = vmax.f32 %v4001, 0.0
  %v4174 = vmax.f32 %v4004, 0.0
  %v4175 = vmax.f32 %v4009, 0.0
  %v4176 = vmax.f32 %v4012, 0.0
  %v4177 = vmax.f32 %v4017, 0.0
  %v4178 = vmax.f32 %v4020, 0.0
  %v4179 = vmax.f32 %v4025, 0.0
  %v4180 = vmax.f32 %v4028, 0.0
  %v4181 = vmax.f32 %v4033, 0.0
  %v4182 = vmax.f32 %v4036, 0.0
  %v4183 = vmax.f32 %v4041, 0.0
  %v4184 = vmax.f32 %v4044, 0.0
  %v4185 = vmax.f32 %v4049, 0.0
  %v4186 = vmax.f32 %v4052, 0.0
  %v4187 = vmax.f32 %v4057, 0.0
  %v4188 = vmax.f32 %v4060, 0.0
  %v4189 = vmax.f32 %v4065, 0.0
  %v4190 = vmax.f32 %v4068, 0.0
  %v4191 = vmax.f32 %v4073, 0.0
  %v4192 = vmax.f32 %v4076, 0.0
  %v4193 = vmax.f32 %v4081, 0.0
  %v4194 = vmax.f32 %v4084, 0.0
  %v4195 = vmax.f32 %v4089, 0.0
  %v4196 = vmax.f32 %v4092, 0.0
  %v4197 = vmax.f32 %v4097, 0.0
  %v4198 = vmax.f32 %v4100, 0.0
  %v4199 = vld [vmem:[%s1 + $0x14] sm:$0xf]
  %v4200 = vld [vmem:[%s1 + $0x34] sm:$0xf]
  %v4201 = vld [vmem:[%s1 + $0x54] sm:$0xf]
  %v4202 = vld [vmem:[%s1 + $0x74] sm:$0xf]
  %v4203 = vld [vmem:[%s2 + $0x5] sm:$0x1]
  %v4204 = vpack.c.bf16 %v4104, %v4103
  %v4205 = vpack.c.bf16 %v4106, %v4105
  %v4206 = vpack.c.bf16 %v4108, %v4107
  %v4207 = vpack.c.bf16 %v4110, %v4109
  %v4208 = vpack.c.bf16 %v4112, %v4111
  %v4209 = vpack.c.bf16 %v4114, %v4113
  %v4210 = vpack.c.bf16 %v4116, %v4115
  %v4211 = vpack.c.bf16 %v4118, %v4117
  %v4212 = vpack.c.bf16 %v4120, %v4119
  %v4213 = vpack.c.bf16 %v4122, %v4121
  %v4214 = vpack.c.bf16 %v4124, %v4123
  %v4215 = vpack.c.bf16 %v4126, %v4125
  %v4216 = vpack.c.bf16 %v4128, %v4127
  %v4217 = vpack.c.bf16 %v4130, %v4129
  %v4218 = vpack.c.bf16 %v4132, %v4131
  %v4219 = vpack.c.bf16 %v4134, %v4133
  %v4220 = vpack.c.bf16 %v4136, %v4135
  %v4221 = vpack.c.bf16 %v4138, %v4137
  %v4222 = vpack.c.bf16 %v4140, %v4139
  %v4223 = vpack.c.bf16 %v4142, %v4141
  %v4224 = vpack.c.bf16 %v4144, %v4143
  %v4225 = vpack.c.bf16 %v4146, %v4145
  %v4226 = vpack.c.bf16 %v4148, %v4147
  %v4227 = vpack.c.bf16 %v4150, %v4149
  %v4228 = vpack.c.bf16 %v4152, %v4151
  %v4229 = vpack.c.bf16 %v4154, %v4153
  %v4230 = vpack.c.bf16 %v4156, %v4155
  %v4231 = vpack.c.bf16 %v4158, %v4157
  %v4232 = vpack.c.bf16 %v4160, %v4159
  %v4233 = vpack.c.bf16 %v4162, %v4161
  %v4234 = vpack.c.bf16 %v4164, %v4163
  %v4235 = vpack.c.bf16 %v4166, %v4165
  %v4236 = vpack.c.bf16 %v4168, %v4167
  %v4237 = vpack.c.bf16 %v4170, %v4169
  %v4238 = vpack.c.bf16 %v4172, %v4171
  %v4239 = vpack.c.bf16 %v4174, %v4173
  %v4240 = vpack.c.bf16 %v4176, %v4175
  %v4241 = vpack.c.bf16 %v4178, %v4177
  %v4242 = vpack.c.bf16 %v4180, %v4179
  %v4243 = vpack.c.bf16 %v4182, %v4181
  %v4244 = vpack.c.bf16 %v4184, %v4183
  %v4245 = vpack.c.bf16 %v4186, %v4185
  %v4246 = vpack.c.bf16 %v4188, %v4187
  %v4247 = vpack.c.bf16 %v4190, %v4189
  %v4248 = vpack.c.bf16 %v4192, %v4191
  %v4249 = vpack.c.bf16 %v4194, %v4193
  %v4250 = vpack.c.bf16 %v4196, %v4195
  %v4251 = vpack.c.bf16 %v4198, %v4197
  %v4253 = vlaneseq
  %v4254 = vshrl.u32 %v4253, 7
  %v4255 = vsub.s32 0, %v4254
  %v4256 = vrot.slane %v4203, %v4255
  %v4262 = vunpack.c.l.b16 %v4199
  %v4263 = vunpack.c.l.b16 %v4200
  %v4264 = vunpack.c.l.b16 %v4201
  %v4265 = vunpack.c.l.b16 %v4202
  %v4266 = vpack.c.b16 %v4263, %v4262
  %v4267 = vpack.c.b16 %v4265, %v4264
  %v4271 = vsel %vm3541, %v4204, 0
  %v4274 = vsel %vm3541, %v4205, 0
  %v4277 = vsel %vm3541, %v4206, 0
  %v4280 = vsel %vm3541, %v4207, 0
  %v4283 = vsel %vm3541, %v4208, 0
  %v4286 = vsel %vm3541, %v4209, 0
  %v4289 = vsel %vm3541, %v4210, 0
  %v4292 = vsel %vm3541, %v4211, 0
  %v4295 = vsel %vm3541, %v4212, 0
  %v4298 = vsel %vm3541, %v4213, 0
  %v4301 = vsel %vm3541, %v4214, 0
  %v4304 = vsel %vm3541, %v4215, 0
  %v4307 = vsel %vm3541, %v4216, 0
  %v4310 = vsel %vm3541, %v4217, 0
  %v4313 = vsel %vm3541, %v4218, 0
  %v4316 = vsel %vm3541, %v4219, 0
  %v4319 = vsel %vm3541, %v4220, 0
  %v4322 = vsel %vm3541, %v4221, 0
  %v4325 = vsel %vm3541, %v4222, 0
  %v4328 = vsel %vm3541, %v4223, 0
  %v4331 = vsel %vm3541, %v4224, 0
  %v4334 = vsel %vm3541, %v4225, 0
  %v4337 = vsel %vm3541, %v4226, 0
  %v4340 = vsel %vm3541, %v4227, 0
  %v4343 = vsel %vm3541, %v4228, 0
  %v4346 = vsel %vm3541, %v4229, 0
  %v4349 = vsel %vm3541, %v4230, 0
  %v4352 = vsel %vm3541, %v4231, 0
  %v4355 = vsel %vm3541, %v4232, 0
  %v4358 = vsel %vm3541, %v4233, 0
  %v4361 = vsel %vm3541, %v4234, 0
  %v4364 = vsel %vm3541, %v4235, 0
  %v4367 = vsel %vm3541, %v4236, 0
  %v4370 = vsel %vm3541, %v4237, 0
  %v4373 = vsel %vm3541, %v4238, 0
  %v4376 = vsel %vm3541, %v4239, 0
  %v4379 = vsel %vm3541, %v4240, 0
  %v4382 = vsel %vm3541, %v4241, 0
  %v4385 = vsel %vm3541, %v4242, 0
  %v4388 = vsel %vm3541, %v4243, 0
  %v4391 = vsel %vm3541, %v4244, 0
  %v4394 = vsel %vm3541, %v4245, 0
  %v4397 = vsel %vm3541, %v4246, 0
  %v4400 = vsel %vm3541, %v4247, 0
  %v4403 = vsel %vm3541, %v4248, 0
  %v4406 = vsel %vm3541, %v4249, 0
  %v4409 = vsel %vm3541, %v4250, 0
  %v4412 = vsel %vm3541, %v4251, 0
  %4414 = vmatprep.subr.bf16.mxu0 0
  %4415 = vmatpush1.bf16.msra.mxu0 %v4266
  %4416 = vmatprep.subr.bf16.mxu0 0
  %4417 = vmatpush1.bf16.msra.mxu0 %v4267
  %4418 = vmatprep.subr.bf16.mxu0 0
  %4419 = vmatpush1.bf16.msra.mxu0 0
  %4420 = vmatprep.subr.bf16.mxu0 0
  %4421 = vmatpush1.bf16.msra.mxu0 0
  %4422 = vmatprep.subr.bf16.mxu0 0
  %4423 = vmatpush1.bf16.msra.mxu0 0
  %4424 = vmatprep.subr.bf16.mxu0 0
  %4425 = vmatpush1.bf16.msra.mxu0 0
  %4426 = vmatprep.subr.bf16.mxu0 0
  %4427 = vmatpush1.bf16.msra.mxu0 0
  %4428 = vmatprep.subr.bf16.mxu0 0
  %4429 = vmatpush1.bf16.msra.mxu0 0
  %4430 = vmatprep.subr.bf16.mxu0 0
  %4431 = vmatpush1.bf16.msra.mxu0 0
  %4432 = vmatprep.subr.bf16.mxu0 0
  %4433 = vmatpush1.bf16.msra.mxu0 0
  %4434 = vmatprep.subr.bf16.mxu0 0
  %4435 = vmatpush1.bf16.msra.mxu0 0
  %4436 = vmatprep.subr.bf16.mxu0 0
  %4437 = vmatpush1.bf16.msra.mxu0 0
  %4438 = vmatprep.subr.bf16.mxu0 0
  %4439 = vmatpush1.bf16.msra.mxu0 0
  %4440 = vmatprep.subr.bf16.mxu0 0
  %4441 = vmatpush1.bf16.msra.mxu0 0
  %4442 = vmatprep.subr.bf16.mxu0 0
  %4443 = vmatpush1.bf16.msra.mxu0 0
  %4444 = vmatprep.subr.bf16.mxu0 0
  %4445 = vmatpush1.bf16.msra.mxu0 0
  %4446 = vmatprep.mubr.bf16.mxu0 0
  %4447 = vmatmul.mubr.bf16.gmra.mrb[0].mxu0 %v4271
  %v4448 = vpop.f32.mrb[0].mxu0
  %v4449 = vadd.f32 %v4256, %v4448
  %v4450 = vpop.f32.mrb[0].mxu0
  %v4451 = vpop.f32.mrb[0].mxu0
  %v4452 = vadd.f32 %v4256, %v4451
  %v4453 = vpop.f32.mrb[0].mxu0
  %4454 = vmatprep.mubr.bf16.mxu0 0
  %4455 = vmatmul.mubr.bf16.gmra.mrb[0].mxu0 %v4274
  %v4456 = vpop.f32.mrb[0].mxu0
  %v4457 = vadd.f32 %v4256, %v4456
  %v4458 = vpop.f32.mrb[0].mxu0
  %v4459 = vpop.f32.mrb[0].mxu0
  %v4460 = vadd.f32 %v4256, %v4459
  %v4461 = vpop.f32.mrb[0].mxu0
  %4462 = vmatprep.mubr.bf16.mxu0 0
  %4463 = vmatmul.mubr.bf16.gmra.mrb[0].mxu0 %v4277
  %v4464 = vpop.f32.mrb[0].mxu0
  %v4465 = vadd.f32 %v4256, %v4464
  %v4466 = vpop.f32.mrb[0].mxu0
  %v4467 = vpop.f32.mrb[0].mxu0
  %v4468 = vadd.f32 %v4256, %v4467
  %v4469 = vpop.f32.mrb[0].mxu0
  %4470 = vmatprep.mubr.bf16.mxu0 0
  %4471 = vmatmul.mubr.bf16.gmra.mrb[0].mxu0 %v4280
  %v4472 = vpop.f32.mrb[0].mxu0
  %v4473 = vadd.f32 %v4256, %v4472
  %v4474 = vpop.f32.mrb[0].mxu0
  %v4475 = vpop.f32.mrb[0].mxu0
  %v4476 = vadd.f32 %v4256, %v4475
  %v4477 = vpop.f32.mrb[0].mxu0
  %4478 = vmatprep.mubr.bf16.mxu0 0
  %4479 = vmatmul.mubr.bf16.gmra.mrb[0].mxu0 %v4283
  %v4480 = vpop.f32.mrb[0].mxu0
  %v4481 = vadd.f32 %v4256, %v4480
  %v4482 = vpop.f32.mrb[0].mxu0
  %v4483 = vpop.f32.mrb[0].mxu0
  %v4484 = vadd.f32 %v4256, %v4483
  %v4485 = vpop.f32.mrb[0].mxu0
  %4486 = vmatprep.mubr.bf16.mxu0 0
  %4487 = vmatmul.mubr.bf16.gmra.mrb[0].mxu0 %v4286
  %v4488 = vpop.f32.mrb[0].mxu0
  %v4489 = vadd.f32 %v4256, %v4488
  %v4490 = vpop.f32.mrb[0].mxu0
  %v4491 = vpop.f32.mrb[0].mxu0
  %v4492 = vadd.f32 %v4256, %v4491
  %v4493 = vpop.f32.mrb[0].mxu0
  %4494 = vmatprep.mubr.bf16.mxu0 0
  %4495 = vmatmul.mubr.bf16.gmra.mrb[0].mxu0 %v4289
  %v4496 = vpop.f32.mrb[0].mxu0
  %v4497 = vadd.f32 %v4256, %v4496
  %v4498 = vpop.f32.mrb[0].mxu0
  %v4499 = vpop.f32.mrb[0].mxu0
  %v4500 = vadd.f32 %v4256, %v4499
  %v4501 = vpop.f32.mrb[0].mxu0
  %4502 = vmatprep.mubr.bf16.mxu0 0
  %4503 = vmatmul.mubr.bf16.gmra.mrb[0].mxu0 %v4292
  %v4504 = vpop.f32.mrb[0].mxu0
  %v4505 = vadd.f32 %v4256, %v4504
  %v4506 = vpop.f32.mrb[0].mxu0
  %v4507 = vpop.f32.mrb[0].mxu0
  %v4508 = vadd.f32 %v4256, %v4507
  %v4509 = vpop.f32.mrb[0].mxu0
  %4510 = vmatprep.mubr.bf16.mxu0 0
  %4511 = vmatmul.mubr.bf16.gmra.mrb[0].mxu0 %v4295
  %v4512 = vpop.f32.mrb[0].mxu0
  %v4513 = vadd.f32 %v4256, %v4512
  %v4514 = vpop.f32.mrb[0].mxu0
  %v4515 = vpop.f32.mrb[0].mxu0
  %v4516 = vadd.f32 %v4256, %v4515
  %v4517 = vpop.f32.mrb[0].mxu0
  %4518 = vmatprep.mubr.bf16.mxu0 0
  %4519 = vmatmul.mubr.bf16.gmra.mrb[0].mxu0 %v4298
  %v4520 = vpop.f32.mrb[0].mxu0
  %v4521 = vadd.f32 %v4256, %v4520
  %v4522 = vpop.f32.mrb[0].mxu0
  %v4523 = vpop.f32.mrb[0].mxu0
  %v4524 = vadd.f32 %v4256, %v4523
  %v4525 = vpop.f32.mrb[0].mxu0
  %4526 = vmatprep.mubr.bf16.mxu0 0
  %4527 = vmatmul.mubr.bf16.gmra.mrb[0].mxu0 %v4301
  %v4528 = vpop.f32.mrb[0].mxu0
  %v4529 = vadd.f32 %v4256, %v4528
  %v4530 = vpop.f32.mrb[0].mxu0
  %v4531 = vpop.f32.mrb[0].mxu0
  %v4532 = vadd.f32 %v4256, %v4531
  %v4533 = vpop.f32.mrb[0].mxu0
  %4534 = vmatprep.mubr.bf16.mxu0 0
  %4535 = vmatmul.mubr.bf16.gmra.mrb[0].mxu0 %v4304
  %v4536 = vpop.f32.mrb[0].mxu0
  %v4537 = vadd.f32 %v4256, %v4536
  %v4538 = vpop.f32.mrb[0].mxu0
  %v4539 = vpop.f32.mrb[0].mxu0
  %v4540 = vadd.f32 %v4256, %v4539
  %v4541 = vpop.f32.mrb[0].mxu0
  %4542 = vmatprep.mubr.bf16.mxu0 0
  %4543 = vmatmul.mubr.bf16.gmra.mrb[0].mxu0 %v4307
  %v4544 = vpop.f32.mrb[0].mxu0
  %v4545 = vadd.f32 %v4256, %v4544
  %v4546 = vpop.f32.mrb[0].mxu0
  %v4547 = vpop.f32.mrb[0].mxu0
  %v4548 = vadd.f32 %v4256, %v4547
  %v4549 = vpop.f32.mrb[0].mxu0
  %4550 = vmatprep.mubr.bf16.mxu0 0
  %4551 = vmatmul.mubr.bf16.gmra.mrb[0].mxu0 %v4310
  %v4552 = vpop.f32.mrb[0].mxu0
  %v4553 = vadd.f32 %v4256, %v4552
  %v4554 = vpop.f32.mrb[0].mxu0
  %v4555 = vpop.f32.mrb[0].mxu0
  %v4556 = vadd.f32 %v4256, %v4555
  %v4557 = vpop.f32.mrb[0].mxu0
  %4558 = vmatprep.mubr.bf16.mxu0 0
  %4559 = vmatmul.mubr.bf16.gmra.mrb[0].mxu0 %v4313
  %v4560 = vpop.f32.mrb[0].mxu0
  %v4561 = vadd.f32 %v4256, %v4560
  %v4562 = vpop.f32.mrb[0].mxu0
  %v4563 = vpop.f32.mrb[0].mxu0
  %v4564 = vadd.f32 %v4256, %v4563
  %v4565 = vpop.f32.mrb[0].mxu0
  %4566 = vmatprep.mubr.bf16.mxu0 0
  %4567 = vmatmul.mubr.bf16.gmra.mrb[0].mxu0 %v4316
  %v4568 = vpop.f32.mrb[0].mxu0
  %v4569 = vadd.f32 %v4256, %v4568
  %v4570 = vpop.f32.mrb[0].mxu0
  %v4571 = vpop.f32.mrb[0].mxu0
  %v4572 = vadd.f32 %v4256, %v4571
  %v4573 = vpop.f32.mrb[0].mxu0
  %4574 = vmatprep.mubr.bf16.mxu0 0
  %4575 = vmatmul.mubr.bf16.gmra.mrb[0].mxu0 %v4319
  %v4576 = vpop.f32.mrb[0].mxu0
  %v4577 = vadd.f32 %v4256, %v4576
  %v4578 = vpop.f32.mrb[0].mxu0
  %v4579 = vpop.f32.mrb[0].mxu0
  %v4580 = vadd.f32 %v4256, %v4579
  %v4581 = vpop.f32.mrb[0].mxu0
  %4582 = vmatprep.mubr.bf16.mxu0 0
  %4583 = vmatmul.mubr.bf16.gmra.mrb[0].mxu0 %v4322
  %v4584 = vpop.f32.mrb[0].mxu0
  %v4585 = vadd.f32 %v4256, %v4584
  %v4586 = vpop.f32.mrb[0].mxu0
  %v4587 = vpop.f32.mrb[0].mxu0
  %v4588 = vadd.f32 %v4256, %v4587
  %v4589 = vpop.f32.mrb[0].mxu0
  %4590 = vmatprep.mubr.bf16.mxu0 0
  %4591 = vmatmul.mubr.bf16.gmra.mrb[0].mxu0 %v4325
  %v4592 = vpop.f32.mrb[0].mxu0
  %v4593 = vadd.f32 %v4256, %v4592
  %v4594 = vpop.f32.mrb[0].mxu0
  %v4595 = vpop.f32.mrb[0].mxu0
  %v4596 = vadd.f32 %v4256, %v4595
  %v4597 = vpop.f32.mrb[0].mxu0
  %4598 = vmatprep.mubr.bf16.mxu0 0
  %4599 = vmatmul.mubr.bf16.gmra.mrb[0].mxu0 %v4328
  %v4600 = vpop.f32.mrb[0].mxu0
  %v4601 = vadd.f32 %v4256, %v4600
  %v4602 = vpop.f32.mrb[0].mxu0
  %v4603 = vpop.f32.mrb[0].mxu0
  %v4604 = vadd.f32 %v4256, %v4603
  %v4605 = vpop.f32.mrb[0].mxu0
  %4606 = vmatprep.mubr.bf16.mxu0 0
  %4607 = vmatmul.mubr.bf16.gmra.mrb[0].mxu0 %v4331
  %v4608 = vpop.f32.mrb[0].mxu0
  %v4609 = vadd.f32 %v4256, %v4608
  %v4610 = vpop.f32.mrb[0].mxu0
  %v4611 = vpop.f32.mrb[0].mxu0
  %v4612 = vadd.f32 %v4256, %v4611
  %v4613 = vpop.f32.mrb[0].mxu0
  %4614 = vmatprep.mubr.bf16.mxu0 0
  %4615 = vmatmul.mubr.bf16.gmra.mrb[0].mxu0 %v4334
  %v4616 = vpop.f32.mrb[0].mxu0
  %v4617 = vadd.f32 %v4256, %v4616
  %v4618 = vpop.f32.mrb[0].mxu0
  %v4619 = vpop.f32.mrb[0].mxu0
  %v4620 = vadd.f32 %v4256, %v4619
  %v4621 = vpop.f32.mrb[0].mxu0
  %4622 = vmatprep.mubr.bf16.mxu0 0
  %4623 = vmatmul.mubr.bf16.gmra.mrb[0].mxu0 %v4337
  %v4624 = vpop.f32.mrb[0].mxu0
  %v4625 = vadd.f32 %v4256, %v4624
  %v4626 = vpop.f32.mrb[0].mxu0
  %v4627 = vpop.f32.mrb[0].mxu0
  %v4628 = vadd.f32 %v4256, %v4627
  %v4629 = vpop.f32.mrb[0].mxu0
  %4630 = vmatprep.mubr.bf16.mxu0 0
  %4631 = vmatmul.mubr.bf16.gmra.mrb[0].mxu0 %v4340
  %v4632 = vpop.f32.mrb[0].mxu0
  %v4633 = vadd.f32 %v4256, %v4632
  %v4634 = vpop.f32.mrb[0].mxu0
  %v4635 = vpop.f32.mrb[0].mxu0
  %v4636 = vadd.f32 %v4256, %v4635
  %v4637 = vpop.f32.mrb[0].mxu0
  %4638 = vmatprep.mubr.bf16.mxu0 0
  %4639 = vmatmul.mubr.bf16.gmra.mrb[0].mxu0 %v4343
  %v4640 = vpop.f32.mrb[0].mxu0
  %v4641 = vadd.f32 %v4256, %v4640
  %v4642 = vpop.f32.mrb[0].mxu0
  %v4643 = vpop.f32.mrb[0].mxu0
  %v4644 = vadd.f32 %v4256, %v4643
  %v4645 = vpop.f32.mrb[0].mxu0
  %4646 = vmatprep.mubr.bf16.mxu0 0
  %4647 = vmatmul.mubr.bf16.gmra.mrb[0].mxu0 %v4346
  %v4648 = vpop.f32.mrb[0].mxu0
  %v4649 = vadd.f32 %v4256, %v4648
  %v4650 = vpop.f32.mrb[0].mxu0
  %v4651 = vpop.f32.mrb[0].mxu0
  %v4652 = vadd.f32 %v4256, %v4651
  %v4653 = vpop.f32.mrb[0].mxu0
  %4654 = vmatprep.mubr.bf16.mxu0 0
  %4655 = vmatmul.mubr.bf16.gmra.mrb[0].mxu0 %v4349
  %v4656 = vpop.f32.mrb[0].mxu0
  %v4657 = vadd.f32 %v4256, %v4656
  %v4658 = vpop.f32.mrb[0].mxu0
  %v4659 = vpop.f32.mrb[0].mxu0
  %v4660 = vadd.f32 %v4256, %v4659
  %v4661 = vpop.f32.mrb[0].mxu0
  %4662 = vmatprep.mubr.bf16.mxu0 0
  %4663 = vmatmul.mubr.bf16.gmra.mrb[0].mxu0 %v4352
  %v4664 = vpop.f32.mrb[0].mxu0
  %v4665 = vadd.f32 %v4256, %v4664
  %v4666 = vpop.f32.mrb[0].mxu0
  %v4667 = vpop.f32.mrb[0].mxu0
  %v4668 = vadd.f32 %v4256, %v4667
  %v4669 = vpop.f32.mrb[0].mxu0
  %4670 = vmatprep.mubr.bf16.mxu0 0
  %4671 = vmatmul.mubr.bf16.gmra.mrb[0].mxu0 %v4355
  %v4672 = vpop.f32.mrb[0].mxu0
  %v4673 = vadd.f32 %v4256, %v4672
  %v4674 = vpop.f32.mrb[0].mxu0
  %v4675 = vpop.f32.mrb[0].mxu0
  %v4676 = vadd.f32 %v4256, %v4675
  %v4677 = vpop.f32.mrb[0].mxu0
  %4678 = vmatprep.mubr.bf16.mxu0 0
  %4679 = vmatmul.mubr.bf16.gmra.mrb[0].mxu0 %v4358
  %v4680 = vpop.f32.mrb[0].mxu0
  %v4681 = vadd.f32 %v4256, %v4680
  %v4682 = vpop.f32.mrb[0].mxu0
  %v4683 = vpop.f32.mrb[0].mxu0
  %v4684 = vadd.f32 %v4256, %v4683
  %v4685 = vpop.f32.mrb[0].mxu0
  %4686 = vmatprep.mubr.bf16.mxu0 0
  %4687 = vmatmul.mubr.bf16.gmra.mrb[0].mxu0 %v4361
  %v4688 = vpop.f32.mrb[0].mxu0
  %v4689 = vadd.f32 %v4256, %v4688
  %v4690 = vpop.f32.mrb[0].mxu0
  %v4691 = vpop.f32.mrb[0].mxu0
  %v4692 = vadd.f32 %v4256, %v4691
  %v4693 = vpop.f32.mrb[0].mxu0
  %4694 = vmatprep.mubr.bf16.mxu0 0
  %4695 = vmatmul.mubr.bf16.gmra.mrb[0].mxu0 %v4364
  %v4696 = vpop.f32.mrb[0].mxu0
  %v4697 = vadd.f32 %v4256, %v4696
  %v4698 = vpop.f32.mrb[0].mxu0
  %v4699 = vpop.f32.mrb[0].mxu0
  %v4700 = vadd.f32 %v4256, %v4699
  %v4701 = vpop.f32.mrb[0].mxu0
  %4702 = vmatprep.mubr.bf16.mxu0 0
  %4703 = vmatmul.mubr.bf16.gmra.mrb[0].mxu0 %v4367
  %v4704 = vpop.f32.mrb[0].mxu0
  %v4705 = vadd.f32 %v4256, %v4704
  %v4706 = vpop.f32.mrb[0].mxu0
  %v4707 = vpop.f32.mrb[0].mxu0
  %v4708 = vadd.f32 %v4256, %v4707
  %v4709 = vpop.f32.mrb[0].mxu0
  %4710 = vmatprep.mubr.bf16.mxu0 0
  %4711 = vmatmul.mubr.bf16.gmra.mrb[0].mxu0 %v4370
  %v4712 = vpop.f32.mrb[0].mxu0
  %v4713 = vadd.f32 %v4256, %v4712
  %v4714 = vpop.f32.mrb[0].mxu0
  %v4715 = vpop.f32.mrb[0].mxu0
  %v4716 = vadd.f32 %v4256, %v4715
  %v4717 = vpop.f32.mrb[0].mxu0
  %4718 = vmatprep.mubr.bf16.mxu0 0
  %4719 = vmatmul.mubr.bf16.gmra.mrb[0].mxu0 %v4373
  %v4720 = vpop.f32.mrb[0].mxu0
  %v4721 = vadd.f32 %v4256, %v4720
  %v4722 = vpop.f32.mrb[0].mxu0
  %v4723 = vpop.f32.mrb[0].mxu0
  %v4724 = vadd.f32 %v4256, %v4723
  %v4725 = vpop.f32.mrb[0].mxu0
  %4726 = vmatprep.mubr.bf16.mxu0 0
  %4727 = vmatmul.mubr.bf16.gmra.mrb[0].mxu0 %v4376
  %v4728 = vpop.f32.mrb[0].mxu0
  %v4729 = vadd.f32 %v4256, %v4728
  %v4730 = vpop.f32.mrb[0].mxu0
  %v4731 = vpop.f32.mrb[0].mxu0
  %v4732 = vadd.f32 %v4256, %v4731
  %v4733 = vpop.f32.mrb[0].mxu0
  %4734 = vmatprep.mubr.bf16.mxu0 0
  %4735 = vmatmul.mubr.bf16.gmra.mrb[0].mxu0 %v4379
  %v4736 = vpop.f32.mrb[0].mxu0
  %v4737 = vadd.f32 %v4256, %v4736
  %v4738 = vpop.f32.mrb[0].mxu0
  %v4739 = vpop.f32.mrb[0].mxu0
  %v4740 = vadd.f32 %v4256, %v4739
  %v4741 = vpop.f32.mrb[0].mxu0
  %4742 = vmatprep.mubr.bf16.mxu0 0
  %4743 = vmatmul.mubr.bf16.gmra.mrb[0].mxu0 %v4382
  %v4744 = vpop.f32.mrb[0].mxu0
  %v4745 = vadd.f32 %v4256, %v4744
  %v4746 = vpop.f32.mrb[0].mxu0
  %v4747 = vpop.f32.mrb[0].mxu0
  %v4748 = vadd.f32 %v4256, %v4747
  %v4749 = vpop.f32.mrb[0].mxu0
  %4750 = vmatprep.mubr.bf16.mxu0 0
  %4751 = vmatmul.mubr.bf16.gmra.mrb[0].mxu0 %v4385
  %v4752 = vpop.f32.mrb[0].mxu0
  %v4753 = vadd.f32 %v4256, %v4752
  %v4754 = vpop.f32.mrb[0].mxu0
  %v4755 = vpop.f32.mrb[0].mxu0
  %v4756 = vadd.f32 %v4256, %v4755
  %v4757 = vpop.f32.mrb[0].mxu0
  %4758 = vmatprep.mubr.bf16.mxu0 0
  %4759 = vmatmul.mubr.bf16.gmra.mrb[0].mxu0 %v4388
  %v4760 = vpop.f32.mrb[0].mxu0
  %v4761 = vadd.f32 %v4256, %v4760
  %v4762 = vpop.f32.mrb[0].mxu0
  %v4763 = vpop.f32.mrb[0].mxu0
  %v4764 = vadd.f32 %v4256, %v4763
  %v4765 = vpop.f32.mrb[0].mxu0
  %4766 = vmatprep.mubr.bf16.mxu0 0
  %4767 = vmatmul.mubr.bf16.gmra.mrb[0].mxu0 %v4391
  %v4768 = vpop.f32.mrb[0].mxu0
  %v4769 = vadd.f32 %v4256, %v4768
  %v4770 = vpop.f32.mrb[0].mxu0
  %v4771 = vpop.f32.mrb[0].mxu0
  %v4772 = vadd.f32 %v4256, %v4771
  %v4773 = vpop.f32.mrb[0].mxu0
  %4774 = vmatprep.mubr.bf16.mxu0 0
  %4775 = vmatmul.mubr.bf16.gmra.mrb[0].mxu0 %v4394
  %v4776 = vpop.f32.mrb[0].mxu0
  %v4777 = vadd.f32 %v4256, %v4776
  %v4778 = vpop.f32.mrb[0].mxu0
  %v4779 = vpop.f32.mrb[0].mxu0
  %v4780 = vadd.f32 %v4256, %v4779
  %v4781 = vpop.f32.mrb[0].mxu0
  %4782 = vmatprep.mubr.bf16.mxu0 0
  %4783 = vmatmul.mubr.bf16.gmra.mrb[0].mxu0 %v4397
  %v4784 = vpop.f32.mrb[0].mxu0
  %v4785 = vadd.f32 %v4256, %v4784
  %v4786 = vpop.f32.mrb[0].mxu0
  %v4787 = vpop.f32.mrb[0].mxu0
  %v4788 = vadd.f32 %v4256, %v4787
  %v4789 = vpop.f32.mrb[0].mxu0
  %4790 = vmatprep.mubr.bf16.mxu0 0
  %4791 = vmatmul.mubr.bf16.gmra.mrb[0].mxu0 %v4400
  %v4792 = vpop.f32.mrb[0].mxu0
  %v4793 = vadd.f32 %v4256, %v4792
  %v4794 = vpop.f32.mrb[0].mxu0
  %v4795 = vpop.f32.mrb[0].mxu0
  %v4796 = vadd.f32 %v4256, %v4795
  %v4797 = vpop.f32.mrb[0].mxu0
  %4798 = vmatprep.mubr.bf16.mxu0 0
  %4799 = vmatmul.mubr.bf16.gmra.mrb[0].mxu0 %v4403
  %v4800 = vpop.f32.mrb[0].mxu0
  %v4801 = vadd.f32 %v4256, %v4800
  %v4802 = vpop.f32.mrb[0].mxu0
  %v4803 = vpop.f32.mrb[0].mxu0
  %v4804 = vadd.f32 %v4256, %v4803
  %v4805 = vpop.f32.mrb[0].mxu0
  %4806 = vmatprep.mubr.bf16.mxu0 0
  %4807 = vmatmul.mubr.bf16.gmra.mrb[0].mxu0 %v4406
  %v4808 = vpop.f32.mrb[0].mxu0
  %v4809 = vadd.f32 %v4256, %v4808
  %v4810 = vpop.f32.mrb[0].mxu0
  %v4811 = vpop.f32.mrb[0].mxu0
  %v4812 = vadd.f32 %v4256, %v4811
  %v4813 = vpop.f32.mrb[0].mxu0
  %4814 = vmatprep.mubr.bf16.mxu0 0
  %4815 = vmatmul.mubr.bf16.gmra.mrb[0].mxu0 %v4409
  %v4816 = vpop.f32.mrb[0].mxu0
  %v4817 = vadd.f32 %v4256, %v4816
  %v4818 = vpop.f32.mrb[0].mxu0
  %v4819 = vpop.f32.mrb[0].mxu0
  %v4820 = vadd.f32 %v4256, %v4819
  %v4821 = vpop.f32.mrb[0].mxu0
  %4822 = vmatprep.mubr.bf16.mxu0 0
  %4823 = vmatmul.mubr.bf16.gmra.mrb[0].mxu0 %v4412
  %v4824 = vpop.f32.mrb[0].mxu0
  %v4825 = vadd.f32 %v4256, %v4824
  %v4826 = vpop.f32.mrb[0].mxu0
  %v4827 = vpop.f32.mrb[0].mxu0
  %v4828 = vadd.f32 %v4256, %v4827
  %v4829 = vpop.f32.mrb[0].mxu0
  %4830 = vdwg.mxu0
  %v4831 = vmax.f32 %v4449, 0.0
  %v4832 = vmax.f32 %v4452, 0.0
  %v4833 = vmax.f32 %v4457, 0.0
  %v4834 = vmax.f32 %v4460, 0.0
  %v4835 = vmax.f32 %v4465, 0.0
  %v4836 = vmax.f32 %v4468, 0.0
  %v4837 = vmax.f32 %v4473, 0.0
  %v4838 = vmax.f32 %v4476, 0.0
  %v4839 = vmax.f32 %v4481, 0.0
  %v4840 = vmax.f32 %v4484, 0.0
  %v4841 = vmax.f32 %v4489, 0.0
  %v4842 = vmax.f32 %v4492, 0.0
  %v4843 = vmax.f32 %v4497, 0.0
  %v4844 = vmax.f32 %v4500, 0.0
  %v4845 = vmax.f32 %v4505, 0.0
  %v4846 = vmax.f32 %v4508, 0.0
  %v4847 = vmax.f32 %v4513, 0.0
  %v4848 = vmax.f32 %v4516, 0.0
  %v4849 = vmax.f32 %v4521, 0.0
  %v4850 = vmax.f32 %v4524, 0.0
  %v4851 = vmax.f32 %v4529, 0.0
  %v4852 = vmax.f32 %v4532, 0.0
  %v4853 = vmax.f32 %v4537, 0.0
  %v4854 = vmax.f32 %v4540, 0.0
  %v4855 = vmax.f32 %v4545, 0.0
  %v4856 = vmax.f32 %v4548, 0.0
  %v4857 = vmax.f32 %v4553, 0.0
  %v4858 = vmax.f32 %v4556, 0.0
  %v4859 = vmax.f32 %v4561, 0.0
  %v4860 = vmax.f32 %v4564, 0.0
  %v4861 = vmax.f32 %v4569, 0.0
  %v4862 = vmax.f32 %v4572, 0.0
  %v4863 = vmax.f32 %v4577, 0.0
  %v4864 = vmax.f32 %v4580, 0.0
  %v4865 = vmax.f32 %v4585, 0.0
  %v4866 = vmax.f32 %v4588, 0.0
  %v4867 = vmax.f32 %v4593, 0.0
  %v4868 = vmax.f32 %v4596, 0.0
  %v4869 = vmax.f32 %v4601, 0.0
  %v4870 = vmax.f32 %v4604, 0.0
  %v4871 = vmax.f32 %v4609, 0.0
  %v4872 = vmax.f32 %v4612, 0.0
  %v4873 = vmax.f32 %v4617, 0.0
  %v4874 = vmax.f32 %v4620, 0.0
  %v4875 = vmax.f32 %v4625, 0.0
  %v4876 = vmax.f32 %v4628, 0.0
  %v4877 = vmax.f32 %v4633, 0.0
  %v4878 = vmax.f32 %v4636, 0.0
  %v4879 = vmax.f32 %v4641, 0.0
  %v4880 = vmax.f32 %v4644, 0.0
  %v4881 = vmax.f32 %v4649, 0.0
  %v4882 = vmax.f32 %v4652, 0.0
  %v4883 = vmax.f32 %v4657, 0.0
  %v4884 = vmax.f32 %v4660, 0.0
  %v4885 = vmax.f32 %v4665, 0.0
  %v4886 = vmax.f32 %v4668, 0.0
  %v4887 = vmax.f32 %v4673, 0.0
  %v4888 = vmax.f32 %v4676, 0.0
  %v4889 = vmax.f32 %v4681, 0.0
  %v4890 = vmax.f32 %v4684, 0.0
  %v4891 = vmax.f32 %v4689, 0.0
  %v4892 = vmax.f32 %v4692, 0.0
  %v4893 = vmax.f32 %v4697, 0.0
  %v4894 = vmax.f32 %v4700, 0.0
  %v4895 = vmax.f32 %v4705, 0.0
  %v4896 = vmax.f32 %v4708, 0.0
  %v4897 = vmax.f32 %v4713, 0.0
  %v4898 = vmax.f32 %v4716, 0.0
  %v4899 = vmax.f32 %v4721, 0.0
  %v4900 = vmax.f32 %v4724, 0.0
  %v4901 = vmax.f32 %v4729, 0.0
  %v4902 = vmax.f32 %v4732, 0.0
  %v4903 = vmax.f32 %v4737, 0.0
  %v4904 = vmax.f32 %v4740, 0.0
  %v4905 = vmax.f32 %v4745, 0.0
  %v4906 = vmax.f32 %v4748, 0.0
  %v4907 = vmax.f32 %v4753, 0.0
  %v4908 = vmax.f32 %v4756, 0.0
  %v4909 = vmax.f32 %v4761, 0.0
  %v4910 = vmax.f32 %v4764, 0.0
  %v4911 = vmax.f32 %v4769, 0.0
  %v4912 = vmax.f32 %v4772, 0.0
  %v4913 = vmax.f32 %v4777, 0.0
  %v4914 = vmax.f32 %v4780, 0.0
  %v4915 = vmax.f32 %v4785, 0.0
  %v4916 = vmax.f32 %v4788, 0.0
  %v4917 = vmax.f32 %v4793, 0.0
  %v4918 = vmax.f32 %v4796, 0.0
  %v4919 = vmax.f32 %v4801, 0.0
  %v4920 = vmax.f32 %v4804, 0.0
  %v4921 = vmax.f32 %v4809, 0.0
  %v4922 = vmax.f32 %v4812, 0.0
  %v4923 = vmax.f32 %v4817, 0.0
  %v4924 = vmax.f32 %v4820, 0.0
  %v4925 = vmax.f32 %v4825, 0.0
  %v4926 = vmax.f32 %v4828, 0.0
  %v4927 = vld [vmem:[%s1 + $0x18] sm:$0xf]
  %v4928 = vld [vmem:[%s1 + $0x38] sm:$0xf]
  %v4929 = vld [vmem:[%s1 + $0x58] sm:$0xf]
  %v4930 = vld [vmem:[%s1 + $0x78] sm:$0xf]
  %v4931 = vld [vmem:[%s1 + $0x98] sm:$0xf]
  %v4932 = vld [vmem:[%s1 + $0xb8] sm:$0xf]
  %v4933 = vld [vmem:[%s1 + $0xd8] sm:$0xf]
  %v4934 = vld [vmem:[%s1 + $0xf8] sm:$0xf]
  %v4935 = vld [vmem:[%s2 + $0x6] sm:$0x1]
  %v4936 = vpack.c.bf16 %v4832, %v4831
  %v4937 = vpack.c.bf16 %v4834, %v4833
  %v4938 = vpack.c.bf16 %v4836, %v4835
  %v4939 = vpack.c.bf16 %v4838, %v4837
  %v4940 = vpack.c.bf16 %v4840, %v4839
  %v4941 = vpack.c.bf16 %v4842, %v4841
  %v4942 = vpack.c.bf16 %v4844, %v4843
  %v4943 = vpack.c.bf16 %v4846, %v4845
  %v4944 = vpack.c.bf16 %v4848, %v4847
  %v4945 = vpack.c.bf16 %v4850, %v4849
  %v4946 = vpack.c.bf16 %v4852, %v4851
  %v4947 = vpack.c.bf16 %v4854, %v4853
  %v4948 = vpack.c.bf16 %v4856, %v4855
  %v4949 = vpack.c.bf16 %v4858, %v4857
  %v4950 = vpack.c.bf16 %v4860, %v4859
  %v4951 = vpack.c.bf16 %v4862, %v4861
  %v4952 = vpack.c.bf16 %v4864, %v4863
  %v4953 = vpack.c.bf16 %v4866, %v4865
  %v4954 = vpack.c.bf16 %v4868, %v4867
  %v4955 = vpack.c.bf16 %v4870, %v4869
  %v4956 = vpack.c.bf16 %v4872, %v4871
  %v4957 = vpack.c.bf16 %v4874, %v4873
  %v4958 = vpack.c.bf16 %v4876, %v4875
  %v4959 = vpack.c.bf16 %v4878, %v4877
  %v4960 = vpack.c.bf16 %v4880, %v4879
  %v4961 = vpack.c.bf16 %v4882, %v4881
  %v4962 = vpack.c.bf16 %v4884, %v4883
  %v4963 = vpack.c.bf16 %v4886, %v4885
  %v4964 = vpack.c.bf16 %v4888, %v4887
  %v4965 = vpack.c.bf16 %v4890, %v4889
  %v4966 = vpack.c.bf16 %v4892, %v4891
  %v4967 = vpack.c.bf16 %v4894, %v4893
  %v4968 = vpack.c.bf16 %v4896, %v4895
  %v4969 = vpack.c.bf16 %v4898, %v4897
  %v4970 = vpack.c.bf16 %v4900, %v4899
  %v4971 = vpack.c.bf16 %v4902, %v4901
  %v4972 = vpack.c.bf16 %v4904, %v4903
  %v4973 = vpack.c.bf16 %v4906, %v4905
  %v4974 = vpack.c.bf16 %v4908, %v4907
  %v4975 = vpack.c.bf16 %v4910, %v4909
  %v4976 = vpack.c.bf16 %v4912, %v4911
  %v4977 = vpack.c.bf16 %v4914, %v4913
  %v4978 = vpack.c.bf16 %v4916, %v4915
  %v4979 = vpack.c.bf16 %v4918, %v4917
  %v4980 = vpack.c.bf16 %v4920, %v4919
  %v4981 = vpack.c.bf16 %v4922, %v4921
  %v4982 = vpack.c.bf16 %v4924, %v4923
  %v4983 = vpack.c.bf16 %v4926, %v4925
  %v4985 = vlaneseq
  %v4986 = vshrl.u32 %v4985, 7
  %v4987 = vsub.s32 0, %v4986
  %v4988 = vrot.slane %v4935, %v4987
  %v4998 = vunpack.c.l.b16 %v4927
  %v4999 = vunpack.c.l.b16 %v4928
  %v5000 = vunpack.c.l.b16 %v4929
  %v5001 = vunpack.c.l.b16 %v4930
  %v5002 = vunpack.c.l.b16 %v4931
  %v5003 = vunpack.c.l.b16 %v4932
  %v5004 = vunpack.c.l.b16 %v4933
  %v5005 = vunpack.c.l.b16 %v4934
  %v5006 = vpack.c.b16 %v4999, %v4998
  %v5007 = vpack.c.b16 %v5001, %v5000
  %v5008 = vpack.c.b16 %v5003, %v5002
  %v5009 = vpack.c.b16 %v5005, %v5004
  %vm5014 = vcmask 523264
  %v5016 = vsel %vm5014, %v4936, 0
  %v5019 = vsel %vm5014, %v4937, 0
  %v5022 = vsel %vm5014, %v4938, 0
  %v5025 = vsel %vm5014, %v4939, 0
  %v5028 = vsel %vm5014, %v4940, 0
  %v5031 = vsel %vm5014, %v4941, 0
  %v5034 = vsel %vm5014, %v4942, 0
  %v5037 = vsel %vm5014, %v4943, 0
  %v5040 = vsel %vm5014, %v4944, 0
  %v5043 = vsel %vm5014, %v4945, 0
  %v5046 = vsel %vm5014, %v4946, 0
  %v5049 = vsel %vm5014, %v4947, 0
  %v5052 = vsel %vm5014, %v4948, 0
  %v5055 = vsel %vm5014, %v4949, 0
  %v5058 = vsel %vm5014, %v4950, 0
  %v5061 = vsel %vm5014, %v4951, 0
  %v5064 = vsel %vm5014, %v4952, 0
  %v5067 = vsel %vm5014, %v4953, 0
  %v5070 = vsel %vm5014, %v4954, 0
  %v5073 = vsel %vm5014, %v4955, 0
  %v5076 = vsel %vm5014, %v4956, 0
  %v5079 = vsel %vm5014, %v4957, 0
  %v5082 = vsel %vm5014, %v4958, 0
  %v5085 = vsel %vm5014, %v4959, 0
  %v5088 = vsel %vm5014, %v4960, 0
  %v5091 = vsel %vm5014, %v4961, 0
  %v5094 = vsel %vm5014, %v4962, 0
  %v5097 = vsel %vm5014, %v4963, 0
  %v5100 = vsel %vm5014, %v4964, 0
  %v5103 = vsel %vm5014, %v4965, 0
  %v5106 = vsel %vm5014, %v4966, 0
  %v5109 = vsel %vm5014, %v4967, 0
  %v5112 = vsel %vm5014, %v4968, 0
  %v5115 = vsel %vm5014, %v4969, 0
  %v5118 = vsel %vm5014, %v4970, 0
  %v5121 = vsel %vm5014, %v4971, 0
  %v5124 = vsel %vm5014, %v4972, 0
  %v5127 = vsel %vm5014, %v4973, 0
  %v5130 = vsel %vm5014, %v4974, 0
  %v5133 = vsel %vm5014, %v4975, 0
  %v5136 = vsel %vm5014, %v4976, 0
  %v5139 = vsel %vm5014, %v4977, 0
  %v5142 = vsel %vm5014, %v4978, 0
  %v5145 = vsel %vm5014, %v4979, 0
  %v5148 = vsel %vm5014, %v4980, 0
  %v5151 = vsel %vm5014, %v4981, 0
  %v5154 = vsel %vm5014, %v4982, 0
  %v5157 = vsel %vm5014, %v4983, 0
  %5159 = vmatprep.subr.bf16.mxu0 0
  %5160 = vmatpush1.bf16.msra.mxu0 %v5006
  %5161 = vmatprep.subr.bf16.mxu0 0
  %5162 = vmatpush1.bf16.msra.mxu0 %v5007
  %5163 = vmatprep.subr.bf16.mxu0 0
  %5164 = vmatpush1.bf16.msra.mxu0 %v5008
  %5165 = vmatprep.subr.bf16.mxu0 0
  %5166 = vmatpush1.bf16.msra.mxu0 %v5009
  %5167 = vmatprep.subr.bf16.mxu0 0
  %5168 = vmatpush1.bf16.msra.mxu0 0
  %5169 = vmatprep.subr.bf16.mxu0 0
  %5170 = vmatpush1.bf16.msra.mxu0 0
  %5171 = vmatprep.subr.bf16.mxu0 0
  %5172 = vmatpush1.bf16.msra.mxu0 0
  %5173 = vmatprep.subr.bf16.mxu0 0
  %5174 = vmatpush1.bf16.msra.mxu0 0
  %5175 = vmatprep.subr.bf16.mxu0 0
  %5176 = vmatpush1.bf16.msra.mxu0 0
  %5177 = vmatprep.subr.bf16.mxu0 0
  %5178 = vmatpush1.bf16.msra.mxu0 0
  %5179 = vmatprep.subr.bf16.mxu0 0
  %5180 = vmatpush1.bf16.msra.mxu0 0
  %5181 = vmatprep.subr.bf16.mxu0 0
  %5182 = vmatpush1.bf16.msra.mxu0 0
  %5183 = vmatprep.subr.bf16.mxu0 0
  %5184 = vmatpush1.bf16.msra.mxu0 0
  %5185 = vmatprep.subr.bf16.mxu0 0
  %5186 = vmatpush1.bf16.msra.mxu0 0
  %5187 = vmatprep.subr.bf16.mxu0 0
  %5188 = vmatpush1.bf16.msra.mxu0 0
  %5189 = vmatprep.subr.bf16.mxu0 0
  %5190 = vmatpush1.bf16.msra.mxu0 0
  %5191 = vmatprep.mubr.bf16.mxu0 0
  %5192 = vmatmul.mubr.bf16.gmra.mrb[0].mxu0 %v5016
  %v5193 = vpop.f32.mrb[0].mxu0
  %v5194 = vadd.f32 %v4988, %v5193
  %v5195 = vpop.f32.mrb[0].mxu0
  %v5196 = vpop.f32.mrb[0].mxu0
  %v5197 = vadd.f32 %v4988, %v5196
  %v5198 = vpop.f32.mrb[0].mxu0
  %5199 = vmatprep.mubr.bf16.mxu0 0
  %5200 = vmatmul.mubr.bf16.gmra.mrb[0].mxu0 %v5019
  %v5201 = vpop.f32.mrb[0].mxu0
  %v5202 = vadd.f32 %v4988, %v5201
  %v5203 = vpop.f32.mrb[0].mxu0
  %v5204 = vpop.f32.mrb[0].mxu0
  %v5205 = vadd.f32 %v4988, %v5204
  %v5206 = vpop.f32.mrb[0].mxu0
  %5207 = vmatprep.mubr.bf16.mxu0 0
  %5208 = vmatmul.mubr.bf16.gmra.mrb[0].mxu0 %v5022
  %v5209 = vpop.f32.mrb[0].mxu0
  %v5210 = vadd.f32 %v4988, %v5209
  %v5211 = vpop.f32.mrb[0].mxu0
  %v5212 = vpop.f32.mrb[0].mxu0
  %v5213 = vadd.f32 %v4988, %v5212
  %v5214 = vpop.f32.mrb[0].mxu0
  %5215 = vmatprep.mubr.bf16.mxu0 0
  %5216 = vmatmul.mubr.bf16.gmra.mrb[0].mxu0 %v5025
  %v5217 = vpop.f32.mrb[0].mxu0
  %v5218 = vadd.f32 %v4988, %v5217
  %v5219 = vpop.f32.mrb[0].mxu0
  %v5220 = vpop.f32.mrb[0].mxu0
  %v5221 = vadd.f32 %v4988, %v5220
  %v5222 = vpop.f32.mrb[0].mxu0
  %5223 = vmatprep.mubr.bf16.mxu0 0
  %5224 = vmatmul.mubr.bf16.gmra.mrb[0].mxu0 %v5028
  %v5225 = vpop.f32.mrb[0].mxu0
  %v5226 = vadd.f32 %v4988, %v5225
  %v5227 = vpop.f32.mrb[0].mxu0
  %v5228 = vpop.f32.mrb[0].mxu0
  %v5229 = vadd.f32 %v4988, %v5228
  %v5230 = vpop.f32.mrb[0].mxu0
  %5231 = vmatprep.mubr.bf16.mxu0 0
  %5232 = vmatmul.mubr.bf16.gmra.mrb[0].mxu0 %v5031
  %v5233 = vpop.f32.mrb[0].mxu0
  %v5234 = vadd.f32 %v4988, %v5233
  %v5235 = vpop.f32.mrb[0].mxu0
  %v5236 = vpop.f32.mrb[0].mxu0
  %v5237 = vadd.f32 %v4988, %v5236
  %v5238 = vpop.f32.mrb[0].mxu0
  %5239 = vmatprep.mubr.bf16.mxu0 0
  %5240 = vmatmul.mubr.bf16.gmra.mrb[0].mxu0 %v5034
  %v5241 = vpop.f32.mrb[0].mxu0
  %v5242 = vadd.f32 %v4988, %v5241
  %v5243 = vpop.f32.mrb[0].mxu0
  %v5244 = vpop.f32.mrb[0].mxu0
  %v5245 = vadd.f32 %v4988, %v5244
  %v5246 = vpop.f32.mrb[0].mxu0
  %5247 = vmatprep.mubr.bf16.mxu0 0
  %5248 = vmatmul.mubr.bf16.gmra.mrb[0].mxu0 %v5037
  %v5249 = vpop.f32.mrb[0].mxu0
  %v5250 = vadd.f32 %v4988, %v5249
  %v5251 = vpop.f32.mrb[0].mxu0
  %v5252 = vpop.f32.mrb[0].mxu0
  %v5253 = vadd.f32 %v4988, %v5252
  %v5254 = vpop.f32.mrb[0].mxu0
  %5255 = vmatprep.mubr.bf16.mxu0 0
  %5256 = vmatmul.mubr.bf16.gmra.mrb[0].mxu0 %v5040
  %v5257 = vpop.f32.mrb[0].mxu0
  %v5258 = vadd.f32 %v4988, %v5257
  %v5259 = vpop.f32.mrb[0].mxu0
  %v5260 = vpop.f32.mrb[0].mxu0
  %v5261 = vadd.f32 %v4988, %v5260
  %v5262 = vpop.f32.mrb[0].mxu0
  %5263 = vmatprep.mubr.bf16.mxu0 0
  %5264 = vmatmul.mubr.bf16.gmra.mrb[0].mxu0 %v5043
  %v5265 = vpop.f32.mrb[0].mxu0
  %v5266 = vadd.f32 %v4988, %v5265
  %v5267 = vpop.f32.mrb[0].mxu0
  %v5268 = vpop.f32.mrb[0].mxu0
  %v5269 = vadd.f32 %v4988, %v5268
  %v5270 = vpop.f32.mrb[0].mxu0
  %5271 = vmatprep.mubr.bf16.mxu0 0
  %5272 = vmatmul.mubr.bf16.gmra.mrb[0].mxu0 %v5046
  %v5273 = vpop.f32.mrb[0].mxu0
  %v5274 = vadd.f32 %v4988, %v5273
  %v5275 = vpop.f32.mrb[0].mxu0
  %v5276 = vpop.f32.mrb[0].mxu0
  %v5277 = vadd.f32 %v4988, %v5276
  %v5278 = vpop.f32.mrb[0].mxu0
  %5279 = vmatprep.mubr.bf16.mxu0 0
  %5280 = vmatmul.mubr.bf16.gmra.mrb[0].mxu0 %v5049
  %v5281 = vpop.f32.mrb[0].mxu0
  %v5282 = vadd.f32 %v4988, %v5281
  %v5283 = vpop.f32.mrb[0].mxu0
  %v5284 = vpop.f32.mrb[0].mxu0
  %v5285 = vadd.f32 %v4988, %v5284
  %v5286 = vpop.f32.mrb[0].mxu0
  %5287 = vmatprep.mubr.bf16.mxu0 0
  %5288 = vmatmul.mubr.bf16.gmra.mrb[0].mxu0 %v5052
  %v5289 = vpop.f32.mrb[0].mxu0
  %v5290 = vadd.f32 %v4988, %v5289
  %v5291 = vpop.f32.mrb[0].mxu0
  %v5292 = vpop.f32.mrb[0].mxu0
  %v5293 = vadd.f32 %v4988, %v5292
  %v5294 = vpop.f32.mrb[0].mxu0
  %5295 = vmatprep.mubr.bf16.mxu0 0
  %5296 = vmatmul.mubr.bf16.gmra.mrb[0].mxu0 %v5055
  %v5297 = vpop.f32.mrb[0].mxu0
  %v5298 = vadd.f32 %v4988, %v5297
  %v5299 = vpop.f32.mrb[0].mxu0
  %v5300 = vpop.f32.mrb[0].mxu0
  %v5301 = vadd.f32 %v4988, %v5300
  %v5302 = vpop.f32.mrb[0].mxu0
  %5303 = vmatprep.mubr.bf16.mxu0 0
  %5304 = vmatmul.mubr.bf16.gmra.mrb[0].mxu0 %v5058
  %v5305 = vpop.f32.mrb[0].mxu0
  %v5306 = vadd.f32 %v4988, %v5305
  %v5307 = vpop.f32.mrb[0].mxu0
  %v5308 = vpop.f32.mrb[0].mxu0
  %v5309 = vadd.f32 %v4988, %v5308
  %v5310 = vpop.f32.mrb[0].mxu0
  %5311 = vmatprep.mubr.bf16.mxu0 0
  %5312 = vmatmul.mubr.bf16.gmra.mrb[0].mxu0 %v5061
  %v5313 = vpop.f32.mrb[0].mxu0
  %v5314 = vadd.f32 %v4988, %v5313
  %v5315 = vpop.f32.mrb[0].mxu0
  %v5316 = vpop.f32.mrb[0].mxu0
  %v5317 = vadd.f32 %v4988, %v5316
  %v5318 = vpop.f32.mrb[0].mxu0
  %5319 = vmatprep.mubr.bf16.mxu0 0
  %5320 = vmatmul.mubr.bf16.gmra.mrb[0].mxu0 %v5064
  %v5321 = vpop.f32.mrb[0].mxu0
  %v5322 = vadd.f32 %v4988, %v5321
  %v5323 = vpop.f32.mrb[0].mxu0
  %v5324 = vpop.f32.mrb[0].mxu0
  %v5325 = vadd.f32 %v4988, %v5324
  %v5326 = vpop.f32.mrb[0].mxu0
  %5327 = vmatprep.mubr.bf16.mxu0 0
  %5328 = vmatmul.mubr.bf16.gmra.mrb[0].mxu0 %v5067
  %v5329 = vpop.f32.mrb[0].mxu0
  %v5330 = vadd.f32 %v4988, %v5329
  %v5331 = vpop.f32.mrb[0].mxu0
  %v5332 = vpop.f32.mrb[0].mxu0
  %v5333 = vadd.f32 %v4988, %v5332
  %v5334 = vpop.f32.mrb[0].mxu0
  %5335 = vmatprep.mubr.bf16.mxu0 0
  %5336 = vmatmul.mubr.bf16.gmra.mrb[0].mxu0 %v5070
  %v5337 = vpop.f32.mrb[0].mxu0
  %v5338 = vadd.f32 %v4988, %v5337
  %v5339 = vpop.f32.mrb[0].mxu0
  %v5340 = vpop.f32.mrb[0].mxu0
  %v5341 = vadd.f32 %v4988, %v5340
  %v5342 = vpop.f32.mrb[0].mxu0
  %5343 = vmatprep.mubr.bf16.mxu0 0
  %5344 = vmatmul.mubr.bf16.gmra.mrb[0].mxu0 %v5073
  %v5345 = vpop.f32.mrb[0].mxu0
  %v5346 = vadd.f32 %v4988, %v5345
  %v5347 = vpop.f32.mrb[0].mxu0
  %v5348 = vpop.f32.mrb[0].mxu0
  %v5349 = vadd.f32 %v4988, %v5348
  %v5350 = vpop.f32.mrb[0].mxu0
  %5351 = vmatprep.mubr.bf16.mxu0 0
  %5352 = vmatmul.mubr.bf16.gmra.mrb[0].mxu0 %v5076
  %v5353 = vpop.f32.mrb[0].mxu0
  %v5354 = vadd.f32 %v4988, %v5353
  %v5355 = vpop.f32.mrb[0].mxu0
  %v5356 = vpop.f32.mrb[0].mxu0
  %v5357 = vadd.f32 %v4988, %v5356
  %v5358 = vpop.f32.mrb[0].mxu0
  %5359 = vmatprep.mubr.bf16.mxu0 0
  %5360 = vmatmul.mubr.bf16.gmra.mrb[0].mxu0 %v5079
  %v5361 = vpop.f32.mrb[0].mxu0
  %v5362 = vadd.f32 %v4988, %v5361
  %v5363 = vpop.f32.mrb[0].mxu0
  %v5364 = vpop.f32.mrb[0].mxu0
  %v5365 = vadd.f32 %v4988, %v5364
  %v5366 = vpop.f32.mrb[0].mxu0
  %5367 = vmatprep.mubr.bf16.mxu0 0
  %5368 = vmatmul.mubr.bf16.gmra.mrb[0].mxu0 %v5082
  %v5369 = vpop.f32.mrb[0].mxu0
  %v5370 = vadd.f32 %v4988, %v5369
  %v5371 = vpop.f32.mrb[0].mxu0
  %v5372 = vpop.f32.mrb[0].mxu0
  %v5373 = vadd.f32 %v4988, %v5372
  %v5374 = vpop.f32.mrb[0].mxu0
  %5375 = vmatprep.mubr.bf16.mxu0 0
  %5376 = vmatmul.mubr.bf16.gmra.mrb[0].mxu0 %v5085
  %v5377 = vpop.f32.mrb[0].mxu0
  %v5378 = vadd.f32 %v4988, %v5377
  %v5379 = vpop.f32.mrb[0].mxu0
  %v5380 = vpop.f32.mrb[0].mxu0
  %v5381 = vadd.f32 %v4988, %v5380
  %v5382 = vpop.f32.mrb[0].mxu0
  %5383 = vmatprep.mubr.bf16.mxu0 0
  %5384 = vmatmul.mubr.bf16.gmra.mrb[0].mxu0 %v5088
  %v5385 = vpop.f32.mrb[0].mxu0
  %v5386 = vadd.f32 %v4988, %v5385
  %v5387 = vpop.f32.mrb[0].mxu0
  %v5388 = vpop.f32.mrb[0].mxu0
  %v5389 = vadd.f32 %v4988, %v5388
  %v5390 = vpop.f32.mrb[0].mxu0
  %5391 = vmatprep.mubr.bf16.mxu0 0
  %5392 = vmatmul.mubr.bf16.gmra.mrb[0].mxu0 %v5091
  %v5393 = vpop.f32.mrb[0].mxu0
  %v5394 = vadd.f32 %v4988, %v5393
  %v5395 = vpop.f32.mrb[0].mxu0
  %v5396 = vpop.f32.mrb[0].mxu0
  %v5397 = vadd.f32 %v4988, %v5396
  %v5398 = vpop.f32.mrb[0].mxu0
  %5399 = vmatprep.mubr.bf16.mxu0 0
  %5400 = vmatmul.mubr.bf16.gmra.mrb[0].mxu0 %v5094
  %v5401 = vpop.f32.mrb[0].mxu0
  %v5402 = vadd.f32 %v4988, %v5401
  %v5403 = vpop.f32.mrb[0].mxu0
  %v5404 = vpop.f32.mrb[0].mxu0
  %v5405 = vadd.f32 %v4988, %v5404
  %v5406 = vpop.f32.mrb[0].mxu0
  %5407 = vmatprep.mubr.bf16.mxu0 0
  %5408 = vmatmul.mubr.bf16.gmra.mrb[0].mxu0 %v5097
  %v5409 = vpop.f32.mrb[0].mxu0
  %v5410 = vadd.f32 %v4988, %v5409
  %v5411 = vpop.f32.mrb[0].mxu0
  %v5412 = vpop.f32.mrb[0].mxu0
  %v5413 = vadd.f32 %v4988, %v5412
  %v5414 = vpop.f32.mrb[0].mxu0
  %5415 = vmatprep.mubr.bf16.mxu0 0
  %5416 = vmatmul.mubr.bf16.gmra.mrb[0].mxu0 %v5100
  %v5417 = vpop.f32.mrb[0].mxu0
  %v5418 = vadd.f32 %v4988, %v5417
  %v5419 = vpop.f32.mrb[0].mxu0
  %v5420 = vpop.f32.mrb[0].mxu0
  %v5421 = vadd.f32 %v4988, %v5420
  %v5422 = vpop.f32.mrb[0].mxu0
  %5423 = vmatprep.mubr.bf16.mxu0 0
  %5424 = vmatmul.mubr.bf16.gmra.mrb[0].mxu0 %v5103
  %v5425 = vpop.f32.mrb[0].mxu0
  %v5426 = vadd.f32 %v4988, %v5425
  %v5427 = vpop.f32.mrb[0].mxu0
  %v5428 = vpop.f32.mrb[0].mxu0
  %v5429 = vadd.f32 %v4988, %v5428
  %v5430 = vpop.f32.mrb[0].mxu0
  %5431 = vmatprep.mubr.bf16.mxu0 0
  %5432 = vmatmul.mubr.bf16.gmra.mrb[0].mxu0 %v5106
  %v5433 = vpop.f32.mrb[0].mxu0
  %v5434 = vadd.f32 %v4988, %v5433
  %v5435 = vpop.f32.mrb[0].mxu0
  %v5436 = vpop.f32.mrb[0].mxu0
  %v5437 = vadd.f32 %v4988, %v5436
  %v5438 = vpop.f32.mrb[0].mxu0
  %5439 = vmatprep.mubr.bf16.mxu0 0
  %5440 = vmatmul.mubr.bf16.gmra.mrb[0].mxu0 %v5109
  %v5441 = vpop.f32.mrb[0].mxu0
  %v5442 = vadd.f32 %v4988, %v5441
  %v5443 = vpop.f32.mrb[0].mxu0
  %v5444 = vpop.f32.mrb[0].mxu0
  %v5445 = vadd.f32 %v4988, %v5444
  %v5446 = vpop.f32.mrb[0].mxu0
  %5447 = vmatprep.mubr.bf16.mxu0 0
  %5448 = vmatmul.mubr.bf16.gmra.mrb[0].mxu0 %v5112
  %v5449 = vpop.f32.mrb[0].mxu0
  %v5450 = vadd.f32 %v4988, %v5449
  %v5451 = vpop.f32.mrb[0].mxu0
  %v5452 = vpop.f32.mrb[0].mxu0
  %v5453 = vadd.f32 %v4988, %v5452
  %v5454 = vpop.f32.mrb[0].mxu0
  %5455 = vmatprep.mubr.bf16.mxu0 0
  %5456 = vmatmul.mubr.bf16.gmra.mrb[0].mxu0 %v5115
  %v5457 = vpop.f32.mrb[0].mxu0
  %v5458 = vadd.f32 %v4988, %v5457
  %v5459 = vpop.f32.mrb[0].mxu0
  %v5460 = vpop.f32.mrb[0].mxu0
  %v5461 = vadd.f32 %v4988, %v5460
  %v5462 = vpop.f32.mrb[0].mxu0
  %5463 = vmatprep.mubr.bf16.mxu0 0
  %5464 = vmatmul.mubr.bf16.gmra.mrb[0].mxu0 %v5118
  %v5465 = vpop.f32.mrb[0].mxu0
  %v5466 = vadd.f32 %v4988, %v5465
  %v5467 = vpop.f32.mrb[0].mxu0
  %v5468 = vpop.f32.mrb[0].mxu0
  %v5469 = vadd.f32 %v4988, %v5468
  %v5470 = vpop.f32.mrb[0].mxu0
  %5471 = vmatprep.mubr.bf16.mxu0 0
  %5472 = vmatmul.mubr.bf16.gmra.mrb[0].mxu0 %v5121
  %v5473 = vpop.f32.mrb[0].mxu0
  %v5474 = vadd.f32 %v4988, %v5473
  %v5475 = vpop.f32.mrb[0].mxu0
  %v5476 = vpop.f32.mrb[0].mxu0
  %v5477 = vadd.f32 %v4988, %v5476
  %v5478 = vpop.f32.mrb[0].mxu0
  %5479 = vmatprep.mubr.bf16.mxu0 0
  %5480 = vmatmul.mubr.bf16.gmra.mrb[0].mxu0 %v5124
  %v5481 = vpop.f32.mrb[0].mxu0
  %v5482 = vadd.f32 %v4988, %v5481
  %v5483 = vpop.f32.mrb[0].mxu0
  %v5484 = vpop.f32.mrb[0].mxu0
  %v5485 = vadd.f32 %v4988, %v5484
  %v5486 = vpop.f32.mrb[0].mxu0
  %5487 = vmatprep.mubr.bf16.mxu0 0
  %5488 = vmatmul.mubr.bf16.gmra.mrb[0].mxu0 %v5127
  %v5489 = vpop.f32.mrb[0].mxu0
  %v5490 = vadd.f32 %v4988, %v5489
  %v5491 = vpop.f32.mrb[0].mxu0
  %v5492 = vpop.f32.mrb[0].mxu0
  %v5493 = vadd.f32 %v4988, %v5492
  %v5494 = vpop.f32.mrb[0].mxu0
  %5495 = vmatprep.mubr.bf16.mxu0 0
  %5496 = vmatmul.mubr.bf16.gmra.mrb[0].mxu0 %v5130
  %v5497 = vpop.f32.mrb[0].mxu0
  %v5498 = vadd.f32 %v4988, %v5497
  %v5499 = vpop.f32.mrb[0].mxu0
  %v5500 = vpop.f32.mrb[0].mxu0
  %v5501 = vadd.f32 %v4988, %v5500
  %v5502 = vpop.f32.mrb[0].mxu0
  %5503 = vmatprep.mubr.bf16.mxu0 0
  %5504 = vmatmul.mubr.bf16.gmra.mrb[0].mxu0 %v5133
  %v5505 = vpop.f32.mrb[0].mxu0
  %v5506 = vadd.f32 %v4988, %v5505
  %v5507 = vpop.f32.mrb[0].mxu0
  %v5508 = vpop.f32.mrb[0].mxu0
  %v5509 = vadd.f32 %v4988, %v5508
  %v5510 = vpop.f32.mrb[0].mxu0
  %5511 = vmatprep.mubr.bf16.mxu0 0
  %5512 = vmatmul.mubr.bf16.gmra.mrb[0].mxu0 %v5136
  %v5513 = vpop.f32.mrb[0].mxu0
  %v5514 = vadd.f32 %v4988, %v5513
  %v5515 = vpop.f32.mrb[0].mxu0
  %v5516 = vpop.f32.mrb[0].mxu0
  %v5517 = vadd.f32 %v4988, %v5516
  %v5518 = vpop.f32.mrb[0].mxu0
  %5519 = vmatprep.mubr.bf16.mxu0 0
  %5520 = vmatmul.mubr.bf16.gmra.mrb[0].mxu0 %v5139
  %v5521 = vpop.f32.mrb[0].mxu0
  %v5522 = vadd.f32 %v4988, %v5521
  %v5523 = vpop.f32.mrb[0].mxu0
  %v5524 = vpop.f32.mrb[0].mxu0
  %v5525 = vadd.f32 %v4988, %v5524
  %v5526 = vpop.f32.mrb[0].mxu0
  %5527 = vmatprep.mubr.bf16.mxu0 0
  %5528 = vmatmul.mubr.bf16.gmra.mrb[0].mxu0 %v5142
  %v5529 = vpop.f32.mrb[0].mxu0
  %v5530 = vadd.f32 %v4988, %v5529
  %v5531 = vpop.f32.mrb[0].mxu0
  %v5532 = vpop.f32.mrb[0].mxu0
  %v5533 = vadd.f32 %v4988, %v5532
  %v5534 = vpop.f32.mrb[0].mxu0
  %5535 = vmatprep.mubr.bf16.mxu0 0
  %5536 = vmatmul.mubr.bf16.gmra.mrb[0].mxu0 %v5145
  %v5537 = vpop.f32.mrb[0].mxu0
  %v5538 = vadd.f32 %v4988, %v5537
  %v5539 = vpop.f32.mrb[0].mxu0
  %v5540 = vpop.f32.mrb[0].mxu0
  %v5541 = vadd.f32 %v4988, %v5540
  %v5542 = vpop.f32.mrb[0].mxu0
  %5543 = vmatprep.mubr.bf16.mxu0 0
  %5544 = vmatmul.mubr.bf16.gmra.mrb[0].mxu0 %v5148
  %v5545 = vpop.f32.mrb[0].mxu0
  %v5546 = vadd.f32 %v4988, %v5545
  %v5547 = vpop.f32.mrb[0].mxu0
  %v5548 = vpop.f32.mrb[0].mxu0
  %v5549 = vadd.f32 %v4988, %v5548
  %v5550 = vpop.f32.mrb[0].mxu0
  %5551 = vmatprep.mubr.bf16.mxu0 0
  %5552 = vmatmul.mubr.bf16.gmra.mrb[0].mxu0 %v5151
  %v5553 = vpop.f32.mrb[0].mxu0
  %v5554 = vadd.f32 %v4988, %v5553
  %v5555 = vpop.f32.mrb[0].mxu0
  %v5556 = vpop.f32.mrb[0].mxu0
  %v5557 = vadd.f32 %v4988, %v5556
  %v5558 = vpop.f32.mrb[0].mxu0
  %5559 = vmatprep.mubr.bf16.mxu0 0
  %5560 = vmatmul.mubr.bf16.gmra.mrb[0].mxu0 %v5154
  %v5561 = vpop.f32.mrb[0].mxu0
  %v5562 = vadd.f32 %v4988, %v5561
  %v5563 = vpop.f32.mrb[0].mxu0
  %v5564 = vpop.f32.mrb[0].mxu0
  %v5565 = vadd.f32 %v4988, %v5564
  %v5566 = vpop.f32.mrb[0].mxu0
  %5567 = vmatprep.mubr.bf16.mxu0 0
  %5568 = vmatmul.mubr.bf16.gmra.mrb[0].mxu0 %v5157
  %v5569 = vpop.f32.mrb[0].mxu0
  %v5570 = vadd.f32 %v4988, %v5569
  %v5571 = vpop.f32.mrb[0].mxu0
  %v5572 = vpop.f32.mrb[0].mxu0
  %v5573 = vadd.f32 %v4988, %v5572
  %v5574 = vpop.f32.mrb[0].mxu0
  %5575 = vdwg.mxu0
  %v5576 = vmax.f32 %v5194, 0.0
  %v5577 = vmax.f32 %v5197, 0.0
  %v5578 = vmax.f32 %v5202, 0.0
  %v5579 = vmax.f32 %v5205, 0.0
  %v5580 = vmax.f32 %v5210, 0.0
  %v5581 = vmax.f32 %v5213, 0.0
  %v5582 = vmax.f32 %v5218, 0.0
  %v5583 = vmax.f32 %v5221, 0.0
  %v5584 = vmax.f32 %v5226, 0.0
  %v5585 = vmax.f32 %v5229, 0.0
  %v5586 = vmax.f32 %v5234, 0.0
  %v5587 = vmax.f32 %v5237, 0.0
  %v5588 = vmax.f32 %v5242, 0.0
  %v5589 = vmax.f32 %v5245, 0.0
  %v5590 = vmax.f32 %v5250, 0.0
  %v5591 = vmax.f32 %v5253, 0.0
  %v5592 = vmax.f32 %v5258, 0.0
  %v5593 = vmax.f32 %v5261, 0.0
  %v5594 = vmax.f32 %v5266, 0.0
  %v5595 = vmax.f32 %v5269, 0.0
  %v5596 = vmax.f32 %v5274, 0.0
  %v5597 = vmax.f32 %v5277, 0.0
  %v5598 = vmax.f32 %v5282, 0.0
  %v5599 = vmax.f32 %v5285, 0.0
  %v5600 = vmax.f32 %v5290, 0.0
  %v5601 = vmax.f32 %v5293, 0.0
  %v5602 = vmax.f32 %v5298, 0.0
  %v5603 = vmax.f32 %v5301, 0.0
  %v5604 = vmax.f32 %v5306, 0.0
  %v5605 = vmax.f32 %v5309, 0.0
  %v5606 = vmax.f32 %v5314, 0.0
  %v5607 = vmax.f32 %v5317, 0.0
  %v5608 = vmax.f32 %v5322, 0.0
  %v5609 = vmax.f32 %v5325, 0.0
  %v5610 = vmax.f32 %v5330, 0.0
  %v5611 = vmax.f32 %v5333, 0.0
  %v5612 = vmax.f32 %v5338, 0.0
  %v5613 = vmax.f32 %v5341, 0.0
  %v5614 = vmax.f32 %v5346, 0.0
  %v5615 = vmax.f32 %v5349, 0.0
  %v5616 = vmax.f32 %v5354, 0.0
  %v5617 = vmax.f32 %v5357, 0.0
  %v5618 = vmax.f32 %v5362, 0.0
  %v5619 = vmax.f32 %v5365, 0.0
  %v5620 = vmax.f32 %v5370, 0.0
  %v5621 = vmax.f32 %v5373, 0.0
  %v5622 = vmax.f32 %v5378, 0.0
  %v5623 = vmax.f32 %v5381, 0.0
  %v5624 = vmax.f32 %v5386, 0.0
  %v5625 = vmax.f32 %v5389, 0.0
  %v5626 = vmax.f32 %v5394, 0.0
  %v5627 = vmax.f32 %v5397, 0.0
  %v5628 = vmax.f32 %v5402, 0.0
  %v5629 = vmax.f32 %v5405, 0.0
  %v5630 = vmax.f32 %v5410, 0.0
  %v5631 = vmax.f32 %v5413, 0.0
  %v5632 = vmax.f32 %v5418, 0.0
  %v5633 = vmax.f32 %v5421, 0.0
  %v5634 = vmax.f32 %v5426, 0.0
  %v5635 = vmax.f32 %v5429, 0.0
  %v5636 = vmax.f32 %v5434, 0.0
  %v5637 = vmax.f32 %v5437, 0.0
  %v5638 = vmax.f32 %v5442, 0.0
  %v5639 = vmax.f32 %v5445, 0.0
  %v5640 = vmax.f32 %v5450, 0.0
  %v5641 = vmax.f32 %v5453, 0.0
  %v5642 = vmax.f32 %v5458, 0.0
  %v5643 = vmax.f32 %v5461, 0.0
  %v5644 = vmax.f32 %v5466, 0.0
  %v5645 = vmax.f32 %v5469, 0.0
  %v5646 = vmax.f32 %v5474, 0.0
  %v5647 = vmax.f32 %v5477, 0.0
  %v5648 = vmax.f32 %v5482, 0.0
  %v5649 = vmax.f32 %v5485, 0.0
  %v5650 = vmax.f32 %v5490, 0.0
  %v5651 = vmax.f32 %v5493, 0.0
  %v5652 = vmax.f32 %v5498, 0.0
  %v5653 = vmax.f32 %v5501, 0.0
  %v5654 = vmax.f32 %v5506, 0.0
  %v5655 = vmax.f32 %v5509, 0.0
  %v5656 = vmax.f32 %v5514, 0.0
  %v5657 = vmax.f32 %v5517, 0.0
  %v5658 = vmax.f32 %v5522, 0.0
  %v5659 = vmax.f32 %v5525, 0.0
  %v5660 = vmax.f32 %v5530, 0.0
  %v5661 = vmax.f32 %v5533, 0.0
  %v5662 = vmax.f32 %v5538, 0.0
  %v5663 = vmax.f32 %v5541, 0.0
  %v5664 = vmax.f32 %v5546, 0.0
  %v5665 = vmax.f32 %v5549, 0.0
  %v5666 = vmax.f32 %v5554, 0.0
  %v5667 = vmax.f32 %v5557, 0.0
  %v5668 = vmax.f32 %v5562, 0.0
  %v5669 = vmax.f32 %v5565, 0.0
  %v5670 = vmax.f32 %v5570, 0.0
  %v5671 = vmax.f32 %v5573, 0.0
  %v5672 = vld [vmem:[%s1 + $0x1c] sm:$0xf]
  %v5673 = vld [vmem:[%s1 + $0x3c] sm:$0xf]
  %v5674 = vld [vmem:[%s1 + $0x5c] sm:$0xf]
  %v5675 = vld [vmem:[%s1 + $0x7c] sm:$0xf]
  %v5676 = vld [vmem:[%s2 + $0x7] sm:$0x1]
  %v5677 = vpack.c.bf16 %v5577, %v5576
  %v5678 = vpack.c.bf16 %v5579, %v5578
  %v5679 = vpack.c.bf16 %v5581, %v5580
  %v5680 = vpack.c.bf16 %v5583, %v5582
  %v5681 = vpack.c.bf16 %v5585, %v5584
  %v5682 = vpack.c.bf16 %v5587, %v5586
  %v5683 = vpack.c.bf16 %v5589, %v5588
  %v5684 = vpack.c.bf16 %v5591, %v5590
  %v5685 = vpack.c.bf16 %v5593, %v5592
  %v5686 = vpack.c.bf16 %v5595, %v5594
  %v5687 = vpack.c.bf16 %v5597, %v5596
  %v5688 = vpack.c.bf16 %v5599, %v5598
  %v5689 = vpack.c.bf16 %v5601, %v5600
  %v5690 = vpack.c.bf16 %v5603, %v5602
  %v5691 = vpack.c.bf16 %v5605, %v5604
  %v5692 = vpack.c.bf16 %v5607, %v5606
  %v5693 = vpack.c.bf16 %v5609, %v5608
  %v5694 = vpack.c.bf16 %v5611, %v5610
  %v5695 = vpack.c.bf16 %v5613, %v5612
  %v5696 = vpack.c.bf16 %v5615, %v5614
  %v5697 = vpack.c.bf16 %v5617, %v5616
  %v5698 = vpack.c.bf16 %v5619, %v5618
  %v5699 = vpack.c.bf16 %v5621, %v5620
  %v5700 = vpack.c.bf16 %v5623, %v5622
  %v5701 = vpack.c.bf16 %v5625, %v5624
  %v5702 = vpack.c.bf16 %v5627, %v5626
  %v5703 = vpack.c.bf16 %v5629, %v5628
  %v5704 = vpack.c.bf16 %v5631, %v5630
  %v5705 = vpack.c.bf16 %v5633, %v5632
  %v5706 = vpack.c.bf16 %v5635, %v5634
  %v5707 = vpack.c.bf16 %v5637, %v5636
  %v5708 = vpack.c.bf16 %v5639, %v5638
  %v5709 = vpack.c.bf16 %v5641, %v5640
  %v5710 = vpack.c.bf16 %v5643, %v5642
  %v5711 = vpack.c.bf16 %v5645, %v5644
  %v5712 = vpack.c.bf16 %v5647, %v5646
  %v5713 = vpack.c.bf16 %v5649, %v5648
  %v5714 = vpack.c.bf16 %v5651, %v5650
  %v5715 = vpack.c.bf16 %v5653, %v5652
  %v5716 = vpack.c.bf16 %v5655, %v5654
  %v5717 = vpack.c.bf16 %v5657, %v5656
  %v5718 = vpack.c.bf16 %v5659, %v5658
  %v5719 = vpack.c.bf16 %v5661, %v5660
  %v5720 = vpack.c.bf16 %v5663, %v5662
  %v5721 = vpack.c.bf16 %v5665, %v5664
  %v5722 = vpack.c.bf16 %v5667, %v5666
  %v5723 = vpack.c.bf16 %v5669, %v5668
  %v5724 = vpack.c.bf16 %v5671, %v5670
  %v5726 = vlaneseq
  %v5727 = vshrl.u32 %v5726, 7
  %v5728 = vsub.s32 0, %v5727
  %v5729 = vrot.slane %v5676, %v5728
  %v5735 = vunpack.c.l.b16 %v5672
  %v5736 = vunpack.c.l.b16 %v5673
  %v5737 = vunpack.c.l.b16 %v5674
  %v5738 = vunpack.c.l.b16 %v5675
  %v5739 = vpack.c.b16 %v5736, %v5735
  %v5740 = vpack.c.b16 %v5738, %v5737
  %v5744 = vsel %vm3541, %v5677, 0
  %v5747 = vsel %vm3541, %v5678, 0
  %v5750 = vsel %vm3541, %v5679, 0
  %v5753 = vsel %vm3541, %v5680, 0
  %v5756 = vsel %vm3541, %v5681, 0
  %v5759 = vsel %vm3541, %v5682, 0
  %v5762 = vsel %vm3541, %v5683, 0
  %v5765 = vsel %vm3541, %v5684, 0
  %v5768 = vsel %vm3541, %v5685, 0
  %v5771 = vsel %vm3541, %v5686, 0
  %v5774 = vsel %vm3541, %v5687, 0
  %v5777 = vsel %vm3541, %v5688, 0
  %v5780 = vsel %vm3541, %v5689, 0
  %v5783 = vsel %vm3541, %v5690, 0
  %v5786 = vsel %vm3541, %v5691, 0
  %v5789 = vsel %vm3541, %v5692, 0
  %v5792 = vsel %vm3541, %v5693, 0
  %v5795 = vsel %vm3541, %v5694, 0
  %v5798 = vsel %vm3541, %v5695, 0
  %v5801 = vsel %vm3541, %v5696, 0
  %v5804 = vsel %vm3541, %v5697, 0
  %v5807 = vsel %vm3541, %v5698, 0
  %v5810 = vsel %vm3541, %v5699, 0
  %v5813 = vsel %vm3541, %v5700, 0
  %v5816 = vsel %vm3541, %v5701, 0
  %v5819 = vsel %vm3541, %v5702, 0
  %v5822 = vsel %vm3541, %v5703, 0
  %v5825 = vsel %vm3541, %v5704, 0
  %v5828 = vsel %vm3541, %v5705, 0
  %v5831 = vsel %vm3541, %v5706, 0
  %v5834 = vsel %vm3541, %v5707, 0
  %v5837 = vsel %vm3541, %v5708, 0
  %v5840 = vsel %vm3541, %v5709, 0
  %v5843 = vsel %vm3541, %v5710, 0
  %v5846 = vsel %vm3541, %v5711, 0
  %v5849 = vsel %vm3541, %v5712, 0
  %v5852 = vsel %vm3541, %v5713, 0
  %v5855 = vsel %vm3541, %v5714, 0
  %v5858 = vsel %vm3541, %v5715, 0
  %v5861 = vsel %vm3541, %v5716, 0
  %v5864 = vsel %vm3541, %v5717, 0
  %v5867 = vsel %vm3541, %v5718, 0
  %v5870 = vsel %vm3541, %v5719, 0
  %v5873 = vsel %vm3541, %v5720, 0
  %v5876 = vsel %vm3541, %v5721, 0
  %v5879 = vsel %vm3541, %v5722, 0
  %v5882 = vsel %vm3541, %v5723, 0
  %v5885 = vsel %vm3541, %v5724, 0
  %5887 = vmatprep.subr.bf16.mxu0 0
  %5888 = vmatpush1.bf16.msra.mxu0 %v5739
  %5889 = vmatprep.subr.bf16.mxu0 0
  %5890 = vmatpush1.bf16.msra.mxu0 %v5740
  %5891 = vmatprep.subr.bf16.mxu0 0
  %5892 = vmatpush1.bf16.msra.mxu0 0
  %5893 = vmatprep.subr.bf16.mxu0 0
  %5894 = vmatpush1.bf16.msra.mxu0 0
  %5895 = vmatprep.subr.bf16.mxu0 0
  %5896 = vmatpush1.bf16.msra.mxu0 0
  %5897 = vmatprep.subr.bf16.mxu0 0
  %5898 = vmatpush1.bf16.msra.mxu0 0
  %5899 = vmatprep.subr.bf16.mxu0 0
  %5900 = vmatpush1.bf16.msra.mxu0 0
  %5901 = vmatprep.subr.bf16.mxu0 0
  %5902 = vmatpush1.bf16.msra.mxu0 0
  %5903 = vmatprep.subr.bf16.mxu0 0
  %5904 = vmatpush1.bf16.msra.mxu0 0
  %5905 = vmatprep.subr.bf16.mxu0 0
  %5906 = vmatpush1.bf16.msra.mxu0 0
  %5907 = vmatprep.subr.bf16.mxu0 0
  %5908 = vmatpush1.bf16.msra.mxu0 0
  %5909 = vmatprep.subr.bf16.mxu0 0
  %5910 = vmatpush1.bf16.msra.mxu0 0
  %5911 = vmatprep.subr.bf16.mxu0 0
  %5912 = vmatpush1.bf16.msra.mxu0 0
  %5913 = vmatprep.subr.bf16.mxu0 0
  %5914 = vmatpush1.bf16.msra.mxu0 0
  %5915 = vmatprep.subr.bf16.mxu0 0
  %5916 = vmatpush1.bf16.msra.mxu0 0
  %5917 = vmatprep.subr.bf16.mxu0 0
  %5918 = vmatpush1.bf16.msra.mxu0 0
  %5919 = vmatprep.mubr.bf16.mxu0 0
  %5920 = vmatmul.mubr.bf16.gmra.mrb[0].mxu0 %v5744
  %v5921 = vpop.f32.mrb[0].mxu0
  %v5922 = vadd.f32 %v5729, %v5921
  %v5923 = vpop.f32.mrb[0].mxu0
  %v5924 = vpop.f32.mrb[0].mxu0
  %v5925 = vadd.f32 %v5729, %v5924
  %v5926 = vpop.f32.mrb[0].mxu0
  %5927 = vmatprep.mubr.bf16.mxu0 0
  %5928 = vmatmul.mubr.bf16.gmra.mrb[0].mxu0 %v5747
  %v5929 = vpop.f32.mrb[0].mxu0
  %v5930 = vadd.f32 %v5729, %v5929
  %v5931 = vpop.f32.mrb[0].mxu0
  %v5932 = vpop.f32.mrb[0].mxu0
  %v5933 = vadd.f32 %v5729, %v5932
  %v5934 = vpop.f32.mrb[0].mxu0
  %5935 = vmatprep.mubr.bf16.mxu0 0
  %5936 = vmatmul.mubr.bf16.gmra.mrb[0].mxu0 %v5750
  %v5937 = vpop.f32.mrb[0].mxu0
  %v5938 = vadd.f32 %v5729, %v5937
  %v5939 = vpop.f32.mrb[0].mxu0
  %v5940 = vpop.f32.mrb[0].mxu0
  %v5941 = vadd.f32 %v5729, %v5940
  %v5942 = vpop.f32.mrb[0].mxu0
  %5943 = vmatprep.mubr.bf16.mxu0 0
  %5944 = vmatmul.mubr.bf16.gmra.mrb[0].mxu0 %v5753
  %v5945 = vpop.f32.mrb[0].mxu0
  %v5946 = vadd.f32 %v5729, %v5945
  %v5947 = vpop.f32.mrb[0].mxu0
  %v5948 = vpop.f32.mrb[0].mxu0
  %v5949 = vadd.f32 %v5729, %v5948
  %v5950 = vpop.f32.mrb[0].mxu0
  %5951 = vmatprep.mubr.bf16.mxu0 0
  %5952 = vmatmul.mubr.bf16.gmra.mrb[0].mxu0 %v5756
  %v5953 = vpop.f32.mrb[0].mxu0
  %v5954 = vadd.f32 %v5729, %v5953
  %v5955 = vpop.f32.mrb[0].mxu0
  %v5956 = vpop.f32.mrb[0].mxu0
  %v5957 = vadd.f32 %v5729, %v5956
  %v5958 = vpop.f32.mrb[0].mxu0
  %5959 = vmatprep.mubr.bf16.mxu0 0
  %5960 = vmatmul.mubr.bf16.gmra.mrb[0].mxu0 %v5759
  %v5961 = vpop.f32.mrb[0].mxu0
  %v5962 = vadd.f32 %v5729, %v5961
  %v5963 = vpop.f32.mrb[0].mxu0
  %v5964 = vpop.f32.mrb[0].mxu0
  %v5965 = vadd.f32 %v5729, %v5964
  %v5966 = vpop.f32.mrb[0].mxu0
  %5967 = vmatprep.mubr.bf16.mxu0 0
  %5968 = vmatmul.mubr.bf16.gmra.mrb[0].mxu0 %v5762
  %v5969 = vpop.f32.mrb[0].mxu0
  %v5970 = vadd.f32 %v5729, %v5969
  %v5971 = vpop.f32.mrb[0].mxu0
  %v5972 = vpop.f32.mrb[0].mxu0
  %v5973 = vadd.f32 %v5729, %v5972
  %v5974 = vpop.f32.mrb[0].mxu0
  %5975 = vmatprep.mubr.bf16.mxu0 0
  %5976 = vmatmul.mubr.bf16.gmra.mrb[0].mxu0 %v5765
  %v5977 = vpop.f32.mrb[0].mxu0
  %v5978 = vadd.f32 %v5729, %v5977
  %v5979 = vpop.f32.mrb[0].mxu0
  %v5980 = vpop.f32.mrb[0].mxu0
  %v5981 = vadd.f32 %v5729, %v5980
  %v5982 = vpop.f32.mrb[0].mxu0
  %5983 = vmatprep.mubr.bf16.mxu0 0
  %5984 = vmatmul.mubr.bf16.gmra.mrb[0].mxu0 %v5768
  %v5985 = vpop.f32.mrb[0].mxu0
  %v5986 = vadd.f32 %v5729, %v5985
  %v5987 = vpop.f32.mrb[0].mxu0
  %v5988 = vpop.f32.mrb[0].mxu0
  %v5989 = vadd.f32 %v5729, %v5988
  %v5990 = vpop.f32.mrb[0].mxu0
  %5991 = vmatprep.mubr.bf16.mxu0 0
  %5992 = vmatmul.mubr.bf16.gmra.mrb[0].mxu0 %v5771
  %v5993 = vpop.f32.mrb[0].mxu0
  %v5994 = vadd.f32 %v5729, %v5993
  %v5995 = vpop.f32.mrb[0].mxu0
  %v5996 = vpop.f32.mrb[0].mxu0
  %v5997 = vadd.f32 %v5729, %v5996
  %v5998 = vpop.f32.mrb[0].mxu0
  %5999 = vmatprep.mubr.bf16.mxu0 0
  %6000 = vmatmul.mubr.bf16.gmra.mrb[0].mxu0 %v5774
  %v6001 = vpop.f32.mrb[0].mxu0
  %v6002 = vadd.f32 %v5729, %v6001
  %v6003 = vpop.f32.mrb[0].mxu0
  %v6004 = vpop.f32.mrb[0].mxu0
  %v6005 = vadd.f32 %v5729, %v6004
  %v6006 = vpop.f32.mrb[0].mxu0
  %6007 = vmatprep.mubr.bf16.mxu0 0
  %6008 = vmatmul.mubr.bf16.gmra.mrb[0].mxu0 %v5777
  %v6009 = vpop.f32.mrb[0].mxu0
  %v6010 = vadd.f32 %v5729, %v6009
  %v6011 = vpop.f32.mrb[0].mxu0
  %v6012 = vpop.f32.mrb[0].mxu0
  %v6013 = vadd.f32 %v5729, %v6012
  %v6014 = vpop.f32.mrb[0].mxu0
  %6015 = vmatprep.mubr.bf16.mxu0 0
  %6016 = vmatmul.mubr.bf16.gmra.mrb[0].mxu0 %v5780
  %v6017 = vpop.f32.mrb[0].mxu0
  %v6018 = vadd.f32 %v5729, %v6017
  %v6019 = vpop.f32.mrb[0].mxu0
  %v6020 = vpop.f32.mrb[0].mxu0
  %v6021 = vadd.f32 %v5729, %v6020
  %v6022 = vpop.f32.mrb[0].mxu0
  %6023 = vmatprep.mubr.bf16.mxu0 0
  %6024 = vmatmul.mubr.bf16.gmra.mrb[0].mxu0 %v5783
  %v6025 = vpop.f32.mrb[0].mxu0
  %v6026 = vadd.f32 %v5729, %v6025
  %v6027 = vpop.f32.mrb[0].mxu0
  %v6028 = vpop.f32.mrb[0].mxu0
  %v6029 = vadd.f32 %v5729, %v6028
  %v6030 = vpop.f32.mrb[0].mxu0
  %6031 = vmatprep.mubr.bf16.mxu0 0
  %6032 = vmatmul.mubr.bf16.gmra.mrb[0].mxu0 %v5786
  %v6033 = vpop.f32.mrb[0].mxu0
  %v6034 = vadd.f32 %v5729, %v6033
  %v6035 = vpop.f32.mrb[0].mxu0
  %v6036 = vpop.f32.mrb[0].mxu0
  %v6037 = vadd.f32 %v5729, %v6036
  %v6038 = vpop.f32.mrb[0].mxu0
  %6039 = vmatprep.mubr.bf16.mxu0 0
  %6040 = vmatmul.mubr.bf16.gmra.mrb[0].mxu0 %v5789
  %v6041 = vpop.f32.mrb[0].mxu0
  %v6042 = vadd.f32 %v5729, %v6041
  %v6043 = vpop.f32.mrb[0].mxu0
  %v6044 = vpop.f32.mrb[0].mxu0
  %v6045 = vadd.f32 %v5729, %v6044
  %v6046 = vpop.f32.mrb[0].mxu0
  %6047 = vmatprep.mubr.bf16.mxu0 0
  %6048 = vmatmul.mubr.bf16.gmra.mrb[0].mxu0 %v5792
  %v6049 = vpop.f32.mrb[0].mxu0
  %v6050 = vadd.f32 %v5729, %v6049
  %v6051 = vpop.f32.mrb[0].mxu0
  %v6052 = vpop.f32.mrb[0].mxu0
  %v6053 = vadd.f32 %v5729, %v6052
  %v6054 = vpop.f32.mrb[0].mxu0
  %6055 = vmatprep.mubr.bf16.mxu0 0
  %6056 = vmatmul.mubr.bf16.gmra.mrb[0].mxu0 %v5795
  %v6057 = vpop.f32.mrb[0].mxu0
  %v6058 = vadd.f32 %v5729, %v6057
  %v6059 = vpop.f32.mrb[0].mxu0
  %v6060 = vpop.f32.mrb[0].mxu0
  %v6061 = vadd.f32 %v5729, %v6060
  %v6062 = vpop.f32.mrb[0].mxu0
  %6063 = vmatprep.mubr.bf16.mxu0 0
  %6064 = vmatmul.mubr.bf16.gmra.mrb[0].mxu0 %v5798
  %v6065 = vpop.f32.mrb[0].mxu0
  %v6066 = vadd.f32 %v5729, %v6065
  %v6067 = vpop.f32.mrb[0].mxu0
  %v6068 = vpop.f32.mrb[0].mxu0
  %v6069 = vadd.f32 %v5729, %v6068
  %v6070 = vpop.f32.mrb[0].mxu0
  %6071 = vmatprep.mubr.bf16.mxu0 0
  %6072 = vmatmul.mubr.bf16.gmra.mrb[0].mxu0 %v5801
  %v6073 = vpop.f32.mrb[0].mxu0
  %v6074 = vadd.f32 %v5729, %v6073
  %v6075 = vpop.f32.mrb[0].mxu0
  %v6076 = vpop.f32.mrb[0].mxu0
  %v6077 = vadd.f32 %v5729, %v6076
  %v6078 = vpop.f32.mrb[0].mxu0
  %6079 = vmatprep.mubr.bf16.mxu0 0
  %6080 = vmatmul.mubr.bf16.gmra.mrb[0].mxu0 %v5804
  %v6081 = vpop.f32.mrb[0].mxu0
  %v6082 = vadd.f32 %v5729, %v6081
  %v6083 = vpop.f32.mrb[0].mxu0
  %v6084 = vpop.f32.mrb[0].mxu0
  %v6085 = vadd.f32 %v5729, %v6084
  %v6086 = vpop.f32.mrb[0].mxu0
  %6087 = vmatprep.mubr.bf16.mxu0 0
  %6088 = vmatmul.mubr.bf16.gmra.mrb[0].mxu0 %v5807
  %v6089 = vpop.f32.mrb[0].mxu0
  %v6090 = vadd.f32 %v5729, %v6089
  %v6091 = vpop.f32.mrb[0].mxu0
  %v6092 = vpop.f32.mrb[0].mxu0
  %v6093 = vadd.f32 %v5729, %v6092
  %v6094 = vpop.f32.mrb[0].mxu0
  %6095 = vmatprep.mubr.bf16.mxu0 0
  %6096 = vmatmul.mubr.bf16.gmra.mrb[0].mxu0 %v5810
  %v6097 = vpop.f32.mrb[0].mxu0
  %v6098 = vadd.f32 %v5729, %v6097
  %v6099 = vpop.f32.mrb[0].mxu0
  %v6100 = vpop.f32.mrb[0].mxu0
  %v6101 = vadd.f32 %v5729, %v6100
  %v6102 = vpop.f32.mrb[0].mxu0
  %6103 = vmatprep.mubr.bf16.mxu0 0
  %6104 = vmatmul.mubr.bf16.gmra.mrb[0].mxu0 %v5813
  %v6105 = vpop.f32.mrb[0].mxu0
  %v6106 = vadd.f32 %v5729, %v6105
  %v6107 = vpop.f32.mrb[0].mxu0
  %v6108 = vpop.f32.mrb[0].mxu0
  %v6109 = vadd.f32 %v5729, %v6108
  %v6110 = vpop.f32.mrb[0].mxu0
  %6111 = vmatprep.mubr.bf16.mxu0 0
  %6112 = vmatmul.mubr.bf16.gmra.mrb[0].mxu0 %v5816
  %v6113 = vpop.f32.mrb[0].mxu0
  %v6114 = vadd.f32 %v5729, %v6113
  %v6115 = vpop.f32.mrb[0].mxu0
  %v6116 = vpop.f32.mrb[0].mxu0
  %v6117 = vadd.f32 %v5729, %v6116
  %v6118 = vpop.f32.mrb[0].mxu0
  %6119 = vmatprep.mubr.bf16.mxu0 0
  %6120 = vmatmul.mubr.bf16.gmra.mrb[0].mxu0 %v5819
  %v6121 = vpop.f32.mrb[0].mxu0
  %v6122 = vadd.f32 %v5729, %v6121
  %v6123 = vpop.f32.mrb[0].mxu0
  %v6124 = vpop.f32.mrb[0].mxu0
  %v6125 = vadd.f32 %v5729, %v6124
  %v6126 = vpop.f32.mrb[0].mxu0
  %6127 = vmatprep.mubr.bf16.mxu0 0
  %6128 = vmatmul.mubr.bf16.gmra.mrb[0].mxu0 %v5822
  %v6129 = vpop.f32.mrb[0].mxu0
  %v6130 = vadd.f32 %v5729, %v6129
  %v6131 = vpop.f32.mrb[0].mxu0
  %v6132 = vpop.f32.mrb[0].mxu0
  %v6133 = vadd.f32 %v5729, %v6132
  %v6134 = vpop.f32.mrb[0].mxu0
  %6135 = vmatprep.mubr.bf16.mxu0 0
  %6136 = vmatmul.mubr.bf16.gmra.mrb[0].mxu0 %v5825
  %v6137 = vpop.f32.mrb[0].mxu0
  %v6138 = vadd.f32 %v5729, %v6137
  %v6139 = vpop.f32.mrb[0].mxu0
  %v6140 = vpop.f32.mrb[0].mxu0
  %v6141 = vadd.f32 %v5729, %v6140
  %v6142 = vpop.f32.mrb[0].mxu0
  %6143 = vmatprep.mubr.bf16.mxu0 0
  %6144 = vmatmul.mubr.bf16.gmra.mrb[0].mxu0 %v5828
  %v6145 = vpop.f32.mrb[0].mxu0
  %v6146 = vadd.f32 %v5729, %v6145
  %v6147 = vpop.f32.mrb[0].mxu0
  %v6148 = vpop.f32.mrb[0].mxu0
  %v6149 = vadd.f32 %v5729, %v6148
  %v6150 = vpop.f32.mrb[0].mxu0
  %6151 = vmatprep.mubr.bf16.mxu0 0
  %6152 = vmatmul.mubr.bf16.gmra.mrb[0].mxu0 %v5831
  %v6153 = vpop.f32.mrb[0].mxu0
  %v6154 = vadd.f32 %v5729, %v6153
  %v6155 = vpop.f32.mrb[0].mxu0
  %v6156 = vpop.f32.mrb[0].mxu0
  %v6157 = vadd.f32 %v5729, %v6156
  %v6158 = vpop.f32.mrb[0].mxu0
  %6159 = vmatprep.mubr.bf16.mxu0 0
  %6160 = vmatmul.mubr.bf16.gmra.mrb[0].mxu0 %v5834
  %v6161 = vpop.f32.mrb[0].mxu0
  %v6162 = vadd.f32 %v5729, %v6161
  %v6163 = vpop.f32.mrb[0].mxu0
  %v6164 = vpop.f32.mrb[0].mxu0
  %v6165 = vadd.f32 %v5729, %v6164
  %v6166 = vpop.f32.mrb[0].mxu0
  %6167 = vmatprep.mubr.bf16.mxu0 0
  %6168 = vmatmul.mubr.bf16.gmra.mrb[0].mxu0 %v5837
  %v6169 = vpop.f32.mrb[0].mxu0
  %v6170 = vadd.f32 %v5729, %v6169
  %v6171 = vpop.f32.mrb[0].mxu0
  %v6172 = vpop.f32.mrb[0].mxu0
  %v6173 = vadd.f32 %v5729, %v6172
  %v6174 = vpop.f32.mrb[0].mxu0
  %6175 = vmatprep.mubr.bf16.mxu0 0
  %6176 = vmatmul.mubr.bf16.gmra.mrb[0].mxu0 %v5840
  %v6177 = vpop.f32.mrb[0].mxu0
  %v6178 = vadd.f32 %v5729, %v6177
  %v6179 = vpop.f32.mrb[0].mxu0
  %v6180 = vpop.f32.mrb[0].mxu0
  %v6181 = vadd.f32 %v5729, %v6180
  %v6182 = vpop.f32.mrb[0].mxu0
  %6183 = vmatprep.mubr.bf16.mxu0 0
  %6184 = vmatmul.mubr.bf16.gmra.mrb[0].mxu0 %v5843
  %v6185 = vpop.f32.mrb[0].mxu0
  %v6186 = vadd.f32 %v5729, %v6185
  %v6187 = vpop.f32.mrb[0].mxu0
  %v6188 = vpop.f32.mrb[0].mxu0
  %v6189 = vadd.f32 %v5729, %v6188
  %v6190 = vpop.f32.mrb[0].mxu0
  %6191 = vmatprep.mubr.bf16.mxu0 0
  %6192 = vmatmul.mubr.bf16.gmra.mrb[0].mxu0 %v5846
  %v6193 = vpop.f32.mrb[0].mxu0
  %v6194 = vadd.f32 %v5729, %v6193
  %v6195 = vpop.f32.mrb[0].mxu0
  %v6196 = vpop.f32.mrb[0].mxu0
  %v6197 = vadd.f32 %v5729, %v6196
  %v6198 = vpop.f32.mrb[0].mxu0
  %6199 = vmatprep.mubr.bf16.mxu0 0
  %6200 = vmatmul.mubr.bf16.gmra.mrb[0].mxu0 %v5849
  %v6201 = vpop.f32.mrb[0].mxu0
  %v6202 = vadd.f32 %v5729, %v6201
  %v6203 = vpop.f32.mrb[0].mxu0
  %v6204 = vpop.f32.mrb[0].mxu0
  %v6205 = vadd.f32 %v5729, %v6204
  %v6206 = vpop.f32.mrb[0].mxu0
  %6207 = vmatprep.mubr.bf16.mxu0 0
  %6208 = vmatmul.mubr.bf16.gmra.mrb[0].mxu0 %v5852
  %v6209 = vpop.f32.mrb[0].mxu0
  %v6210 = vadd.f32 %v5729, %v6209
  %v6211 = vpop.f32.mrb[0].mxu0
  %v6212 = vpop.f32.mrb[0].mxu0
  %v6213 = vadd.f32 %v5729, %v6212
  %v6214 = vpop.f32.mrb[0].mxu0
  %6215 = vmatprep.mubr.bf16.mxu0 0
  %6216 = vmatmul.mubr.bf16.gmra.mrb[0].mxu0 %v5855
  %v6217 = vpop.f32.mrb[0].mxu0
  %v6218 = vadd.f32 %v5729, %v6217
  %v6219 = vpop.f32.mrb[0].mxu0
  %v6220 = vpop.f32.mrb[0].mxu0
  %v6221 = vadd.f32 %v5729, %v6220
  %v6222 = vpop.f32.mrb[0].mxu0
  %6223 = vmatprep.mubr.bf16.mxu0 0
  %6224 = vmatmul.mubr.bf16.gmra.mrb[0].mxu0 %v5858
  %v6225 = vpop.f32.mrb[0].mxu0
  %v6226 = vadd.f32 %v5729, %v6225
  %v6227 = vpop.f32.mrb[0].mxu0
  %v6228 = vpop.f32.mrb[0].mxu0
  %v6229 = vadd.f32 %v5729, %v6228
  %v6230 = vpop.f32.mrb[0].mxu0
  %6231 = vmatprep.mubr.bf16.mxu0 0
  %6232 = vmatmul.mubr.bf16.gmra.mrb[0].mxu0 %v5861
  %v6233 = vpop.f32.mrb[0].mxu0
  %v6234 = vadd.f32 %v5729, %v6233
  %v6235 = vpop.f32.mrb[0].mxu0
  %v6236 = vpop.f32.mrb[0].mxu0
  %v6237 = vadd.f32 %v5729, %v6236
  %v6238 = vpop.f32.mrb[0].mxu0
  %6239 = vmatprep.mubr.bf16.mxu0 0
  %6240 = vmatmul.mubr.bf16.gmra.mrb[0].mxu0 %v5864
  %v6241 = vpop.f32.mrb[0].mxu0
  %v6242 = vadd.f32 %v5729, %v6241
  %v6243 = vpop.f32.mrb[0].mxu0
  %v6244 = vpop.f32.mrb[0].mxu0
  %v6245 = vadd.f32 %v5729, %v6244
  %v6246 = vpop.f32.mrb[0].mxu0
  %6247 = vmatprep.mubr.bf16.mxu0 0
  %6248 = vmatmul.mubr.bf16.gmra.mrb[0].mxu0 %v5867
  %v6249 = vpop.f32.mrb[0].mxu0
  %v6250 = vadd.f32 %v5729, %v6249
  %v6251 = vpop.f32.mrb[0].mxu0
  %v6252 = vpop.f32.mrb[0].mxu0
  %v6253 = vadd.f32 %v5729, %v6252
  %v6254 = vpop.f32.mrb[0].mxu0
  %6255 = vmatprep.mubr.bf16.mxu0 0
  %6256 = vmatmul.mubr.bf16.gmra.mrb[0].mxu0 %v5870
  %v6257 = vpop.f32.mrb[0].mxu0
  %v6258 = vadd.f32 %v5729, %v6257
  %v6259 = vpop.f32.mrb[0].mxu0
  %v6260 = vpop.f32.mrb[0].mxu0
  %v6261 = vadd.f32 %v5729, %v6260
  %v6262 = vpop.f32.mrb[0].mxu0
  %6263 = vmatprep.mubr.bf16.mxu0 0
  %6264 = vmatmul.mubr.bf16.gmra.mrb[0].mxu0 %v5873
  %v6265 = vpop.f32.mrb[0].mxu0
  %v6266 = vadd.f32 %v5729, %v6265
  %v6267 = vpop.f32.mrb[0].mxu0
  %v6268 = vpop.f32.mrb[0].mxu0
  %v6269 = vadd.f32 %v5729, %v6268
  %v6270 = vpop.f32.mrb[0].mxu0
  %6271 = vmatprep.mubr.bf16.mxu0 0
  %6272 = vmatmul.mubr.bf16.gmra.mrb[0].mxu0 %v5876
  %v6273 = vpop.f32.mrb[0].mxu0
  %v6274 = vadd.f32 %v5729, %v6273
  %v6275 = vpop.f32.mrb[0].mxu0
  %v6276 = vpop.f32.mrb[0].mxu0
  %v6277 = vadd.f32 %v5729, %v6276
  %v6278 = vpop.f32.mrb[0].mxu0
  %6279 = vmatprep.mubr.bf16.mxu0 0
  %6280 = vmatmul.mubr.bf16.gmra.mrb[0].mxu0 %v5879
  %v6281 = vpop.f32.mrb[0].mxu0
  %v6282 = vadd.f32 %v5729, %v6281
  %v6283 = vpop.f32.mrb[0].mxu0
  %v6284 = vpop.f32.mrb[0].mxu0
  %v6285 = vadd.f32 %v5729, %v6284
  %v6286 = vpop.f32.mrb[0].mxu0
  %6287 = vmatprep.mubr.bf16.mxu0 0
  %6288 = vmatmul.mubr.bf16.gmra.mrb[0].mxu0 %v5882
  %v6289 = vpop.f32.mrb[0].mxu0
  %v6290 = vadd.f32 %v5729, %v6289
  %v6291 = vpop.f32.mrb[0].mxu0
  %v6292 = vpop.f32.mrb[0].mxu0
  %v6293 = vadd.f32 %v5729, %v6292
  %v6294 = vpop.f32.mrb[0].mxu0
  %6295 = vmatprep.mubr.bf16.mxu0 0
  %6296 = vmatmul.mubr.bf16.gmra.mrb[0].mxu0 %v5885
  %v6297 = vpop.f32.mrb[0].mxu0
  %v6298 = vadd.f32 %v5729, %v6297
  %v6299 = vpop.f32.mrb[0].mxu0
  %v6300 = vpop.f32.mrb[0].mxu0
  %v6301 = vadd.f32 %v5729, %v6300
  %v6302 = vpop.f32.mrb[0].mxu0
  %6303 = vdwg.mxu0
  %6400 = vrot.lane.b32.xlu0 %v5922, 64
  %v6401 = vpop.permute.xlu0 %6400
  %6402 = vrot.lane.b32.xlu0 %v5925, 64
  %v6403 = vpop.permute.xlu0 %6402
  %6404 = vrot.lane.b32.xlu0 %v5930, 64
  %v6405 = vpop.permute.xlu0 %6404
  %6406 = vrot.lane.b32.xlu0 %v5933, 64
  %v6407 = vpop.permute.xlu0 %6406
  %6408 = vrot.lane.b32.xlu0 %v5938, 64
  %v6409 = vpop.permute.xlu0 %6408
  %6410 = vrot.lane.b32.xlu0 %v5941, 64
  %v6411 = vpop.permute.xlu0 %6410
  %6412 = vrot.lane.b32.xlu0 %v5946, 64
  %v6413 = vpop.permute.xlu0 %6412
  %6414 = vrot.lane.b32.xlu0 %v5949, 64
  %v6415 = vpop.permute.xlu0 %6414
  %6416 = vrot.lane.b32.xlu0 %v5954, 64
  %v6417 = vpop.permute.xlu0 %6416
  %6418 = vrot.lane.b32.xlu0 %v5957, 64
  %v6419 = vpop.permute.xlu0 %6418
  %6420 = vrot.lane.b32.xlu0 %v5962, 64
  %v6421 = vpop.permute.xlu0 %6420
  %6422 = vrot.lane.b32.xlu0 %v5965, 64
  %v6423 = vpop.permute.xlu0 %6422
  %6424 = vrot.lane.b32.xlu0 %v5970, 64
  %v6425 = vpop.permute.xlu0 %6424
  %6426 = vrot.lane.b32.xlu0 %v5973, 64
  %v6427 = vpop.permute.xlu0 %6426
  %6428 = vrot.lane.b32.xlu0 %v5978, 64
  %v6429 = vpop.permute.xlu0 %6428
  %6430 = vrot.lane.b32.xlu0 %v5981, 64
  %v6431 = vpop.permute.xlu0 %6430
  %6432 = vrot.lane.b32.xlu0 %v5986, 64
  %v6433 = vpop.permute.xlu0 %6432
  %6434 = vrot.lane.b32.xlu0 %v5989, 64
  %v6435 = vpop.permute.xlu0 %6434
  %6436 = vrot.lane.b32.xlu0 %v5994, 64
  %v6437 = vpop.permute.xlu0 %6436
  %6438 = vrot.lane.b32.xlu0 %v5997, 64
  %v6439 = vpop.permute.xlu0 %6438
  %6440 = vrot.lane.b32.xlu0 %v6002, 64
  %v6441 = vpop.permute.xlu0 %6440
  %6442 = vrot.lane.b32.xlu0 %v6005, 64
  %v6443 = vpop.permute.xlu0 %6442
  %6444 = vrot.lane.b32.xlu0 %v6010, 64
  %v6445 = vpop.permute.xlu0 %6444
  %6446 = vrot.lane.b32.xlu0 %v6013, 64
  %v6447 = vpop.permute.xlu0 %6446
  %6448 = vrot.lane.b32.xlu0 %v6018, 64
  %v6449 = vpop.permute.xlu0 %6448
  %6450 = vrot.lane.b32.xlu0 %v6021, 64
  %v6451 = vpop.permute.xlu0 %6450
  %6452 = vrot.lane.b32.xlu0 %v6026, 64
  %v6453 = vpop.permute.xlu0 %6452
  %6454 = vrot.lane.b32.xlu0 %v6029, 64
  %v6455 = vpop.permute.xlu0 %6454
  %6456 = vrot.lane.b32.xlu0 %v6034, 64
  %v6457 = vpop.permute.xlu0 %6456
  %6458 = vrot.lane.b32.xlu0 %v6037, 64
  %v6459 = vpop.permute.xlu0 %6458
  %6460 = vrot.lane.b32.xlu0 %v6042, 64
  %v6461 = vpop.permute.xlu0 %6460
  %6462 = vrot.lane.b32.xlu0 %v6045, 64
  %v6463 = vpop.permute.xlu0 %6462
  %6464 = vrot.lane.b32.xlu0 %v6050, 64
  %v6465 = vpop.permute.xlu0 %6464
  %6466 = vrot.lane.b32.xlu0 %v6053, 64
  %v6467 = vpop.permute.xlu0 %6466
  %6468 = vrot.lane.b32.xlu0 %v6058, 64
  %v6469 = vpop.permute.xlu0 %6468
  %6470 = vrot.lane.b32.xlu0 %v6061, 64
  %v6471 = vpop.permute.xlu0 %6470
  %6472 = vrot.lane.b32.xlu0 %v6066, 64
  %v6473 = vpop.permute.xlu0 %6472
  %6474 = vrot.lane.b32.xlu0 %v6069, 64
  %v6475 = vpop.permute.xlu0 %6474
  %6476 = vrot.lane.b32.xlu0 %v6074, 64
  %v6477 = vpop.permute.xlu0 %6476
  %6478 = vrot.lane.b32.xlu0 %v6077, 64
  %v6479 = vpop.permute.xlu0 %6478
  %6480 = vrot.lane.b32.xlu0 %v6082, 64
  %v6481 = vpop.permute.xlu0 %6480
  %6482 = vrot.lane.b32.xlu0 %v6085, 64
  %v6483 = vpop.permute.xlu0 %6482
  %6484 = vrot.lane.b32.xlu0 %v6090, 64
  %v6485 = vpop.permute.xlu0 %6484
  %6486 = vrot.lane.b32.xlu0 %v6093, 64
  %v6487 = vpop.permute.xlu0 %6486
  %6488 = vrot.lane.b32.xlu0 %v6098, 64
  %v6489 = vpop.permute.xlu0 %6488
  %6490 = vrot.lane.b32.xlu0 %v6101, 64
  %v6491 = vpop.permute.xlu0 %6490
  %6492 = vrot.lane.b32.xlu0 %v6106, 64
  %v6493 = vpop.permute.xlu0 %6492
  %6494 = vrot.lane.b32.xlu0 %v6109, 64
  %v6495 = vpop.permute.xlu0 %6494
  %6496 = vrot.lane.b32.xlu0 %v6114, 64
  %v6497 = vpop.permute.xlu0 %6496
  %6498 = vrot.lane.b32.xlu0 %v6117, 64
  %v6499 = vpop.permute.xlu0 %6498
  %6500 = vrot.lane.b32.xlu0 %v6122, 64
  %v6501 = vpop.permute.xlu0 %6500
  %6502 = vrot.lane.b32.xlu0 %v6125, 64
  %v6503 = vpop.permute.xlu0 %6502
  %6504 = vrot.lane.b32.xlu0 %v6130, 64
  %v6505 = vpop.permute.xlu0 %6504
  %6506 = vrot.lane.b32.xlu0 %v6133, 64
  %v6507 = vpop.permute.xlu0 %6506
  %6508 = vrot.lane.b32.xlu0 %v6138, 64
  %v6509 = vpop.permute.xlu0 %6508
  %6510 = vrot.lane.b32.xlu0 %v6141, 64
  %v6511 = vpop.permute.xlu0 %6510
  %6512 = vrot.lane.b32.xlu0 %v6146, 64
  %v6513 = vpop.permute.xlu0 %6512
  %6514 = vrot.lane.b32.xlu0 %v6149, 64
  %v6515 = vpop.permute.xlu0 %6514
  %6516 = vrot.lane.b32.xlu0 %v6154, 64
  %v6517 = vpop.permute.xlu0 %6516
  %6518 = vrot.lane.b32.xlu0 %v6157, 64
  %v6519 = vpop.permute.xlu0 %6518
  %6520 = vrot.lane.b32.xlu0 %v6162, 64
  %v6521 = vpop.permute.xlu0 %6520
  %6522 = vrot.lane.b32.xlu0 %v6165, 64
  %v6523 = vpop.permute.xlu0 %6522
  %6524 = vrot.lane.b32.xlu0 %v6170, 64
  %v6525 = vpop.permute.xlu0 %6524
  %6526 = vrot.lane.b32.xlu0 %v6173, 64
  %v6527 = vpop.permute.xlu0 %6526
  %6528 = vrot.lane.b32.xlu0 %v6178, 64
  %v6529 = vpop.permute.xlu0 %6528
  %6530 = vrot.lane.b32.xlu0 %v6181, 64
  %v6531 = vpop.permute.xlu0 %6530
  %6532 = vrot.lane.b32.xlu0 %v6186, 64
  %v6533 = vpop.permute.xlu0 %6532
  %6534 = vrot.lane.b32.xlu0 %v6189, 64
  %v6535 = vpop.permute.xlu0 %6534
  %6536 = vrot.lane.b32.xlu0 %v6194, 64
  %v6537 = vpop.permute.xlu0 %6536
  %6538 = vrot.lane.b32.xlu0 %v6197, 64
  %v6539 = vpop.permute.xlu0 %6538
  %6540 = vrot.lane.b32.xlu0 %v6202, 64
  %v6541 = vpop.permute.xlu0 %6540
  %6542 = vrot.lane.b32.xlu0 %v6205, 64
  %v6543 = vpop.permute.xlu0 %6542
  %6544 = vrot.lane.b32.xlu0 %v6210, 64
  %v6545 = vpop.permute.xlu0 %6544
  %6546 = vrot.lane.b32.xlu0 %v6213, 64
  %v6547 = vpop.permute.xlu0 %6546
  %6548 = vrot.lane.b32.xlu0 %v6218, 64
  %v6549 = vpop.permute.xlu0 %6548
  %6550 = vrot.lane.b32.xlu0 %v6221, 64
  %v6551 = vpop.permute.xlu0 %6550
  %6552 = vrot.lane.b32.xlu0 %v6226, 64
  %v6553 = vpop.permute.xlu0 %6552
  %6554 = vrot.lane.b32.xlu0 %v6229, 64
  %v6555 = vpop.permute.xlu0 %6554
  %6556 = vrot.lane.b32.xlu0 %v6234, 64
  %v6557 = vpop.permute.xlu0 %6556
  %6558 = vrot.lane.b32.xlu0 %v6237, 64
  %v6559 = vpop.permute.xlu0 %6558
  %6560 = vrot.lane.b32.xlu0 %v6242, 64
  %v6561 = vpop.permute.xlu0 %6560
  %6562 = vrot.lane.b32.xlu0 %v6245, 64
  %v6563 = vpop.permute.xlu0 %6562
  %6564 = vrot.lane.b32.xlu0 %v6250, 64
  %v6565 = vpop.permute.xlu0 %6564
  %6566 = vrot.lane.b32.xlu0 %v6253, 64
  %v6567 = vpop.permute.xlu0 %6566
  %6568 = vrot.lane.b32.xlu0 %v6258, 64
  %v6569 = vpop.permute.xlu0 %6568
  %6570 = vrot.lane.b32.xlu0 %v6261, 64
  %v6571 = vpop.permute.xlu0 %6570
  %6572 = vrot.lane.b32.xlu0 %v6266, 64
  %v6573 = vpop.permute.xlu0 %6572
  %6574 = vrot.lane.b32.xlu0 %v6269, 64
  %v6575 = vpop.permute.xlu0 %6574
  %6576 = vrot.lane.b32.xlu0 %v6274, 64
  %v6577 = vpop.permute.xlu0 %6576
  %6578 = vrot.lane.b32.xlu0 %v6277, 64
  %v6579 = vpop.permute.xlu0 %6578
  %6580 = vrot.lane.b32.xlu0 %v6282, 64
  %v6581 = vpop.permute.xlu0 %6580
  %6582 = vrot.lane.b32.xlu0 %v6285, 64
  %v6583 = vpop.permute.xlu0 %6582
  %6584 = vrot.lane.b32.xlu0 %v6290, 64
  %v6585 = vpop.permute.xlu0 %6584
  %6586 = vrot.lane.b32.xlu0 %v6293, 64
  %v6587 = vpop.permute.xlu0 %6586
  %6588 = vrot.lane.b32.xlu0 %v6298, 64
  %v6589 = vpop.permute.xlu0 %6588
  %6590 = vrot.lane.b32.xlu0 %v6301, 64
  %v6591 = vpop.permute.xlu0 %6590
  %v6688 = vsel %vm3541, %v3374, %v5194
  %v6689 = vsel %vm3541, %v3375, %v5197
  %v6690 = vsel %vm3541, %v3376, %v5202
  %v6691 = vsel %vm3541, %v3377, %v5205
  %v6692 = vsel %vm3541, %v3378, %v5210
  %v6693 = vsel %vm3541, %v3379, %v5213
  %v6694 = vsel %vm3541, %v3380, %v5218
  %v6695 = vsel %vm3541, %v3381, %v5221
  %v6696 = vsel %vm3541, %v3382, %v5226
  %v6697 = vsel %vm3541, %v3383, %v5229
  %v6698 = vsel %vm3541, %v3384, %v5234
  %v6699 = vsel %vm3541, %v3385, %v5237
  %v6700 = vsel %vm3541, %v3386, %v5242
  %v6701 = vsel %vm3541, %v3387, %v5245
  %v6702 = vsel %vm3541, %v3388, %v5250
  %v6703 = vsel %vm3541, %v3389, %v5253
  %v6704 = vsel %vm3541, %v3390, %v5258
  %v6705 = vsel %vm3541, %v3391, %v5261
  %v6706 = vsel %vm3541, %v3392, %v5266
  %v6707 = vsel %vm3541, %v3393, %v5269
  %v6708 = vsel %vm3541, %v3394, %v5274
  %v6709 = vsel %vm3541, %v3395, %v5277
  %v6710 = vsel %vm3541, %v3396, %v5282
  %v6711 = vsel %vm3541, %v3397, %v5285
  %v6712 = vsel %vm3541, %v3398, %v5290
  %v6713 = vsel %vm3541, %v3399, %v5293
  %v6714 = vsel %vm3541, %v3400, %v5298
  %v6715 = vsel %vm3541, %v3401, %v5301
  %v6716 = vsel %vm3541, %v3402, %v5306
  %v6717 = vsel %vm3541, %v3403, %v5309
  %v6718 = vsel %vm3541, %v3404, %v5314
  %v6719 = vsel %vm3541, %v3405, %v5317
  %v6720 = vsel %vm3541, %v3406, %v5322
  %v6721 = vsel %vm3541, %v3407, %v5325
  %v6722 = vsel %vm3541, %v3408, %v5330
  %v6723 = vsel %vm3541, %v3409, %v5333
  %v6724 = vsel %vm3541, %v3410, %v5338
  %v6725 = vsel %vm3541, %v3411, %v5341
  %v6726 = vsel %vm3541, %v3412, %v5346
  %v6727 = vsel %vm3541, %v3413, %v5349
  %v6728 = vsel %vm3541, %v3414, %v5354
  %v6729 = vsel %vm3541, %v3415, %v5357
  %v6730 = vsel %vm3541, %v3416, %v5362
  %v6731 = vsel %vm3541, %v3417, %v5365
  %v6732 = vsel %vm3541, %v3418, %v5370
  %v6733 = vsel %vm3541, %v3419, %v5373
  %v6734 = vsel %vm3541, %v3420, %v5378
  %v6735 = vsel %vm3541, %v3421, %v5381
  %v6736 = vsel %vm3541, %v3422, %v5386
  %v6737 = vsel %vm3541, %v3423, %v5389
  %v6738 = vsel %vm3541, %v3424, %v5394
  %v6739 = vsel %vm3541, %v3425, %v5397
  %v6740 = vsel %vm3541, %v3426, %v5402
  %v6741 = vsel %vm3541, %v3427, %v5405
  %v6742 = vsel %vm3541, %v3428, %v5410
  %v6743 = vsel %vm3541, %v3429, %v5413
  %v6744 = vsel %vm3541, %v3430, %v5418
  %v6745 = vsel %vm3541, %v3431, %v5421
  %v6746 = vsel %vm3541, %v3432, %v5426
  %v6747 = vsel %vm3541, %v3433, %v5429
  %v6748 = vsel %vm3541, %v3434, %v5434
  %v6749 = vsel %vm3541, %v3435, %v5437
  %v6750 = vsel %vm3541, %v3436, %v5442
  %v6751 = vsel %vm3541, %v3437, %v5445
  %v6752 = vsel %vm3541, %v3438, %v5450
  %v6753 = vsel %vm3541, %v3439, %v5453
  %v6754 = vsel %vm3541, %v3440, %v5458
  %v6755 = vsel %vm3541, %v3441, %v5461
  %v6756 = vsel %vm3541, %v3442, %v5466
  %v6757 = vsel %vm3541, %v3443, %v5469
  %v6758 = vsel %vm3541, %v3444, %v5474
  %v6759 = vsel %vm3541, %v3445, %v5477
  %v6760 = vsel %vm3541, %v3446, %v5482
  %v6761 = vsel %vm3541, %v3447, %v5485
  %v6762 = vsel %vm3541, %v3448, %v5490
  %v6763 = vsel %vm3541, %v3449, %v5493
  %v6764 = vsel %vm3541, %v3450, %v5498
  %v6765 = vsel %vm3541, %v3451, %v5501
  %v6766 = vsel %vm3541, %v3452, %v5506
  %v6767 = vsel %vm3541, %v3453, %v5509
  %v6768 = vsel %vm3541, %v3454, %v5514
  %v6769 = vsel %vm3541, %v3455, %v5517
  %v6770 = vsel %vm3541, %v3456, %v5522
  %v6771 = vsel %vm3541, %v3457, %v5525
  %v6772 = vsel %vm3541, %v3458, %v5530
  %v6773 = vsel %vm3541, %v3459, %v5533
  %v6774 = vsel %vm3541, %v3460, %v5538
  %v6775 = vsel %vm3541, %v3461, %v5541
  %v6776 = vsel %vm3541, %v3462, %v5546
  %v6777 = vsel %vm3541, %v3463, %v5549
  %v6778 = vsel %vm3541, %v3464, %v5554
  %v6779 = vsel %vm3541, %v3465, %v5557
  %v6780 = vsel %vm3541, %v3466, %v5562
  %v6781 = vsel %vm3541, %v3467, %v5565
  %v6782 = vsel %vm3541, %v3468, %v5570
  %v6783 = vsel %vm3541, %v3469, %v5573
  %v6784 = vsel %vm5014, %v6688, %v6401
  %v6785 = vsel %vm5014, %v6689, %v6403
  %v6786 = vsel %vm5014, %v6690, %v6405
  %v6787 = vsel %vm5014, %v6691, %v6407
  %v6788 = vsel %vm5014, %v6692, %v6409
  %v6789 = vsel %vm5014, %v6693, %v6411
  %v6790 = vsel %vm5014, %v6694, %v6413
  %v6791 = vsel %vm5014, %v6695, %v6415
  %v6792 = vsel %vm5014, %v6696, %v6417
  %v6793 = vsel %vm5014, %v6697, %v6419
  %v6794 = vsel %vm5014, %v6698, %v6421
  %v6795 = vsel %vm5014, %v6699, %v6423
  %v6796 = vsel %vm5014, %v6700, %v6425
  %v6797 = vsel %vm5014, %v6701, %v6427
  %v6798 = vsel %vm5014, %v6702, %v6429
  %v6799 = vsel %vm5014, %v6703, %v6431
  %v6800 = vsel %vm5014, %v6704, %v6433
  %v6801 = vsel %vm5014, %v6705, %v6435
  %v6802 = vsel %vm5014, %v6706, %v6437
  %v6803 = vsel %vm5014, %v6707, %v6439
  %v6804 = vsel %vm5014, %v6708, %v6441
  %v6805 = vsel %vm5014, %v6709, %v6443
  %v6806 = vsel %vm5014, %v6710, %v6445
  %v6807 = vsel %vm5014, %v6711, %v6447
  %v6808 = vsel %vm5014, %v6712, %v6449
  %v6809 = vsel %vm5014, %v6713, %v6451
  %v6810 = vsel %vm5014, %v6714, %v6453
  %v6811 = vsel %vm5014, %v6715, %v6455
  %v6812 = vsel %vm5014, %v6716, %v6457
  %v6813 = vsel %vm5014, %v6717, %v6459
  %v6814 = vsel %vm5014, %v6718, %v6461
  %v6815 = vsel %vm5014, %v6719, %v6463
  %v6816 = vsel %vm5014, %v6720, %v6465
  %v6817 = vsel %vm5014, %v6721, %v6467
  %v6818 = vsel %vm5014, %v6722, %v6469
  %v6819 = vsel %vm5014, %v6723, %v6471
  %v6820 = vsel %vm5014, %v6724, %v6473
  %v6821 = vsel %vm5014, %v6725, %v6475
  %v6822 = vsel %vm5014, %v6726, %v6477
  %v6823 = vsel %vm5014, %v6727, %v6479
  %v6824 = vsel %vm5014, %v6728, %v6481
  %v6825 = vsel %vm5014, %v6729, %v6483
  %v6826 = vsel %vm5014, %v6730, %v6485
  %v6827 = vsel %vm5014, %v6731, %v6487
  %v6828 = vsel %vm5014, %v6732, %v6489
  %v6829 = vsel %vm5014, %v6733, %v6491
  %v6830 = vsel %vm5014, %v6734, %v6493
  %v6831 = vsel %vm5014, %v6735, %v6495
  %v6832 = vsel %vm5014, %v6736, %v6497
  %v6833 = vsel %vm5014, %v6737, %v6499
  %v6834 = vsel %vm5014, %v6738, %v6501
  %v6835 = vsel %vm5014, %v6739, %v6503
  %v6836 = vsel %vm5014, %v6740, %v6505
  %v6837 = vsel %vm5014, %v6741, %v6507
  %v6838 = vsel %vm5014, %v6742, %v6509
  %v6839 = vsel %vm5014, %v6743, %v6511
  %v6840 = vsel %vm5014, %v6744, %v6513
  %v6841 = vsel %vm5014, %v6745, %v6515
  %v6842 = vsel %vm5014, %v6746, %v6517
  %v6843 = vsel %vm5014, %v6747, %v6519
  %v6844 = vsel %vm5014, %v6748, %v6521
  %v6845 = vsel %vm5014, %v6749, %v6523
  %v6846 = vsel %vm5014, %v6750, %v6525
  %v6847 = vsel %vm5014, %v6751, %v6527
  %v6848 = vsel %vm5014, %v6752, %v6529
  %v6849 = vsel %vm5014, %v6753, %v6531
  %v6850 = vsel %vm5014, %v6754, %v6533
  %v6851 = vsel %vm5014, %v6755, %v6535
  %v6852 = vsel %vm5014, %v6756, %v6537
  %v6853 = vsel %vm5014, %v6757, %v6539
  %v6854 = vsel %vm5014, %v6758, %v6541
  %v6855 = vsel %vm5014, %v6759, %v6543
  %v6856 = vsel %vm5014, %v6760, %v6545
  %v6857 = vsel %vm5014, %v6761, %v6547
  %v6858 = vsel %vm5014, %v6762, %v6549
  %v6859 = vsel %vm5014, %v6763, %v6551
  %v6860 = vsel %vm5014, %v6764, %v6553
  %v6861 = vsel %vm5014, %v6765, %v6555
  %v6862 = vsel %vm5014, %v6766, %v6557
  %v6863 = vsel %vm5014, %v6767, %v6559
  %v6864 = vsel %vm5014, %v6768, %v6561
  %v6865 = vsel %vm5014, %v6769, %v6563
  %v6866 = vsel %vm5014, %v6770, %v6565
  %v6867 = vsel %vm5014, %v6771, %v6567
  %v6868 = vsel %vm5014, %v6772, %v6569
  %v6869 = vsel %vm5014, %v6773, %v6571
  %v6870 = vsel %vm5014, %v6774, %v6573
  %v6871 = vsel %vm5014, %v6775, %v6575
  %v6872 = vsel %vm5014, %v6776, %v6577
  %v6873 = vsel %vm5014, %v6777, %v6579
  %v6874 = vsel %vm5014, %v6778, %v6581
  %v6875 = vsel %vm5014, %v6779, %v6583
  %v6876 = vsel %vm5014, %v6780, %v6585
  %v6877 = vsel %vm5014, %v6781, %v6587
  %v6878 = vsel %vm5014, %v6782, %v6589
  %v6879 = vsel %vm5014, %v6783, %v6591
  %vm6880 = vcmask 785408
  %v6881 = vsel %vm6880, %v6784, 0.0
  %v6882 = vsel %vm6880, %v6785, 0.0
  %v6883 = vsel %vm6880, %v6786, 0.0
  %v6884 = vsel %vm6880, %v6787, 0.0
  %v6885 = vsel %vm6880, %v6788, 0.0
  %v6886 = vsel %vm6880, %v6789, 0.0
  %v6887 = vsel %vm6880, %v6790, 0.0
  %v6888 = vsel %vm6880, %v6791, 0.0
  %v6889 = vsel %vm6880, %v6792, 0.0
  %v6890 = vsel %vm6880, %v6793, 0.0
  %v6891 = vsel %vm6880, %v6794, 0.0
  %v6892 = vsel %vm6880, %v6795, 0.0
  %v6893 = vsel %vm6880, %v6796, 0.0
  %v6894 = vsel %vm6880, %v6797, 0.0
  %v6895 = vsel %vm6880, %v6798, 0.0
  %v6896 = vsel %vm6880, %v6799, 0.0
  %v6897 = vsel %vm6880, %v6800, 0.0
  %v6898 = vsel %vm6880, %v6801, 0.0
  %v6899 = vsel %vm6880, %v6802, 0.0
  %v6900 = vsel %vm6880, %v6803, 0.0
  %v6901 = vsel %vm6880, %v6804, 0.0
  %v6902 = vsel %vm6880, %v6805, 0.0
  %v6903 = vsel %vm6880, %v6806, 0.0
  %v6904 = vsel %vm6880, %v6807, 0.0
  %v6905 = vsel %vm6880, %v6808, 0.0
  %v6906 = vsel %vm6880, %v6809, 0.0
  %v6907 = vsel %vm6880, %v6810, 0.0
  %v6908 = vsel %vm6880, %v6811, 0.0
  %v6909 = vsel %vm6880, %v6812, 0.0
  %v6910 = vsel %vm6880, %v6813, 0.0
  %v6911 = vsel %vm6880, %v6814, 0.0
  %v6912 = vsel %vm6880, %v6815, 0.0
  %v6913 = vsel %vm6880, %v6816, 0.0
  %v6914 = vsel %vm6880, %v6817, 0.0
  %v6915 = vsel %vm6880, %v6818, 0.0
  %v6916 = vsel %vm6880, %v6819, 0.0
  %v6917 = vsel %vm6880, %v6820, 0.0
  %v6918 = vsel %vm6880, %v6821, 0.0
  %v6919 = vsel %vm6880, %v6822, 0.0
  %v6920 = vsel %vm6880, %v6823, 0.0
  %v6921 = vsel %vm6880, %v6824, 0.0
  %v6922 = vsel %vm6880, %v6825, 0.0
  %v6923 = vsel %vm6880, %v6826, 0.0
  %v6924 = vsel %vm6880, %v6827, 0.0
  %v6925 = vsel %vm6880, %v6828, 0.0
  %v6926 = vsel %vm6880, %v6829, 0.0
  %v6927 = vsel %vm6880, %v6830, 0.0
  %v6928 = vsel %vm6880, %v6831, 0.0
  %v6929 = vsel %vm6880, %v6832, 0.0
  %v6930 = vsel %vm6880, %v6833, 0.0
  %v6931 = vsel %vm6880, %v6834, 0.0
  %v6932 = vsel %vm6880, %v6835, 0.0
  %v6933 = vsel %vm6880, %v6836, 0.0
  %v6934 = vsel %vm6880, %v6837, 0.0
  %v6935 = vsel %vm6880, %v6838, 0.0
  %v6936 = vsel %vm6880, %v6839, 0.0
  %v6937 = vsel %vm6880, %v6840, 0.0
  %v6938 = vsel %vm6880, %v6841, 0.0
  %v6939 = vsel %vm6880, %v6842, 0.0
  %v6940 = vsel %vm6880, %v6843, 0.0
  %v6941 = vsel %vm6880, %v6844, 0.0
  %v6942 = vsel %vm6880, %v6845, 0.0
  %v6943 = vsel %vm6880, %v6846, 0.0
  %v6944 = vsel %vm6880, %v6847, 0.0
  %v6945 = vsel %vm6880, %v6848, 0.0
  %v6946 = vsel %vm6880, %v6849, 0.0
  %v6947 = vsel %vm6880, %v6850, 0.0
  %v6948 = vsel %vm6880, %v6851, 0.0
  %v6949 = vsel %vm6880, %v6852, 0.0
  %v6950 = vsel %vm6880, %v6853, 0.0
  %v6951 = vsel %vm6880, %v6854, 0.0
  %v6952 = vsel %vm6880, %v6855, 0.0
  %v6953 = vsel %vm6880, %v6856, 0.0
  %v6954 = vsel %vm6880, %v6857, 0.0
  %v6955 = vsel %vm6880, %v6858, 0.0
  %v6956 = vsel %vm6880, %v6859, 0.0
  %v6957 = vsel %vm6880, %v6860, 0.0
  %v6958 = vsel %vm6880, %v6861, 0.0
  %v6959 = vsel %vm6880, %v6862, 0.0
  %v6960 = vsel %vm6880, %v6863, 0.0
  %v6961 = vsel %vm6880, %v6864, 0.0
  %v6962 = vsel %vm6880, %v6865, 0.0
  %v6963 = vsel %vm6880, %v6866, 0.0
  %v6964 = vsel %vm6880, %v6867, 0.0
  %v6965 = vsel %vm6880, %v6868, 0.0
  %v6966 = vsel %vm6880, %v6869, 0.0
  %v6967 = vsel %vm6880, %v6870, 0.0
  %v6968 = vsel %vm6880, %v6871, 0.0
  %v6969 = vsel %vm6880, %v6872, 0.0
  %v6970 = vsel %vm6880, %v6873, 0.0
  %v6971 = vsel %vm6880, %v6874, 0.0
  %v6972 = vsel %vm6880, %v6875, 0.0
  %v6973 = vsel %vm6880, %v6876, 0.0
  %v6974 = vsel %vm6880, %v6877, 0.0
  %v6975 = vsel %vm6880, %v6878, 0.0
  %v6976 = vsel %vm6880, %v6879, 0.0
  %6977 = vst [vmem:[%s3] sm:$0xff] %v6881
  %6978 = vst [vmem:[%s3 + $0x8] sm:$0xff] %v6882
  %6979 = vst [vmem:[%s3 + $0x10] sm:$0xff] %v6883
  %6980 = vst [vmem:[%s3 + $0x18] sm:$0xff] %v6884
  %6981 = vst [vmem:[%s3 + $0x20] sm:$0xff] %v6885
  %6982 = vst [vmem:[%s3 + $0x28] sm:$0xff] %v6886
  %6983 = vst [vmem:[%s3 + $0x30] sm:$0xff] %v6887
  %6984 = vst [vmem:[%s3 + $0x38] sm:$0xff] %v6888
  %6985 = vst [vmem:[%s3 + $0x40] sm:$0xff] %v6889
  %6986 = vst [vmem:[%s3 + $0x48] sm:$0xff] %v6890
  %6987 = vst [vmem:[%s3 + $0x50] sm:$0xff] %v6891
  %6988 = vst [vmem:[%s3 + $0x58] sm:$0xff] %v6892
  %6989 = vst [vmem:[%s3 + $0x60] sm:$0xff] %v6893
  %6990 = vst [vmem:[%s3 + $0x68] sm:$0xff] %v6894
  %6991 = vst [vmem:[%s3 + $0x70] sm:$0xff] %v6895
  %6992 = vst [vmem:[%s3 + $0x78] sm:$0xff] %v6896
  %6993 = vst [vmem:[%s3 + $0x80] sm:$0xff] %v6897
  %6994 = vst [vmem:[%s3 + $0x88] sm:$0xff] %v6898
  %6995 = vst [vmem:[%s3 + $0x90] sm:$0xff] %v6899
  %6996 = vst [vmem:[%s3 + $0x98] sm:$0xff] %v6900
  %6997 = vst [vmem:[%s3 + $0xa0] sm:$0xff] %v6901
  %6998 = vst [vmem:[%s3 + $0xa8] sm:$0xff] %v6902
  %6999 = vst [vmem:[%s3 + $0xb0] sm:$0xff] %v6903
  %7000 = vst [vmem:[%s3 + $0xb8] sm:$0xff] %v6904
  %7001 = vst [vmem:[%s3 + $0xc0] sm:$0xff] %v6905
  %7002 = vst [vmem:[%s3 + $0xc8] sm:$0xff] %v6906
  %7003 = vst [vmem:[%s3 + $0xd0] sm:$0xff] %v6907
  %7004 = vst [vmem:[%s3 + $0xd8] sm:$0xff] %v6908
  %7005 = vst [vmem:[%s3 + $0xe0] sm:$0xff] %v6909
  %7006 = vst [vmem:[%s3 + $0xe8] sm:$0xff] %v6910
  %7007 = vst [vmem:[%s3 + $0xf0] sm:$0xff] %v6911
  %7008 = vst [vmem:[%s3 + $0xf8] sm:$0xff] %v6912
  %7009 = vst [vmem:[%s3 + $0x100] sm:$0xff] %v6913
  %7010 = vst [vmem:[%s3 + $0x108] sm:$0xff] %v6914
  %7011 = vst [vmem:[%s3 + $0x110] sm:$0xff] %v6915
  %7012 = vst [vmem:[%s3 + $0x118] sm:$0xff] %v6916
  %7013 = vst [vmem:[%s3 + $0x120] sm:$0xff] %v6917
  %7014 = vst [vmem:[%s3 + $0x128] sm:$0xff] %v6918
  %7015 = vst [vmem:[%s3 + $0x130] sm:$0xff] %v6919
  %7016 = vst [vmem:[%s3 + $0x138] sm:$0xff] %v6920
  %7017 = vst [vmem:[%s3 + $0x140] sm:$0xff] %v6921
  %7018 = vst [vmem:[%s3 + $0x148] sm:$0xff] %v6922
  %7019 = vst [vmem:[%s3 + $0x150] sm:$0xff] %v6923
  %7020 = vst [vmem:[%s3 + $0x158] sm:$0xff] %v6924
  %7021 = vst [vmem:[%s3 + $0x160] sm:$0xff] %v6925
  %7022 = vst [vmem:[%s3 + $0x168] sm:$0xff] %v6926
  %7023 = vst [vmem:[%s3 + $0x170] sm:$0xff] %v6927
  %7024 = vst [vmem:[%s3 + $0x178] sm:$0xff] %v6928
  %7025 = vst [vmem:[%s3 + $0x180] sm:$0xff] %v6929
  %7026 = vst [vmem:[%s3 + $0x188] sm:$0xff] %v6930
  %7027 = vst [vmem:[%s3 + $0x190] sm:$0xff] %v6931
  %7028 = vst [vmem:[%s3 + $0x198] sm:$0xff] %v6932
  %7029 = vst [vmem:[%s3 + $0x1a0] sm:$0xff] %v6933
  %7030 = vst [vmem:[%s3 + $0x1a8] sm:$0xff] %v6934
  %7031 = vst [vmem:[%s3 + $0x1b0] sm:$0xff] %v6935
  %7032 = vst [vmem:[%s3 + $0x1b8] sm:$0xff] %v6936
  %7033 = vst [vmem:[%s3 + $0x1c0] sm:$0xff] %v6937
  %7034 = vst [vmem:[%s3 + $0x1c8] sm:$0xff] %v6938
  %7035 = vst [vmem:[%s3 + $0x1d0] sm:$0xff] %v6939
  %7036 = vst [vmem:[%s3 + $0x1d8] sm:$0xff] %v6940
  %7037 = vst [vmem:[%s3 + $0x1e0] sm:$0xff] %v6941
  %7038 = vst [vmem:[%s3 + $0x1e8] sm:$0xff] %v6942
  %7039 = vst [vmem:[%s3 + $0x1f0] sm:$0xff] %v6943
  %7040 = vst [vmem:[%s3 + $0x1f8] sm:$0xff] %v6944
  %7041 = vst [vmem:[%s3 + $0x200] sm:$0xff] %v6945
  %7042 = vst [vmem:[%s3 + $0x208] sm:$0xff] %v6946
  %7043 = vst [vmem:[%s3 + $0x210] sm:$0xff] %v6947
  %7044 = vst [vmem:[%s3 + $0x218] sm:$0xff] %v6948
  %7045 = vst [vmem:[%s3 + $0x220] sm:$0xff] %v6949
  %7046 = vst [vmem:[%s3 + $0x228] sm:$0xff] %v6950
  %7047 = vst [vmem:[%s3 + $0x230] sm:$0xff] %v6951
  %7048 = vst [vmem:[%s3 + $0x238] sm:$0xff] %v6952
  %7049 = vst [vmem:[%s3 + $0x240] sm:$0xff] %v6953
  %7050 = vst [vmem:[%s3 + $0x248] sm:$0xff] %v6954
  %7051 = vst [vmem:[%s3 + $0x250] sm:$0xff] %v6955
  %7052 = vst [vmem:[%s3 + $0x258] sm:$0xff] %v6956
  %7053 = vst [vmem:[%s3 + $0x260] sm:$0xff] %v6957
  %7054 = vst [vmem:[%s3 + $0x268] sm:$0xff] %v6958
  %7055 = vst [vmem:[%s3 + $0x270] sm:$0xff] %v6959
  %7056 = vst [vmem:[%s3 + $0x278] sm:$0xff] %v6960
  %7057 = vst [vmem:[%s3 + $0x280] sm:$0xff] %v6961
  %7058 = vst [vmem:[%s3 + $0x288] sm:$0xff] %v6962
  %7059 = vst [vmem:[%s3 + $0x290] sm:$0xff] %v6963
  %7060 = vst [vmem:[%s3 + $0x298] sm:$0xff] %v6964
  %7061 = vst [vmem:[%s3 + $0x2a0] sm:$0xff] %v6965
  %7062 = vst [vmem:[%s3 + $0x2a8] sm:$0xff] %v6966
  %7063 = vst [vmem:[%s3 + $0x2b0] sm:$0xff] %v6967
  %7064 = vst [vmem:[%s3 + $0x2b8] sm:$0xff] %v6968
  %7065 = vst [vmem:[%s3 + $0x2c0] sm:$0xff] %v6969
  %7066 = vst [vmem:[%s3 + $0x2c8] sm:$0xff] %v6970
  %7067 = vst [vmem:[%s3 + $0x2d0] sm:$0xff] %v6971
  %7068 = vst [vmem:[%s3 + $0x2d8] sm:$0xff] %v6972
  %7069 = vst [vmem:[%s3 + $0x2e0] sm:$0xff] %v6973
  %7070 = vst [vmem:[%s3 + $0x2e8] sm:$0xff] %v6974
  %7071 = vst [vmem:[%s3 + $0x2f0] sm:$0xff] %v6975
  %7072 = vst [vmem:[%s3 + $0x2f8] sm:$0xff] %v6976
  // Predicated region
  $region14: #{protonet_forward.3} parent=0 // pred_check
    _
  $region15: #{protonet_forward.3} parent=0 // pred_check_branch
    %7074 = sbr.rel (0) target = $region17
  $region16: #{protonet_forward.3} parent=0 // pred_region
    _
  $region17: #{protonet_forward.3} parent=0 // pred_fallthru
    _
  // Predicated region
  $region18: #{protonet_forward.3} parent=0 // pred_check
    _
  $region19: #{protonet_forward.3} parent=0 // pred_check_branch
    %7076 = sbr.rel (0) target = $region21
  $region20: #{protonet_forward.3} parent=0 // pred_region
    _
  $region21: #{protonet_forward.3} parent=0 // pred_fallthru
    _

</llo_original>
